<compile_context>
chip_gen: v5e
topology: v5e:2x2
jax: 0.10.0
libtpu: 0.0.40
codegen_flags: <defaults>
</compile_context>

<pallas_src>
import numpy as np
import jax
import jax.numpy as jnp
from jax.experimental import pallas as pl
from jax.experimental.pallas import tpu as pltpu

# ---------------------------------------------------------------------------
# Model configuration (small, consistent with DeterministicPolicy structure)
# ---------------------------------------------------------------------------
BSIZE = 2
NCOND = 4          # number of conditioning frames
IMG_C = 3          # channels per frame
IMG_H = IMG_W = 16
NFEATURE = 32      # conv feature width
H_HEIGHT = H_WIDTH = 2          # spatial size after 3 stride-2 convs: 16->8->4->2
N_SPATIAL = H_HEIGHT * H_WIDTH  # 4
HSIZE = NFEATURE * N_SPATIAL    # 128
N_HIDDEN = 64
N_OUTPUTS = 2
STATE_DIM = 4      # state features per frame

KSIZE = 4
STRIDE = 2
PAD = 1
TAPS = KSIZE * KSIZE            # 16
H1 = IMG_H // STRIDE            # 8   conv1 output spatial
H2 = H1 // STRIDE               # 4   conv2 output spatial
H3 = H2 // STRIDE               # 2   conv3 output spatial
OUT_PAD = 128                   # lane-dense padded output width

# ---------------------------------------------------------------------------
# Packed-parameter layout (fixed, batch-size independent).  Three slabs,
# grouped by lane width so there is no column-padding waste, plus an f32 bias
# slab.  Offsets are module-level Python constants shared by pack_params()
# and the kernel's static slices.
# ---------------------------------------------------------------------------
def _row_offsets(spec):
    out, off = {}, 0
    for name, rows in spec:
        out[name] = (off, rows)
        off += rows
    return out, off


_SLAB32_SPEC = [("w1", NCOND * IMG_C * TAPS),   # (192, 32) conv1 weight (im2col layout)
                ("w2s", TAPS * NFEATURE),       # (512, 32) conv2 tap-stacked weight
                ("w3s", TAPS * NFEATURE),       # (512, 32) conv3 tap-stacked weight
                ("s1w", NCOND * STATE_DIM)]     # (16, 32)  state encoder 1
_SLAB64_SPEC = [("pw", HSIZE),                  # (128, 64) proj (row-permuted)
                ("f1w", N_HIDDEN),              # (64, 64)  MixLinear fc1
                ("f2w", N_HIDDEN)]              # (64, 64)  MixLinear fc2
_SLAB128_SPEC = [("s2w", NFEATURE),             # (32, 128) state encoder 2 (col-permuted)
                 ("f3w", N_HIDDEN)]             # (64, 128) MixLinear fc3 (lane padded)

_SLAB32_OFF, _SLAB32_ROWS = _row_offsets(_SLAB32_SPEC)
_SLAB64_OFF, _SLAB64_ROWS = _row_offsets(_SLAB64_SPEC)
_SLAB128_OFF, _SLAB128_ROWS = _row_offsets(_SLAB128_SPEC)

_BIAS_ROW = {"b1": 0, "b2": 1, "b3": 2, "s1b": 3, "s2b": 4,
             "pb": 5, "f1b": 6, "f2b": 7, "f3b": 8}
_BIAS_ROWS = 16

# kernel feature order f_k = p*NFEATURE + c  <->  PyTorch flatten f_pt = c*N_SPATIAL + p
_HSIZE_PERM = np.array(
    [c * N_SPATIAL + p for p in range(N_SPATIAL) for c in range(NFEATURE)],
    dtype=np.int32)


# ---------------------------------------------------------------------------
# Fused Pallas kernel: entire forward pass, everything VMEM-resident
# ---------------------------------------------------------------------------
def _fused_policy_kernel(patch1_ref, states_ref, g2_ref, g3_ref,
                         s32_ref, s64_ref, s128_ref, bias_ref,
                         out_ref, p2w_ref, p3w_ref, flat_ref):
    f32 = jnp.float32
    cdt = s32_ref.dtype                                  # MXU operand dtype
    prec = (jax.lax.Precision.HIGHEST if cdt == jnp.float32
            else jax.lax.Precision.DEFAULT)
    nf = NFEATURE
    r2 = p2w_ref.shape[0]                                # B*H2*H2
    r3 = p3w_ref.shape[0]                                # B*H3*H3
    bs = out_ref.shape[0]

    def mdot(a, b):                                      # MXU dot, f32 accumulate
        return jnp.dot(a.astype(cdt), b.astype(cdt),
                       preferred_element_type=f32, precision=prec)

    def w32(name):
        o, r = _SLAB32_OFF[name]
        return s32_ref[o:o + r, :]

    def w64(name):
        o, r = _SLAB64_OFF[name]
        return s64_ref[o:o + r, :]

    def w128(name):
        o, r = _SLAB128_OFF[name]
        return s128_ref[o:o + r, :]

    def bias(name, width):
        row = _BIAS_ROW[name]
        return bias_ref[row:row + 1, 0:width]            # f32 (1, width)

    # ---- conv1 (input im2col'd once in the wrapper) -------------------------
    y1 = jnp.maximum(mdot(patch1_ref[...], w32("w1")) + bias("b1", nf), 0.0)
    # y1: (B*H1*H1, 32) f32, rows ordered (n, h, w)

    # ---- conv2: one-hot gather -> tap-widen (static column-block stores)
    # ---- -> ONE 512-deep-contraction matmul ---------------------------------
    p2 = mdot(g2_ref[...], y1)                           # (TAPS*r2, 32) f32
    for k in range(TAPS):
        p2w_ref[:, k * nf:(k + 1) * nf] = p2[k * r2:(k + 1) * r2, :]
    y2 = jnp.maximum(mdot(p2w_ref[...], w32("w2s")) + bias("b2", nf), 0.0)
    # y2: (B*H2*H2, 32) f32, rows ordered (n, h, w)

    # ---- conv3 (no trailing ReLU, as in the reference encoder) --------------
    # output rows ordered (spatial, batch) so the flatten below is 4 slices
    p3 = mdot(g3_ref[...], y2)                           # (TAPS*r3, 32) f32
    for k in range(TAPS):
        p3w_ref[:, k * nf:(k + 1) * nf] = p3[k * r3:(k + 1) * r3, :]
    y3 = mdot(p3w_ref[...], w32("w3s")) + bias("b3", nf)  # (r3, 32) f32

    # ---- fold the PyTorch (c,h,w) flatten: flat[n, p*32 + c] = y3[p*B + n, c]
    # (senc2 / proj weights were permuted to this basis in pack_params)
    for p in range(N_SPATIAL):
        flat_ref[:, p * nf:(p + 1) * nf] = y3[p * bs:(p + 1) * bs, :]

    # ---- state encoder -------------------------------------------------------
    hs = jnp.maximum(mdot(states_ref[...], w32("s1w")) + bias("s1b", nf), 0.0)
    hs = mdot(hs, w128("s2w")) + bias("s2b", HSIZE)       # (B, 128) f32

    # ---- encoder fusion (+), proj, fc (MixLinear == nn.Linear at inference) --
    h = hs + flat_ref[...]
    h = mdot(h, w64("pw")) + bias("pb", N_HIDDEN)
    h = jnp.maximum(mdot(h, w64("f1w")) + bias("f1b", N_HIDDEN), 0.0)
    h = jnp.maximum(mdot(h, w64("f2w")) + bias("f2b", N_HIDDEN), 0.0)
    a = mdot(h, w128("f3w")) + bias("f3b", OUT_PAD)       # (B, 128) lane-dense
    out_ref[...] = a.astype(out_ref.dtype)


# ---------------------------------------------------------------------------
# Wrapper-side glue
# ---------------------------------------------------------------------------
def _im2col(x, kh, kw, stride, pad):
    """x: (N,C,H,W) -> patches (N*oh*ow, C*kh*kw) with (C,kh,kw)-major columns."""
    x = jnp.pad(x, ((0, 0), (0, 0), (pad, pad), (pad, pad)))
    N, C, H, W = x.shape
    oh = (H - kh) // stride + 1
    ow = (W - kw) // stride + 1
    cols = []
    for i in range(kh):
        for j in range(kw):
            cols.append(x[:, :, i:i + stride * oh:stride, j:j + stride * ow:stride])
    patches = jnp.stack(cols, axis=2).reshape(N, C, kh, kw, oh, ow)
    patches = patches.transpose(0, 4, 5, 1, 2, 3).reshape(N * oh * ow, C * kh * kw)
    return patches, oh, ow


def _conv_gather_matrix(bsize, h_in, w_in, ksize, stride, pad, out_order):
    """One-hot gather matrix G (taps*R_out, R_in) s.t. G @ act picks, for every
    kernel tap and output position, the corresponding input row (zero row for
    padding).  Input rows are (n, h, w) row-major.  out_order:
      'nhw': output rows ordered (n, i, j);  'hwn': ordered (i*w_out+j, n)."""
    h_out = (h_in + 2 * pad - ksize) // stride + 1
    w_out = (w_in + 2 * pad - ksize) // stride + 1
    r_in = bsize * h_in * w_in
    r_out = bsize * h_out * w_out
    g = np.zeros((ksize * ksize * r_out, r_in), np.float32)
    for n in range(bsize):
        for i in range(h_out):
            for j in range(w_out):
                if out_order == "nhw":
                    ro = n * h_out * w_out + i * w_out + j
                else:  # "hwn"
                    ro = (i * w_out + j) * bsize + n
                for ki in range(ksize):
                    for kj in range(ksize):
                        hh = i * stride + ki - pad
                        ww = j * stride + kj - pad
                        if 0 <= hh < h_in and 0 <= ww < w_in:
                            tap = ki * ksize + kj
                            g[tap * r_out + ro, n * h_in * w_in + hh * w_in + ww] = 1.0
    return g


def pack_params(params, bsize, dtype=jnp.bfloat16):
    """One-time parameter packing: width-classed weight slabs (MXU-operand
    dtype), an f32 bias slab, and the per-batch-size one-hot gather matrices.
    Call once; reuse the result every step."""
    w1 = params["conv1_w"].reshape(NFEATURE, -1).T                          # (192, 32)
    w2s = params["conv2_w"].transpose(2, 3, 1, 0).reshape(TAPS * NFEATURE, NFEATURE)
    w3s = params["conv3_w"].transpose(2, 3, 1, 0).reshape(TAPS * NFEATURE, NFEATURE)
    pieces = {
        "w1": w1, "w2s": w2s, "w3s": w3s, "s1w": params["senc1_w"],
        "pw": params["proj_w"][_HSIZE_PERM, :],
        "f1w": params["fc1_w"], "f2w": params["fc2_w"],
        "s2w": params["senc2_w"][:, _HSIZE_PERM],
        "f3w": jnp.pad(params["fc3_w"], ((0, 0), (0, OUT_PAD - N_OUTPUTS))),
    }

    def slab(spec, width):
        parts = []
        for name, rows in spec:
            a = pieces[name]
            assert a.shape == (rows, width), (name, a.shape)
            parts.append(a)
        return jnp.concatenate(parts, axis=0).astype(dtype)

    biases = jnp.zeros((_BIAS_ROWS, OUT_PAD), jnp.float32)
    bias_vals = {"b1": params["conv1_b"], "b2": params["conv2_b"],
                 "b3": params["conv3_b"], "s1b": params["senc1_b"],
                 "s2b": params["senc2_b"][_HSIZE_PERM], "pb": params["proj_b"],
                 "f1b": params["fc1_b"], "f2b": params["fc2_b"],
                 "f3b": params["fc3_b"]}
    for name, v in bias_vals.items():
        biases = biases.at[_BIAS_ROW[name], :v.shape[0]].set(v.astype(jnp.float32))

    g2 = jnp.asarray(_conv_gather_matrix(bsize, H1, H1, KSIZE, STRIDE, PAD, "nhw"),
                     dtype=dtype)
    g3 = jnp.asarray(_conv_gather_matrix(bsize, H2, H2, KSIZE, STRIDE, PAD, "hwn"),
                     dtype=dtype)
    return {"slab32": slab(_SLAB32_SPEC, 32),
            "slab64": slab(_SLAB64_SPEC, 64),
            "slab128": slab(_SLAB128_SPEC, 128),
            "biases": biases, "g2": g2, "g3": g3}


# ---------------------------------------------------------------------------
# Parameters (deterministic, synthetic — PyTorch-style uniform fan-in init)
# ---------------------------------------------------------------------------
def _init_linear(key, fan_in, fan_out):
    k1, k2 = jax.random.split(key)
    bound = 1.0 / (fan_in ** 0.5)
    w = jax.random.uniform(k1, (fan_in, fan_out), jnp.float32, -bound, bound)
    b = jax.random.uniform(k2, (fan_out,), jnp.float32, -bound, bound)
    return w, b


def _init_conv(key, out_ch, in_ch, kh, kw):
    k1, k2 = jax.random.split(key)
    bound = 1.0 / ((in_ch * kh * kw) ** 0.5)
    w = jax.random.uniform(k1, (out_ch, in_ch, kh, kw), jnp.float32, -bound, bound)
    b = jax.random.uniform(k2, (out_ch,), jnp.float32, -bound, bound)
    return w, b


def init_params(key):
    keys = jax.random.split(key, 9)
    p = {}
    p["conv1_w"], p["conv1_b"] = _init_conv(keys[0], NFEATURE, NCOND * IMG_C, KSIZE, KSIZE)
    p["conv2_w"], p["conv2_b"] = _init_conv(keys[1], NFEATURE, NFEATURE, KSIZE, KSIZE)
    p["conv3_w"], p["conv3_b"] = _init_conv(keys[2], NFEATURE, NFEATURE, KSIZE, KSIZE)
    p["senc1_w"], p["senc1_b"] = _init_linear(keys[3], NCOND * STATE_DIM, NFEATURE)
    p["senc2_w"], p["senc2_b"] = _init_linear(keys[4], NFEATURE, HSIZE)
    p["proj_w"], p["proj_b"] = _init_linear(keys[5], HSIZE, N_HIDDEN)
    p["fc1_w"], p["fc1_b"] = _init_linear(keys[6], N_HIDDEN, N_HIDDEN)      # MixLinear
    p["fc2_w"], p["fc2_b"] = _init_linear(keys[7], N_HIDDEN, N_HIDDEN)      # MixLinear
    p["fc3_w"], p["fc3_b"] = _init_linear(keys[8], N_HIDDEN, N_OUTPUTS)     # MixLinear
    return p


# ---------------------------------------------------------------------------
# Forward pass (mirrors MixoutDeterministicPolicy.forward, defaults:
# normalize_inputs=False, normalize_outputs=False).  `packed` = pack_params(...).
# ---------------------------------------------------------------------------
def mixout_policy_forward(packed, state_images, states):
    if state_images.ndim == 4:                       # .unsqueeze(0) branch
        state_images = state_images[None]
        states = states[None]
    bsize = state_images.shape[0]
    cdt = packed["slab32"].dtype

    # per-step input transforms only (parameter packing is hoisted out)
    x = state_images.reshape(bsize, NCOND * IMG_C, IMG_H, IMG_W)
    patch1, _, _ = _im2col(x, KSIZE, KSIZE, STRIDE, PAD)      # (B*64, 192)
    patch1 = patch1.astype(cdt)
    s = states.reshape(bsize, NCOND * STATE_DIM).astype(cdt)

    r2 = bsize * H2 * H2
    r3 = bsize * H3 * H3
    args = (patch1, s, packed["g2"], packed["g3"],
            packed["slab32"], packed["slab64"], packed["slab128"], packed["biases"])

    out = pl.pallas_call(
        _fused_policy_kernel,
        out_shape=jax.ShapeDtypeStruct((bsize, OUT_PAD), jnp.float32),
        in_specs=[pl.BlockSpec(memory_space=pltpu.MemorySpace.VMEM)] * len(args),
        out_specs=pl.BlockSpec(memory_space=pltpu.MemorySpace.VMEM),
        scratch_shapes=[pltpu.VMEM((r2, TAPS * NFEATURE), jnp.float32),  # conv2 wide patches
                        pltpu.VMEM((r3, TAPS * NFEATURE), jnp.float32),  # conv3 wide patches
                        pltpu.VMEM((bsize, HSIZE), jnp.float32)],        # flattened conv feat
    )(*args)
    return out[:, :N_OUTPUTS]                        # .view(bsize, self.n_outputs)


# ---------------------------------------------------------------------------
# Pure-JAX reference (PyTorch-faithful: NCHW convs, (c,h,w) flatten), f32
# at HIGHEST precision so the f32-path comparison is meaningful.
# ---------------------------------------------------------------------------
def reference_forward(params, state_images, states):
    if state_images.ndim == 4:
        state_images, states = state_images[None], states[None]
    bsize = state_images.shape[0]
    hi = jax.lax.Precision.HIGHEST
    x = state_images.reshape(bsize, NCOND * IMG_C, IMG_H, IMG_W)

    def conv(x, w, b, relu):
        y = jax.lax.conv_general_dilated(
            x, w, (STRIDE, STRIDE), ((PAD, PAD), (PAD, PAD)),
            dimension_numbers=("NCHW", "OIHW", "NCHW"), precision=hi)
        y = y + b[None, :, None, None]
        return jnp.maximum(y, 0.0) if relu else y

    dot = lambda a, b: jnp.dot(a, b, precision=hi)
    h = conv(x, params["conv1_w"], params["conv1_b"], True)
    h = conv(h, params["conv2_w"], params["conv2_b"], True)
    h = conv(h, params["conv3_w"], params["conv3_b"], False)
    h_conv = h.reshape(bsize, HSIZE)
    s = states.reshape(bsize, NCOND * STATE_DIM)
    s = jnp.maximum(dot(s, params["senc1_w"]) + params["senc1_b"], 0.0)
    h_state = dot(s, params["senc2_w"]) + params["senc2_b"]
    h = h_conv + h_state
    h = dot(h, params["proj_w"]) + params["proj_b"]
    h = jnp.maximum(dot(h, params["fc1_w"]) + params["fc1_b"], 0.0)
    h = jnp.maximum(dot(h, params["fc2_w"]) + params["fc2_b"], 0.0)
    return dot(h, params["fc3_w"]) + params["fc3_b"]


if __name__ == "__main__":
    key = jax.random.PRNGKey(0)
    k_img, k_state, k_params = jax.random.split(key, 3)

    state_images = jax.random.normal(
        k_img, (BSIZE, NCOND, IMG_C, IMG_H, IMG_W), jnp.float32)
    states = jax.random.normal(k_state, (BSIZE, NCOND, STATE_DIM), jnp.float32)
    params = init_params(k_params)

    ref = jax.block_until_ready(reference_forward(params, state_images, states))
    fwd = jax.jit(mixout_policy_forward)

    # f32 MXU-operand path: tight tolerance so layout/permutation bugs can't hide
    packed_f32 = pack_params(params, BSIZE, dtype=jnp.float32)
    out_f32 = jax.block_until_ready(fwd(packed_f32, state_images, states))
    assert out_f32.shape == (BSIZE, N_OUTPUTS)
    assert jnp.allclose(out_f32, ref, rtol=1e-4, atol=1e-4), (out_f32, ref)

    # bf16 MXU-operand path (deployment config): halved DMA, ~3x faster serial dots
    packed_bf16 = pack_params(params, BSIZE, dtype=jnp.bfloat16)
    out_bf16 = jax.block_until_ready(fwd(packed_bf16, state_images, states))
    assert out_bf16.shape == (BSIZE, N_OUTPUTS)
    assert jnp.allclose(out_bf16, ref, rtol=3e-2, atol=3e-2), (out_bf16, ref)

    print("KERNEL_OK")
</pallas_src>

<mosaic_0001>
module attributes {stable_mosaic.version = 11 : i64} {
  func.func @_fused_policy_kernel(%arg0: memref<128x192xf32, #tpu.memory_space<vmem>>, %arg1: memref<2x16xf32, #tpu.memory_space<vmem>>, %arg2: memref<512x128xf32, #tpu.memory_space<vmem>>, %arg3: memref<128x32xf32, #tpu.memory_space<vmem>>, %arg4: memref<1232x32xf32, #tpu.memory_space<vmem>>, %arg5: memref<256x64xf32, #tpu.memory_space<vmem>>, %arg6: memref<96x128xf32, #tpu.memory_space<vmem>>, %arg7: memref<16x128xf32, #tpu.memory_space<vmem>>, %arg8: memref<2x128xf32, #tpu.memory_space<vmem>>, %arg9: memref<32x512xf32, #tpu.memory_space<vmem>>, %arg10: memref<8x512xf32, #tpu.memory_space<vmem>>, %arg11: memref<2x128xf32, #tpu.memory_space<vmem>>) attributes {dimension_semantics = [], scalar_prefetch = 0 : i64, scratch_operands = 3 : i64, tpu.core_type = #tpu.core_type<tc>} {
    %c0 = arith.constant 0 : index
    %c0_0 = arith.constant 0 : index
    %0 = vector.load %arg0[%c0, %c0_0] : memref<128x192xf32, #tpu.memory_space<vmem>>, vector<128x192xf32>
    %c0_1 = arith.constant 0 : index
    %c0_2 = arith.constant 0 : index
    %1 = vector.load %arg4[%c0_1, %c0_2] : memref<1232x32xf32, #tpu.memory_space<vmem>>, vector<192x32xf32>
    %cst = arith.constant dense<0.000000e+00> : vector<128x32xf32>
    %2 = tpu.matmul %0, %1, %cst {dimension_numbers = #tpu.dot_dimension_numbers<[1], [0], [0], [1], [0, 0, 1, 1], [], []>, precision = #tpu.contract_precision<fp32>} : vector<128x192xf32>, vector<192x32xf32>, vector<128x32xf32> -> vector<128x32xf32>
    %c0_3 = arith.constant 0 : index
    %c0_4 = arith.constant 0 : index
    %3 = vector.load %arg7[%c0_3, %c0_4] : memref<16x128xf32, #tpu.memory_space<vmem>>, vector<1x32xf32>
    %4 = vector.broadcast %3 : vector<1x32xf32> to vector<128x32xf32>
    %5 = arith.addf %2, %4 : vector<128x32xf32>
    %cst_5 = arith.constant 0.000000e+00 : f32
    %6 = vector.broadcast %cst_5 : f32 to vector<128x32xf32>
    %7 = arith.maximumf %5, %6 : vector<128x32xf32>
    %c0_6 = arith.constant 0 : index
    %c0_7 = arith.constant 0 : index
    %8 = vector.load %arg2[%c0_6, %c0_7] : memref<512x128xf32, #tpu.memory_space<vmem>>, vector<512x128xf32>
    %cst_8 = arith.constant dense<0.000000e+00> : vector<512x32xf32>
    %9 = tpu.matmul %8, %7, %cst_8 {dimension_numbers = #tpu.dot_dimension_numbers<[1], [0], [0], [1], [0, 0, 1, 1], [], []>, precision = #tpu.contract_precision<fp32>} : vector<512x128xf32>, vector<128x32xf32>, vector<512x32xf32> -> vector<512x32xf32>
    %10 = vector.extract_strided_slice %9 {offsets = [0, 0], sizes = [32, 32], strides = [1, 1]} : vector<512x32xf32> to vector<32x32xf32>
    %c0_9 = arith.constant 0 : index
    %c0_10 = arith.constant 0 : index
    %11 = vector.load %arg9[%c0_9, %c0_10] : memref<32x512xf32, #tpu.memory_space<vmem>>, vector<32x32xf32>
    tpu.vector_store %arg9[%c0_9, %c0_10], %10 {strides = array<i32>} : memref<32x512xf32, #tpu.memory_space<vmem>>, vector<32x32xf32>,
    %12 = vector.extract_strided_slice %9 {offsets = [32, 0], sizes = [32, 32], strides = [1, 1]} : vector<512x32xf32> to vector<32x32xf32>
    %c0_11 = arith.constant 0 : index
    %c32 = arith.constant 32 : index
    %13 = vector.load %arg9[%c0_11, %c32] : memref<32x512xf32, #tpu.memory_space<vmem>>, vector<32x32xf32>
    tpu.vector_store %arg9[%c0_11, %c32], %12 {strides = array<i32>} : memref<32x512xf32, #tpu.memory_space<vmem>>, vector<32x32xf32>,
    %14 = vector.extract_strided_slice %9 {offsets = [64, 0], sizes = [32, 32], strides = [1, 1]} : vector<512x32xf32> to vector<32x32xf32>
    %c0_12 = arith.constant 0 : index
    %c64 = arith.constant 64 : index
    %15 = vector.load %arg9[%c0_12, %c64] : memref<32x512xf32, #tpu.memory_space<vmem>>, vector<32x32xf32>
    tpu.vector_store %arg9[%c0_12, %c64], %14 {strides = array<i32>} : memref<32x512xf32, #tpu.memory_space<vmem>>, vector<32x32xf32>,
    %16 = vector.extract_strided_slice %9 {offsets = [96, 0], sizes = [32, 32], strides = [1, 1]} : vector<512x32xf32> to vector<32x32xf32>
    %c0_13 = arith.constant 0 : index
    %c96 = arith.constant 96 : index
    %17 = vector.load %arg9[%c0_13, %c96] : memref<32x512xf32, #tpu.memory_space<vmem>>, vector<32x32xf32>
    tpu.vector_store %arg9[%c0_13, %c96], %16 {strides = array<i32>} : memref<32x512xf32, #tpu.memory_space<vmem>>, vector<32x32xf32>,
    %18 = vector.extract_strided_slice %9 {offsets = [128, 0], sizes = [32, 32], strides = [1, 1]} : vector<512x32xf32> to vector<32x32xf32>
    %c0_14 = arith.constant 0 : index
    %c128 = arith.constant 128 : index
    %19 = vector.load %arg9[%c0_14, %c128] : memref<32x512xf32, #tpu.memory_space<vmem>>, vector<32x32xf32>
    tpu.vector_store %arg9[%c0_14, %c128], %18 {strides = array<i32>} : memref<32x512xf32, #tpu.memory_space<vmem>>, vector<32x32xf32>,
    %20 = vector.extract_strided_slice %9 {offsets = [160, 0], sizes = [32, 32], strides = [1, 1]} : vector<512x32xf32> to vector<32x32xf32>
    %c0_15 = arith.constant 0 : index
    %c160 = arith.constant 160 : index
    %21 = vector.load %arg9[%c0_15, %c160] : memref<32x512xf32, #tpu.memory_space<vmem>>, vector<32x32xf32>
    tpu.vector_store %arg9[%c0_15, %c160], %20 {strides = array<i32>} : memref<32x512xf32, #tpu.memory_space<vmem>>, vector<32x32xf32>,
    %22 = vector.extract_strided_slice %9 {offsets = [192, 0], sizes = [32, 32], strides = [1, 1]} : vector<512x32xf32> to vector<32x32xf32>
    %c0_16 = arith.constant 0 : index
    %c192 = arith.constant 192 : index
    %23 = vector.load %arg9[%c0_16, %c192] : memref<32x512xf32, #tpu.memory_space<vmem>>, vector<32x32xf32>
    tpu.vector_store %arg9[%c0_16, %c192], %22 {strides = array<i32>} : memref<32x512xf32, #tpu.memory_space<vmem>>, vector<32x32xf32>,
    %24 = vector.extract_strided_slice %9 {offsets = [224, 0], sizes = [32, 32], strides = [1, 1]} : vector<512x32xf32> to vector<32x32xf32>
    %c0_17 = arith.constant 0 : index
    %c224 = arith.constant 224 : index
    %25 = vector.load %arg9[%c0_17, %c224] : memref<32x512xf32, #tpu.memory_space<vmem>>, vector<32x32xf32>
    tpu.vector_store %arg9[%c0_17, %c224], %24 {strides = array<i32>} : memref<32x512xf32, #tpu.memory_space<vmem>>, vector<32x32xf32>,
    %26 = vector.extract_strided_slice %9 {offsets = [256, 0], sizes = [32, 32], strides = [1, 1]} : vector<512x32xf32> to vector<32x32xf32>
    %c0_18 = arith.constant 0 : index
    %c256 = arith.constant 256 : index
    %27 = vector.load %arg9[%c0_18, %c256] : memref<32x512xf32, #tpu.memory_space<vmem>>, vector<32x32xf32>
    tpu.vector_store %arg9[%c0_18, %c256], %26 {strides = array<i32>} : memref<32x512xf32, #tpu.memory_space<vmem>>, vector<32x32xf32>,
    %28 = vector.extract_strided_slice %9 {offsets = [288, 0], sizes = [32, 32], strides = [1, 1]} : vector<512x32xf32> to vector<32x32xf32>
    %c0_19 = arith.constant 0 : index
    %c288 = arith.constant 288 : index
    %29 = vector.load %arg9[%c0_19, %c288] : memref<32x512xf32, #tpu.memory_space<vmem>>, vector<32x32xf32>
    tpu.vector_store %arg9[%c0_19, %c288], %28 {strides = array<i32>} : memref<32x512xf32, #tpu.memory_space<vmem>>, vector<32x32xf32>,
    %30 = vector.extract_strided_slice %9 {offsets = [320, 0], sizes = [32, 32], strides = [1, 1]} : vector<512x32xf32> to vector<32x32xf32>
    %c0_20 = arith.constant 0 : index
    %c320 = arith.constant 320 : index
    %31 = vector.load %arg9[%c0_20, %c320] : memref<32x512xf32, #tpu.memory_space<vmem>>, vector<32x32xf32>
    tpu.vector_store %arg9[%c0_20, %c320], %30 {strides = array<i32>} : memref<32x512xf32, #tpu.memory_space<vmem>>, vector<32x32xf32>,
    %32 = vector.extract_strided_slice %9 {offsets = [352, 0], sizes = [32, 32], strides = [1, 1]} : vector<512x32xf32> to vector<32x32xf32>
    %c0_21 = arith.constant 0 : index
    %c352 = arith.constant 352 : index
    %33 = vector.load %arg9[%c0_21, %c352] : memref<32x512xf32, #tpu.memory_space<vmem>>, vector<32x32xf32>
    tpu.vector_store %arg9[%c0_21, %c352], %32 {strides = array<i32>} : memref<32x512xf32, #tpu.memory_space<vmem>>, vector<32x32xf32>,
    %34 = vector.extract_strided_slice %9 {offsets = [384, 0], sizes = [32, 32], strides = [1, 1]} : vector<512x32xf32> to vector<32x32xf32>
    %c0_22 = arith.constant 0 : index
    %c384 = arith.constant 384 : index
    %35 = vector.load %arg9[%c0_22, %c384] : memref<32x512xf32, #tpu.memory_space<vmem>>, vector<32x32xf32>
    tpu.vector_store %arg9[%c0_22, %c384], %34 {strides = array<i32>} : memref<32x512xf32, #tpu.memory_space<vmem>>, vector<32x32xf32>,
    %36 = vector.extract_strided_slice %9 {offsets = [416, 0], sizes = [32, 32], strides = [1, 1]} : vector<512x32xf32> to vector<32x32xf32>
    %c0_23 = arith.constant 0 : index
    %c416 = arith.constant 416 : index
    %37 = vector.load %arg9[%c0_23, %c416] : memref<32x512xf32, #tpu.memory_space<vmem>>, vector<32x32xf32>
    tpu.vector_store %arg9[%c0_23, %c416], %36 {strides = array<i32>} : memref<32x512xf32, #tpu.memory_space<vmem>>, vector<32x32xf32>,
    %38 = vector.extract_strided_slice %9 {offsets = [448, 0], sizes = [32, 32], strides = [1, 1]} : vector<512x32xf32> to vector<32x32xf32>
    %c0_24 = arith.constant 0 : index
    %c448 = arith.constant 448 : index
    %39 = vector.load %arg9[%c0_24, %c448] : memref<32x512xf32, #tpu.memory_space<vmem>>, vector<32x32xf32>
    tpu.vector_store %arg9[%c0_24, %c448], %38 {strides = array<i32>} : memref<32x512xf32, #tpu.memory_space<vmem>>, vector<32x32xf32>,
    %40 = vector.extract_strided_slice %9 {offsets = [480, 0], sizes = [32, 32], strides = [1, 1]} : vector<512x32xf32> to vector<32x32xf32>
    %c0_25 = arith.constant 0 : index
    %c480 = arith.constant 480 : index
    %41 = vector.load %arg9[%c0_25, %c480] : memref<32x512xf32, #tpu.memory_space<vmem>>, vector<32x32xf32>
    tpu.vector_store %arg9[%c0_25, %c480], %40 {strides = array<i32>} : memref<32x512xf32, #tpu.memory_space<vmem>>, vector<32x32xf32>,
    %c0_26 = arith.constant 0 : index
    %c0_27 = arith.constant 0 : index
    %42 = vector.load %arg9[%c0_26, %c0_27] : memref<32x512xf32, #tpu.memory_space<vmem>>, vector<32x512xf32>
    %c192_28 = arith.constant 192 : index
    %c0_29 = arith.constant 0 : index
    %43 = vector.load %arg4[%c192_28, %c0_29] : memref<1232x32xf32, #tpu.memory_space<vmem>>, vector<512x32xf32>
    %cst_30 = arith.constant dense<0.000000e+00> : vector<32x32xf32>
    %44 = tpu.matmul %42, %43, %cst_30 {dimension_numbers = #tpu.dot_dimension_numbers<[1], [0], [0], [1], [0, 0, 1, 1], [], []>, precision = #tpu.contract_precision<fp32>} : vector<32x512xf32>, vector<512x32xf32>, vector<32x32xf32> -> vector<32x32xf32>
    %c1 = arith.constant 1 : index
    %c0_31 = arith.constant 0 : index
    %45 = vector.load %arg7[%c1, %c0_31] : memref<16x128xf32, #tpu.memory_space<vmem>>, vector<1x32xf32>
    %46 = vector.broadcast %45 : vector<1x32xf32> to vector<32x32xf32>
    %47 = arith.addf %44, %46 : vector<32x32xf32>
    %cst_32 = arith.constant 0.000000e+00 : f32
    %48 = vector.broadcast %cst_32 : f32 to vector<32x32xf32>
    %49 = arith.maximumf %47, %48 : vector<32x32xf32>
    %c0_33 = arith.constant 0 : index
    %c0_34 = arith.constant 0 : index
    %50 = vector.load %arg3[%c0_33, %c0_34] : memref<128x32xf32, #tpu.memory_space<vmem>>, vector<128x32xf32>
    %cst_35 = arith.constant dense<0.000000e+00> : vector<128x32xf32>
    %51 = tpu.matmul %50, %49, %cst_35 {dimension_numbers = #tpu.dot_dimension_numbers<[1], [0], [0], [1], [0, 0, 1, 1], [], []>, precision = #tpu.contract_precision<fp32>} : vector<128x32xf32>, vector<32x32xf32>, vector<128x32xf32> -> vector<128x32xf32>
    %52 = vector.extract_strided_slice %51 {offsets = [0, 0], sizes = [8, 32], strides = [1, 1]} : vector<128x32xf32> to vector<8x32xf32>
    %c0_36 = arith.constant 0 : index
    %c0_37 = arith.constant 0 : index
    %53 = vector.load %arg10[%c0_36, %c0_37] : memref<8x512xf32, #tpu.memory_space<vmem>>, vector<8x32xf32>
    tpu.vector_store %arg10[%c0_36, %c0_37], %52 {strides = array<i32>} : memref<8x512xf32, #tpu.memory_space<vmem>>, vector<8x32xf32>,
    %54 = vector.extract_strided_slice %51 {offsets = [8, 0], sizes = [8, 32], strides = [1, 1]} : vector<128x32xf32> to vector<8x32xf32>
    %c0_38 = arith.constant 0 : index
    %c32_39 = arith.constant 32 : index
    %55 = vector.load %arg10[%c0_38, %c32_39] : memref<8x512xf32, #tpu.memory_space<vmem>>, vector<8x32xf32>
    tpu.vector_store %arg10[%c0_38, %c32_39], %54 {strides = array<i32>} : memref<8x512xf32, #tpu.memory_space<vmem>>, vector<8x32xf32>,
    %56 = vector.extract_strided_slice %51 {offsets = [16, 0], sizes = [8, 32], strides = [1, 1]} : vector<128x32xf32> to vector<8x32xf32>
    %c0_40 = arith.constant 0 : index
    %c64_41 = arith.constant 64 : index
    %57 = vector.load %arg10[%c0_40, %c64_41] : memref<8x512xf32, #tpu.memory_space<vmem>>, vector<8x32xf32>
    tpu.vector_store %arg10[%c0_40, %c64_41], %56 {strides = array<i32>} : memref<8x512xf32, #tpu.memory_space<vmem>>, vector<8x32xf32>,
    %58 = vector.extract_strided_slice %51 {offsets = [24, 0], sizes = [8, 32], strides = [1, 1]} : vector<128x32xf32> to vector<8x32xf32>
    %c0_42 = arith.constant 0 : index
    %c96_43 = arith.constant 96 : index
    %59 = vector.load %arg10[%c0_42, %c96_43] : memref<8x512xf32, #tpu.memory_space<vmem>>, vector<8x32xf32>
    tpu.vector_store %arg10[%c0_42, %c96_43], %58 {strides = array<i32>} : memref<8x512xf32, #tpu.memory_space<vmem>>, vector<8x32xf32>,
    %60 = vector.extract_strided_slice %51 {offsets = [32, 0], sizes = [8, 32], strides = [1, 1]} : vector<128x32xf32> to vector<8x32xf32>
    %c0_44 = arith.constant 0 : index
    %c128_45 = arith.constant 128 : index
    %61 = vector.load %arg10[%c0_44, %c128_45] : memref<8x512xf32, #tpu.memory_space<vmem>>, vector<8x32xf32>
    tpu.vector_store %arg10[%c0_44, %c128_45], %60 {strides = array<i32>} : memref<8x512xf32, #tpu.memory_space<vmem>>, vector<8x32xf32>,
    %62 = vector.extract_strided_slice %51 {offsets = [40, 0], sizes = [8, 32], strides = [1, 1]} : vector<128x32xf32> to vector<8x32xf32>
    %c0_46 = arith.constant 0 : index
    %c160_47 = arith.constant 160 : index
    %63 = vector.load %arg10[%c0_46, %c160_47] : memref<8x512xf32, #tpu.memory_space<vmem>>, vector<8x32xf32>
    tpu.vector_store %arg10[%c0_46, %c160_47], %62 {strides = array<i32>} : memref<8x512xf32, #tpu.memory_space<vmem>>, vector<8x32xf32>,
    %64 = vector.extract_strided_slice %51 {offsets = [48, 0], sizes = [8, 32], strides = [1, 1]} : vector<128x32xf32> to vector<8x32xf32>
    %c0_48 = arith.constant 0 : index
    %c192_49 = arith.constant 192 : index
    %65 = vector.load %arg10[%c0_48, %c192_49] : memref<8x512xf32, #tpu.memory_space<vmem>>, vector<8x32xf32>
    tpu.vector_store %arg10[%c0_48, %c192_49], %64 {strides = array<i32>} : memref<8x512xf32, #tpu.memory_space<vmem>>, vector<8x32xf32>,
    %66 = vector.extract_strided_slice %51 {offsets = [56, 0], sizes = [8, 32], strides = [1, 1]} : vector<128x32xf32> to vector<8x32xf32>
    %c0_50 = arith.constant 0 : index
    %c224_51 = arith.constant 224 : index
    %67 = vector.load %arg10[%c0_50, %c224_51] : memref<8x512xf32, #tpu.memory_space<vmem>>, vector<8x32xf32>
    tpu.vector_store %arg10[%c0_50, %c224_51], %66 {strides = array<i32>} : memref<8x512xf32, #tpu.memory_space<vmem>>, vector<8x32xf32>,
    %68 = vector.extract_strided_slice %51 {offsets = [64, 0], sizes = [8, 32], strides = [1, 1]} : vector<128x32xf32> to vector<8x32xf32>
    %c0_52 = arith.constant 0 : index
    %c256_53 = arith.constant 256 : index
    %69 = vector.load %arg10[%c0_52, %c256_53] : memref<8x512xf32, #tpu.memory_space<vmem>>, vector<8x32xf32>
    tpu.vector_store %arg10[%c0_52, %c256_53], %68 {strides = array<i32>} : memref<8x512xf32, #tpu.memory_space<vmem>>, vector<8x32xf32>,
    %70 = vector.extract_strided_slice %51 {offsets = [72, 0], sizes = [8, 32], strides = [1, 1]} : vector<128x32xf32> to vector<8x32xf32>
    %c0_54 = arith.constant 0 : index
    %c288_55 = arith.constant 288 : index
    %71 = vector.load %arg10[%c0_54, %c288_55] : memref<8x512xf32, #tpu.memory_space<vmem>>, vector<8x32xf32>
    tpu.vector_store %arg10[%c0_54, %c288_55], %70 {strides = array<i32>} : memref<8x512xf32, #tpu.memory_space<vmem>>, vector<8x32xf32>,
    %72 = vector.extract_strided_slice %51 {offsets = [80, 0], sizes = [8, 32], strides = [1, 1]} : vector<128x32xf32> to vector<8x32xf32>
    %c0_56 = arith.constant 0 : index
    %c320_57 = arith.constant 320 : index
    %73 = vector.load %arg10[%c0_56, %c320_57] : memref<8x512xf32, #tpu.memory_space<vmem>>, vector<8x32xf32>
    tpu.vector_store %arg10[%c0_56, %c320_57], %72 {strides = array<i32>} : memref<8x512xf32, #tpu.memory_space<vmem>>, vector<8x32xf32>,
    %74 = vector.extract_strided_slice %51 {offsets = [88, 0], sizes = [8, 32], strides = [1, 1]} : vector<128x32xf32> to vector<8x32xf32>
    %c0_58 = arith.constant 0 : index
    %c352_59 = arith.constant 352 : index
    %75 = vector.load %arg10[%c0_58, %c352_59] : memref<8x512xf32, #tpu.memory_space<vmem>>, vector<8x32xf32>
    tpu.vector_store %arg10[%c0_58, %c352_59], %74 {strides = array<i32>} : memref<8x512xf32, #tpu.memory_space<vmem>>, vector<8x32xf32>,
    %76 = vector.extract_strided_slice %51 {offsets = [96, 0], sizes = [8, 32], strides = [1, 1]} : vector<128x32xf32> to vector<8x32xf32>
    %c0_60 = arith.constant 0 : index
    %c384_61 = arith.constant 384 : index
    %77 = vector.load %arg10[%c0_60, %c384_61] : memref<8x512xf32, #tpu.memory_space<vmem>>, vector<8x32xf32>
    tpu.vector_store %arg10[%c0_60, %c384_61], %76 {strides = array<i32>} : memref<8x512xf32, #tpu.memory_space<vmem>>, vector<8x32xf32>,
    %78 = vector.extract_strided_slice %51 {offsets = [104, 0], sizes = [8, 32], strides = [1, 1]} : vector<128x32xf32> to vector<8x32xf32>
    %c0_62 = arith.constant 0 : index
    %c416_63 = arith.constant 416 : index
    %79 = vector.load %arg10[%c0_62, %c416_63] : memref<8x512xf32, #tpu.memory_space<vmem>>, vector<8x32xf32>
    tpu.vector_store %arg10[%c0_62, %c416_63], %78 {strides = array<i32>} : memref<8x512xf32, #tpu.memory_space<vmem>>, vector<8x32xf32>,
    %80 = vector.extract_strided_slice %51 {offsets = [112, 0], sizes = [8, 32], strides = [1, 1]} : vector<128x32xf32> to vector<8x32xf32>
    %c0_64 = arith.constant 0 : index
    %c448_65 = arith.constant 448 : index
    %81 = vector.load %arg10[%c0_64, %c448_65] : memref<8x512xf32, #tpu.memory_space<vmem>>, vector<8x32xf32>
    tpu.vector_store %arg10[%c0_64, %c448_65], %80 {strides = array<i32>} : memref<8x512xf32, #tpu.memory_space<vmem>>, vector<8x32xf32>,
    %82 = vector.extract_strided_slice %51 {offsets = [120, 0], sizes = [8, 32], strides = [1, 1]} : vector<128x32xf32> to vector<8x32xf32>
    %c0_66 = arith.constant 0 : index
    %c480_67 = arith.constant 480 : index
    %83 = vector.load %arg10[%c0_66, %c480_67] : memref<8x512xf32, #tpu.memory_space<vmem>>, vector<8x32xf32>
    tpu.vector_store %arg10[%c0_66, %c480_67], %82 {strides = array<i32>} : memref<8x512xf32, #tpu.memory_space<vmem>>, vector<8x32xf32>,
    %c0_68 = arith.constant 0 : index
    %c0_69 = arith.constant 0 : index
    %84 = vector.load %arg10[%c0_68, %c0_69] : memref<8x512xf32, #tpu.memory_space<vmem>>, vector<8x512xf32>
    %c704 = arith.constant 704 : index
    %c0_70 = arith.constant 0 : index
    %85 = vector.load %arg4[%c704, %c0_70] : memref<1232x32xf32, #tpu.memory_space<vmem>>, vector<512x32xf32>
    %cst_71 = arith.constant dense<0.000000e+00> : vector<8x32xf32>
    %86 = tpu.matmul %84, %85, %cst_71 {dimension_numbers = #tpu.dot_dimension_numbers<[1], [0], [0], [1], [0, 0, 1, 1], [], []>, precision = #tpu.contract_precision<fp32>} : vector<8x512xf32>, vector<512x32xf32>, vector<8x32xf32> -> vector<8x32xf32>
    %c2 = arith.constant 2 : index
    %c0_72 = arith.constant 0 : index
    %87 = vector.load %arg7[%c2, %c0_72] : memref<16x128xf32, #tpu.memory_space<vmem>>, vector<1x32xf32>
    %88 = vector.broadcast %87 : vector<1x32xf32> to vector<8x32xf32>
    %89 = arith.addf %86, %88 : vector<8x32xf32>
    %90 = vector.extract_strided_slice %89 {offsets = [0, 0], sizes = [2, 32], strides = [1, 1]} : vector<8x32xf32> to vector<2x32xf32>
    %c0_73 = arith.constant 0 : index
    %c0_74 = arith.constant 0 : index
    %91 = vector.load %arg11[%c0_73, %c0_74] : memref<2x128xf32, #tpu.memory_space<vmem>>, vector<2x32xf32>
    tpu.vector_store %arg11[%c0_73, %c0_74], %90 {strides = array<i32>} : memref<2x128xf32, #tpu.memory_space<vmem>>, vector<2x32xf32>,
    %92 = vector.extract_strided_slice %89 {offsets = [2, 0], sizes = [2, 32], strides = [1, 1]} : vector<8x32xf32> to vector<2x32xf32>
    %c0_75 = arith.constant 0 : index
    %c32_76 = arith.constant 32 : index
    %93 = vector.load %arg11[%c0_75, %c32_76] : memref<2x128xf32, #tpu.memory_space<vmem>>, vector<2x32xf32>
    tpu.vector_store %arg11[%c0_75, %c32_76], %92 {strides = array<i32>} : memref<2x128xf32, #tpu.memory_space<vmem>>, vector<2x32xf32>,
    %94 = vector.extract_strided_slice %89 {offsets = [4, 0], sizes = [2, 32], strides = [1, 1]} : vector<8x32xf32> to vector<2x32xf32>
    %c0_77 = arith.constant 0 : index
    %c64_78 = arith.constant 64 : index
    %95 = vector.load %arg11[%c0_77, %c64_78] : memref<2x128xf32, #tpu.memory_space<vmem>>, vector<2x32xf32>
    tpu.vector_store %arg11[%c0_77, %c64_78], %94 {strides = array<i32>} : memref<2x128xf32, #tpu.memory_space<vmem>>, vector<2x32xf32>,
    %96 = vector.extract_strided_slice %89 {offsets = [6, 0], sizes = [2, 32], strides = [1, 1]} : vector<8x32xf32> to vector<2x32xf32>
    %c0_79 = arith.constant 0 : index
    %c96_80 = arith.constant 96 : index
    %97 = vector.load %arg11[%c0_79, %c96_80] : memref<2x128xf32, #tpu.memory_space<vmem>>, vector<2x32xf32>
    tpu.vector_store %arg11[%c0_79, %c96_80], %96 {strides = array<i32>} : memref<2x128xf32, #tpu.memory_space<vmem>>, vector<2x32xf32>,
    %c0_81 = arith.constant 0 : index
    %c0_82 = arith.constant 0 : index
    %98 = vector.load %arg1[%c0_81, %c0_82] : memref<2x16xf32, #tpu.memory_space<vmem>>, vector<2x16xf32>
    %c1216 = arith.constant 1216 : index
    %c0_83 = arith.constant 0 : index
    %99 = vector.load %arg4[%c1216, %c0_83] : memref<1232x32xf32, #tpu.memory_space<vmem>>, vector<16x32xf32>
    %cst_84 = arith.constant dense<0.000000e+00> : vector<2x32xf32>
    %100 = tpu.matmul %98, %99, %cst_84 {dimension_numbers = #tpu.dot_dimension_numbers<[1], [0], [0], [1], [0, 0, 1, 1], [], []>, precision = #tpu.contract_precision<fp32>} : vector<2x16xf32>, vector<16x32xf32>, vector<2x32xf32> -> vector<2x32xf32>
    %c3 = arith.constant 3 : index
    %c0_85 = arith.constant 0 : index
    %101 = vector.load %arg7[%c3, %c0_85] : memref<16x128xf32, #tpu.memory_space<vmem>>, vector<1x32xf32>
    %102 = vector.broadcast %101 : vector<1x32xf32> to vector<2x32xf32>
    %103 = arith.addf %100, %102 : vector<2x32xf32>
    %cst_86 = arith.constant 0.000000e+00 : f32
    %104 = vector.broadcast %cst_86 : f32 to vector<2x32xf32>
    %105 = arith.maximumf %103, %104 : vector<2x32xf32>
    %c0_87 = arith.constant 0 : index
    %c0_88 = arith.constant 0 : index
    %106 = vector.load %arg6[%c0_87, %c0_88] : memref<96x128xf32, #tpu.memory_space<vmem>>, vector<32x128xf32>
    %cst_89 = arith.constant dense<0.000000e+00> : vector<2x128xf32>
    %107 = tpu.matmul %105, %106, %cst_89 {dimension_numbers = #tpu.dot_dimension_numbers<[1], [0], [0], [1], [0, 0, 1, 1], [], []>, precision = #tpu.contract_precision<fp32>} : vector<2x32xf32>, vector<32x128xf32>, vector<2x128xf32> -> vector<2x128xf32>
    %c4 = arith.constant 4 : index
    %c0_90 = arith.constant 0 : index
    %108 = vector.load %arg7[%c4, %c0_90] : memref<16x128xf32, #tpu.memory_space<vmem>>, vector<1x128xf32>
    %109 = vector.broadcast %108 : vector<1x128xf32> to vector<2x128xf32>
    %110 = arith.addf %107, %109 : vector<2x128xf32>
    %c0_91 = arith.constant 0 : index
    %c0_92 = arith.constant 0 : index
    %111 = vector.load %arg11[%c0_91, %c0_92] : memref<2x128xf32, #tpu.memory_space<vmem>>, vector<2x128xf32>
    %112 = arith.addf %110, %111 : vector<2x128xf32>
    %c0_93 = arith.constant 0 : index
    %c0_94 = arith.constant 0 : index
    %113 = vector.load %arg5[%c0_93, %c0_94] : memref<256x64xf32, #tpu.memory_space<vmem>>, vector<128x64xf32>
    %cst_95 = arith.constant dense<0.000000e+00> : vector<2x64xf32>
    %114 = tpu.matmul %112, %113, %cst_95 {dimension_numbers = #tpu.dot_dimension_numbers<[1], [0], [0], [1], [0, 0, 1, 1], [], []>, precision = #tpu.contract_precision<fp32>} : vector<2x128xf32>, vector<128x64xf32>, vector<2x64xf32> -> vector<2x64xf32>
    %c5 = arith.constant 5 : index
    %c0_96 = arith.constant 0 : index
    %115 = vector.load %arg7[%c5, %c0_96] : memref<16x128xf32, #tpu.memory_space<vmem>>, vector<1x64xf32>
    %116 = vector.broadcast %115 : vector<1x64xf32> to vector<2x64xf32>
    %117 = arith.addf %114, %116 : vector<2x64xf32>
    %c128_97 = arith.constant 128 : index
    %c0_98 = arith.constant 0 : index
    %118 = vector.load %arg5[%c128_97, %c0_98] : memref<256x64xf32, #tpu.memory_space<vmem>>, vector<64x64xf32>
    %cst_99 = arith.constant dense<0.000000e+00> : vector<2x64xf32>
    %119 = tpu.matmul %117, %118, %cst_99 {dimension_numbers = #tpu.dot_dimension_numbers<[1], [0], [0], [1], [0, 0, 1, 1], [], []>, precision = #tpu.contract_precision<fp32>} : vector<2x64xf32>, vector<64x64xf32>, vector<2x64xf32> -> vector<2x64xf32>
    %c6 = arith.constant 6 : index
    %c0_100 = arith.constant 0 : index
    %120 = vector.load %arg7[%c6, %c0_100] : memref<16x128xf32, #tpu.memory_space<vmem>>, vector<1x64xf32>
    %121 = vector.broadcast %120 : vector<1x64xf32> to vector<2x64xf32>
    %122 = arith.addf %119, %121 : vector<2x64xf32>
    %cst_101 = arith.constant 0.000000e+00 : f32
    %123 = vector.broadcast %cst_101 : f32 to vector<2x64xf32>
    %124 = arith.maximumf %122, %123 : vector<2x64xf32>
    %c192_102 = arith.constant 192 : index
    %c0_103 = arith.constant 0 : index
    %125 = vector.load %arg5[%c192_102, %c0_103] : memref<256x64xf32, #tpu.memory_space<vmem>>, vector<64x64xf32>
    %cst_104 = arith.constant dense<0.000000e+00> : vector<2x64xf32>
    %126 = tpu.matmul %124, %125, %cst_104 {dimension_numbers = #tpu.dot_dimension_numbers<[1], [0], [0], [1], [0, 0, 1, 1], [], []>, precision = #tpu.contract_precision<fp32>} : vector<2x64xf32>, vector<64x64xf32>, vector<2x64xf32> -> vector<2x64xf32>
    %c7 = arith.constant 7 : index
    %c0_105 = arith.constant 0 : index
    %127 = vector.load %arg7[%c7, %c0_105] : memref<16x128xf32, #tpu.memory_space<vmem>>, vector<1x64xf32>
    %128 = vector.broadcast %127 : vector<1x64xf32> to vector<2x64xf32>
    %129 = arith.addf %126, %128 : vector<2x64xf32>
    %cst_106 = arith.constant 0.000000e+00 : f32
    %130 = vector.broadcast %cst_106 : f32 to vector<2x64xf32>
    %131 = arith.maximumf %129, %130 : vector<2x64xf32>
    %c32_107 = arith.constant 32 : index
    %c0_108 = arith.constant 0 : index
    %132 = vector.load %arg6[%c32_107, %c0_108] : memref<96x128xf32, #tpu.memory_space<vmem>>, vector<64x128xf32>
    %cst_109 = arith.constant dense<0.000000e+00> : vector<2x128xf32>
    %133 = tpu.matmul %131, %132, %cst_109 {dimension_numbers = #tpu.dot_dimension_numbers<[1], [0], [0], [1], [0, 0, 1, 1], [], []>, precision = #tpu.contract_precision<fp32>} : vector<2x64xf32>, vector<64x128xf32>, vector<2x128xf32> -> vector<2x128xf32>
    %c8 = arith.constant 8 : index
    %c0_110 = arith.constant 0 : index
    %134 = vector.load %arg7[%c8, %c0_110] : memref<16x128xf32, #tpu.memory_space<vmem>>, vector<1x128xf32>
    %135 = vector.broadcast %134 : vector<1x128xf32> to vector<2x128xf32>
    %136 = arith.addf %133, %135 : vector<2x128xf32>
    %c0_111 = arith.constant 0 : index
    %c0_112 = arith.constant 0 : index
    %137 = vector.load %arg8[%c0_111, %c0_112] : memref<2x128xf32, #tpu.memory_space<vmem>>, vector<2x128xf32>
    tpu.vector_store %arg8[%c0_111, %c0_112], %136 {strides = array<i32>} : memref<2x128xf32, #tpu.memory_space<vmem>>, vector<2x128xf32>,
    return
  }
}

</mosaic_0001>

<llo_original>
// kernel: mixout_policy_forward.1
$region0: #{mixout_policy_forward.1}
  #allocation0 [shape = 'u32[]', space=smem, size = 0x4, offset = 0x4, fixed_abs, tag = 'smem constant byte address 0x4 - core index']
  #allocation1 [shape = 'u32[72,128]{1,0:T(1,128)}', space=vmem, size = 0x9000, scoped, tag = 'internal scratch']
  #allocation2 [shape = 'f32[32,512]{1,0:T(8,128)}', space=vmem, size = 0x10000, scoped, tag = 'scratch operand']
  #allocation3 [shape = 'f32[8,512]{1,0:T(8,128)}', space=vmem, size = 0x4000, scoped, tag = 'scratch operand']
  #allocation4 [shape = 'f32[2,128]{1,0:T(2,128)}', space=vmem, size = 0x400, scoped, tag = 'scratch operand']
  %s0 = inlined_call_operand.vmem [shape: f32[128,192], index: 0, kind: input, shape index: {}]
  %s1 = inlined_call_operand.vmem [shape: f32[2,16], index: 1, kind: input, shape index: {}]
  %s2 = inlined_call_operand.vmem [shape: f32[512,128], index: 2, kind: input, shape index: {}]
  %s3 = inlined_call_operand.vmem [shape: f32[128,32], index: 3, kind: input, shape index: {}]
  %s4 = inlined_call_operand.vmem [shape: f32[1232,32], index: 4, kind: input, shape index: {}]
  %s5 = inlined_call_operand.vmem [shape: f32[256,64], index: 5, kind: input, shape index: {}]
  %s6 = inlined_call_operand.vmem [shape: f32[96,128], index: 6, kind: input, shape index: {}]
  %s7 = inlined_call_operand.vmem [shape: f32[16,128], index: 7, kind: input, shape index: {}]
  %s8 = inlined_call_operand.hbm [shape: f32[2,128], index: 8, kind: output, shape index: {}]
  %s9 = sld [smem:[#allocation0]]
  $region42: #{mixout_policy_forward.1} parent=0
    _
  %s11 = ssub.s32 1, %s9
  %s12 = scalar_select 0, %s11, %s9
  $region1: #{mixout_policy_forward.1} parent=0
    #allocation5 [shape = 'u8[1024]{0}', space=vmem, size = 0x400, scoped, tag = 'output window, operand 0, single buffered']
    #allocation6 [shape = 's32[1]{0}', space=sflag, size = 0x4, scoped, tag = 'scoped memory for mixout_policy_forward.1']
    %13 = vsyncpa [#allocation6], 0
    // Predicated region
    $region2: #{mixout_policy_forward.1} parent=1 // pred_check
      _
    $region3: #{mixout_policy_forward.1} parent=1 // pred_check_branch
      %15 = sbr.rel (0) target = $region5
    $region4: #{mixout_policy_forward.1} parent=1 // pred_region
      _
    $region5: #{mixout_policy_forward.1} parent=1 // pred_fallthru
      _
    // Predicated region
    $region6: #{mixout_policy_forward.1} parent=1 // pred_check
      _
    $region7: #{mixout_policy_forward.1} parent=1 // pred_check_branch
      %17 = sbr.rel (0) target = $region9
    $region8: #{mixout_policy_forward.1} parent=1 // pred_region
      _
    $region9: #{mixout_policy_forward.1} parent=1 // pred_fallthru
      _
    // Predicated region
    $region10: #{mixout_policy_forward.1} parent=1 // pred_check
      _
    $region11: #{mixout_policy_forward.1} parent=1 // pred_check_branch
      %19 = sbr.rel (0) target = $region13
    $region12: #{mixout_policy_forward.1} parent=1 // pred_region
      _
    $region13: #{mixout_policy_forward.1} parent=1 // pred_fallthru
      _
    // Predicated region
    $region14: #{mixout_policy_forward.1} parent=1 // pred_check
      _
    $region15: #{mixout_policy_forward.1} parent=1 // pred_check_branch
      %21 = sbr.rel (0) target = $region17
    $region16: #{mixout_policy_forward.1} parent=1 // pred_region
      _
    $region17: #{mixout_policy_forward.1} parent=1 // pred_fallthru
      _
    // Predicated region
    $region18: #{mixout_policy_forward.1} parent=1 // pred_check
      _
    $region19: #{mixout_policy_forward.1} parent=1 // pred_check_branch
      %23 = sbr.rel (0) target = $region21
    $region20: #{mixout_policy_forward.1} parent=1 // pred_region
      _
    $region21: #{mixout_policy_forward.1} parent=1 // pred_fallthru
      _
    // Predicated region
    $region22: #{mixout_policy_forward.1} parent=1 // pred_check
      _
    $region23: #{mixout_policy_forward.1} parent=1 // pred_check_branch
      %25 = sbr.rel (0) target = $region25
    $region24: #{mixout_policy_forward.1} parent=1 // pred_region
      _
    $region25: #{mixout_policy_forward.1} parent=1 // pred_fallthru
      _
    // Predicated region
    $region26: #{mixout_policy_forward.1} parent=1 // pred_check
      _
    $region27: #{mixout_policy_forward.1} parent=1 // pred_check_branch
      %27 = sbr.rel (0) target = $region29
    $region28: #{mixout_policy_forward.1} parent=1 // pred_region
      _
    $region29: #{mixout_policy_forward.1} parent=1 // pred_fallthru
      _
    // Predicated region
    $region30: #{mixout_policy_forward.1} parent=1 // pred_check
      _
    $region31: #{mixout_policy_forward.1} parent=1 // pred_check_branch
      %29 = sbr.rel (0) target = $region33
    $region32: #{mixout_policy_forward.1} parent=1 // pred_region
      _
    $region33: #{mixout_policy_forward.1} parent=1 // pred_fallthru
      _
    %v30 = vld [vmem:[%s0] sm:$0xff]
    %v31 = vld [vmem:[%s0 + $0x8] sm:$0xff]
    %v32 = vld [vmem:[%s0 + $0x10] sm:$0xff]
    %v33 = vld [vmem:[%s0 + $0x18] sm:$0xff]
    %v34 = vld [vmem:[%s0 + $0x20] sm:$0xff]
    %v35 = vld [vmem:[%s0 + $0x28] sm:$0xff]
    %v36 = vld [vmem:[%s0 + $0x30] sm:$0xff]
    %v37 = vld [vmem:[%s0 + $0x38] sm:$0xff]
    %v38 = vld [vmem:[%s0 + $0x40] sm:$0xff]
    %v39 = vld [vmem:[%s0 + $0x48] sm:$0xff]
    %v40 = vld [vmem:[%s0 + $0x50] sm:$0xff]
    %v41 = vld [vmem:[%s0 + $0x58] sm:$0xff]
    %v42 = vld [vmem:[%s0 + $0x60] sm:$0xff]
    %v43 = vld [vmem:[%s0 + $0x68] sm:$0xff]
    %v44 = vld [vmem:[%s0 + $0x70] sm:$0xff]
    %v45 = vld [vmem:[%s0 + $0x78] sm:$0xff]
    %v46 = vld [vmem:[%s0 + $0x80] sm:$0xff]
    %v47 = vld [vmem:[%s0 + $0x88] sm:$0xff]
    %v48 = vld [vmem:[%s0 + $0x90] sm:$0xff]
    %v49 = vld [vmem:[%s0 + $0x98] sm:$0xff]
    %v50 = vld [vmem:[%s0 + $0xa0] sm:$0xff]
    %v51 = vld [vmem:[%s0 + $0xa8] sm:$0xff]
    %v52 = vld [vmem:[%s0 + $0xb0] sm:$0xff]
    %v53 = vld [vmem:[%s0 + $0xb8] sm:$0xff]
    %v54 = vld [vmem:[%s0 + $0xc0] sm:$0xff]
    %v55 = vld [vmem:[%s0 + $0xc8] sm:$0xff]
    %v56 = vld [vmem:[%s0 + $0xd0] sm:$0xff]
    %v57 = vld [vmem:[%s0 + $0xd8] sm:$0xff]
    %v58 = vld [vmem:[%s0 + $0xe0] sm:$0xff]
    %v59 = vld [vmem:[%s0 + $0xe8] sm:$0xff]
    %v60 = vld [vmem:[%s0 + $0xf0] sm:$0xff]
    %v61 = vld [vmem:[%s0 + $0xf8] sm:$0xff]
    %v62 = vld [vmem:[%s4] sm:$0xff]
    %v63 = vld [vmem:[%s4 + $0x8] sm:$0xff]
    %v64 = vld [vmem:[%s4 + $0x10] sm:$0xff]
    %v65 = vld [vmem:[%s4 + $0x18] sm:$0xff]
    %v66 = vld [vmem:[%s4 + $0x20] sm:$0xff]
    %v67 = vld [vmem:[%s4 + $0x28] sm:$0xff]
    %v68 = vld [vmem:[%s4 + $0x30] sm:$0xff]
    %v69 = vld [vmem:[%s4 + $0x38] sm:$0xff]
    %v70 = vld [vmem:[%s4 + $0x40] sm:$0xff]
    %v71 = vld [vmem:[%s4 + $0x48] sm:$0xff]
    %v72 = vld [vmem:[%s4 + $0x50] sm:$0xff]
    %v73 = vld [vmem:[%s4 + $0x58] sm:$0xff]
    %v74 = vld [vmem:[%s4 + $0x60] sm:$0xff]
    %v75 = vld [vmem:[%s4 + $0x68] sm:$0xff]
    %v76 = vld [vmem:[%s4 + $0x70] sm:$0xff]
    %v77 = vld [vmem:[%s4 + $0x78] sm:$0xff]
    %v78 = vld [vmem:[%s4 + $0x80] sm:$0xff]
    %v79 = vld [vmem:[%s4 + $0x88] sm:$0xff]
    %v80 = vld [vmem:[%s4 + $0x90] sm:$0xff]
    %v81 = vld [vmem:[%s4 + $0x98] sm:$0xff]
    %v82 = vld [vmem:[%s4 + $0xa0] sm:$0xff]
    %v83 = vld [vmem:[%s4 + $0xa8] sm:$0xff]
    %v84 = vld [vmem:[%s4 + $0xb0] sm:$0xff]
    %v85 = vld [vmem:[%s4 + $0xb8] sm:$0xff]
    %v86 = vld [vmem:[%s7] sm:$0x1]
    %v87 = vperm.slane %v86, 0
    %vm88 = vcmask 523264
    %v90 = vsel %vm88, %v31, 0
    %v93 = vsel %vm88, %v33, 0
    %v96 = vsel %vm88, %v35, 0
    %v99 = vsel %vm88, %v37, 0
    %v102 = vsel %vm88, %v39, 0
    %v105 = vsel %vm88, %v41, 0
    %v108 = vsel %vm88, %v43, 0
    %v111 = vsel %vm88, %v45, 0
    %v114 = vsel %vm88, %v47, 0
    %v117 = vsel %vm88, %v49, 0
    %v120 = vsel %vm88, %v51, 0
    %v123 = vsel %vm88, %v53, 0
    %v126 = vsel %vm88, %v55, 0
    %v129 = vsel %vm88, %v57, 0
    %v132 = vsel %vm88, %v59, 0
    %v135 = vsel %vm88, %v61, 0
    %v137 = vand.u32 %v77, 4294901760
    %138 = vmatpush.msra.mxu0 %v137
    %v139 = vand.u32 %v76, 4294901760
    %140 = vmatpush.msra.mxu0 %v139
    %v141 = vand.u32 %v75, 4294901760
    %142 = vmatpush.msra.mxu0 %v141
    %v143 = vand.u32 %v74, 4294901760
    %144 = vmatpush.msra.mxu0 %v143
    %v145 = vand.u32 %v73, 4294901760
    %146 = vmatpush.msra.mxu0 %v145
    %v147 = vand.u32 %v72, 4294901760
    %148 = vmatpush.msra.mxu0 %v147
    %v149 = vand.u32 %v71, 4294901760
    %150 = vmatpush.msra.mxu0 %v149
    %v151 = vand.u32 %v70, 4294901760
    %152 = vmatpush.msra.mxu0 %v151
    %v153 = vand.u32 %v69, 4294901760
    %154 = vmatpush.msra.mxu0 %v153
    %v155 = vand.u32 %v68, 4294901760
    %156 = vmatpush.msra.mxu0 %v155
    %v157 = vand.u32 %v67, 4294901760
    %158 = vmatpush.msra.mxu0 %v157
    %v159 = vand.u32 %v66, 4294901760
    %160 = vmatpush.msra.mxu0 %v159
    %v161 = vand.u32 %v65, 4294901760
    %162 = vmatpush.msra.mxu0 %v161
    %v163 = vand.u32 %v64, 4294901760
    %164 = vmatpush.msra.mxu0 %v163
    %v165 = vand.u32 %v63, 4294901760
    %166 = vmatpush.msra.mxu0 %v165
    %v167 = vand.u32 %v62, 4294901760
    %168 = vmatpush.msra.mxu0 %v167
    %v169 = vand.u32 %v30, 4294901760
    %v170 = vsub.f32 %v30, %v169
    %v171 = vand.u32 %v170, 4294901760
    %v172 = vsub.f32 %v170, %v171
    %v173 = vand.u32 %v172, 4294901760
    %174 = vmatmul.f32.gmra.mxu0 %v173
    %v175 = vpop.f32.mrf.mxu0
    %v176 = vadd.f32 %v87, %v175
    %v177 = vand.u32 %v32, 4294901760
    %v178 = vsub.f32 %v32, %v177
    %v179 = vand.u32 %v178, 4294901760
    %v180 = vsub.f32 %v178, %v179
    %v181 = vand.u32 %v180, 4294901760
    %182 = vmatmul.f32.gmra.mxu0 %v181
    %v183 = vpop.f32.mrf.mxu0
    %v184 = vadd.f32 %v87, %v183
    %v185 = vand.u32 %v34, 4294901760
    %v186 = vsub.f32 %v34, %v185
    %v187 = vand.u32 %v186, 4294901760
    %v188 = vsub.f32 %v186, %v187
    %v189 = vand.u32 %v188, 4294901760
    %190 = vmatmul.f32.gmra.mxu0 %v189
    %v191 = vpop.f32.mrf.mxu0
    %v192 = vadd.f32 %v87, %v191
    %v193 = vand.u32 %v36, 4294901760
    %v194 = vsub.f32 %v36, %v193
    %v195 = vand.u32 %v194, 4294901760
    %v196 = vsub.f32 %v194, %v195
    %v197 = vand.u32 %v196, 4294901760
    %198 = vmatmul.f32.gmra.mxu0 %v197
    %v199 = vpop.f32.mrf.mxu0
    %v200 = vadd.f32 %v87, %v199
    %v201 = vand.u32 %v38, 4294901760
    %v202 = vsub.f32 %v38, %v201
    %v203 = vand.u32 %v202, 4294901760
    %v204 = vsub.f32 %v202, %v203
    %v205 = vand.u32 %v204, 4294901760
    %206 = vmatmul.f32.gmra.mxu0 %v205
    %v207 = vpop.f32.mrf.mxu0
    %v208 = vadd.f32 %v87, %v207
    %v209 = vand.u32 %v40, 4294901760
    %v210 = vsub.f32 %v40, %v209
    %v211 = vand.u32 %v210, 4294901760
    %v212 = vsub.f32 %v210, %v211
    %v213 = vand.u32 %v212, 4294901760
    %214 = vmatmul.f32.gmra.mxu0 %v213
    %v215 = vpop.f32.mrf.mxu0
    %v216 = vadd.f32 %v87, %v215
    %v217 = vand.u32 %v42, 4294901760
    %v218 = vsub.f32 %v42, %v217
    %v219 = vand.u32 %v218, 4294901760
    %v220 = vsub.f32 %v218, %v219
    %v221 = vand.u32 %v220, 4294901760
    %222 = vmatmul.f32.gmra.mxu0 %v221
    %v223 = vpop.f32.mrf.mxu0
    %v224 = vadd.f32 %v87, %v223
    %v225 = vand.u32 %v44, 4294901760
    %v226 = vsub.f32 %v44, %v225
    %v227 = vand.u32 %v226, 4294901760
    %v228 = vsub.f32 %v226, %v227
    %v229 = vand.u32 %v228, 4294901760
    %230 = vmatmul.f32.gmra.mxu0 %v229
    %v231 = vpop.f32.mrf.mxu0
    %v232 = vadd.f32 %v87, %v231
    %v233 = vand.u32 %v46, 4294901760
    %v234 = vsub.f32 %v46, %v233
    %v235 = vand.u32 %v234, 4294901760
    %v236 = vsub.f32 %v234, %v235
    %v237 = vand.u32 %v236, 4294901760
    %238 = vmatmul.f32.gmra.mxu0 %v237
    %v239 = vpop.f32.mrf.mxu0
    %v240 = vadd.f32 %v87, %v239
    %v241 = vand.u32 %v48, 4294901760
    %v242 = vsub.f32 %v48, %v241
    %v243 = vand.u32 %v242, 4294901760
    %v244 = vsub.f32 %v242, %v243
    %v245 = vand.u32 %v244, 4294901760
    %246 = vmatmul.f32.gmra.mxu0 %v245
    %v247 = vpop.f32.mrf.mxu0
    %v248 = vadd.f32 %v87, %v247
    %v249 = vand.u32 %v50, 4294901760
    %v250 = vsub.f32 %v50, %v249
    %v251 = vand.u32 %v250, 4294901760
    %v252 = vsub.f32 %v250, %v251
    %v253 = vand.u32 %v252, 4294901760
    %254 = vmatmul.f32.gmra.mxu0 %v253
    %v255 = vpop.f32.mrf.mxu0
    %v256 = vadd.f32 %v87, %v255
    %v257 = vand.u32 %v52, 4294901760
    %v258 = vsub.f32 %v52, %v257
    %v259 = vand.u32 %v258, 4294901760
    %v260 = vsub.f32 %v258, %v259
    %v261 = vand.u32 %v260, 4294901760
    %262 = vmatmul.f32.gmra.mxu0 %v261
    %v263 = vpop.f32.mrf.mxu0
    %v264 = vadd.f32 %v87, %v263
    %v265 = vand.u32 %v54, 4294901760
    %v266 = vsub.f32 %v54, %v265
    %v267 = vand.u32 %v266, 4294901760
    %v268 = vsub.f32 %v266, %v267
    %v269 = vand.u32 %v268, 4294901760
    %270 = vmatmul.f32.gmra.mxu0 %v269
    %v271 = vpop.f32.mrf.mxu0
    %v272 = vadd.f32 %v87, %v271
    %v273 = vand.u32 %v56, 4294901760
    %v274 = vsub.f32 %v56, %v273
    %v275 = vand.u32 %v274, 4294901760
    %v276 = vsub.f32 %v274, %v275
    %v277 = vand.u32 %v276, 4294901760
    %278 = vmatmul.f32.gmra.mxu0 %v277
    %v279 = vpop.f32.mrf.mxu0
    %v280 = vadd.f32 %v87, %v279
    %v281 = vand.u32 %v58, 4294901760
    %v282 = vsub.f32 %v58, %v281
    %v283 = vand.u32 %v282, 4294901760
    %v284 = vsub.f32 %v282, %v283
    %v285 = vand.u32 %v284, 4294901760
    %286 = vmatmul.f32.gmra.mxu0 %v285
    %v287 = vpop.f32.mrf.mxu0
    %v288 = vadd.f32 %v87, %v287
    %v289 = vand.u32 %v60, 4294901760
    %v290 = vsub.f32 %v60, %v289
    %v291 = vand.u32 %v290, 4294901760
    %v292 = vsub.f32 %v290, %v291
    %v293 = vand.u32 %v292, 4294901760
    %294 = vmatmul.f32.gmra.mxu0 %v293
    %v295 = vpop.f32.mrf.mxu0
    %v296 = vadd.f32 %v87, %v295
    %297 = vdwg.mxu0
    %v298 = vand.u32 %v77, 4294901760
    %v299 = vsub.f32 %v77, %v298
    %v300 = vand.u32 %v299, 4294901760
    %v301 = vsub.f32 %v299, %v300
    %v302 = vand.u32 %v301, 4294901760
    %303 = vmatpush.msra.mxu0 %v302
    %v304 = vand.u32 %v76, 4294901760
    %v305 = vsub.f32 %v76, %v304
    %v306 = vand.u32 %v305, 4294901760
    %v307 = vsub.f32 %v305, %v306
    %v308 = vand.u32 %v307, 4294901760
    %309 = vmatpush.msra.mxu0 %v308
    %v310 = vand.u32 %v75, 4294901760
    %v311 = vsub.f32 %v75, %v310
    %v312 = vand.u32 %v311, 4294901760
    %v313 = vsub.f32 %v311, %v312
    %v314 = vand.u32 %v313, 4294901760
    %315 = vmatpush.msra.mxu0 %v314
    %v316 = vand.u32 %v74, 4294901760
    %v317 = vsub.f32 %v74, %v316
    %v318 = vand.u32 %v317, 4294901760
    %v319 = vsub.f32 %v317, %v318
    %v320 = vand.u32 %v319, 4294901760
    %321 = vmatpush.msra.mxu0 %v320
    %v322 = vand.u32 %v73, 4294901760
    %v323 = vsub.f32 %v73, %v322
    %v324 = vand.u32 %v323, 4294901760
    %v325 = vsub.f32 %v323, %v324
    %v326 = vand.u32 %v325, 4294901760
    %327 = vmatpush.msra.mxu0 %v326
    %v328 = vand.u32 %v72, 4294901760
    %v329 = vsub.f32 %v72, %v328
    %v330 = vand.u32 %v329, 4294901760
    %v331 = vsub.f32 %v329, %v330
    %v332 = vand.u32 %v331, 4294901760
    %333 = vmatpush.msra.mxu0 %v332
    %v334 = vand.u32 %v71, 4294901760
    %v335 = vsub.f32 %v71, %v334
    %v336 = vand.u32 %v335, 4294901760
    %v337 = vsub.f32 %v335, %v336
    %v338 = vand.u32 %v337, 4294901760
    %339 = vmatpush.msra.mxu0 %v338
    %v340 = vand.u32 %v70, 4294901760
    %v341 = vsub.f32 %v70, %v340
    %v342 = vand.u32 %v341, 4294901760
    %v343 = vsub.f32 %v341, %v342
    %v344 = vand.u32 %v343, 4294901760
    %345 = vmatpush.msra.mxu0 %v344
    %v346 = vand.u32 %v69, 4294901760
    %v347 = vsub.f32 %v69, %v346
    %v348 = vand.u32 %v347, 4294901760
    %v349 = vsub.f32 %v347, %v348
    %v350 = vand.u32 %v349, 4294901760
    %351 = vmatpush.msra.mxu0 %v350
    %v352 = vand.u32 %v68, 4294901760
    %v353 = vsub.f32 %v68, %v352
    %v354 = vand.u32 %v353, 4294901760
    %v355 = vsub.f32 %v353, %v354
    %v356 = vand.u32 %v355, 4294901760
    %357 = vmatpush.msra.mxu0 %v356
    %v358 = vand.u32 %v67, 4294901760
    %v359 = vsub.f32 %v67, %v358
    %v360 = vand.u32 %v359, 4294901760
    %v361 = vsub.f32 %v359, %v360
    %v362 = vand.u32 %v361, 4294901760
    %363 = vmatpush.msra.mxu0 %v362
    %v364 = vand.u32 %v66, 4294901760
    %v365 = vsub.f32 %v66, %v364
    %v366 = vand.u32 %v365, 4294901760
    %v367 = vsub.f32 %v365, %v366
    %v368 = vand.u32 %v367, 4294901760
    %369 = vmatpush.msra.mxu0 %v368
    %v370 = vand.u32 %v65, 4294901760
    %v371 = vsub.f32 %v65, %v370
    %v372 = vand.u32 %v371, 4294901760
    %v373 = vsub.f32 %v371, %v372
    %v374 = vand.u32 %v373, 4294901760
    %375 = vmatpush.msra.mxu0 %v374
    %v376 = vand.u32 %v64, 4294901760
    %v377 = vsub.f32 %v64, %v376
    %v378 = vand.u32 %v377, 4294901760
    %v379 = vsub.f32 %v377, %v378
    %v380 = vand.u32 %v379, 4294901760
    %381 = vmatpush.msra.mxu0 %v380
    %v382 = vand.u32 %v63, 4294901760
    %v383 = vsub.f32 %v63, %v382
    %v384 = vand.u32 %v383, 4294901760
    %v385 = vsub.f32 %v383, %v384
    %v386 = vand.u32 %v385, 4294901760
    %387 = vmatpush.msra.mxu0 %v386
    %v388 = vand.u32 %v62, 4294901760
    %v389 = vsub.f32 %v62, %v388
    %v390 = vand.u32 %v389, 4294901760
    %v391 = vsub.f32 %v389, %v390
    %v392 = vand.u32 %v391, 4294901760
    %393 = vmatpush.msra.mxu0 %v392
    %v394 = vand.u32 %v30, 4294901760
    %395 = vmatmul.f32.gmra.mxu0 %v394
    %v396 = vpop.f32.mrf.mxu0
    %v397 = vadd.f32 %v176, %v396
    %v398 = vand.u32 %v32, 4294901760
    %399 = vmatmul.f32.gmra.mxu0 %v398
    %v400 = vpop.f32.mrf.mxu0
    %v401 = vadd.f32 %v184, %v400
    %v402 = vand.u32 %v34, 4294901760
    %403 = vmatmul.f32.gmra.mxu0 %v402
    %v404 = vpop.f32.mrf.mxu0
    %v405 = vadd.f32 %v192, %v404
    %v406 = vand.u32 %v36, 4294901760
    %407 = vmatmul.f32.gmra.mxu0 %v406
    %v408 = vpop.f32.mrf.mxu0
    %v409 = vadd.f32 %v200, %v408
    %v410 = vand.u32 %v38, 4294901760
    %411 = vmatmul.f32.gmra.mxu0 %v410
    %v412 = vpop.f32.mrf.mxu0
    %v413 = vadd.f32 %v208, %v412
    %v414 = vand.u32 %v40, 4294901760
    %415 = vmatmul.f32.gmra.mxu0 %v414
    %v416 = vpop.f32.mrf.mxu0
    %v417 = vadd.f32 %v216, %v416
    %v418 = vand.u32 %v42, 4294901760
    %419 = vmatmul.f32.gmra.mxu0 %v418
    %v420 = vpop.f32.mrf.mxu0
    %v421 = vadd.f32 %v224, %v420
    %v422 = vand.u32 %v44, 4294901760
    %423 = vmatmul.f32.gmra.mxu0 %v422
    %v424 = vpop.f32.mrf.mxu0
    %v425 = vadd.f32 %v232, %v424
    %v426 = vand.u32 %v46, 4294901760
    %427 = vmatmul.f32.gmra.mxu0 %v426
    %v428 = vpop.f32.mrf.mxu0
    %v429 = vadd.f32 %v240, %v428
    %v430 = vand.u32 %v48, 4294901760
    %431 = vmatmul.f32.gmra.mxu0 %v430
    %v432 = vpop.f32.mrf.mxu0
    %v433 = vadd.f32 %v248, %v432
    %v434 = vand.u32 %v50, 4294901760
    %435 = vmatmul.f32.gmra.mxu0 %v434
    %v436 = vpop.f32.mrf.mxu0
    %v437 = vadd.f32 %v256, %v436
    %v438 = vand.u32 %v52, 4294901760
    %439 = vmatmul.f32.gmra.mxu0 %v438
    %v440 = vpop.f32.mrf.mxu0
    %v441 = vadd.f32 %v264, %v440
    %v442 = vand.u32 %v54, 4294901760
    %443 = vmatmul.f32.gmra.mxu0 %v442
    %v444 = vpop.f32.mrf.mxu0
    %v445 = vadd.f32 %v272, %v444
    %v446 = vand.u32 %v56, 4294901760
    %447 = vmatmul.f32.gmra.mxu0 %v446
    %v448 = vpop.f32.mrf.mxu0
    %v449 = vadd.f32 %v280, %v448
    %v450 = vand.u32 %v58, 4294901760
    %451 = vmatmul.f32.gmra.mxu0 %v450
    %v452 = vpop.f32.mrf.mxu0
    %v453 = vadd.f32 %v288, %v452
    %v454 = vand.u32 %v60, 4294901760
    %455 = vmatmul.f32.gmra.mxu0 %v454
    %v456 = vpop.f32.mrf.mxu0
    %v457 = vadd.f32 %v296, %v456
    %458 = vdwg.mxu0
    %v459 = vand.u32 %v77, 4294901760
    %v460 = vsub.f32 %v77, %v459
    %461 = vmatpush.msra.mxu0 %v460
    %v462 = vand.u32 %v76, 4294901760
    %v463 = vsub.f32 %v76, %v462
    %464 = vmatpush.msra.mxu0 %v463
    %v465 = vand.u32 %v75, 4294901760
    %v466 = vsub.f32 %v75, %v465
    %467 = vmatpush.msra.mxu0 %v466
    %v468 = vand.u32 %v74, 4294901760
    %v469 = vsub.f32 %v74, %v468
    %470 = vmatpush.msra.mxu0 %v469
    %v471 = vand.u32 %v73, 4294901760
    %v472 = vsub.f32 %v73, %v471
    %473 = vmatpush.msra.mxu0 %v472
    %v474 = vand.u32 %v72, 4294901760
    %v475 = vsub.f32 %v72, %v474
    %476 = vmatpush.msra.mxu0 %v475
    %v477 = vand.u32 %v71, 4294901760
    %v478 = vsub.f32 %v71, %v477
    %479 = vmatpush.msra.mxu0 %v478
    %v480 = vand.u32 %v70, 4294901760
    %v481 = vsub.f32 %v70, %v480
    %482 = vmatpush.msra.mxu0 %v481
    %v483 = vand.u32 %v69, 4294901760
    %v484 = vsub.f32 %v69, %v483
    %485 = vmatpush.msra.mxu0 %v484
    %v486 = vand.u32 %v68, 4294901760
    %v487 = vsub.f32 %v68, %v486
    %488 = vmatpush.msra.mxu0 %v487
    %v489 = vand.u32 %v67, 4294901760
    %v490 = vsub.f32 %v67, %v489
    %491 = vmatpush.msra.mxu0 %v490
    %v492 = vand.u32 %v66, 4294901760
    %v493 = vsub.f32 %v66, %v492
    %494 = vmatpush.msra.mxu0 %v493
    %v495 = vand.u32 %v65, 4294901760
    %v496 = vsub.f32 %v65, %v495
    %497 = vmatpush.msra.mxu0 %v496
    %v498 = vand.u32 %v64, 4294901760
    %v499 = vsub.f32 %v64, %v498
    %500 = vmatpush.msra.mxu0 %v499
    %v501 = vand.u32 %v63, 4294901760
    %v502 = vsub.f32 %v63, %v501
    %503 = vmatpush.msra.mxu0 %v502
    %v504 = vand.u32 %v62, 4294901760
    %v505 = vsub.f32 %v62, %v504
    %506 = vmatpush.msra.mxu0 %v505
    %v507 = vand.u32 %v30, 4294901760
    %v508 = vsub.f32 %v30, %v507
    %509 = vmatmul.f32.gmra.mxu0 %v508
    %v510 = vpop.f32.mrf.mxu0
    %v511 = vadd.f32 %v397, %v510
    %v512 = vand.u32 %v32, 4294901760
    %v513 = vsub.f32 %v32, %v512
    %514 = vmatmul.f32.gmra.mxu0 %v513
    %v515 = vpop.f32.mrf.mxu0
    %v516 = vadd.f32 %v401, %v515
    %v517 = vand.u32 %v34, 4294901760
    %v518 = vsub.f32 %v34, %v517
    %519 = vmatmul.f32.gmra.mxu0 %v518
    %v520 = vpop.f32.mrf.mxu0
    %v521 = vadd.f32 %v405, %v520
    %v522 = vand.u32 %v36, 4294901760
    %v523 = vsub.f32 %v36, %v522
    %524 = vmatmul.f32.gmra.mxu0 %v523
    %v525 = vpop.f32.mrf.mxu0
    %v526 = vadd.f32 %v409, %v525
    %v527 = vand.u32 %v38, 4294901760
    %v528 = vsub.f32 %v38, %v527
    %529 = vmatmul.f32.gmra.mxu0 %v528
    %v530 = vpop.f32.mrf.mxu0
    %v531 = vadd.f32 %v413, %v530
    %v532 = vand.u32 %v40, 4294901760
    %v533 = vsub.f32 %v40, %v532
    %534 = vmatmul.f32.gmra.mxu0 %v533
    %v535 = vpop.f32.mrf.mxu0
    %v536 = vadd.f32 %v417, %v535
    %v537 = vand.u32 %v42, 4294901760
    %v538 = vsub.f32 %v42, %v537
    %539 = vmatmul.f32.gmra.mxu0 %v538
    %v540 = vpop.f32.mrf.mxu0
    %v541 = vadd.f32 %v421, %v540
    %v542 = vand.u32 %v44, 4294901760
    %v543 = vsub.f32 %v44, %v542
    %544 = vmatmul.f32.gmra.mxu0 %v543
    %v545 = vpop.f32.mrf.mxu0
    %v546 = vadd.f32 %v425, %v545
    %v547 = vand.u32 %v46, 4294901760
    %v548 = vsub.f32 %v46, %v547
    %549 = vmatmul.f32.gmra.mxu0 %v548
    %v550 = vpop.f32.mrf.mxu0
    %v551 = vadd.f32 %v429, %v550
    %v552 = vand.u32 %v48, 4294901760
    %v553 = vsub.f32 %v48, %v552
    %554 = vmatmul.f32.gmra.mxu0 %v553
    %v555 = vpop.f32.mrf.mxu0
    %v556 = vadd.f32 %v433, %v555
    %v557 = vand.u32 %v50, 4294901760
    %v558 = vsub.f32 %v50, %v557
    %559 = vmatmul.f32.gmra.mxu0 %v558
    %v560 = vpop.f32.mrf.mxu0
    %v561 = vadd.f32 %v437, %v560
    %v562 = vand.u32 %v52, 4294901760
    %v563 = vsub.f32 %v52, %v562
    %564 = vmatmul.f32.gmra.mxu0 %v563
    %v565 = vpop.f32.mrf.mxu0
    %v566 = vadd.f32 %v441, %v565
    %v567 = vand.u32 %v54, 4294901760
    %v568 = vsub.f32 %v54, %v567
    %569 = vmatmul.f32.gmra.mxu0 %v568
    %v570 = vpop.f32.mrf.mxu0
    %v571 = vadd.f32 %v445, %v570
    %v572 = vand.u32 %v56, 4294901760
    %v573 = vsub.f32 %v56, %v572
    %574 = vmatmul.f32.gmra.mxu0 %v573
    %v575 = vpop.f32.mrf.mxu0
    %v576 = vadd.f32 %v449, %v575
    %v577 = vand.u32 %v58, 4294901760
    %v578 = vsub.f32 %v58, %v577
    %579 = vmatmul.f32.gmra.mxu0 %v578
    %v580 = vpop.f32.mrf.mxu0
    %v581 = vadd.f32 %v453, %v580
    %v582 = vand.u32 %v60, 4294901760
    %v583 = vsub.f32 %v60, %v582
    %584 = vmatmul.f32.gmra.mxu0 %v583
    %v585 = vpop.f32.mrf.mxu0
    %v586 = vadd.f32 %v457, %v585
    %587 = vdwg.mxu0
    %v588 = vand.u32 %v77, 4294901760
    %589 = vmatpush.msra.mxu0 %v588
    %v590 = vand.u32 %v76, 4294901760
    %591 = vmatpush.msra.mxu0 %v590
    %v592 = vand.u32 %v75, 4294901760
    %593 = vmatpush.msra.mxu0 %v592
    %v594 = vand.u32 %v74, 4294901760
    %595 = vmatpush.msra.mxu0 %v594
    %v596 = vand.u32 %v73, 4294901760
    %597 = vmatpush.msra.mxu0 %v596
    %v598 = vand.u32 %v72, 4294901760
    %599 = vmatpush.msra.mxu0 %v598
    %v600 = vand.u32 %v71, 4294901760
    %601 = vmatpush.msra.mxu0 %v600
    %v602 = vand.u32 %v70, 4294901760
    %603 = vmatpush.msra.mxu0 %v602
    %v604 = vand.u32 %v69, 4294901760
    %605 = vmatpush.msra.mxu0 %v604
    %v606 = vand.u32 %v68, 4294901760
    %607 = vmatpush.msra.mxu0 %v606
    %v608 = vand.u32 %v67, 4294901760
    %609 = vmatpush.msra.mxu0 %v608
    %v610 = vand.u32 %v66, 4294901760
    %611 = vmatpush.msra.mxu0 %v610
    %v612 = vand.u32 %v65, 4294901760
    %613 = vmatpush.msra.mxu0 %v612
    %v614 = vand.u32 %v64, 4294901760
    %615 = vmatpush.msra.mxu0 %v614
    %v616 = vand.u32 %v63, 4294901760
    %617 = vmatpush.msra.mxu0 %v616
    %v618 = vand.u32 %v62, 4294901760
    %619 = vmatpush.msra.mxu0 %v618
    %v620 = vand.u32 %v30, 4294901760
    %v621 = vsub.f32 %v30, %v620
    %v622 = vand.u32 %v621, 4294901760
    %623 = vmatmul.f32.gmra.mxu0 %v622
    %v624 = vpop.f32.mrf.mxu0
    %v625 = vadd.f32 %v511, %v624
    %v626 = vand.u32 %v32, 4294901760
    %v627 = vsub.f32 %v32, %v626
    %v628 = vand.u32 %v627, 4294901760
    %629 = vmatmul.f32.gmra.mxu0 %v628
    %v630 = vpop.f32.mrf.mxu0
    %v631 = vadd.f32 %v516, %v630
    %v632 = vand.u32 %v34, 4294901760
    %v633 = vsub.f32 %v34, %v632
    %v634 = vand.u32 %v633, 4294901760
    %635 = vmatmul.f32.gmra.mxu0 %v634
    %v636 = vpop.f32.mrf.mxu0
    %v637 = vadd.f32 %v521, %v636
    %v638 = vand.u32 %v36, 4294901760
    %v639 = vsub.f32 %v36, %v638
    %v640 = vand.u32 %v639, 4294901760
    %641 = vmatmul.f32.gmra.mxu0 %v640
    %v642 = vpop.f32.mrf.mxu0
    %v643 = vadd.f32 %v526, %v642
    %v644 = vand.u32 %v38, 4294901760
    %v645 = vsub.f32 %v38, %v644
    %v646 = vand.u32 %v645, 4294901760
    %647 = vmatmul.f32.gmra.mxu0 %v646
    %v648 = vpop.f32.mrf.mxu0
    %v649 = vadd.f32 %v531, %v648
    %v650 = vand.u32 %v40, 4294901760
    %v651 = vsub.f32 %v40, %v650
    %v652 = vand.u32 %v651, 4294901760
    %653 = vmatmul.f32.gmra.mxu0 %v652
    %v654 = vpop.f32.mrf.mxu0
    %v655 = vadd.f32 %v536, %v654
    %v656 = vand.u32 %v42, 4294901760
    %v657 = vsub.f32 %v42, %v656
    %v658 = vand.u32 %v657, 4294901760
    %659 = vmatmul.f32.gmra.mxu0 %v658
    %v660 = vpop.f32.mrf.mxu0
    %v661 = vadd.f32 %v541, %v660
    %v662 = vand.u32 %v44, 4294901760
    %v663 = vsub.f32 %v44, %v662
    %v664 = vand.u32 %v663, 4294901760
    %665 = vmatmul.f32.gmra.mxu0 %v664
    %v666 = vpop.f32.mrf.mxu0
    %v667 = vadd.f32 %v546, %v666
    %v668 = vand.u32 %v46, 4294901760
    %v669 = vsub.f32 %v46, %v668
    %v670 = vand.u32 %v669, 4294901760
    %671 = vmatmul.f32.gmra.mxu0 %v670
    %v672 = vpop.f32.mrf.mxu0
    %v673 = vadd.f32 %v551, %v672
    %v674 = vand.u32 %v48, 4294901760
    %v675 = vsub.f32 %v48, %v674
    %v676 = vand.u32 %v675, 4294901760
    %677 = vmatmul.f32.gmra.mxu0 %v676
    %v678 = vpop.f32.mrf.mxu0
    %v679 = vadd.f32 %v556, %v678
    %v680 = vand.u32 %v50, 4294901760
    %v681 = vsub.f32 %v50, %v680
    %v682 = vand.u32 %v681, 4294901760
    %683 = vmatmul.f32.gmra.mxu0 %v682
    %v684 = vpop.f32.mrf.mxu0
    %v685 = vadd.f32 %v561, %v684
    %v686 = vand.u32 %v52, 4294901760
    %v687 = vsub.f32 %v52, %v686
    %v688 = vand.u32 %v687, 4294901760
    %689 = vmatmul.f32.gmra.mxu0 %v688
    %v690 = vpop.f32.mrf.mxu0
    %v691 = vadd.f32 %v566, %v690
    %v692 = vand.u32 %v54, 4294901760
    %v693 = vsub.f32 %v54, %v692
    %v694 = vand.u32 %v693, 4294901760
    %695 = vmatmul.f32.gmra.mxu0 %v694
    %v696 = vpop.f32.mrf.mxu0
    %v697 = vadd.f32 %v571, %v696
    %v698 = vand.u32 %v56, 4294901760
    %v699 = vsub.f32 %v56, %v698
    %v700 = vand.u32 %v699, 4294901760
    %701 = vmatmul.f32.gmra.mxu0 %v700
    %v702 = vpop.f32.mrf.mxu0
    %v703 = vadd.f32 %v576, %v702
    %v704 = vand.u32 %v58, 4294901760
    %v705 = vsub.f32 %v58, %v704
    %v706 = vand.u32 %v705, 4294901760
    %707 = vmatmul.f32.gmra.mxu0 %v706
    %v708 = vpop.f32.mrf.mxu0
    %v709 = vadd.f32 %v581, %v708
    %v710 = vand.u32 %v60, 4294901760
    %v711 = vsub.f32 %v60, %v710
    %v712 = vand.u32 %v711, 4294901760
    %713 = vmatmul.f32.gmra.mxu0 %v712
    %v714 = vpop.f32.mrf.mxu0
    %v715 = vadd.f32 %v586, %v714
    %716 = vdwg.mxu0
    %v717 = vand.u32 %v77, 4294901760
    %v718 = vsub.f32 %v77, %v717
    %v719 = vand.u32 %v718, 4294901760
    %720 = vmatpush.msra.mxu0 %v719
    %v721 = vand.u32 %v76, 4294901760
    %v722 = vsub.f32 %v76, %v721
    %v723 = vand.u32 %v722, 4294901760
    %724 = vmatpush.msra.mxu0 %v723
    %v725 = vand.u32 %v75, 4294901760
    %v726 = vsub.f32 %v75, %v725
    %v727 = vand.u32 %v726, 4294901760
    %728 = vmatpush.msra.mxu0 %v727
    %v729 = vand.u32 %v74, 4294901760
    %v730 = vsub.f32 %v74, %v729
    %v731 = vand.u32 %v730, 4294901760
    %732 = vmatpush.msra.mxu0 %v731
    %v733 = vand.u32 %v73, 4294901760
    %v734 = vsub.f32 %v73, %v733
    %v735 = vand.u32 %v734, 4294901760
    %736 = vmatpush.msra.mxu0 %v735
    %v737 = vand.u32 %v72, 4294901760
    %v738 = vsub.f32 %v72, %v737
    %v739 = vand.u32 %v738, 4294901760
    %740 = vmatpush.msra.mxu0 %v739
    %v741 = vand.u32 %v71, 4294901760
    %v742 = vsub.f32 %v71, %v741
    %v743 = vand.u32 %v742, 4294901760
    %744 = vmatpush.msra.mxu0 %v743
    %v745 = vand.u32 %v70, 4294901760
    %v746 = vsub.f32 %v70, %v745
    %v747 = vand.u32 %v746, 4294901760
    %748 = vmatpush.msra.mxu0 %v747
    %v749 = vand.u32 %v69, 4294901760
    %v750 = vsub.f32 %v69, %v749
    %v751 = vand.u32 %v750, 4294901760
    %752 = vmatpush.msra.mxu0 %v751
    %v753 = vand.u32 %v68, 4294901760
    %v754 = vsub.f32 %v68, %v753
    %v755 = vand.u32 %v754, 4294901760
    %756 = vmatpush.msra.mxu0 %v755
    %v757 = vand.u32 %v67, 4294901760
    %v758 = vsub.f32 %v67, %v757
    %v759 = vand.u32 %v758, 4294901760
    %760 = vmatpush.msra.mxu0 %v759
    %v761 = vand.u32 %v66, 4294901760
    %v762 = vsub.f32 %v66, %v761
    %v763 = vand.u32 %v762, 4294901760
    %764 = vmatpush.msra.mxu0 %v763
    %v765 = vand.u32 %v65, 4294901760
    %v766 = vsub.f32 %v65, %v765
    %v767 = vand.u32 %v766, 4294901760
    %768 = vmatpush.msra.mxu0 %v767
    %v769 = vand.u32 %v64, 4294901760
    %v770 = vsub.f32 %v64, %v769
    %v771 = vand.u32 %v770, 4294901760
    %772 = vmatpush.msra.mxu0 %v771
    %v773 = vand.u32 %v63, 4294901760
    %v774 = vsub.f32 %v63, %v773
    %v775 = vand.u32 %v774, 4294901760
    %776 = vmatpush.msra.mxu0 %v775
    %v777 = vand.u32 %v62, 4294901760
    %v778 = vsub.f32 %v62, %v777
    %v779 = vand.u32 %v778, 4294901760
    %780 = vmatpush.msra.mxu0 %v779
    %v781 = vand.u32 %v30, 4294901760
    %782 = vmatmul.f32.gmra.mxu0 %v781
    %v783 = vpop.f32.mrf.mxu0
    %v784 = vadd.f32 %v625, %v783
    %v785 = vand.u32 %v32, 4294901760
    %786 = vmatmul.f32.gmra.mxu0 %v785
    %v787 = vpop.f32.mrf.mxu0
    %v788 = vadd.f32 %v631, %v787
    %v789 = vand.u32 %v34, 4294901760
    %790 = vmatmul.f32.gmra.mxu0 %v789
    %v791 = vpop.f32.mrf.mxu0
    %v792 = vadd.f32 %v637, %v791
    %v793 = vand.u32 %v36, 4294901760
    %794 = vmatmul.f32.gmra.mxu0 %v793
    %v795 = vpop.f32.mrf.mxu0
    %v796 = vadd.f32 %v643, %v795
    %v797 = vand.u32 %v38, 4294901760
    %798 = vmatmul.f32.gmra.mxu0 %v797
    %v799 = vpop.f32.mrf.mxu0
    %v800 = vadd.f32 %v649, %v799
    %v801 = vand.u32 %v40, 4294901760
    %802 = vmatmul.f32.gmra.mxu0 %v801
    %v803 = vpop.f32.mrf.mxu0
    %v804 = vadd.f32 %v655, %v803
    %v805 = vand.u32 %v42, 4294901760
    %806 = vmatmul.f32.gmra.mxu0 %v805
    %v807 = vpop.f32.mrf.mxu0
    %v808 = vadd.f32 %v661, %v807
    %v809 = vand.u32 %v44, 4294901760
    %810 = vmatmul.f32.gmra.mxu0 %v809
    %v811 = vpop.f32.mrf.mxu0
    %v812 = vadd.f32 %v667, %v811
    %v813 = vand.u32 %v46, 4294901760
    %814 = vmatmul.f32.gmra.mxu0 %v813
    %v815 = vpop.f32.mrf.mxu0
    %v816 = vadd.f32 %v673, %v815
    %v817 = vand.u32 %v48, 4294901760
    %818 = vmatmul.f32.gmra.mxu0 %v817
    %v819 = vpop.f32.mrf.mxu0
    %v820 = vadd.f32 %v679, %v819
    %v821 = vand.u32 %v50, 4294901760
    %822 = vmatmul.f32.gmra.mxu0 %v821
    %v823 = vpop.f32.mrf.mxu0
    %v824 = vadd.f32 %v685, %v823
    %v825 = vand.u32 %v52, 4294901760
    %826 = vmatmul.f32.gmra.mxu0 %v825
    %v827 = vpop.f32.mrf.mxu0
    %v828 = vadd.f32 %v691, %v827
    %v829 = vand.u32 %v54, 4294901760
    %830 = vmatmul.f32.gmra.mxu0 %v829
    %v831 = vpop.f32.mrf.mxu0
    %v832 = vadd.f32 %v697, %v831
    %v833 = vand.u32 %v56, 4294901760
    %834 = vmatmul.f32.gmra.mxu0 %v833
    %v835 = vpop.f32.mrf.mxu0
    %v836 = vadd.f32 %v703, %v835
    %v837 = vand.u32 %v58, 4294901760
    %838 = vmatmul.f32.gmra.mxu0 %v837
    %v839 = vpop.f32.mrf.mxu0
    %v840 = vadd.f32 %v709, %v839
    %v841 = vand.u32 %v60, 4294901760
    %842 = vmatmul.f32.gmra.mxu0 %v841
    %v843 = vpop.f32.mrf.mxu0
    %v844 = vadd.f32 %v715, %v843
    %845 = vdwg.mxu0
    %v846 = vand.u32 %v77, 4294901760
    %847 = vmatpush.msra.mxu0 %v846
    %v848 = vand.u32 %v76, 4294901760
    %849 = vmatpush.msra.mxu0 %v848
    %v850 = vand.u32 %v75, 4294901760
    %851 = vmatpush.msra.mxu0 %v850
    %v852 = vand.u32 %v74, 4294901760
    %853 = vmatpush.msra.mxu0 %v852
    %v854 = vand.u32 %v73, 4294901760
    %855 = vmatpush.msra.mxu0 %v854
    %v856 = vand.u32 %v72, 4294901760
    %857 = vmatpush.msra.mxu0 %v856
    %v858 = vand.u32 %v71, 4294901760
    %859 = vmatpush.msra.mxu0 %v858
    %v860 = vand.u32 %v70, 4294901760
    %861 = vmatpush.msra.mxu0 %v860
    %v862 = vand.u32 %v69, 4294901760
    %863 = vmatpush.msra.mxu0 %v862
    %v864 = vand.u32 %v68, 4294901760
    %865 = vmatpush.msra.mxu0 %v864
    %v866 = vand.u32 %v67, 4294901760
    %867 = vmatpush.msra.mxu0 %v866
    %v868 = vand.u32 %v66, 4294901760
    %869 = vmatpush.msra.mxu0 %v868
    %v870 = vand.u32 %v65, 4294901760
    %871 = vmatpush.msra.mxu0 %v870
    %v872 = vand.u32 %v64, 4294901760
    %873 = vmatpush.msra.mxu0 %v872
    %v874 = vand.u32 %v63, 4294901760
    %875 = vmatpush.msra.mxu0 %v874
    %v876 = vand.u32 %v62, 4294901760
    %877 = vmatpush.msra.mxu0 %v876
    %v878 = vand.u32 %v30, 4294901760
    %879 = vmatmul.f32.gmra.mxu0 %v878
    %v880 = vpop.f32.mrf.mxu0
    %v881 = vadd.f32 %v784, %v880
    %v882 = vand.u32 %v32, 4294901760
    %883 = vmatmul.f32.gmra.mxu0 %v882
    %v884 = vpop.f32.mrf.mxu0
    %v885 = vadd.f32 %v788, %v884
    %v886 = vand.u32 %v34, 4294901760
    %887 = vmatmul.f32.gmra.mxu0 %v886
    %v888 = vpop.f32.mrf.mxu0
    %v889 = vadd.f32 %v792, %v888
    %v890 = vand.u32 %v36, 4294901760
    %891 = vmatmul.f32.gmra.mxu0 %v890
    %v892 = vpop.f32.mrf.mxu0
    %v893 = vadd.f32 %v796, %v892
    %v894 = vand.u32 %v38, 4294901760
    %895 = vmatmul.f32.gmra.mxu0 %v894
    %v896 = vpop.f32.mrf.mxu0
    %v897 = vadd.f32 %v800, %v896
    %v898 = vand.u32 %v40, 4294901760
    %899 = vmatmul.f32.gmra.mxu0 %v898
    %v900 = vpop.f32.mrf.mxu0
    %v901 = vadd.f32 %v804, %v900
    %v902 = vand.u32 %v42, 4294901760
    %903 = vmatmul.f32.gmra.mxu0 %v902
    %v904 = vpop.f32.mrf.mxu0
    %v905 = vadd.f32 %v808, %v904
    %v906 = vand.u32 %v44, 4294901760
    %907 = vmatmul.f32.gmra.mxu0 %v906
    %v908 = vpop.f32.mrf.mxu0
    %v909 = vadd.f32 %v812, %v908
    %v910 = vand.u32 %v46, 4294901760
    %911 = vmatmul.f32.gmra.mxu0 %v910
    %v912 = vpop.f32.mrf.mxu0
    %v913 = vadd.f32 %v816, %v912
    %v914 = vand.u32 %v48, 4294901760
    %915 = vmatmul.f32.gmra.mxu0 %v914
    %v916 = vpop.f32.mrf.mxu0
    %v917 = vadd.f32 %v820, %v916
    %v918 = vand.u32 %v50, 4294901760
    %919 = vmatmul.f32.gmra.mxu0 %v918
    %v920 = vpop.f32.mrf.mxu0
    %v921 = vadd.f32 %v824, %v920
    %v922 = vand.u32 %v52, 4294901760
    %923 = vmatmul.f32.gmra.mxu0 %v922
    %v924 = vpop.f32.mrf.mxu0
    %v925 = vadd.f32 %v828, %v924
    %v926 = vand.u32 %v54, 4294901760
    %927 = vmatmul.f32.gmra.mxu0 %v926
    %v928 = vpop.f32.mrf.mxu0
    %v929 = vadd.f32 %v832, %v928
    %v930 = vand.u32 %v56, 4294901760
    %931 = vmatmul.f32.gmra.mxu0 %v930
    %v932 = vpop.f32.mrf.mxu0
    %v933 = vadd.f32 %v836, %v932
    %v934 = vand.u32 %v58, 4294901760
    %935 = vmatmul.f32.gmra.mxu0 %v934
    %v936 = vpop.f32.mrf.mxu0
    %v937 = vadd.f32 %v840, %v936
    %v938 = vand.u32 %v60, 4294901760
    %939 = vmatmul.f32.gmra.mxu0 %v938
    %v940 = vpop.f32.mrf.mxu0
    %v941 = vadd.f32 %v844, %v940
    %942 = vdwg.mxu0
    %943 = vmatpush.msra.mxu0 0.0
    %944 = vmatpush.msra.mxu0 0.0
    %945 = vmatpush.msra.mxu0 0.0
    %946 = vmatpush.msra.mxu0 0.0
    %947 = vmatpush.msra.mxu0 0.0
    %948 = vmatpush.msra.mxu0 0.0
    %949 = vmatpush.msra.mxu0 0.0
    %950 = vmatpush.msra.mxu0 0.0
    %v951 = vand.u32 %v85, 4294901760
    %952 = vmatpush.msra.mxu0 %v951
    %v953 = vand.u32 %v84, 4294901760
    %954 = vmatpush.msra.mxu0 %v953
    %v955 = vand.u32 %v83, 4294901760
    %956 = vmatpush.msra.mxu0 %v955
    %v957 = vand.u32 %v82, 4294901760
    %958 = vmatpush.msra.mxu0 %v957
    %v959 = vand.u32 %v81, 4294901760
    %960 = vmatpush.msra.mxu0 %v959
    %v961 = vand.u32 %v80, 4294901760
    %962 = vmatpush.msra.mxu0 %v961
    %v963 = vand.u32 %v79, 4294901760
    %964 = vmatpush.msra.mxu0 %v963
    %v965 = vand.u32 %v78, 4294901760
    %966 = vmatpush.msra.mxu0 %v965
    %v967 = vand.u32 %v90, 4294901760
    %v968 = vsub.f32 %v90, %v967
    %v969 = vand.u32 %v968, 4294901760
    %v970 = vsub.f32 %v968, %v969
    %v971 = vand.u32 %v970, 4294901760
    %972 = vmatmul.f32.gmra.mxu0 %v971
    %v973 = vpop.f32.mrf.mxu0
    %v974 = vadd.f32 %v881, %v973
    %v975 = vand.u32 %v93, 4294901760
    %v976 = vsub.f32 %v93, %v975
    %v977 = vand.u32 %v976, 4294901760
    %v978 = vsub.f32 %v976, %v977
    %v979 = vand.u32 %v978, 4294901760
    %980 = vmatmul.f32.gmra.mxu0 %v979
    %v981 = vpop.f32.mrf.mxu0
    %v982 = vadd.f32 %v885, %v981
    %v983 = vand.u32 %v96, 4294901760
    %v984 = vsub.f32 %v96, %v983
    %v985 = vand.u32 %v984, 4294901760
    %v986 = vsub.f32 %v984, %v985
    %v987 = vand.u32 %v986, 4294901760
    %988 = vmatmul.f32.gmra.mxu0 %v987
    %v989 = vpop.f32.mrf.mxu0
    %v990 = vadd.f32 %v889, %v989
    %v991 = vand.u32 %v99, 4294901760
    %v992 = vsub.f32 %v99, %v991
    %v993 = vand.u32 %v992, 4294901760
    %v994 = vsub.f32 %v992, %v993
    %v995 = vand.u32 %v994, 4294901760
    %996 = vmatmul.f32.gmra.mxu0 %v995
    %v997 = vpop.f32.mrf.mxu0
    %v998 = vadd.f32 %v893, %v997
    %v999 = vand.u32 %v102, 4294901760
    %v1000 = vsub.f32 %v102, %v999
    %v1001 = vand.u32 %v1000, 4294901760
    %v1002 = vsub.f32 %v1000, %v1001
    %v1003 = vand.u32 %v1002, 4294901760
    %1004 = vmatmul.f32.gmra.mxu0 %v1003
    %v1005 = vpop.f32.mrf.mxu0
    %v1006 = vadd.f32 %v897, %v1005
    %v1007 = vand.u32 %v105, 4294901760
    %v1008 = vsub.f32 %v105, %v1007
    %v1009 = vand.u32 %v1008, 4294901760
    %v1010 = vsub.f32 %v1008, %v1009
    %v1011 = vand.u32 %v1010, 4294901760
    %1012 = vmatmul.f32.gmra.mxu0 %v1011
    %v1013 = vpop.f32.mrf.mxu0
    %v1014 = vadd.f32 %v901, %v1013
    %v1015 = vand.u32 %v108, 4294901760
    %v1016 = vsub.f32 %v108, %v1015
    %v1017 = vand.u32 %v1016, 4294901760
    %v1018 = vsub.f32 %v1016, %v1017
    %v1019 = vand.u32 %v1018, 4294901760
    %1020 = vmatmul.f32.gmra.mxu0 %v1019
    %v1021 = vpop.f32.mrf.mxu0
    %v1022 = vadd.f32 %v905, %v1021
    %v1023 = vand.u32 %v111, 4294901760
    %v1024 = vsub.f32 %v111, %v1023
    %v1025 = vand.u32 %v1024, 4294901760
    %v1026 = vsub.f32 %v1024, %v1025
    %v1027 = vand.u32 %v1026, 4294901760
    %1028 = vmatmul.f32.gmra.mxu0 %v1027
    %v1029 = vpop.f32.mrf.mxu0
    %v1030 = vadd.f32 %v909, %v1029
    %v1031 = vand.u32 %v114, 4294901760
    %v1032 = vsub.f32 %v114, %v1031
    %v1033 = vand.u32 %v1032, 4294901760
    %v1034 = vsub.f32 %v1032, %v1033
    %v1035 = vand.u32 %v1034, 4294901760
    %1036 = vmatmul.f32.gmra.mxu0 %v1035
    %v1037 = vpop.f32.mrf.mxu0
    %v1038 = vadd.f32 %v913, %v1037
    %v1039 = vand.u32 %v117, 4294901760
    %v1040 = vsub.f32 %v117, %v1039
    %v1041 = vand.u32 %v1040, 4294901760
    %v1042 = vsub.f32 %v1040, %v1041
    %v1043 = vand.u32 %v1042, 4294901760
    %1044 = vmatmul.f32.gmra.mxu0 %v1043
    %v1045 = vpop.f32.mrf.mxu0
    %v1046 = vadd.f32 %v917, %v1045
    %v1047 = vand.u32 %v120, 4294901760
    %v1048 = vsub.f32 %v120, %v1047
    %v1049 = vand.u32 %v1048, 4294901760
    %v1050 = vsub.f32 %v1048, %v1049
    %v1051 = vand.u32 %v1050, 4294901760
    %1052 = vmatmul.f32.gmra.mxu0 %v1051
    %v1053 = vpop.f32.mrf.mxu0
    %v1054 = vadd.f32 %v921, %v1053
    %v1055 = vand.u32 %v123, 4294901760
    %v1056 = vsub.f32 %v123, %v1055
    %v1057 = vand.u32 %v1056, 4294901760
    %v1058 = vsub.f32 %v1056, %v1057
    %v1059 = vand.u32 %v1058, 4294901760
    %1060 = vmatmul.f32.gmra.mxu0 %v1059
    %v1061 = vpop.f32.mrf.mxu0
    %v1062 = vadd.f32 %v925, %v1061
    %v1063 = vand.u32 %v126, 4294901760
    %v1064 = vsub.f32 %v126, %v1063
    %v1065 = vand.u32 %v1064, 4294901760
    %v1066 = vsub.f32 %v1064, %v1065
    %v1067 = vand.u32 %v1066, 4294901760
    %1068 = vmatmul.f32.gmra.mxu0 %v1067
    %v1069 = vpop.f32.mrf.mxu0
    %v1070 = vadd.f32 %v929, %v1069
    %v1071 = vand.u32 %v129, 4294901760
    %v1072 = vsub.f32 %v129, %v1071
    %v1073 = vand.u32 %v1072, 4294901760
    %v1074 = vsub.f32 %v1072, %v1073
    %v1075 = vand.u32 %v1074, 4294901760
    %1076 = vmatmul.f32.gmra.mxu0 %v1075
    %v1077 = vpop.f32.mrf.mxu0
    %v1078 = vadd.f32 %v933, %v1077
    %v1079 = vand.u32 %v132, 4294901760
    %v1080 = vsub.f32 %v132, %v1079
    %v1081 = vand.u32 %v1080, 4294901760
    %v1082 = vsub.f32 %v1080, %v1081
    %v1083 = vand.u32 %v1082, 4294901760
    %1084 = vmatmul.f32.gmra.mxu0 %v1083
    %v1085 = vpop.f32.mrf.mxu0
    %v1086 = vadd.f32 %v937, %v1085
    %v1087 = vand.u32 %v135, 4294901760
    %v1088 = vsub.f32 %v135, %v1087
    %v1089 = vand.u32 %v1088, 4294901760
    %v1090 = vsub.f32 %v1088, %v1089
    %v1091 = vand.u32 %v1090, 4294901760
    %1092 = vmatmul.f32.gmra.mxu0 %v1091
    %v1093 = vpop.f32.mrf.mxu0
    %v1094 = vadd.f32 %v941, %v1093
    %1095 = vdwg.mxu0
    %1096 = vmatpush.msra.mxu0 0.0
    %1097 = vmatpush.msra.mxu0 0.0
    %1098 = vmatpush.msra.mxu0 0.0
    %1099 = vmatpush.msra.mxu0 0.0
    %1100 = vmatpush.msra.mxu0 0.0
    %1101 = vmatpush.msra.mxu0 0.0
    %1102 = vmatpush.msra.mxu0 0.0
    %1103 = vmatpush.msra.mxu0 0.0
    %v1104 = vand.u32 %v85, 4294901760
    %v1105 = vsub.f32 %v85, %v1104
    %v1106 = vand.u32 %v1105, 4294901760
    %v1107 = vsub.f32 %v1105, %v1106
    %v1108 = vand.u32 %v1107, 4294901760
    %1109 = vmatpush.msra.mxu0 %v1108
    %v1110 = vand.u32 %v84, 4294901760
    %v1111 = vsub.f32 %v84, %v1110
    %v1112 = vand.u32 %v1111, 4294901760
    %v1113 = vsub.f32 %v1111, %v1112
    %v1114 = vand.u32 %v1113, 4294901760
    %1115 = vmatpush.msra.mxu0 %v1114
    %v1116 = vand.u32 %v83, 4294901760
    %v1117 = vsub.f32 %v83, %v1116
    %v1118 = vand.u32 %v1117, 4294901760
    %v1119 = vsub.f32 %v1117, %v1118
    %v1120 = vand.u32 %v1119, 4294901760
    %1121 = vmatpush.msra.mxu0 %v1120
    %v1122 = vand.u32 %v82, 4294901760
    %v1123 = vsub.f32 %v82, %v1122
    %v1124 = vand.u32 %v1123, 4294901760
    %v1125 = vsub.f32 %v1123, %v1124
    %v1126 = vand.u32 %v1125, 4294901760
    %1127 = vmatpush.msra.mxu0 %v1126
    %v1128 = vand.u32 %v81, 4294901760
    %v1129 = vsub.f32 %v81, %v1128
    %v1130 = vand.u32 %v1129, 4294901760
    %v1131 = vsub.f32 %v1129, %v1130
    %v1132 = vand.u32 %v1131, 4294901760
    %1133 = vmatpush.msra.mxu0 %v1132
    %v1134 = vand.u32 %v80, 4294901760
    %v1135 = vsub.f32 %v80, %v1134
    %v1136 = vand.u32 %v1135, 4294901760
    %v1137 = vsub.f32 %v1135, %v1136
    %v1138 = vand.u32 %v1137, 4294901760
    %1139 = vmatpush.msra.mxu0 %v1138
    %v1140 = vand.u32 %v79, 4294901760
    %v1141 = vsub.f32 %v79, %v1140
    %v1142 = vand.u32 %v1141, 4294901760
    %v1143 = vsub.f32 %v1141, %v1142
    %v1144 = vand.u32 %v1143, 4294901760
    %1145 = vmatpush.msra.mxu0 %v1144
    %v1146 = vand.u32 %v78, 4294901760
    %v1147 = vsub.f32 %v78, %v1146
    %v1148 = vand.u32 %v1147, 4294901760
    %v1149 = vsub.f32 %v1147, %v1148
    %v1150 = vand.u32 %v1149, 4294901760
    %1151 = vmatpush.msra.mxu0 %v1150
    %v1152 = vand.u32 %v90, 4294901760
    %1153 = vmatmul.f32.gmra.mxu0 %v1152
    %v1154 = vpop.f32.mrf.mxu0
    %v1155 = vadd.f32 %v974, %v1154
    %v1156 = vand.u32 %v93, 4294901760
    %1157 = vmatmul.f32.gmra.mxu0 %v1156
    %v1158 = vpop.f32.mrf.mxu0
    %v1159 = vadd.f32 %v982, %v1158
    %v1160 = vand.u32 %v96, 4294901760
    %1161 = vmatmul.f32.gmra.mxu0 %v1160
    %v1162 = vpop.f32.mrf.mxu0
    %v1163 = vadd.f32 %v990, %v1162
    %v1164 = vand.u32 %v99, 4294901760
    %1165 = vmatmul.f32.gmra.mxu0 %v1164
    %v1166 = vpop.f32.mrf.mxu0
    %v1167 = vadd.f32 %v998, %v1166
    %v1168 = vand.u32 %v102, 4294901760
    %1169 = vmatmul.f32.gmra.mxu0 %v1168
    %v1170 = vpop.f32.mrf.mxu0
    %v1171 = vadd.f32 %v1006, %v1170
    %v1172 = vand.u32 %v105, 4294901760
    %1173 = vmatmul.f32.gmra.mxu0 %v1172
    %v1174 = vpop.f32.mrf.mxu0
    %v1175 = vadd.f32 %v1014, %v1174
    %v1176 = vand.u32 %v108, 4294901760
    %1177 = vmatmul.f32.gmra.mxu0 %v1176
    %v1178 = vpop.f32.mrf.mxu0
    %v1179 = vadd.f32 %v1022, %v1178
    %v1180 = vand.u32 %v111, 4294901760
    %1181 = vmatmul.f32.gmra.mxu0 %v1180
    %v1182 = vpop.f32.mrf.mxu0
    %v1183 = vadd.f32 %v1030, %v1182
    %v1184 = vand.u32 %v114, 4294901760
    %1185 = vmatmul.f32.gmra.mxu0 %v1184
    %v1186 = vpop.f32.mrf.mxu0
    %v1187 = vadd.f32 %v1038, %v1186
    %v1188 = vand.u32 %v117, 4294901760
    %1189 = vmatmul.f32.gmra.mxu0 %v1188
    %v1190 = vpop.f32.mrf.mxu0
    %v1191 = vadd.f32 %v1046, %v1190
    %v1192 = vand.u32 %v120, 4294901760
    %1193 = vmatmul.f32.gmra.mxu0 %v1192
    %v1194 = vpop.f32.mrf.mxu0
    %v1195 = vadd.f32 %v1054, %v1194
    %v1196 = vand.u32 %v123, 4294901760
    %1197 = vmatmul.f32.gmra.mxu0 %v1196
    %v1198 = vpop.f32.mrf.mxu0
    %v1199 = vadd.f32 %v1062, %v1198
    %v1200 = vand.u32 %v126, 4294901760
    %1201 = vmatmul.f32.gmra.mxu0 %v1200
    %v1202 = vpop.f32.mrf.mxu0
    %v1203 = vadd.f32 %v1070, %v1202
    %v1204 = vand.u32 %v129, 4294901760
    %1205 = vmatmul.f32.gmra.mxu0 %v1204
    %v1206 = vpop.f32.mrf.mxu0
    %v1207 = vadd.f32 %v1078, %v1206
    %v1208 = vand.u32 %v132, 4294901760
    %1209 = vmatmul.f32.gmra.mxu0 %v1208
    %v1210 = vpop.f32.mrf.mxu0
    %v1211 = vadd.f32 %v1086, %v1210
    %v1212 = vand.u32 %v135, 4294901760
    %1213 = vmatmul.f32.gmra.mxu0 %v1212
    %v1214 = vpop.f32.mrf.mxu0
    %v1215 = vadd.f32 %v1094, %v1214
    %1216 = vdwg.mxu0
    %1217 = vmatpush.msra.mxu0 0.0
    %1218 = vmatpush.msra.mxu0 0.0
    %1219 = vmatpush.msra.mxu0 0.0
    %1220 = vmatpush.msra.mxu0 0.0
    %1221 = vmatpush.msra.mxu0 0.0
    %1222 = vmatpush.msra.mxu0 0.0
    %1223 = vmatpush.msra.mxu0 0.0
    %1224 = vmatpush.msra.mxu0 0.0
    %v1225 = vand.u32 %v85, 4294901760
    %v1226 = vsub.f32 %v85, %v1225
    %1227 = vmatpush.msra.mxu0 %v1226
    %v1228 = vand.u32 %v84, 4294901760
    %v1229 = vsub.f32 %v84, %v1228
    %1230 = vmatpush.msra.mxu0 %v1229
    %v1231 = vand.u32 %v83, 4294901760
    %v1232 = vsub.f32 %v83, %v1231
    %1233 = vmatpush.msra.mxu0 %v1232
    %v1234 = vand.u32 %v82, 4294901760
    %v1235 = vsub.f32 %v82, %v1234
    %1236 = vmatpush.msra.mxu0 %v1235
    %v1237 = vand.u32 %v81, 4294901760
    %v1238 = vsub.f32 %v81, %v1237
    %1239 = vmatpush.msra.mxu0 %v1238
    %v1240 = vand.u32 %v80, 4294901760
    %v1241 = vsub.f32 %v80, %v1240
    %1242 = vmatpush.msra.mxu0 %v1241
    %v1243 = vand.u32 %v79, 4294901760
    %v1244 = vsub.f32 %v79, %v1243
    %1245 = vmatpush.msra.mxu0 %v1244
    %v1246 = vand.u32 %v78, 4294901760
    %v1247 = vsub.f32 %v78, %v1246
    %1248 = vmatpush.msra.mxu0 %v1247
    %v1249 = vand.u32 %v90, 4294901760
    %v1250 = vsub.f32 %v90, %v1249
    %1251 = vmatmul.f32.gmra.mxu0 %v1250
    %v1252 = vpop.f32.mrf.mxu0
    %v1253 = vadd.f32 %v1155, %v1252
    %v1254 = vand.u32 %v93, 4294901760
    %v1255 = vsub.f32 %v93, %v1254
    %1256 = vmatmul.f32.gmra.mxu0 %v1255
    %v1257 = vpop.f32.mrf.mxu0
    %v1258 = vadd.f32 %v1159, %v1257
    %v1259 = vand.u32 %v96, 4294901760
    %v1260 = vsub.f32 %v96, %v1259
    %1261 = vmatmul.f32.gmra.mxu0 %v1260
    %v1262 = vpop.f32.mrf.mxu0
    %v1263 = vadd.f32 %v1163, %v1262
    %v1264 = vand.u32 %v99, 4294901760
    %v1265 = vsub.f32 %v99, %v1264
    %1266 = vmatmul.f32.gmra.mxu0 %v1265
    %v1267 = vpop.f32.mrf.mxu0
    %v1268 = vadd.f32 %v1167, %v1267
    %v1269 = vand.u32 %v102, 4294901760
    %v1270 = vsub.f32 %v102, %v1269
    %1271 = vmatmul.f32.gmra.mxu0 %v1270
    %v1272 = vpop.f32.mrf.mxu0
    %v1273 = vadd.f32 %v1171, %v1272
    %v1274 = vand.u32 %v105, 4294901760
    %v1275 = vsub.f32 %v105, %v1274
    %1276 = vmatmul.f32.gmra.mxu0 %v1275
    %v1277 = vpop.f32.mrf.mxu0
    %v1278 = vadd.f32 %v1175, %v1277
    %v1279 = vand.u32 %v108, 4294901760
    %v1280 = vsub.f32 %v108, %v1279
    %1281 = vmatmul.f32.gmra.mxu0 %v1280
    %v1282 = vpop.f32.mrf.mxu0
    %v1283 = vadd.f32 %v1179, %v1282
    %v1284 = vand.u32 %v111, 4294901760
    %v1285 = vsub.f32 %v111, %v1284
    %1286 = vmatmul.f32.gmra.mxu0 %v1285
    %v1287 = vpop.f32.mrf.mxu0
    %v1288 = vadd.f32 %v1183, %v1287
    %v1289 = vand.u32 %v114, 4294901760
    %v1290 = vsub.f32 %v114, %v1289
    %1291 = vmatmul.f32.gmra.mxu0 %v1290
    %v1292 = vpop.f32.mrf.mxu0
    %v1293 = vadd.f32 %v1187, %v1292
    %v1294 = vand.u32 %v117, 4294901760
    %v1295 = vsub.f32 %v117, %v1294
    %1296 = vmatmul.f32.gmra.mxu0 %v1295
    %v1297 = vpop.f32.mrf.mxu0
    %v1298 = vadd.f32 %v1191, %v1297
    %v1299 = vand.u32 %v120, 4294901760
    %v1300 = vsub.f32 %v120, %v1299
    %1301 = vmatmul.f32.gmra.mxu0 %v1300
    %v1302 = vpop.f32.mrf.mxu0
    %v1303 = vadd.f32 %v1195, %v1302
    %v1304 = vand.u32 %v123, 4294901760
    %v1305 = vsub.f32 %v123, %v1304
    %1306 = vmatmul.f32.gmra.mxu0 %v1305
    %v1307 = vpop.f32.mrf.mxu0
    %v1308 = vadd.f32 %v1199, %v1307
    %v1309 = vand.u32 %v126, 4294901760
    %v1310 = vsub.f32 %v126, %v1309
    %1311 = vmatmul.f32.gmra.mxu0 %v1310
    %v1312 = vpop.f32.mrf.mxu0
    %v1313 = vadd.f32 %v1203, %v1312
    %v1314 = vand.u32 %v129, 4294901760
    %v1315 = vsub.f32 %v129, %v1314
    %1316 = vmatmul.f32.gmra.mxu0 %v1315
    %v1317 = vpop.f32.mrf.mxu0
    %v1318 = vadd.f32 %v1207, %v1317
    %v1319 = vand.u32 %v132, 4294901760
    %v1320 = vsub.f32 %v132, %v1319
    %1321 = vmatmul.f32.gmra.mxu0 %v1320
    %v1322 = vpop.f32.mrf.mxu0
    %v1323 = vadd.f32 %v1211, %v1322
    %v1324 = vand.u32 %v135, 4294901760
    %v1325 = vsub.f32 %v135, %v1324
    %1326 = vmatmul.f32.gmra.mxu0 %v1325
    %v1327 = vpop.f32.mrf.mxu0
    %v1328 = vadd.f32 %v1215, %v1327
    %1329 = vdwg.mxu0
    %1330 = vmatpush.msra.mxu0 0.0
    %1331 = vmatpush.msra.mxu0 0.0
    %1332 = vmatpush.msra.mxu0 0.0
    %1333 = vmatpush.msra.mxu0 0.0
    %1334 = vmatpush.msra.mxu0 0.0
    %1335 = vmatpush.msra.mxu0 0.0
    %1336 = vmatpush.msra.mxu0 0.0
    %1337 = vmatpush.msra.mxu0 0.0
    %v1338 = vand.u32 %v85, 4294901760
    %1339 = vmatpush.msra.mxu0 %v1338
    %v1340 = vand.u32 %v84, 4294901760
    %1341 = vmatpush.msra.mxu0 %v1340
    %v1342 = vand.u32 %v83, 4294901760
    %1343 = vmatpush.msra.mxu0 %v1342
    %v1344 = vand.u32 %v82, 4294901760
    %1345 = vmatpush.msra.mxu0 %v1344
    %v1346 = vand.u32 %v81, 4294901760
    %1347 = vmatpush.msra.mxu0 %v1346
    %v1348 = vand.u32 %v80, 4294901760
    %1349 = vmatpush.msra.mxu0 %v1348
    %v1350 = vand.u32 %v79, 4294901760
    %1351 = vmatpush.msra.mxu0 %v1350
    %v1352 = vand.u32 %v78, 4294901760
    %1353 = vmatpush.msra.mxu0 %v1352
    %v1354 = vand.u32 %v90, 4294901760
    %v1355 = vsub.f32 %v90, %v1354
    %v1356 = vand.u32 %v1355, 4294901760
    %1357 = vmatmul.f32.gmra.mxu0 %v1356
    %v1358 = vpop.f32.mrf.mxu0
    %v1359 = vadd.f32 %v1253, %v1358
    %v1360 = vand.u32 %v93, 4294901760
    %v1361 = vsub.f32 %v93, %v1360
    %v1362 = vand.u32 %v1361, 4294901760
    %1363 = vmatmul.f32.gmra.mxu0 %v1362
    %v1364 = vpop.f32.mrf.mxu0
    %v1365 = vadd.f32 %v1258, %v1364
    %v1366 = vand.u32 %v96, 4294901760
    %v1367 = vsub.f32 %v96, %v1366
    %v1368 = vand.u32 %v1367, 4294901760
    %1369 = vmatmul.f32.gmra.mxu0 %v1368
    %v1370 = vpop.f32.mrf.mxu0
    %v1371 = vadd.f32 %v1263, %v1370
    %v1372 = vand.u32 %v99, 4294901760
    %v1373 = vsub.f32 %v99, %v1372
    %v1374 = vand.u32 %v1373, 4294901760
    %1375 = vmatmul.f32.gmra.mxu0 %v1374
    %v1376 = vpop.f32.mrf.mxu0
    %v1377 = vadd.f32 %v1268, %v1376
    %v1378 = vand.u32 %v102, 4294901760
    %v1379 = vsub.f32 %v102, %v1378
    %v1380 = vand.u32 %v1379, 4294901760
    %1381 = vmatmul.f32.gmra.mxu0 %v1380
    %v1382 = vpop.f32.mrf.mxu0
    %v1383 = vadd.f32 %v1273, %v1382
    %v1384 = vand.u32 %v105, 4294901760
    %v1385 = vsub.f32 %v105, %v1384
    %v1386 = vand.u32 %v1385, 4294901760
    %1387 = vmatmul.f32.gmra.mxu0 %v1386
    %v1388 = vpop.f32.mrf.mxu0
    %v1389 = vadd.f32 %v1278, %v1388
    %v1390 = vand.u32 %v108, 4294901760
    %v1391 = vsub.f32 %v108, %v1390
    %v1392 = vand.u32 %v1391, 4294901760
    %1393 = vmatmul.f32.gmra.mxu0 %v1392
    %v1394 = vpop.f32.mrf.mxu0
    %v1395 = vadd.f32 %v1283, %v1394
    %v1396 = vand.u32 %v111, 4294901760
    %v1397 = vsub.f32 %v111, %v1396
    %v1398 = vand.u32 %v1397, 4294901760
    %1399 = vmatmul.f32.gmra.mxu0 %v1398
    %v1400 = vpop.f32.mrf.mxu0
    %v1401 = vadd.f32 %v1288, %v1400
    %v1402 = vand.u32 %v114, 4294901760
    %v1403 = vsub.f32 %v114, %v1402
    %v1404 = vand.u32 %v1403, 4294901760
    %1405 = vmatmul.f32.gmra.mxu0 %v1404
    %v1406 = vpop.f32.mrf.mxu0
    %v1407 = vadd.f32 %v1293, %v1406
    %v1408 = vand.u32 %v117, 4294901760
    %v1409 = vsub.f32 %v117, %v1408
    %v1410 = vand.u32 %v1409, 4294901760
    %1411 = vmatmul.f32.gmra.mxu0 %v1410
    %v1412 = vpop.f32.mrf.mxu0
    %v1413 = vadd.f32 %v1298, %v1412
    %v1414 = vand.u32 %v120, 4294901760
    %v1415 = vsub.f32 %v120, %v1414
    %v1416 = vand.u32 %v1415, 4294901760
    %1417 = vmatmul.f32.gmra.mxu0 %v1416
    %v1418 = vpop.f32.mrf.mxu0
    %v1419 = vadd.f32 %v1303, %v1418
    %v1420 = vand.u32 %v123, 4294901760
    %v1421 = vsub.f32 %v123, %v1420
    %v1422 = vand.u32 %v1421, 4294901760
    %1423 = vmatmul.f32.gmra.mxu0 %v1422
    %v1424 = vpop.f32.mrf.mxu0
    %v1425 = vadd.f32 %v1308, %v1424
    %v1426 = vand.u32 %v126, 4294901760
    %v1427 = vsub.f32 %v126, %v1426
    %v1428 = vand.u32 %v1427, 4294901760
    %1429 = vmatmul.f32.gmra.mxu0 %v1428
    %v1430 = vpop.f32.mrf.mxu0
    %v1431 = vadd.f32 %v1313, %v1430
    %v1432 = vand.u32 %v129, 4294901760
    %v1433 = vsub.f32 %v129, %v1432
    %v1434 = vand.u32 %v1433, 4294901760
    %1435 = vmatmul.f32.gmra.mxu0 %v1434
    %v1436 = vpop.f32.mrf.mxu0
    %v1437 = vadd.f32 %v1318, %v1436
    %v1438 = vand.u32 %v132, 4294901760
    %v1439 = vsub.f32 %v132, %v1438
    %v1440 = vand.u32 %v1439, 4294901760
    %1441 = vmatmul.f32.gmra.mxu0 %v1440
    %v1442 = vpop.f32.mrf.mxu0
    %v1443 = vadd.f32 %v1323, %v1442
    %v1444 = vand.u32 %v135, 4294901760
    %v1445 = vsub.f32 %v135, %v1444
    %v1446 = vand.u32 %v1445, 4294901760
    %1447 = vmatmul.f32.gmra.mxu0 %v1446
    %v1448 = vpop.f32.mrf.mxu0
    %v1449 = vadd.f32 %v1328, %v1448
    %1450 = vdwg.mxu0
    %1451 = vmatpush.msra.mxu0 0.0
    %1452 = vmatpush.msra.mxu0 0.0
    %1453 = vmatpush.msra.mxu0 0.0
    %1454 = vmatpush.msra.mxu0 0.0
    %1455 = vmatpush.msra.mxu0 0.0
    %1456 = vmatpush.msra.mxu0 0.0
    %1457 = vmatpush.msra.mxu0 0.0
    %1458 = vmatpush.msra.mxu0 0.0
    %v1459 = vand.u32 %v85, 4294901760
    %v1460 = vsub.f32 %v85, %v1459
    %v1461 = vand.u32 %v1460, 4294901760
    %1462 = vmatpush.msra.mxu0 %v1461
    %v1463 = vand.u32 %v84, 4294901760
    %v1464 = vsub.f32 %v84, %v1463
    %v1465 = vand.u32 %v1464, 4294901760
    %1466 = vmatpush.msra.mxu0 %v1465
    %v1467 = vand.u32 %v83, 4294901760
    %v1468 = vsub.f32 %v83, %v1467
    %v1469 = vand.u32 %v1468, 4294901760
    %1470 = vmatpush.msra.mxu0 %v1469
    %v1471 = vand.u32 %v82, 4294901760
    %v1472 = vsub.f32 %v82, %v1471
    %v1473 = vand.u32 %v1472, 4294901760
    %1474 = vmatpush.msra.mxu0 %v1473
    %v1475 = vand.u32 %v81, 4294901760
    %v1476 = vsub.f32 %v81, %v1475
    %v1477 = vand.u32 %v1476, 4294901760
    %1478 = vmatpush.msra.mxu0 %v1477
    %v1479 = vand.u32 %v80, 4294901760
    %v1480 = vsub.f32 %v80, %v1479
    %v1481 = vand.u32 %v1480, 4294901760
    %1482 = vmatpush.msra.mxu0 %v1481
    %v1483 = vand.u32 %v79, 4294901760
    %v1484 = vsub.f32 %v79, %v1483
    %v1485 = vand.u32 %v1484, 4294901760
    %1486 = vmatpush.msra.mxu0 %v1485
    %v1487 = vand.u32 %v78, 4294901760
    %v1488 = vsub.f32 %v78, %v1487
    %v1489 = vand.u32 %v1488, 4294901760
    %1490 = vmatpush.msra.mxu0 %v1489
    %v1491 = vand.u32 %v90, 4294901760
    %1492 = vmatmul.f32.gmra.mxu0 %v1491
    %v1493 = vpop.f32.mrf.mxu0
    %v1494 = vadd.f32 %v1359, %v1493
    %v1495 = vand.u32 %v93, 4294901760
    %1496 = vmatmul.f32.gmra.mxu0 %v1495
    %v1497 = vpop.f32.mrf.mxu0
    %v1498 = vadd.f32 %v1365, %v1497
    %v1499 = vand.u32 %v96, 4294901760
    %1500 = vmatmul.f32.gmra.mxu0 %v1499
    %v1501 = vpop.f32.mrf.mxu0
    %v1502 = vadd.f32 %v1371, %v1501
    %v1503 = vand.u32 %v99, 4294901760
    %1504 = vmatmul.f32.gmra.mxu0 %v1503
    %v1505 = vpop.f32.mrf.mxu0
    %v1506 = vadd.f32 %v1377, %v1505
    %v1507 = vand.u32 %v102, 4294901760
    %1508 = vmatmul.f32.gmra.mxu0 %v1507
    %v1509 = vpop.f32.mrf.mxu0
    %v1510 = vadd.f32 %v1383, %v1509
    %v1511 = vand.u32 %v105, 4294901760
    %1512 = vmatmul.f32.gmra.mxu0 %v1511
    %v1513 = vpop.f32.mrf.mxu0
    %v1514 = vadd.f32 %v1389, %v1513
    %v1515 = vand.u32 %v108, 4294901760
    %1516 = vmatmul.f32.gmra.mxu0 %v1515
    %v1517 = vpop.f32.mrf.mxu0
    %v1518 = vadd.f32 %v1395, %v1517
    %v1519 = vand.u32 %v111, 4294901760
    %1520 = vmatmul.f32.gmra.mxu0 %v1519
    %v1521 = vpop.f32.mrf.mxu0
    %v1522 = vadd.f32 %v1401, %v1521
    %v1523 = vand.u32 %v114, 4294901760
    %1524 = vmatmul.f32.gmra.mxu0 %v1523
    %v1525 = vpop.f32.mrf.mxu0
    %v1526 = vadd.f32 %v1407, %v1525
    %v1527 = vand.u32 %v117, 4294901760
    %1528 = vmatmul.f32.gmra.mxu0 %v1527
    %v1529 = vpop.f32.mrf.mxu0
    %v1530 = vadd.f32 %v1413, %v1529
    %v1531 = vand.u32 %v120, 4294901760
    %1532 = vmatmul.f32.gmra.mxu0 %v1531
    %v1533 = vpop.f32.mrf.mxu0
    %v1534 = vadd.f32 %v1419, %v1533
    %v1535 = vand.u32 %v123, 4294901760
    %1536 = vmatmul.f32.gmra.mxu0 %v1535
    %v1537 = vpop.f32.mrf.mxu0
    %v1538 = vadd.f32 %v1425, %v1537
    %v1539 = vand.u32 %v126, 4294901760
    %1540 = vmatmul.f32.gmra.mxu0 %v1539
    %v1541 = vpop.f32.mrf.mxu0
    %v1542 = vadd.f32 %v1431, %v1541
    %v1543 = vand.u32 %v129, 4294901760
    %1544 = vmatmul.f32.gmra.mxu0 %v1543
    %v1545 = vpop.f32.mrf.mxu0
    %v1546 = vadd.f32 %v1437, %v1545
    %v1547 = vand.u32 %v132, 4294901760
    %1548 = vmatmul.f32.gmra.mxu0 %v1547
    %v1549 = vpop.f32.mrf.mxu0
    %v1550 = vadd.f32 %v1443, %v1549
    %v1551 = vand.u32 %v135, 4294901760
    %1552 = vmatmul.f32.gmra.mxu0 %v1551
    %v1553 = vpop.f32.mrf.mxu0
    %v1554 = vadd.f32 %v1449, %v1553
    %1555 = vdwg.mxu0
    %1556 = vmatpush.msra.mxu0 0.0
    %1557 = vmatpush.msra.mxu0 0.0
    %1558 = vmatpush.msra.mxu0 0.0
    %1559 = vmatpush.msra.mxu0 0.0
    %1560 = vmatpush.msra.mxu0 0.0
    %1561 = vmatpush.msra.mxu0 0.0
    %1562 = vmatpush.msra.mxu0 0.0
    %1563 = vmatpush.msra.mxu0 0.0
    %v1564 = vand.u32 %v85, 4294901760
    %1565 = vmatpush.msra.mxu0 %v1564
    %v1566 = vand.u32 %v84, 4294901760
    %1567 = vmatpush.msra.mxu0 %v1566
    %v1568 = vand.u32 %v83, 4294901760
    %1569 = vmatpush.msra.mxu0 %v1568
    %v1570 = vand.u32 %v82, 4294901760
    %1571 = vmatpush.msra.mxu0 %v1570
    %v1572 = vand.u32 %v81, 4294901760
    %1573 = vmatpush.msra.mxu0 %v1572
    %v1574 = vand.u32 %v80, 4294901760
    %1575 = vmatpush.msra.mxu0 %v1574
    %v1576 = vand.u32 %v79, 4294901760
    %1577 = vmatpush.msra.mxu0 %v1576
    %v1578 = vand.u32 %v78, 4294901760
    %1579 = vmatpush.msra.mxu0 %v1578
    %v1580 = vand.u32 %v90, 4294901760
    %1581 = vmatmul.f32.gmra.mxu0 %v1580
    %v1582 = vpop.f32.mrf.mxu0
    %v1583 = vadd.f32 %v1494, %v1582
    %v1584 = vand.u32 %v93, 4294901760
    %1585 = vmatmul.f32.gmra.mxu0 %v1584
    %v1586 = vpop.f32.mrf.mxu0
    %v1587 = vadd.f32 %v1498, %v1586
    %v1588 = vand.u32 %v96, 4294901760
    %1589 = vmatmul.f32.gmra.mxu0 %v1588
    %v1590 = vpop.f32.mrf.mxu0
    %v1591 = vadd.f32 %v1502, %v1590
    %v1592 = vand.u32 %v99, 4294901760
    %1593 = vmatmul.f32.gmra.mxu0 %v1592
    %v1594 = vpop.f32.mrf.mxu0
    %v1595 = vadd.f32 %v1506, %v1594
    %v1596 = vand.u32 %v102, 4294901760
    %1597 = vmatmul.f32.gmra.mxu0 %v1596
    %v1598 = vpop.f32.mrf.mxu0
    %v1599 = vadd.f32 %v1510, %v1598
    %v1600 = vand.u32 %v105, 4294901760
    %1601 = vmatmul.f32.gmra.mxu0 %v1600
    %v1602 = vpop.f32.mrf.mxu0
    %v1603 = vadd.f32 %v1514, %v1602
    %v1604 = vand.u32 %v108, 4294901760
    %1605 = vmatmul.f32.gmra.mxu0 %v1604
    %v1606 = vpop.f32.mrf.mxu0
    %v1607 = vadd.f32 %v1518, %v1606
    %v1608 = vand.u32 %v111, 4294901760
    %1609 = vmatmul.f32.gmra.mxu0 %v1608
    %v1610 = vpop.f32.mrf.mxu0
    %v1611 = vadd.f32 %v1522, %v1610
    %v1612 = vand.u32 %v114, 4294901760
    %1613 = vmatmul.f32.gmra.mxu0 %v1612
    %v1614 = vpop.f32.mrf.mxu0
    %v1615 = vadd.f32 %v1526, %v1614
    %v1616 = vand.u32 %v117, 4294901760
    %1617 = vmatmul.f32.gmra.mxu0 %v1616
    %v1618 = vpop.f32.mrf.mxu0
    %v1619 = vadd.f32 %v1530, %v1618
    %v1620 = vand.u32 %v120, 4294901760
    %1621 = vmatmul.f32.gmra.mxu0 %v1620
    %v1622 = vpop.f32.mrf.mxu0
    %v1623 = vadd.f32 %v1534, %v1622
    %v1624 = vand.u32 %v123, 4294901760
    %1625 = vmatmul.f32.gmra.mxu0 %v1624
    %v1626 = vpop.f32.mrf.mxu0
    %v1627 = vadd.f32 %v1538, %v1626
    %v1628 = vand.u32 %v126, 4294901760
    %1629 = vmatmul.f32.gmra.mxu0 %v1628
    %v1630 = vpop.f32.mrf.mxu0
    %v1631 = vadd.f32 %v1542, %v1630
    %v1632 = vand.u32 %v129, 4294901760
    %1633 = vmatmul.f32.gmra.mxu0 %v1632
    %v1634 = vpop.f32.mrf.mxu0
    %v1635 = vadd.f32 %v1546, %v1634
    %v1636 = vand.u32 %v132, 4294901760
    %1637 = vmatmul.f32.gmra.mxu0 %v1636
    %v1638 = vpop.f32.mrf.mxu0
    %v1639 = vadd.f32 %v1550, %v1638
    %v1640 = vand.u32 %v135, 4294901760
    %1641 = vmatmul.f32.gmra.mxu0 %v1640
    %v1642 = vpop.f32.mrf.mxu0
    %v1643 = vadd.f32 %v1554, %v1642
    %1644 = vdwg.mxu0
    %v1645 = vmax.f32 %v1583, 0.0
    %v1646 = vmax.f32 %v1587, 0.0
    %v1647 = vmax.f32 %v1591, 0.0
    %v1648 = vmax.f32 %v1595, 0.0
    %v1649 = vmax.f32 %v1599, 0.0
    %v1650 = vmax.f32 %v1603, 0.0
    %v1651 = vmax.f32 %v1607, 0.0
    %v1652 = vmax.f32 %v1611, 0.0
    %v1653 = vmax.f32 %v1615, 0.0
    %v1654 = vmax.f32 %v1619, 0.0
    %v1655 = vmax.f32 %v1623, 0.0
    %v1656 = vmax.f32 %v1627, 0.0
    %v1657 = vmax.f32 %v1631, 0.0
    %v1658 = vmax.f32 %v1635, 0.0
    %v1659 = vmax.f32 %v1639, 0.0
    %v1660 = vmax.f32 %v1643, 0.0
    %v1661 = vld [vmem:[%s2] sm:$0xff]
    %v1662 = vld [vmem:[%s2 + $0x8] sm:$0xff]
    %v1663 = vld [vmem:[%s2 + $0x10] sm:$0xff]
    %v1664 = vld [vmem:[%s2 + $0x18] sm:$0xff]
    %v1665 = vld [vmem:[%s2 + $0x20] sm:$0xff]
    %v1666 = vld [vmem:[%s2 + $0x28] sm:$0xff]
    %v1667 = vld [vmem:[%s2 + $0x30] sm:$0xff]
    %v1668 = vld [vmem:[%s2 + $0x38] sm:$0xff]
    %v1669 = vld [vmem:[%s2 + $0x40] sm:$0xff]
    %v1670 = vld [vmem:[%s2 + $0x48] sm:$0xff]
    %v1671 = vld [vmem:[%s2 + $0x50] sm:$0xff]
    %v1672 = vld [vmem:[%s2 + $0x58] sm:$0xff]
    %v1673 = vld [vmem:[%s2 + $0x60] sm:$0xff]
    %v1674 = vld [vmem:[%s2 + $0x68] sm:$0xff]
    %v1675 = vld [vmem:[%s2 + $0x70] sm:$0xff]
    %v1676 = vld [vmem:[%s2 + $0x78] sm:$0xff]
    %v1677 = vld [vmem:[%s2 + $0x80] sm:$0xff]
    %v1678 = vld [vmem:[%s2 + $0x88] sm:$0xff]
    %v1679 = vld [vmem:[%s2 + $0x90] sm:$0xff]
    %v1680 = vld [vmem:[%s2 + $0x98] sm:$0xff]
    %v1681 = vld [vmem:[%s2 + $0xa0] sm:$0xff]
    %v1682 = vld [vmem:[%s2 + $0xa8] sm:$0xff]
    %v1683 = vld [vmem:[%s2 + $0xb0] sm:$0xff]
    %v1684 = vld [vmem:[%s2 + $0xb8] sm:$0xff]
    %v1685 = vld [vmem:[%s2 + $0xc0] sm:$0xff]
    %v1686 = vld [vmem:[%s2 + $0xc8] sm:$0xff]
    %v1687 = vld [vmem:[%s2 + $0xd0] sm:$0xff]
    %v1688 = vld [vmem:[%s2 + $0xd8] sm:$0xff]
    %v1689 = vld [vmem:[%s2 + $0xe0] sm:$0xff]
    %v1690 = vld [vmem:[%s2 + $0xe8] sm:$0xff]
    %v1691 = vld [vmem:[%s2 + $0xf0] sm:$0xff]
    %v1692 = vld [vmem:[%s2 + $0xf8] sm:$0xff]
    %v1693 = vld [vmem:[%s2 + $0x100] sm:$0xff]
    %v1694 = vld [vmem:[%s2 + $0x108] sm:$0xff]
    %v1695 = vld [vmem:[%s2 + $0x110] sm:$0xff]
    %v1696 = vld [vmem:[%s2 + $0x118] sm:$0xff]
    %v1697 = vld [vmem:[%s2 + $0x120] sm:$0xff]
    %v1698 = vld [vmem:[%s2 + $0x128] sm:$0xff]
    %v1699 = vld [vmem:[%s2 + $0x130] sm:$0xff]
    %v1700 = vld [vmem:[%s2 + $0x138] sm:$0xff]
    %v1701 = vld [vmem:[%s2 + $0x140] sm:$0xff]
    %v1702 = vld [vmem:[%s2 + $0x148] sm:$0xff]
    %v1703 = vld [vmem:[%s2 + $0x150] sm:$0xff]
    %v1704 = vld [vmem:[%s2 + $0x158] sm:$0xff]
    %v1705 = vld [vmem:[%s2 + $0x160] sm:$0xff]
    %v1706 = vld [vmem:[%s2 + $0x168] sm:$0xff]
    %v1707 = vld [vmem:[%s2 + $0x170] sm:$0xff]
    %v1708 = vld [vmem:[%s2 + $0x178] sm:$0xff]
    %v1709 = vld [vmem:[%s2 + $0x180] sm:$0xff]
    %v1710 = vld [vmem:[%s2 + $0x188] sm:$0xff]
    %v1711 = vld [vmem:[%s2 + $0x190] sm:$0xff]
    %v1712 = vld [vmem:[%s2 + $0x198] sm:$0xff]
    %v1713 = vld [vmem:[%s2 + $0x1a0] sm:$0xff]
    %v1714 = vld [vmem:[%s2 + $0x1a8] sm:$0xff]
    %v1715 = vld [vmem:[%s2 + $0x1b0] sm:$0xff]
    %v1716 = vld [vmem:[%s2 + $0x1b8] sm:$0xff]
    %v1717 = vld [vmem:[%s2 + $0x1c0] sm:$0xff]
    %v1718 = vld [vmem:[%s2 + $0x1c8] sm:$0xff]
    %v1719 = vld [vmem:[%s2 + $0x1d0] sm:$0xff]
    %v1720 = vld [vmem:[%s2 + $0x1d8] sm:$0xff]
    %v1721 = vld [vmem:[%s2 + $0x1e0] sm:$0xff]
    %v1722 = vld [vmem:[%s2 + $0x1e8] sm:$0xff]
    %v1723 = vld [vmem:[%s2 + $0x1f0] sm:$0xff]
    %v1724 = vld [vmem:[%s2 + $0x1f8] sm:$0xff]
    %v1725 = vand.u32 %v1660, 4294901760
    %1726 = vmatpush.msra.mxu0 %v1725
    %v1727 = vand.u32 %v1659, 4294901760
    %1728 = vmatpush.msra.mxu0 %v1727
    %v1729 = vand.u32 %v1658, 4294901760
    %1730 = vmatpush.msra.mxu0 %v1729
    %v1731 = vand.u32 %v1657, 4294901760
    %1732 = vmatpush.msra.mxu0 %v1731
    %v1733 = vand.u32 %v1656, 4294901760
    %1734 = vmatpush.msra.mxu0 %v1733
    %v1735 = vand.u32 %v1655, 4294901760
    %1736 = vmatpush.msra.mxu0 %v1735
    %v1737 = vand.u32 %v1654, 4294901760
    %1738 = vmatpush.msra.mxu0 %v1737
    %v1739 = vand.u32 %v1653, 4294901760
    %1740 = vmatpush.msra.mxu0 %v1739
    %v1741 = vand.u32 %v1652, 4294901760
    %1742 = vmatpush.msra.mxu0 %v1741
    %v1743 = vand.u32 %v1651, 4294901760
    %1744 = vmatpush.msra.mxu0 %v1743
    %v1745 = vand.u32 %v1650, 4294901760
    %1746 = vmatpush.msra.mxu0 %v1745
    %v1747 = vand.u32 %v1649, 4294901760
    %1748 = vmatpush.msra.mxu0 %v1747
    %v1749 = vand.u32 %v1648, 4294901760
    %1750 = vmatpush.msra.mxu0 %v1749
    %v1751 = vand.u32 %v1647, 4294901760
    %1752 = vmatpush.msra.mxu0 %v1751
    %v1753 = vand.u32 %v1646, 4294901760
    %1754 = vmatpush.msra.mxu0 %v1753
    %v1755 = vand.u32 %v1645, 4294901760
    %1756 = vmatpush.msra.mxu0 %v1755
    %v1757 = vand.u32 %v1661, 4294901760
    %v1758 = vsub.f32 %v1661, %v1757
    %v1759 = vand.u32 %v1758, 4294901760
    %v1760 = vsub.f32 %v1758, %v1759
    %v1761 = vand.u32 %v1760, 4294901760
    %1762 = vmatmul.f32.gmra.mxu0 %v1761
    %v1763 = vpop.f32.mrf.mxu0
    %v1764 = vadd.f32 0.0, %v1763
    %v1765 = vand.u32 %v1662, 4294901760
    %v1766 = vsub.f32 %v1662, %v1765
    %v1767 = vand.u32 %v1766, 4294901760
    %v1768 = vsub.f32 %v1766, %v1767
    %v1769 = vand.u32 %v1768, 4294901760
    %1770 = vmatmul.f32.gmra.mxu0 %v1769
    %v1771 = vpop.f32.mrf.mxu0
    %v1772 = vadd.f32 0.0, %v1771
    %v1773 = vand.u32 %v1663, 4294901760
    %v1774 = vsub.f32 %v1663, %v1773
    %v1775 = vand.u32 %v1774, 4294901760
    %v1776 = vsub.f32 %v1774, %v1775
    %v1777 = vand.u32 %v1776, 4294901760
    %1778 = vmatmul.f32.gmra.mxu0 %v1777
    %v1779 = vpop.f32.mrf.mxu0
    %v1780 = vadd.f32 0.0, %v1779
    %v1781 = vand.u32 %v1664, 4294901760
    %v1782 = vsub.f32 %v1664, %v1781
    %v1783 = vand.u32 %v1782, 4294901760
    %v1784 = vsub.f32 %v1782, %v1783
    %v1785 = vand.u32 %v1784, 4294901760
    %1786 = vmatmul.f32.gmra.mxu0 %v1785
    %v1787 = vpop.f32.mrf.mxu0
    %v1788 = vadd.f32 0.0, %v1787
    %v1789 = vand.u32 %v1665, 4294901760
    %v1790 = vsub.f32 %v1665, %v1789
    %v1791 = vand.u32 %v1790, 4294901760
    %v1792 = vsub.f32 %v1790, %v1791
    %v1793 = vand.u32 %v1792, 4294901760
    %1794 = vmatmul.f32.gmra.mxu0 %v1793
    %v1795 = vpop.f32.mrf.mxu0
    %v1796 = vadd.f32 0.0, %v1795
    %v1797 = vand.u32 %v1666, 4294901760
    %v1798 = vsub.f32 %v1666, %v1797
    %v1799 = vand.u32 %v1798, 4294901760
    %v1800 = vsub.f32 %v1798, %v1799
    %v1801 = vand.u32 %v1800, 4294901760
    %1802 = vmatmul.f32.gmra.mxu0 %v1801
    %v1803 = vpop.f32.mrf.mxu0
    %v1804 = vadd.f32 0.0, %v1803
    %v1805 = vand.u32 %v1667, 4294901760
    %v1806 = vsub.f32 %v1667, %v1805
    %v1807 = vand.u32 %v1806, 4294901760
    %v1808 = vsub.f32 %v1806, %v1807
    %v1809 = vand.u32 %v1808, 4294901760
    %1810 = vmatmul.f32.gmra.mxu0 %v1809
    %v1811 = vpop.f32.mrf.mxu0
    %v1812 = vadd.f32 0.0, %v1811
    %v1813 = vand.u32 %v1668, 4294901760
    %v1814 = vsub.f32 %v1668, %v1813
    %v1815 = vand.u32 %v1814, 4294901760
    %v1816 = vsub.f32 %v1814, %v1815
    %v1817 = vand.u32 %v1816, 4294901760
    %1818 = vmatmul.f32.gmra.mxu0 %v1817
    %v1819 = vpop.f32.mrf.mxu0
    %v1820 = vadd.f32 0.0, %v1819
    %v1821 = vand.u32 %v1669, 4294901760
    %v1822 = vsub.f32 %v1669, %v1821
    %v1823 = vand.u32 %v1822, 4294901760
    %v1824 = vsub.f32 %v1822, %v1823
    %v1825 = vand.u32 %v1824, 4294901760
    %1826 = vmatmul.f32.gmra.mxu0 %v1825
    %v1827 = vpop.f32.mrf.mxu0
    %v1828 = vadd.f32 0.0, %v1827
    %v1829 = vand.u32 %v1670, 4294901760
    %v1830 = vsub.f32 %v1670, %v1829
    %v1831 = vand.u32 %v1830, 4294901760
    %v1832 = vsub.f32 %v1830, %v1831
    %v1833 = vand.u32 %v1832, 4294901760
    %1834 = vmatmul.f32.gmra.mxu0 %v1833
    %v1835 = vpop.f32.mrf.mxu0
    %v1836 = vadd.f32 0.0, %v1835
    %v1837 = vand.u32 %v1671, 4294901760
    %v1838 = vsub.f32 %v1671, %v1837
    %v1839 = vand.u32 %v1838, 4294901760
    %v1840 = vsub.f32 %v1838, %v1839
    %v1841 = vand.u32 %v1840, 4294901760
    %1842 = vmatmul.f32.gmra.mxu0 %v1841
    %v1843 = vpop.f32.mrf.mxu0
    %v1844 = vadd.f32 0.0, %v1843
    %v1845 = vand.u32 %v1672, 4294901760
    %v1846 = vsub.f32 %v1672, %v1845
    %v1847 = vand.u32 %v1846, 4294901760
    %v1848 = vsub.f32 %v1846, %v1847
    %v1849 = vand.u32 %v1848, 4294901760
    %1850 = vmatmul.f32.gmra.mxu0 %v1849
    %v1851 = vpop.f32.mrf.mxu0
    %v1852 = vadd.f32 0.0, %v1851
    %v1853 = vand.u32 %v1673, 4294901760
    %v1854 = vsub.f32 %v1673, %v1853
    %v1855 = vand.u32 %v1854, 4294901760
    %v1856 = vsub.f32 %v1854, %v1855
    %v1857 = vand.u32 %v1856, 4294901760
    %1858 = vmatmul.f32.gmra.mxu0 %v1857
    %v1859 = vpop.f32.mrf.mxu0
    %v1860 = vadd.f32 0.0, %v1859
    %v1861 = vand.u32 %v1674, 4294901760
    %v1862 = vsub.f32 %v1674, %v1861
    %v1863 = vand.u32 %v1862, 4294901760
    %v1864 = vsub.f32 %v1862, %v1863
    %v1865 = vand.u32 %v1864, 4294901760
    %1866 = vmatmul.f32.gmra.mxu0 %v1865
    %v1867 = vpop.f32.mrf.mxu0
    %v1868 = vadd.f32 0.0, %v1867
    %v1869 = vand.u32 %v1675, 4294901760
    %v1870 = vsub.f32 %v1675, %v1869
    %v1871 = vand.u32 %v1870, 4294901760
    %v1872 = vsub.f32 %v1870, %v1871
    %v1873 = vand.u32 %v1872, 4294901760
    %1874 = vmatmul.f32.gmra.mxu0 %v1873
    %v1875 = vpop.f32.mrf.mxu0
    %v1876 = vadd.f32 0.0, %v1875
    %v1877 = vand.u32 %v1676, 4294901760
    %v1878 = vsub.f32 %v1676, %v1877
    %v1879 = vand.u32 %v1878, 4294901760
    %v1880 = vsub.f32 %v1878, %v1879
    %v1881 = vand.u32 %v1880, 4294901760
    %1882 = vmatmul.f32.gmra.mxu0 %v1881
    %v1883 = vpop.f32.mrf.mxu0
    %v1884 = vadd.f32 0.0, %v1883
    %v1885 = vand.u32 %v1677, 4294901760
    %v1886 = vsub.f32 %v1677, %v1885
    %v1887 = vand.u32 %v1886, 4294901760
    %v1888 = vsub.f32 %v1886, %v1887
    %v1889 = vand.u32 %v1888, 4294901760
    %1890 = vmatmul.f32.gmra.mxu0 %v1889
    %v1891 = vpop.f32.mrf.mxu0
    %v1892 = vadd.f32 0.0, %v1891
    %v1893 = vand.u32 %v1678, 4294901760
    %v1894 = vsub.f32 %v1678, %v1893
    %v1895 = vand.u32 %v1894, 4294901760
    %v1896 = vsub.f32 %v1894, %v1895
    %v1897 = vand.u32 %v1896, 4294901760
    %1898 = vmatmul.f32.gmra.mxu0 %v1897
    %v1899 = vpop.f32.mrf.mxu0
    %v1900 = vadd.f32 0.0, %v1899
    %v1901 = vand.u32 %v1679, 4294901760
    %v1902 = vsub.f32 %v1679, %v1901
    %v1903 = vand.u32 %v1902, 4294901760
    %v1904 = vsub.f32 %v1902, %v1903
    %v1905 = vand.u32 %v1904, 4294901760
    %1906 = vmatmul.f32.gmra.mxu0 %v1905
    %v1907 = vpop.f32.mrf.mxu0
    %v1908 = vadd.f32 0.0, %v1907
    %v1909 = vand.u32 %v1680, 4294901760
    %v1910 = vsub.f32 %v1680, %v1909
    %v1911 = vand.u32 %v1910, 4294901760
    %v1912 = vsub.f32 %v1910, %v1911
    %v1913 = vand.u32 %v1912, 4294901760
    %1914 = vmatmul.f32.gmra.mxu0 %v1913
    %v1915 = vpop.f32.mrf.mxu0
    %v1916 = vadd.f32 0.0, %v1915
    %v1917 = vand.u32 %v1681, 4294901760
    %v1918 = vsub.f32 %v1681, %v1917
    %v1919 = vand.u32 %v1918, 4294901760
    %v1920 = vsub.f32 %v1918, %v1919
    %v1921 = vand.u32 %v1920, 4294901760
    %1922 = vmatmul.f32.gmra.mxu0 %v1921
    %v1923 = vpop.f32.mrf.mxu0
    %v1924 = vadd.f32 0.0, %v1923
    %v1925 = vand.u32 %v1682, 4294901760
    %v1926 = vsub.f32 %v1682, %v1925
    %v1927 = vand.u32 %v1926, 4294901760
    %v1928 = vsub.f32 %v1926, %v1927
    %v1929 = vand.u32 %v1928, 4294901760
    %1930 = vmatmul.f32.gmra.mxu0 %v1929
    %v1931 = vpop.f32.mrf.mxu0
    %v1932 = vadd.f32 0.0, %v1931
    %v1933 = vand.u32 %v1683, 4294901760
    %v1934 = vsub.f32 %v1683, %v1933
    %v1935 = vand.u32 %v1934, 4294901760
    %v1936 = vsub.f32 %v1934, %v1935
    %v1937 = vand.u32 %v1936, 4294901760
    %1938 = vmatmul.f32.gmra.mxu0 %v1937
    %v1939 = vpop.f32.mrf.mxu0
    %v1940 = vadd.f32 0.0, %v1939
    %v1941 = vand.u32 %v1684, 4294901760
    %v1942 = vsub.f32 %v1684, %v1941
    %v1943 = vand.u32 %v1942, 4294901760
    %v1944 = vsub.f32 %v1942, %v1943
    %v1945 = vand.u32 %v1944, 4294901760
    %1946 = vmatmul.f32.gmra.mxu0 %v1945
    %v1947 = vpop.f32.mrf.mxu0
    %v1948 = vadd.f32 0.0, %v1947
    %v1949 = vand.u32 %v1685, 4294901760
    %v1950 = vsub.f32 %v1685, %v1949
    %v1951 = vand.u32 %v1950, 4294901760
    %v1952 = vsub.f32 %v1950, %v1951
    %v1953 = vand.u32 %v1952, 4294901760
    %1954 = vmatmul.f32.gmra.mxu0 %v1953
    %v1955 = vpop.f32.mrf.mxu0
    %v1956 = vadd.f32 0.0, %v1955
    %v1957 = vand.u32 %v1686, 4294901760
    %v1958 = vsub.f32 %v1686, %v1957
    %v1959 = vand.u32 %v1958, 4294901760
    %v1960 = vsub.f32 %v1958, %v1959
    %v1961 = vand.u32 %v1960, 4294901760
    %1962 = vmatmul.f32.gmra.mxu0 %v1961
    %v1963 = vpop.f32.mrf.mxu0
    %v1964 = vadd.f32 0.0, %v1963
    %v1965 = vand.u32 %v1687, 4294901760
    %v1966 = vsub.f32 %v1687, %v1965
    %v1967 = vand.u32 %v1966, 4294901760
    %v1968 = vsub.f32 %v1966, %v1967
    %v1969 = vand.u32 %v1968, 4294901760
    %1970 = vmatmul.f32.gmra.mxu0 %v1969
    %v1971 = vpop.f32.mrf.mxu0
    %v1972 = vadd.f32 0.0, %v1971
    %v1973 = vand.u32 %v1688, 4294901760
    %v1974 = vsub.f32 %v1688, %v1973
    %v1975 = vand.u32 %v1974, 4294901760
    %v1976 = vsub.f32 %v1974, %v1975
    %v1977 = vand.u32 %v1976, 4294901760
    %1978 = vmatmul.f32.gmra.mxu0 %v1977
    %v1979 = vpop.f32.mrf.mxu0
    %v1980 = vadd.f32 0.0, %v1979
    %v1981 = vand.u32 %v1689, 4294901760
    %v1982 = vsub.f32 %v1689, %v1981
    %v1983 = vand.u32 %v1982, 4294901760
    %v1984 = vsub.f32 %v1982, %v1983
    %v1985 = vand.u32 %v1984, 4294901760
    %1986 = vmatmul.f32.gmra.mxu0 %v1985
    %v1987 = vpop.f32.mrf.mxu0
    %v1988 = vadd.f32 0.0, %v1987
    %v1989 = vand.u32 %v1690, 4294901760
    %v1990 = vsub.f32 %v1690, %v1989
    %v1991 = vand.u32 %v1990, 4294901760
    %v1992 = vsub.f32 %v1990, %v1991
    %v1993 = vand.u32 %v1992, 4294901760
    %1994 = vmatmul.f32.gmra.mxu0 %v1993
    %v1995 = vpop.f32.mrf.mxu0
    %v1996 = vadd.f32 0.0, %v1995
    %v1997 = vand.u32 %v1691, 4294901760
    %v1998 = vsub.f32 %v1691, %v1997
    %v1999 = vand.u32 %v1998, 4294901760
    %v2000 = vsub.f32 %v1998, %v1999
    %v2001 = vand.u32 %v2000, 4294901760
    %2002 = vmatmul.f32.gmra.mxu0 %v2001
    %v2003 = vpop.f32.mrf.mxu0
    %v2004 = vadd.f32 0.0, %v2003
    %v2005 = vand.u32 %v1692, 4294901760
    %v2006 = vsub.f32 %v1692, %v2005
    %v2007 = vand.u32 %v2006, 4294901760
    %v2008 = vsub.f32 %v2006, %v2007
    %v2009 = vand.u32 %v2008, 4294901760
    %2010 = vmatmul.f32.gmra.mxu0 %v2009
    %v2011 = vpop.f32.mrf.mxu0
    %v2012 = vadd.f32 0.0, %v2011
    %v2013 = vand.u32 %v1693, 4294901760
    %v2014 = vsub.f32 %v1693, %v2013
    %v2015 = vand.u32 %v2014, 4294901760
    %v2016 = vsub.f32 %v2014, %v2015
    %v2017 = vand.u32 %v2016, 4294901760
    %2018 = vmatmul.f32.gmra.mxu0 %v2017
    %v2019 = vpop.f32.mrf.mxu0
    %v2020 = vadd.f32 0.0, %v2019
    %v2021 = vand.u32 %v1694, 4294901760
    %v2022 = vsub.f32 %v1694, %v2021
    %v2023 = vand.u32 %v2022, 4294901760
    %v2024 = vsub.f32 %v2022, %v2023
    %v2025 = vand.u32 %v2024, 4294901760
    %2026 = vmatmul.f32.gmra.mxu0 %v2025
    %v2027 = vpop.f32.mrf.mxu0
    %v2028 = vadd.f32 0.0, %v2027
    %v2029 = vand.u32 %v1695, 4294901760
    %v2030 = vsub.f32 %v1695, %v2029
    %v2031 = vand.u32 %v2030, 4294901760
    %v2032 = vsub.f32 %v2030, %v2031
    %v2033 = vand.u32 %v2032, 4294901760
    %2034 = vmatmul.f32.gmra.mxu0 %v2033
    %v2035 = vpop.f32.mrf.mxu0
    %v2036 = vadd.f32 0.0, %v2035
    %v2037 = vand.u32 %v1696, 4294901760
    %v2038 = vsub.f32 %v1696, %v2037
    %v2039 = vand.u32 %v2038, 4294901760
    %v2040 = vsub.f32 %v2038, %v2039
    %v2041 = vand.u32 %v2040, 4294901760
    %2042 = vmatmul.f32.gmra.mxu0 %v2041
    %v2043 = vpop.f32.mrf.mxu0
    %v2044 = vadd.f32 0.0, %v2043
    %v2045 = vand.u32 %v1697, 4294901760
    %v2046 = vsub.f32 %v1697, %v2045
    %v2047 = vand.u32 %v2046, 4294901760
    %v2048 = vsub.f32 %v2046, %v2047
    %v2049 = vand.u32 %v2048, 4294901760
    %2050 = vmatmul.f32.gmra.mxu0 %v2049
    %v2051 = vpop.f32.mrf.mxu0
    %v2052 = vadd.f32 0.0, %v2051
    %v2053 = vand.u32 %v1698, 4294901760
    %v2054 = vsub.f32 %v1698, %v2053
    %v2055 = vand.u32 %v2054, 4294901760
    %v2056 = vsub.f32 %v2054, %v2055
    %v2057 = vand.u32 %v2056, 4294901760
    %2058 = vmatmul.f32.gmra.mxu0 %v2057
    %v2059 = vpop.f32.mrf.mxu0
    %v2060 = vadd.f32 0.0, %v2059
    %v2061 = vand.u32 %v1699, 4294901760
    %v2062 = vsub.f32 %v1699, %v2061
    %v2063 = vand.u32 %v2062, 4294901760
    %v2064 = vsub.f32 %v2062, %v2063
    %v2065 = vand.u32 %v2064, 4294901760
    %2066 = vmatmul.f32.gmra.mxu0 %v2065
    %v2067 = vpop.f32.mrf.mxu0
    %v2068 = vadd.f32 0.0, %v2067
    %v2069 = vand.u32 %v1700, 4294901760
    %v2070 = vsub.f32 %v1700, %v2069
    %v2071 = vand.u32 %v2070, 4294901760
    %v2072 = vsub.f32 %v2070, %v2071
    %v2073 = vand.u32 %v2072, 4294901760
    %2074 = vmatmul.f32.gmra.mxu0 %v2073
    %v2075 = vpop.f32.mrf.mxu0
    %v2076 = vadd.f32 0.0, %v2075
    %v2077 = vand.u32 %v1701, 4294901760
    %v2078 = vsub.f32 %v1701, %v2077
    %v2079 = vand.u32 %v2078, 4294901760
    %v2080 = vsub.f32 %v2078, %v2079
    %v2081 = vand.u32 %v2080, 4294901760
    %2082 = vmatmul.f32.gmra.mxu0 %v2081
    %v2083 = vpop.f32.mrf.mxu0
    %v2084 = vadd.f32 0.0, %v2083
    %v2085 = vand.u32 %v1702, 4294901760
    %v2086 = vsub.f32 %v1702, %v2085
    %v2087 = vand.u32 %v2086, 4294901760
    %v2088 = vsub.f32 %v2086, %v2087
    %v2089 = vand.u32 %v2088, 4294901760
    %2090 = vmatmul.f32.gmra.mxu0 %v2089
    %v2091 = vpop.f32.mrf.mxu0
    %v2092 = vadd.f32 0.0, %v2091
    %v2093 = vand.u32 %v1703, 4294901760
    %v2094 = vsub.f32 %v1703, %v2093
    %v2095 = vand.u32 %v2094, 4294901760
    %v2096 = vsub.f32 %v2094, %v2095
    %v2097 = vand.u32 %v2096, 4294901760
    %2098 = vmatmul.f32.gmra.mxu0 %v2097
    %v2099 = vpop.f32.mrf.mxu0
    %v2100 = vadd.f32 0.0, %v2099
    %v2101 = vand.u32 %v1704, 4294901760
    %v2102 = vsub.f32 %v1704, %v2101
    %v2103 = vand.u32 %v2102, 4294901760
    %v2104 = vsub.f32 %v2102, %v2103
    %v2105 = vand.u32 %v2104, 4294901760
    %2106 = vmatmul.f32.gmra.mxu0 %v2105
    %v2107 = vpop.f32.mrf.mxu0
    %v2108 = vadd.f32 0.0, %v2107
    %v2109 = vand.u32 %v1705, 4294901760
    %v2110 = vsub.f32 %v1705, %v2109
    %v2111 = vand.u32 %v2110, 4294901760
    %v2112 = vsub.f32 %v2110, %v2111
    %v2113 = vand.u32 %v2112, 4294901760
    %2114 = vmatmul.f32.gmra.mxu0 %v2113
    %v2115 = vpop.f32.mrf.mxu0
    %v2116 = vadd.f32 0.0, %v2115
    %v2117 = vand.u32 %v1706, 4294901760
    %v2118 = vsub.f32 %v1706, %v2117
    %v2119 = vand.u32 %v2118, 4294901760
    %v2120 = vsub.f32 %v2118, %v2119
    %v2121 = vand.u32 %v2120, 4294901760
    %2122 = vmatmul.f32.gmra.mxu0 %v2121
    %v2123 = vpop.f32.mrf.mxu0
    %v2124 = vadd.f32 0.0, %v2123
    %v2125 = vand.u32 %v1707, 4294901760
    %v2126 = vsub.f32 %v1707, %v2125
    %v2127 = vand.u32 %v2126, 4294901760
    %v2128 = vsub.f32 %v2126, %v2127
    %v2129 = vand.u32 %v2128, 4294901760
    %2130 = vmatmul.f32.gmra.mxu0 %v2129
    %v2131 = vpop.f32.mrf.mxu0
    %v2132 = vadd.f32 0.0, %v2131
    %v2133 = vand.u32 %v1708, 4294901760
    %v2134 = vsub.f32 %v1708, %v2133
    %v2135 = vand.u32 %v2134, 4294901760
    %v2136 = vsub.f32 %v2134, %v2135
    %v2137 = vand.u32 %v2136, 4294901760
    %2138 = vmatmul.f32.gmra.mxu0 %v2137
    %v2139 = vpop.f32.mrf.mxu0
    %v2140 = vadd.f32 0.0, %v2139
    %v2141 = vand.u32 %v1709, 4294901760
    %v2142 = vsub.f32 %v1709, %v2141
    %v2143 = vand.u32 %v2142, 4294901760
    %v2144 = vsub.f32 %v2142, %v2143
    %v2145 = vand.u32 %v2144, 4294901760
    %2146 = vmatmul.f32.gmra.mxu0 %v2145
    %v2147 = vpop.f32.mrf.mxu0
    %v2148 = vadd.f32 0.0, %v2147
    %v2149 = vand.u32 %v1710, 4294901760
    %v2150 = vsub.f32 %v1710, %v2149
    %v2151 = vand.u32 %v2150, 4294901760
    %v2152 = vsub.f32 %v2150, %v2151
    %v2153 = vand.u32 %v2152, 4294901760
    %2154 = vmatmul.f32.gmra.mxu0 %v2153
    %v2155 = vpop.f32.mrf.mxu0
    %v2156 = vadd.f32 0.0, %v2155
    %v2157 = vand.u32 %v1711, 4294901760
    %v2158 = vsub.f32 %v1711, %v2157
    %v2159 = vand.u32 %v2158, 4294901760
    %v2160 = vsub.f32 %v2158, %v2159
    %v2161 = vand.u32 %v2160, 4294901760
    %2162 = vmatmul.f32.gmra.mxu0 %v2161
    %v2163 = vpop.f32.mrf.mxu0
    %v2164 = vadd.f32 0.0, %v2163
    %v2165 = vand.u32 %v1712, 4294901760
    %v2166 = vsub.f32 %v1712, %v2165
    %v2167 = vand.u32 %v2166, 4294901760
    %v2168 = vsub.f32 %v2166, %v2167
    %v2169 = vand.u32 %v2168, 4294901760
    %2170 = vmatmul.f32.gmra.mxu0 %v2169
    %v2171 = vpop.f32.mrf.mxu0
    %v2172 = vadd.f32 0.0, %v2171
    %v2173 = vand.u32 %v1713, 4294901760
    %v2174 = vsub.f32 %v1713, %v2173
    %v2175 = vand.u32 %v2174, 4294901760
    %v2176 = vsub.f32 %v2174, %v2175
    %v2177 = vand.u32 %v2176, 4294901760
    %2178 = vmatmul.f32.gmra.mxu0 %v2177
    %v2179 = vpop.f32.mrf.mxu0
    %v2180 = vadd.f32 0.0, %v2179
    %v2181 = vand.u32 %v1714, 4294901760
    %v2182 = vsub.f32 %v1714, %v2181
    %v2183 = vand.u32 %v2182, 4294901760
    %v2184 = vsub.f32 %v2182, %v2183
    %v2185 = vand.u32 %v2184, 4294901760
    %2186 = vmatmul.f32.gmra.mxu0 %v2185
    %v2187 = vpop.f32.mrf.mxu0
    %v2188 = vadd.f32 0.0, %v2187
    %v2189 = vand.u32 %v1715, 4294901760
    %v2190 = vsub.f32 %v1715, %v2189
    %v2191 = vand.u32 %v2190, 4294901760
    %v2192 = vsub.f32 %v2190, %v2191
    %v2193 = vand.u32 %v2192, 4294901760
    %2194 = vmatmul.f32.gmra.mxu0 %v2193
    %v2195 = vpop.f32.mrf.mxu0
    %v2196 = vadd.f32 0.0, %v2195
    %v2197 = vand.u32 %v1716, 4294901760
    %v2198 = vsub.f32 %v1716, %v2197
    %v2199 = vand.u32 %v2198, 4294901760
    %v2200 = vsub.f32 %v2198, %v2199
    %v2201 = vand.u32 %v2200, 4294901760
    %2202 = vmatmul.f32.gmra.mxu0 %v2201
    %v2203 = vpop.f32.mrf.mxu0
    %v2204 = vadd.f32 0.0, %v2203
    %v2205 = vand.u32 %v1717, 4294901760
    %v2206 = vsub.f32 %v1717, %v2205
    %v2207 = vand.u32 %v2206, 4294901760
    %v2208 = vsub.f32 %v2206, %v2207
    %v2209 = vand.u32 %v2208, 4294901760
    %2210 = vmatmul.f32.gmra.mxu0 %v2209
    %v2211 = vpop.f32.mrf.mxu0
    %v2212 = vadd.f32 0.0, %v2211
    %v2213 = vand.u32 %v1718, 4294901760
    %v2214 = vsub.f32 %v1718, %v2213
    %v2215 = vand.u32 %v2214, 4294901760
    %v2216 = vsub.f32 %v2214, %v2215
    %v2217 = vand.u32 %v2216, 4294901760
    %2218 = vmatmul.f32.gmra.mxu0 %v2217
    %v2219 = vpop.f32.mrf.mxu0
    %v2220 = vadd.f32 0.0, %v2219
    %v2221 = vand.u32 %v1719, 4294901760
    %v2222 = vsub.f32 %v1719, %v2221
    %v2223 = vand.u32 %v2222, 4294901760
    %v2224 = vsub.f32 %v2222, %v2223
    %v2225 = vand.u32 %v2224, 4294901760
    %2226 = vmatmul.f32.gmra.mxu0 %v2225
    %v2227 = vpop.f32.mrf.mxu0
    %v2228 = vadd.f32 0.0, %v2227
    %v2229 = vand.u32 %v1720, 4294901760
    %v2230 = vsub.f32 %v1720, %v2229
    %v2231 = vand.u32 %v2230, 4294901760
    %v2232 = vsub.f32 %v2230, %v2231
    %v2233 = vand.u32 %v2232, 4294901760
    %2234 = vmatmul.f32.gmra.mxu0 %v2233
    %v2235 = vpop.f32.mrf.mxu0
    %v2236 = vadd.f32 0.0, %v2235
    %v2237 = vand.u32 %v1721, 4294901760
    %v2238 = vsub.f32 %v1721, %v2237
    %v2239 = vand.u32 %v2238, 4294901760
    %v2240 = vsub.f32 %v2238, %v2239
    %v2241 = vand.u32 %v2240, 4294901760
    %2242 = vmatmul.f32.gmra.mxu0 %v2241
    %v2243 = vpop.f32.mrf.mxu0
    %v2244 = vadd.f32 0.0, %v2243
    %v2245 = vand.u32 %v1722, 4294901760
    %v2246 = vsub.f32 %v1722, %v2245
    %v2247 = vand.u32 %v2246, 4294901760
    %v2248 = vsub.f32 %v2246, %v2247
    %v2249 = vand.u32 %v2248, 4294901760
    %2250 = vmatmul.f32.gmra.mxu0 %v2249
    %v2251 = vpop.f32.mrf.mxu0
    %v2252 = vadd.f32 0.0, %v2251
    %v2253 = vand.u32 %v1723, 4294901760
    %v2254 = vsub.f32 %v1723, %v2253
    %v2255 = vand.u32 %v2254, 4294901760
    %v2256 = vsub.f32 %v2254, %v2255
    %v2257 = vand.u32 %v2256, 4294901760
    %2258 = vmatmul.f32.gmra.mxu0 %v2257
    %v2259 = vpop.f32.mrf.mxu0
    %v2260 = vadd.f32 0.0, %v2259
    %v2261 = vand.u32 %v1724, 4294901760
    %v2262 = vsub.f32 %v1724, %v2261
    %v2263 = vand.u32 %v2262, 4294901760
    %v2264 = vsub.f32 %v2262, %v2263
    %v2265 = vand.u32 %v2264, 4294901760
    %2266 = vmatmul.f32.gmra.mxu0 %v2265
    %v2267 = vpop.f32.mrf.mxu0
    %v2268 = vadd.f32 0.0, %v2267
    %2269 = vdwg.mxu0
    %v2270 = vand.u32 %v1660, 4294901760
    %v2271 = vsub.f32 %v1660, %v2270
    %v2272 = vand.u32 %v2271, 4294901760
    %v2273 = vsub.f32 %v2271, %v2272
    %v2274 = vand.u32 %v2273, 4294901760
    %2275 = vmatpush.msra.mxu0 %v2274
    %v2276 = vand.u32 %v1659, 4294901760
    %v2277 = vsub.f32 %v1659, %v2276
    %v2278 = vand.u32 %v2277, 4294901760
    %v2279 = vsub.f32 %v2277, %v2278
    %v2280 = vand.u32 %v2279, 4294901760
    %2281 = vmatpush.msra.mxu0 %v2280
    %v2282 = vand.u32 %v1658, 4294901760
    %v2283 = vsub.f32 %v1658, %v2282
    %v2284 = vand.u32 %v2283, 4294901760
    %v2285 = vsub.f32 %v2283, %v2284
    %v2286 = vand.u32 %v2285, 4294901760
    %2287 = vmatpush.msra.mxu0 %v2286
    %v2288 = vand.u32 %v1657, 4294901760
    %v2289 = vsub.f32 %v1657, %v2288
    %v2290 = vand.u32 %v2289, 4294901760
    %v2291 = vsub.f32 %v2289, %v2290
    %v2292 = vand.u32 %v2291, 4294901760
    %2293 = vmatpush.msra.mxu0 %v2292
    %v2294 = vand.u32 %v1656, 4294901760
    %v2295 = vsub.f32 %v1656, %v2294
    %v2296 = vand.u32 %v2295, 4294901760
    %v2297 = vsub.f32 %v2295, %v2296
    %v2298 = vand.u32 %v2297, 4294901760
    %2299 = vmatpush.msra.mxu0 %v2298
    %v2300 = vand.u32 %v1655, 4294901760
    %v2301 = vsub.f32 %v1655, %v2300
    %v2302 = vand.u32 %v2301, 4294901760
    %v2303 = vsub.f32 %v2301, %v2302
    %v2304 = vand.u32 %v2303, 4294901760
    %2305 = vmatpush.msra.mxu0 %v2304
    %v2306 = vand.u32 %v1654, 4294901760
    %v2307 = vsub.f32 %v1654, %v2306
    %v2308 = vand.u32 %v2307, 4294901760
    %v2309 = vsub.f32 %v2307, %v2308
    %v2310 = vand.u32 %v2309, 4294901760
    %2311 = vmatpush.msra.mxu0 %v2310
    %v2312 = vand.u32 %v1653, 4294901760
    %v2313 = vsub.f32 %v1653, %v2312
    %v2314 = vand.u32 %v2313, 4294901760
    %v2315 = vsub.f32 %v2313, %v2314
    %v2316 = vand.u32 %v2315, 4294901760
    %2317 = vmatpush.msra.mxu0 %v2316
    %v2318 = vand.u32 %v1652, 4294901760
    %v2319 = vsub.f32 %v1652, %v2318
    %v2320 = vand.u32 %v2319, 4294901760
    %v2321 = vsub.f32 %v2319, %v2320
    %v2322 = vand.u32 %v2321, 4294901760
    %2323 = vmatpush.msra.mxu0 %v2322
    %v2324 = vand.u32 %v1651, 4294901760
    %v2325 = vsub.f32 %v1651, %v2324
    %v2326 = vand.u32 %v2325, 4294901760
    %v2327 = vsub.f32 %v2325, %v2326
    %v2328 = vand.u32 %v2327, 4294901760
    %2329 = vmatpush.msra.mxu0 %v2328
    %v2330 = vand.u32 %v1650, 4294901760
    %v2331 = vsub.f32 %v1650, %v2330
    %v2332 = vand.u32 %v2331, 4294901760
    %v2333 = vsub.f32 %v2331, %v2332
    %v2334 = vand.u32 %v2333, 4294901760
    %2335 = vmatpush.msra.mxu0 %v2334
    %v2336 = vand.u32 %v1649, 4294901760
    %v2337 = vsub.f32 %v1649, %v2336
    %v2338 = vand.u32 %v2337, 4294901760
    %v2339 = vsub.f32 %v2337, %v2338
    %v2340 = vand.u32 %v2339, 4294901760
    %2341 = vmatpush.msra.mxu0 %v2340
    %v2342 = vand.u32 %v1648, 4294901760
    %v2343 = vsub.f32 %v1648, %v2342
    %v2344 = vand.u32 %v2343, 4294901760
    %v2345 = vsub.f32 %v2343, %v2344
    %v2346 = vand.u32 %v2345, 4294901760
    %2347 = vmatpush.msra.mxu0 %v2346
    %v2348 = vand.u32 %v1647, 4294901760
    %v2349 = vsub.f32 %v1647, %v2348
    %v2350 = vand.u32 %v2349, 4294901760
    %v2351 = vsub.f32 %v2349, %v2350
    %v2352 = vand.u32 %v2351, 4294901760
    %2353 = vmatpush.msra.mxu0 %v2352
    %v2354 = vand.u32 %v1646, 4294901760
    %v2355 = vsub.f32 %v1646, %v2354
    %v2356 = vand.u32 %v2355, 4294901760
    %v2357 = vsub.f32 %v2355, %v2356
    %v2358 = vand.u32 %v2357, 4294901760
    %2359 = vmatpush.msra.mxu0 %v2358
    %v2360 = vand.u32 %v1645, 4294901760
    %v2361 = vsub.f32 %v1645, %v2360
    %v2362 = vand.u32 %v2361, 4294901760
    %v2363 = vsub.f32 %v2361, %v2362
    %v2364 = vand.u32 %v2363, 4294901760
    %2365 = vmatpush.msra.mxu0 %v2364
    %v2366 = vand.u32 %v1661, 4294901760
    %2367 = vmatmul.f32.gmra.mxu0 %v2366
    %v2368 = vpop.f32.mrf.mxu0
    %v2369 = vadd.f32 %v1764, %v2368
    %v2370 = vand.u32 %v1662, 4294901760
    %2371 = vmatmul.f32.gmra.mxu0 %v2370
    %v2372 = vpop.f32.mrf.mxu0
    %v2373 = vadd.f32 %v1772, %v2372
    %v2374 = vand.u32 %v1663, 4294901760
    %2375 = vmatmul.f32.gmra.mxu0 %v2374
    %v2376 = vpop.f32.mrf.mxu0
    %v2377 = vadd.f32 %v1780, %v2376
    %v2378 = vand.u32 %v1664, 4294901760
    %2379 = vmatmul.f32.gmra.mxu0 %v2378
    %v2380 = vpop.f32.mrf.mxu0
    %v2381 = vadd.f32 %v1788, %v2380
    %v2382 = vand.u32 %v1665, 4294901760
    %2383 = vmatmul.f32.gmra.mxu0 %v2382
    %v2384 = vpop.f32.mrf.mxu0
    %v2385 = vadd.f32 %v1796, %v2384
    %v2386 = vand.u32 %v1666, 4294901760
    %2387 = vmatmul.f32.gmra.mxu0 %v2386
    %v2388 = vpop.f32.mrf.mxu0
    %v2389 = vadd.f32 %v1804, %v2388
    %v2390 = vand.u32 %v1667, 4294901760
    %2391 = vmatmul.f32.gmra.mxu0 %v2390
    %v2392 = vpop.f32.mrf.mxu0
    %v2393 = vadd.f32 %v1812, %v2392
    %v2394 = vand.u32 %v1668, 4294901760
    %2395 = vmatmul.f32.gmra.mxu0 %v2394
    %v2396 = vpop.f32.mrf.mxu0
    %v2397 = vadd.f32 %v1820, %v2396
    %v2398 = vand.u32 %v1669, 4294901760
    %2399 = vmatmul.f32.gmra.mxu0 %v2398
    %v2400 = vpop.f32.mrf.mxu0
    %v2401 = vadd.f32 %v1828, %v2400
    %v2402 = vand.u32 %v1670, 4294901760
    %2403 = vmatmul.f32.gmra.mxu0 %v2402
    %v2404 = vpop.f32.mrf.mxu0
    %v2405 = vadd.f32 %v1836, %v2404
    %v2406 = vand.u32 %v1671, 4294901760
    %2407 = vmatmul.f32.gmra.mxu0 %v2406
    %v2408 = vpop.f32.mrf.mxu0
    %v2409 = vadd.f32 %v1844, %v2408
    %v2410 = vand.u32 %v1672, 4294901760
    %2411 = vmatmul.f32.gmra.mxu0 %v2410
    %v2412 = vpop.f32.mrf.mxu0
    %v2413 = vadd.f32 %v1852, %v2412
    %v2414 = vand.u32 %v1673, 4294901760
    %2415 = vmatmul.f32.gmra.mxu0 %v2414
    %v2416 = vpop.f32.mrf.mxu0
    %v2417 = vadd.f32 %v1860, %v2416
    %v2418 = vand.u32 %v1674, 4294901760
    %2419 = vmatmul.f32.gmra.mxu0 %v2418
    %v2420 = vpop.f32.mrf.mxu0
    %v2421 = vadd.f32 %v1868, %v2420
    %v2422 = vand.u32 %v1675, 4294901760
    %2423 = vmatmul.f32.gmra.mxu0 %v2422
    %v2424 = vpop.f32.mrf.mxu0
    %v2425 = vadd.f32 %v1876, %v2424
    %v2426 = vand.u32 %v1676, 4294901760
    %2427 = vmatmul.f32.gmra.mxu0 %v2426
    %v2428 = vpop.f32.mrf.mxu0
    %v2429 = vadd.f32 %v1884, %v2428
    %v2430 = vand.u32 %v1677, 4294901760
    %2431 = vmatmul.f32.gmra.mxu0 %v2430
    %v2432 = vpop.f32.mrf.mxu0
    %v2433 = vadd.f32 %v1892, %v2432
    %v2434 = vand.u32 %v1678, 4294901760
    %2435 = vmatmul.f32.gmra.mxu0 %v2434
    %v2436 = vpop.f32.mrf.mxu0
    %v2437 = vadd.f32 %v1900, %v2436
    %v2438 = vand.u32 %v1679, 4294901760
    %2439 = vmatmul.f32.gmra.mxu0 %v2438
    %v2440 = vpop.f32.mrf.mxu0
    %v2441 = vadd.f32 %v1908, %v2440
    %v2442 = vand.u32 %v1680, 4294901760
    %2443 = vmatmul.f32.gmra.mxu0 %v2442
    %v2444 = vpop.f32.mrf.mxu0
    %v2445 = vadd.f32 %v1916, %v2444
    %v2446 = vand.u32 %v1681, 4294901760
    %2447 = vmatmul.f32.gmra.mxu0 %v2446
    %v2448 = vpop.f32.mrf.mxu0
    %v2449 = vadd.f32 %v1924, %v2448
    %v2450 = vand.u32 %v1682, 4294901760
    %2451 = vmatmul.f32.gmra.mxu0 %v2450
    %v2452 = vpop.f32.mrf.mxu0
    %v2453 = vadd.f32 %v1932, %v2452
    %v2454 = vand.u32 %v1683, 4294901760
    %2455 = vmatmul.f32.gmra.mxu0 %v2454
    %v2456 = vpop.f32.mrf.mxu0
    %v2457 = vadd.f32 %v1940, %v2456
    %v2458 = vand.u32 %v1684, 4294901760
    %2459 = vmatmul.f32.gmra.mxu0 %v2458
    %v2460 = vpop.f32.mrf.mxu0
    %v2461 = vadd.f32 %v1948, %v2460
    %v2462 = vand.u32 %v1685, 4294901760
    %2463 = vmatmul.f32.gmra.mxu0 %v2462
    %v2464 = vpop.f32.mrf.mxu0
    %v2465 = vadd.f32 %v1956, %v2464
    %v2466 = vand.u32 %v1686, 4294901760
    %2467 = vmatmul.f32.gmra.mxu0 %v2466
    %v2468 = vpop.f32.mrf.mxu0
    %v2469 = vadd.f32 %v1964, %v2468
    %v2470 = vand.u32 %v1687, 4294901760
    %2471 = vmatmul.f32.gmra.mxu0 %v2470
    %v2472 = vpop.f32.mrf.mxu0
    %v2473 = vadd.f32 %v1972, %v2472
    %v2474 = vand.u32 %v1688, 4294901760
    %2475 = vmatmul.f32.gmra.mxu0 %v2474
    %v2476 = vpop.f32.mrf.mxu0
    %v2477 = vadd.f32 %v1980, %v2476
    %v2478 = vand.u32 %v1689, 4294901760
    %2479 = vmatmul.f32.gmra.mxu0 %v2478
    %v2480 = vpop.f32.mrf.mxu0
    %v2481 = vadd.f32 %v1988, %v2480
    %v2482 = vand.u32 %v1690, 4294901760
    %2483 = vmatmul.f32.gmra.mxu0 %v2482
    %v2484 = vpop.f32.mrf.mxu0
    %v2485 = vadd.f32 %v1996, %v2484
    %v2486 = vand.u32 %v1691, 4294901760
    %2487 = vmatmul.f32.gmra.mxu0 %v2486
    %v2488 = vpop.f32.mrf.mxu0
    %v2489 = vadd.f32 %v2004, %v2488
    %v2490 = vand.u32 %v1692, 4294901760
    %2491 = vmatmul.f32.gmra.mxu0 %v2490
    %v2492 = vpop.f32.mrf.mxu0
    %v2493 = vadd.f32 %v2012, %v2492
    %v2494 = vand.u32 %v1693, 4294901760
    %2495 = vmatmul.f32.gmra.mxu0 %v2494
    %v2496 = vpop.f32.mrf.mxu0
    %v2497 = vadd.f32 %v2020, %v2496
    %v2498 = vand.u32 %v1694, 4294901760
    %2499 = vmatmul.f32.gmra.mxu0 %v2498
    %v2500 = vpop.f32.mrf.mxu0
    %v2501 = vadd.f32 %v2028, %v2500
    %v2502 = vand.u32 %v1695, 4294901760
    %2503 = vmatmul.f32.gmra.mxu0 %v2502
    %v2504 = vpop.f32.mrf.mxu0
    %v2505 = vadd.f32 %v2036, %v2504
    %v2506 = vand.u32 %v1696, 4294901760
    %2507 = vmatmul.f32.gmra.mxu0 %v2506
    %v2508 = vpop.f32.mrf.mxu0
    %v2509 = vadd.f32 %v2044, %v2508
    %v2510 = vand.u32 %v1697, 4294901760
    %2511 = vmatmul.f32.gmra.mxu0 %v2510
    %v2512 = vpop.f32.mrf.mxu0
    %v2513 = vadd.f32 %v2052, %v2512
    %v2514 = vand.u32 %v1698, 4294901760
    %2515 = vmatmul.f32.gmra.mxu0 %v2514
    %v2516 = vpop.f32.mrf.mxu0
    %v2517 = vadd.f32 %v2060, %v2516
    %v2518 = vand.u32 %v1699, 4294901760
    %2519 = vmatmul.f32.gmra.mxu0 %v2518
    %v2520 = vpop.f32.mrf.mxu0
    %v2521 = vadd.f32 %v2068, %v2520
    %v2522 = vand.u32 %v1700, 4294901760
    %2523 = vmatmul.f32.gmra.mxu0 %v2522
    %v2524 = vpop.f32.mrf.mxu0
    %v2525 = vadd.f32 %v2076, %v2524
    %v2526 = vand.u32 %v1701, 4294901760
    %2527 = vmatmul.f32.gmra.mxu0 %v2526
    %v2528 = vpop.f32.mrf.mxu0
    %v2529 = vadd.f32 %v2084, %v2528
    %v2530 = vand.u32 %v1702, 4294901760
    %2531 = vmatmul.f32.gmra.mxu0 %v2530
    %v2532 = vpop.f32.mrf.mxu0
    %v2533 = vadd.f32 %v2092, %v2532
    %v2534 = vand.u32 %v1703, 4294901760
    %2535 = vmatmul.f32.gmra.mxu0 %v2534
    %v2536 = vpop.f32.mrf.mxu0
    %v2537 = vadd.f32 %v2100, %v2536
    %v2538 = vand.u32 %v1704, 4294901760
    %2539 = vmatmul.f32.gmra.mxu0 %v2538
    %v2540 = vpop.f32.mrf.mxu0
    %v2541 = vadd.f32 %v2108, %v2540
    %v2542 = vand.u32 %v1705, 4294901760
    %2543 = vmatmul.f32.gmra.mxu0 %v2542
    %v2544 = vpop.f32.mrf.mxu0
    %v2545 = vadd.f32 %v2116, %v2544
    %v2546 = vand.u32 %v1706, 4294901760
    %2547 = vmatmul.f32.gmra.mxu0 %v2546
    %v2548 = vpop.f32.mrf.mxu0
    %v2549 = vadd.f32 %v2124, %v2548
    %v2550 = vand.u32 %v1707, 4294901760
    %2551 = vmatmul.f32.gmra.mxu0 %v2550
    %v2552 = vpop.f32.mrf.mxu0
    %v2553 = vadd.f32 %v2132, %v2552
    %v2554 = vand.u32 %v1708, 4294901760
    %2555 = vmatmul.f32.gmra.mxu0 %v2554
    %v2556 = vpop.f32.mrf.mxu0
    %v2557 = vadd.f32 %v2140, %v2556
    %v2558 = vand.u32 %v1709, 4294901760
    %2559 = vmatmul.f32.gmra.mxu0 %v2558
    %v2560 = vpop.f32.mrf.mxu0
    %v2561 = vadd.f32 %v2148, %v2560
    %v2562 = vand.u32 %v1710, 4294901760
    %2563 = vmatmul.f32.gmra.mxu0 %v2562
    %v2564 = vpop.f32.mrf.mxu0
    %v2565 = vadd.f32 %v2156, %v2564
    %v2566 = vand.u32 %v1711, 4294901760
    %2567 = vmatmul.f32.gmra.mxu0 %v2566
    %v2568 = vpop.f32.mrf.mxu0
    %v2569 = vadd.f32 %v2164, %v2568
    %v2570 = vand.u32 %v1712, 4294901760
    %2571 = vmatmul.f32.gmra.mxu0 %v2570
    %v2572 = vpop.f32.mrf.mxu0
    %v2573 = vadd.f32 %v2172, %v2572
    %v2574 = vand.u32 %v1713, 4294901760
    %2575 = vmatmul.f32.gmra.mxu0 %v2574
    %v2576 = vpop.f32.mrf.mxu0
    %v2577 = vadd.f32 %v2180, %v2576
    %v2578 = vand.u32 %v1714, 4294901760
    %2579 = vmatmul.f32.gmra.mxu0 %v2578
    %v2580 = vpop.f32.mrf.mxu0
    %v2581 = vadd.f32 %v2188, %v2580
    %v2582 = vand.u32 %v1715, 4294901760
    %2583 = vmatmul.f32.gmra.mxu0 %v2582
    %v2584 = vpop.f32.mrf.mxu0
    %v2585 = vadd.f32 %v2196, %v2584
    %v2586 = vand.u32 %v1716, 4294901760
    %2587 = vmatmul.f32.gmra.mxu0 %v2586
    %v2588 = vpop.f32.mrf.mxu0
    %v2589 = vadd.f32 %v2204, %v2588
    %v2590 = vand.u32 %v1717, 4294901760
    %2591 = vmatmul.f32.gmra.mxu0 %v2590
    %v2592 = vpop.f32.mrf.mxu0
    %v2593 = vadd.f32 %v2212, %v2592
    %v2594 = vand.u32 %v1718, 4294901760
    %2595 = vmatmul.f32.gmra.mxu0 %v2594
    %v2596 = vpop.f32.mrf.mxu0
    %v2597 = vadd.f32 %v2220, %v2596
    %v2598 = vand.u32 %v1719, 4294901760
    %2599 = vmatmul.f32.gmra.mxu0 %v2598
    %v2600 = vpop.f32.mrf.mxu0
    %v2601 = vadd.f32 %v2228, %v2600
    %v2602 = vand.u32 %v1720, 4294901760
    %2603 = vmatmul.f32.gmra.mxu0 %v2602
    %v2604 = vpop.f32.mrf.mxu0
    %v2605 = vadd.f32 %v2236, %v2604
    %v2606 = vand.u32 %v1721, 4294901760
    %2607 = vmatmul.f32.gmra.mxu0 %v2606
    %v2608 = vpop.f32.mrf.mxu0
    %v2609 = vadd.f32 %v2244, %v2608
    %v2610 = vand.u32 %v1722, 4294901760
    %2611 = vmatmul.f32.gmra.mxu0 %v2610
    %v2612 = vpop.f32.mrf.mxu0
    %v2613 = vadd.f32 %v2252, %v2612
    %v2614 = vand.u32 %v1723, 4294901760
    %2615 = vmatmul.f32.gmra.mxu0 %v2614
    %v2616 = vpop.f32.mrf.mxu0
    %v2617 = vadd.f32 %v2260, %v2616
    %v2618 = vand.u32 %v1724, 4294901760
    %2619 = vmatmul.f32.gmra.mxu0 %v2618
    %v2620 = vpop.f32.mrf.mxu0
    %v2621 = vadd.f32 %v2268, %v2620
    %2622 = vdwg.mxu0
    %v2623 = vand.u32 %v1660, 4294901760
    %v2624 = vsub.f32 %v1660, %v2623
    %2625 = vmatpush.msra.mxu0 %v2624
    %v2626 = vand.u32 %v1659, 4294901760
    %v2627 = vsub.f32 %v1659, %v2626
    %2628 = vmatpush.msra.mxu0 %v2627
    %v2629 = vand.u32 %v1658, 4294901760
    %v2630 = vsub.f32 %v1658, %v2629
    %2631 = vmatpush.msra.mxu0 %v2630
    %v2632 = vand.u32 %v1657, 4294901760
    %v2633 = vsub.f32 %v1657, %v2632
    %2634 = vmatpush.msra.mxu0 %v2633
    %v2635 = vand.u32 %v1656, 4294901760
    %v2636 = vsub.f32 %v1656, %v2635
    %2637 = vmatpush.msra.mxu0 %v2636
    %v2638 = vand.u32 %v1655, 4294901760
    %v2639 = vsub.f32 %v1655, %v2638
    %2640 = vmatpush.msra.mxu0 %v2639
    %v2641 = vand.u32 %v1654, 4294901760
    %v2642 = vsub.f32 %v1654, %v2641
    %2643 = vmatpush.msra.mxu0 %v2642
    %v2644 = vand.u32 %v1653, 4294901760
    %v2645 = vsub.f32 %v1653, %v2644
    %2646 = vmatpush.msra.mxu0 %v2645
    %v2647 = vand.u32 %v1652, 4294901760
    %v2648 = vsub.f32 %v1652, %v2647
    %2649 = vmatpush.msra.mxu0 %v2648
    %v2650 = vand.u32 %v1651, 4294901760
    %v2651 = vsub.f32 %v1651, %v2650
    %2652 = vmatpush.msra.mxu0 %v2651
    %v2653 = vand.u32 %v1650, 4294901760
    %v2654 = vsub.f32 %v1650, %v2653
    %2655 = vmatpush.msra.mxu0 %v2654
    %v2656 = vand.u32 %v1649, 4294901760
    %v2657 = vsub.f32 %v1649, %v2656
    %2658 = vmatpush.msra.mxu0 %v2657
    %v2659 = vand.u32 %v1648, 4294901760
    %v2660 = vsub.f32 %v1648, %v2659
    %2661 = vmatpush.msra.mxu0 %v2660
    %v2662 = vand.u32 %v1647, 4294901760
    %v2663 = vsub.f32 %v1647, %v2662
    %2664 = vmatpush.msra.mxu0 %v2663
    %v2665 = vand.u32 %v1646, 4294901760
    %v2666 = vsub.f32 %v1646, %v2665
    %2667 = vmatpush.msra.mxu0 %v2666
    %v2668 = vand.u32 %v1645, 4294901760
    %v2669 = vsub.f32 %v1645, %v2668
    %2670 = vmatpush.msra.mxu0 %v2669
    %v2671 = vand.u32 %v1661, 4294901760
    %v2672 = vsub.f32 %v1661, %v2671
    %2673 = vmatmul.f32.gmra.mxu0 %v2672
    %v2674 = vpop.f32.mrf.mxu0
    %v2675 = vadd.f32 %v2369, %v2674
    %v2676 = vand.u32 %v1662, 4294901760
    %v2677 = vsub.f32 %v1662, %v2676
    %2678 = vmatmul.f32.gmra.mxu0 %v2677
    %v2679 = vpop.f32.mrf.mxu0
    %v2680 = vadd.f32 %v2373, %v2679
    %v2681 = vand.u32 %v1663, 4294901760
    %v2682 = vsub.f32 %v1663, %v2681
    %2683 = vmatmul.f32.gmra.mxu0 %v2682
    %v2684 = vpop.f32.mrf.mxu0
    %v2685 = vadd.f32 %v2377, %v2684
    %v2686 = vand.u32 %v1664, 4294901760
    %v2687 = vsub.f32 %v1664, %v2686
    %2688 = vmatmul.f32.gmra.mxu0 %v2687
    %v2689 = vpop.f32.mrf.mxu0
    %v2690 = vadd.f32 %v2381, %v2689
    %v2691 = vand.u32 %v1665, 4294901760
    %v2692 = vsub.f32 %v1665, %v2691
    %2693 = vmatmul.f32.gmra.mxu0 %v2692
    %v2694 = vpop.f32.mrf.mxu0
    %v2695 = vadd.f32 %v2385, %v2694
    %v2696 = vand.u32 %v1666, 4294901760
    %v2697 = vsub.f32 %v1666, %v2696
    %2698 = vmatmul.f32.gmra.mxu0 %v2697
    %v2699 = vpop.f32.mrf.mxu0
    %v2700 = vadd.f32 %v2389, %v2699
    %v2701 = vand.u32 %v1667, 4294901760
    %v2702 = vsub.f32 %v1667, %v2701
    %2703 = vmatmul.f32.gmra.mxu0 %v2702
    %v2704 = vpop.f32.mrf.mxu0
    %v2705 = vadd.f32 %v2393, %v2704
    %v2706 = vand.u32 %v1668, 4294901760
    %v2707 = vsub.f32 %v1668, %v2706
    %2708 = vmatmul.f32.gmra.mxu0 %v2707
    %v2709 = vpop.f32.mrf.mxu0
    %v2710 = vadd.f32 %v2397, %v2709
    %v2711 = vand.u32 %v1669, 4294901760
    %v2712 = vsub.f32 %v1669, %v2711
    %2713 = vmatmul.f32.gmra.mxu0 %v2712
    %v2714 = vpop.f32.mrf.mxu0
    %v2715 = vadd.f32 %v2401, %v2714
    %v2716 = vand.u32 %v1670, 4294901760
    %v2717 = vsub.f32 %v1670, %v2716
    %2718 = vmatmul.f32.gmra.mxu0 %v2717
    %v2719 = vpop.f32.mrf.mxu0
    %v2720 = vadd.f32 %v2405, %v2719
    %v2721 = vand.u32 %v1671, 4294901760
    %v2722 = vsub.f32 %v1671, %v2721
    %2723 = vmatmul.f32.gmra.mxu0 %v2722
    %v2724 = vpop.f32.mrf.mxu0
    %v2725 = vadd.f32 %v2409, %v2724
    %v2726 = vand.u32 %v1672, 4294901760
    %v2727 = vsub.f32 %v1672, %v2726
    %2728 = vmatmul.f32.gmra.mxu0 %v2727
    %v2729 = vpop.f32.mrf.mxu0
    %v2730 = vadd.f32 %v2413, %v2729
    %v2731 = vand.u32 %v1673, 4294901760
    %v2732 = vsub.f32 %v1673, %v2731
    %2733 = vmatmul.f32.gmra.mxu0 %v2732
    %v2734 = vpop.f32.mrf.mxu0
    %v2735 = vadd.f32 %v2417, %v2734
    %v2736 = vand.u32 %v1674, 4294901760
    %v2737 = vsub.f32 %v1674, %v2736
    %2738 = vmatmul.f32.gmra.mxu0 %v2737
    %v2739 = vpop.f32.mrf.mxu0
    %v2740 = vadd.f32 %v2421, %v2739
    %v2741 = vand.u32 %v1675, 4294901760
    %v2742 = vsub.f32 %v1675, %v2741
    %2743 = vmatmul.f32.gmra.mxu0 %v2742
    %v2744 = vpop.f32.mrf.mxu0
    %v2745 = vadd.f32 %v2425, %v2744
    %v2746 = vand.u32 %v1676, 4294901760
    %v2747 = vsub.f32 %v1676, %v2746
    %2748 = vmatmul.f32.gmra.mxu0 %v2747
    %v2749 = vpop.f32.mrf.mxu0
    %v2750 = vadd.f32 %v2429, %v2749
    %v2751 = vand.u32 %v1677, 4294901760
    %v2752 = vsub.f32 %v1677, %v2751
    %2753 = vmatmul.f32.gmra.mxu0 %v2752
    %v2754 = vpop.f32.mrf.mxu0
    %v2755 = vadd.f32 %v2433, %v2754
    %v2756 = vand.u32 %v1678, 4294901760
    %v2757 = vsub.f32 %v1678, %v2756
    %2758 = vmatmul.f32.gmra.mxu0 %v2757
    %v2759 = vpop.f32.mrf.mxu0
    %v2760 = vadd.f32 %v2437, %v2759
    %v2761 = vand.u32 %v1679, 4294901760
    %v2762 = vsub.f32 %v1679, %v2761
    %2763 = vmatmul.f32.gmra.mxu0 %v2762
    %v2764 = vpop.f32.mrf.mxu0
    %v2765 = vadd.f32 %v2441, %v2764
    %v2766 = vand.u32 %v1680, 4294901760
    %v2767 = vsub.f32 %v1680, %v2766
    %2768 = vmatmul.f32.gmra.mxu0 %v2767
    %v2769 = vpop.f32.mrf.mxu0
    %v2770 = vadd.f32 %v2445, %v2769
    %v2771 = vand.u32 %v1681, 4294901760
    %v2772 = vsub.f32 %v1681, %v2771
    %2773 = vmatmul.f32.gmra.mxu0 %v2772
    %v2774 = vpop.f32.mrf.mxu0
    %v2775 = vadd.f32 %v2449, %v2774
    %v2776 = vand.u32 %v1682, 4294901760
    %v2777 = vsub.f32 %v1682, %v2776
    %2778 = vmatmul.f32.gmra.mxu0 %v2777
    %v2779 = vpop.f32.mrf.mxu0
    %v2780 = vadd.f32 %v2453, %v2779
    %v2781 = vand.u32 %v1683, 4294901760
    %v2782 = vsub.f32 %v1683, %v2781
    %2783 = vmatmul.f32.gmra.mxu0 %v2782
    %v2784 = vpop.f32.mrf.mxu0
    %v2785 = vadd.f32 %v2457, %v2784
    %v2786 = vand.u32 %v1684, 4294901760
    %v2787 = vsub.f32 %v1684, %v2786
    %2788 = vmatmul.f32.gmra.mxu0 %v2787
    %v2789 = vpop.f32.mrf.mxu0
    %v2790 = vadd.f32 %v2461, %v2789
    %v2791 = vand.u32 %v1685, 4294901760
    %v2792 = vsub.f32 %v1685, %v2791
    %2793 = vmatmul.f32.gmra.mxu0 %v2792
    %v2794 = vpop.f32.mrf.mxu0
    %v2795 = vadd.f32 %v2465, %v2794
    %v2796 = vand.u32 %v1686, 4294901760
    %v2797 = vsub.f32 %v1686, %v2796
    %2798 = vmatmul.f32.gmra.mxu0 %v2797
    %v2799 = vpop.f32.mrf.mxu0
    %v2800 = vadd.f32 %v2469, %v2799
    %v2801 = vand.u32 %v1687, 4294901760
    %v2802 = vsub.f32 %v1687, %v2801
    %2803 = vmatmul.f32.gmra.mxu0 %v2802
    %v2804 = vpop.f32.mrf.mxu0
    %v2805 = vadd.f32 %v2473, %v2804
    %v2806 = vand.u32 %v1688, 4294901760
    %v2807 = vsub.f32 %v1688, %v2806
    %2808 = vmatmul.f32.gmra.mxu0 %v2807
    %v2809 = vpop.f32.mrf.mxu0
    %v2810 = vadd.f32 %v2477, %v2809
    %v2811 = vand.u32 %v1689, 4294901760
    %v2812 = vsub.f32 %v1689, %v2811
    %2813 = vmatmul.f32.gmra.mxu0 %v2812
    %v2814 = vpop.f32.mrf.mxu0
    %v2815 = vadd.f32 %v2481, %v2814
    %v2816 = vand.u32 %v1690, 4294901760
    %v2817 = vsub.f32 %v1690, %v2816
    %2818 = vmatmul.f32.gmra.mxu0 %v2817
    %v2819 = vpop.f32.mrf.mxu0
    %v2820 = vadd.f32 %v2485, %v2819
    %v2821 = vand.u32 %v1691, 4294901760
    %v2822 = vsub.f32 %v1691, %v2821
    %2823 = vmatmul.f32.gmra.mxu0 %v2822
    %v2824 = vpop.f32.mrf.mxu0
    %v2825 = vadd.f32 %v2489, %v2824
    %v2826 = vand.u32 %v1692, 4294901760
    %v2827 = vsub.f32 %v1692, %v2826
    %2828 = vmatmul.f32.gmra.mxu0 %v2827
    %v2829 = vpop.f32.mrf.mxu0
    %v2830 = vadd.f32 %v2493, %v2829
    %v2831 = vand.u32 %v1693, 4294901760
    %v2832 = vsub.f32 %v1693, %v2831
    %2833 = vmatmul.f32.gmra.mxu0 %v2832
    %v2834 = vpop.f32.mrf.mxu0
    %v2835 = vadd.f32 %v2497, %v2834
    %v2836 = vand.u32 %v1694, 4294901760
    %v2837 = vsub.f32 %v1694, %v2836
    %2838 = vmatmul.f32.gmra.mxu0 %v2837
    %v2839 = vpop.f32.mrf.mxu0
    %v2840 = vadd.f32 %v2501, %v2839
    %v2841 = vand.u32 %v1695, 4294901760
    %v2842 = vsub.f32 %v1695, %v2841
    %2843 = vmatmul.f32.gmra.mxu0 %v2842
    %v2844 = vpop.f32.mrf.mxu0
    %v2845 = vadd.f32 %v2505, %v2844
    %v2846 = vand.u32 %v1696, 4294901760
    %v2847 = vsub.f32 %v1696, %v2846
    %2848 = vmatmul.f32.gmra.mxu0 %v2847
    %v2849 = vpop.f32.mrf.mxu0
    %v2850 = vadd.f32 %v2509, %v2849
    %v2851 = vand.u32 %v1697, 4294901760
    %v2852 = vsub.f32 %v1697, %v2851
    %2853 = vmatmul.f32.gmra.mxu0 %v2852
    %v2854 = vpop.f32.mrf.mxu0
    %v2855 = vadd.f32 %v2513, %v2854
    %v2856 = vand.u32 %v1698, 4294901760
    %v2857 = vsub.f32 %v1698, %v2856
    %2858 = vmatmul.f32.gmra.mxu0 %v2857
    %v2859 = vpop.f32.mrf.mxu0
    %v2860 = vadd.f32 %v2517, %v2859
    %v2861 = vand.u32 %v1699, 4294901760
    %v2862 = vsub.f32 %v1699, %v2861
    %2863 = vmatmul.f32.gmra.mxu0 %v2862
    %v2864 = vpop.f32.mrf.mxu0
    %v2865 = vadd.f32 %v2521, %v2864
    %v2866 = vand.u32 %v1700, 4294901760
    %v2867 = vsub.f32 %v1700, %v2866
    %2868 = vmatmul.f32.gmra.mxu0 %v2867
    %v2869 = vpop.f32.mrf.mxu0
    %v2870 = vadd.f32 %v2525, %v2869
    %v2871 = vand.u32 %v1701, 4294901760
    %v2872 = vsub.f32 %v1701, %v2871
    %2873 = vmatmul.f32.gmra.mxu0 %v2872
    %v2874 = vpop.f32.mrf.mxu0
    %v2875 = vadd.f32 %v2529, %v2874
    %v2876 = vand.u32 %v1702, 4294901760
    %v2877 = vsub.f32 %v1702, %v2876
    %2878 = vmatmul.f32.gmra.mxu0 %v2877
    %v2879 = vpop.f32.mrf.mxu0
    %v2880 = vadd.f32 %v2533, %v2879
    %v2881 = vand.u32 %v1703, 4294901760
    %v2882 = vsub.f32 %v1703, %v2881
    %2883 = vmatmul.f32.gmra.mxu0 %v2882
    %v2884 = vpop.f32.mrf.mxu0
    %v2885 = vadd.f32 %v2537, %v2884
    %v2886 = vand.u32 %v1704, 4294901760
    %v2887 = vsub.f32 %v1704, %v2886
    %2888 = vmatmul.f32.gmra.mxu0 %v2887
    %v2889 = vpop.f32.mrf.mxu0
    %v2890 = vadd.f32 %v2541, %v2889
    %v2891 = vand.u32 %v1705, 4294901760
    %v2892 = vsub.f32 %v1705, %v2891
    %2893 = vmatmul.f32.gmra.mxu0 %v2892
    %v2894 = vpop.f32.mrf.mxu0
    %v2895 = vadd.f32 %v2545, %v2894
    %v2896 = vand.u32 %v1706, 4294901760
    %v2897 = vsub.f32 %v1706, %v2896
    %2898 = vmatmul.f32.gmra.mxu0 %v2897
    %v2899 = vpop.f32.mrf.mxu0
    %v2900 = vadd.f32 %v2549, %v2899
    %v2901 = vand.u32 %v1707, 4294901760
    %v2902 = vsub.f32 %v1707, %v2901
    %2903 = vmatmul.f32.gmra.mxu0 %v2902
    %v2904 = vpop.f32.mrf.mxu0
    %v2905 = vadd.f32 %v2553, %v2904
    %v2906 = vand.u32 %v1708, 4294901760
    %v2907 = vsub.f32 %v1708, %v2906
    %2908 = vmatmul.f32.gmra.mxu0 %v2907
    %v2909 = vpop.f32.mrf.mxu0
    %v2910 = vadd.f32 %v2557, %v2909
    %v2911 = vand.u32 %v1709, 4294901760
    %v2912 = vsub.f32 %v1709, %v2911
    %2913 = vmatmul.f32.gmra.mxu0 %v2912
    %v2914 = vpop.f32.mrf.mxu0
    %v2915 = vadd.f32 %v2561, %v2914
    %v2916 = vand.u32 %v1710, 4294901760
    %v2917 = vsub.f32 %v1710, %v2916
    %2918 = vmatmul.f32.gmra.mxu0 %v2917
    %v2919 = vpop.f32.mrf.mxu0
    %v2920 = vadd.f32 %v2565, %v2919
    %v2921 = vand.u32 %v1711, 4294901760
    %v2922 = vsub.f32 %v1711, %v2921
    %2923 = vmatmul.f32.gmra.mxu0 %v2922
    %v2924 = vpop.f32.mrf.mxu0
    %v2925 = vadd.f32 %v2569, %v2924
    %v2926 = vand.u32 %v1712, 4294901760
    %v2927 = vsub.f32 %v1712, %v2926
    %2928 = vmatmul.f32.gmra.mxu0 %v2927
    %v2929 = vpop.f32.mrf.mxu0
    %v2930 = vadd.f32 %v2573, %v2929
    %v2931 = vand.u32 %v1713, 4294901760
    %v2932 = vsub.f32 %v1713, %v2931
    %2933 = vmatmul.f32.gmra.mxu0 %v2932
    %v2934 = vpop.f32.mrf.mxu0
    %v2935 = vadd.f32 %v2577, %v2934
    %v2936 = vand.u32 %v1714, 4294901760
    %v2937 = vsub.f32 %v1714, %v2936
    %2938 = vmatmul.f32.gmra.mxu0 %v2937
    %v2939 = vpop.f32.mrf.mxu0
    %v2940 = vadd.f32 %v2581, %v2939
    %v2941 = vand.u32 %v1715, 4294901760
    %v2942 = vsub.f32 %v1715, %v2941
    %2943 = vmatmul.f32.gmra.mxu0 %v2942
    %v2944 = vpop.f32.mrf.mxu0
    %v2945 = vadd.f32 %v2585, %v2944
    %v2946 = vand.u32 %v1716, 4294901760
    %v2947 = vsub.f32 %v1716, %v2946
    %2948 = vmatmul.f32.gmra.mxu0 %v2947
    %v2949 = vpop.f32.mrf.mxu0
    %v2950 = vadd.f32 %v2589, %v2949
    %v2951 = vand.u32 %v1717, 4294901760
    %v2952 = vsub.f32 %v1717, %v2951
    %2953 = vmatmul.f32.gmra.mxu0 %v2952
    %v2954 = vpop.f32.mrf.mxu0
    %v2955 = vadd.f32 %v2593, %v2954
    %v2956 = vand.u32 %v1718, 4294901760
    %v2957 = vsub.f32 %v1718, %v2956
    %2958 = vmatmul.f32.gmra.mxu0 %v2957
    %v2959 = vpop.f32.mrf.mxu0
    %v2960 = vadd.f32 %v2597, %v2959
    %v2961 = vand.u32 %v1719, 4294901760
    %v2962 = vsub.f32 %v1719, %v2961
    %2963 = vmatmul.f32.gmra.mxu0 %v2962
    %v2964 = vpop.f32.mrf.mxu0
    %v2965 = vadd.f32 %v2601, %v2964
    %v2966 = vand.u32 %v1720, 4294901760
    %v2967 = vsub.f32 %v1720, %v2966
    %2968 = vmatmul.f32.gmra.mxu0 %v2967
    %v2969 = vpop.f32.mrf.mxu0
    %v2970 = vadd.f32 %v2605, %v2969
    %v2971 = vand.u32 %v1721, 4294901760
    %v2972 = vsub.f32 %v1721, %v2971
    %2973 = vmatmul.f32.gmra.mxu0 %v2972
    %v2974 = vpop.f32.mrf.mxu0
    %v2975 = vadd.f32 %v2609, %v2974
    %v2976 = vand.u32 %v1722, 4294901760
    %v2977 = vsub.f32 %v1722, %v2976
    %2978 = vmatmul.f32.gmra.mxu0 %v2977
    %v2979 = vpop.f32.mrf.mxu0
    %v2980 = vadd.f32 %v2613, %v2979
    %v2981 = vand.u32 %v1723, 4294901760
    %v2982 = vsub.f32 %v1723, %v2981
    %2983 = vmatmul.f32.gmra.mxu0 %v2982
    %v2984 = vpop.f32.mrf.mxu0
    %v2985 = vadd.f32 %v2617, %v2984
    %v2986 = vand.u32 %v1724, 4294901760
    %v2987 = vsub.f32 %v1724, %v2986
    %2988 = vmatmul.f32.gmra.mxu0 %v2987
    %v2989 = vpop.f32.mrf.mxu0
    %v2990 = vadd.f32 %v2621, %v2989
    %2991 = vdwg.mxu0
    %v2992 = vand.u32 %v1660, 4294901760
    %2993 = vmatpush.msra.mxu0 %v2992
    %v2994 = vand.u32 %v1659, 4294901760
    %2995 = vmatpush.msra.mxu0 %v2994
    %v2996 = vand.u32 %v1658, 4294901760
    %2997 = vmatpush.msra.mxu0 %v2996
    %v2998 = vand.u32 %v1657, 4294901760
    %2999 = vmatpush.msra.mxu0 %v2998
    %v3000 = vand.u32 %v1656, 4294901760
    %3001 = vmatpush.msra.mxu0 %v3000
    %v3002 = vand.u32 %v1655, 4294901760
    %3003 = vmatpush.msra.mxu0 %v3002
    %v3004 = vand.u32 %v1654, 4294901760
    %3005 = vmatpush.msra.mxu0 %v3004
    %v3006 = vand.u32 %v1653, 4294901760
    %3007 = vmatpush.msra.mxu0 %v3006
    %v3008 = vand.u32 %v1652, 4294901760
    %3009 = vmatpush.msra.mxu0 %v3008
    %v3010 = vand.u32 %v1651, 4294901760
    %3011 = vmatpush.msra.mxu0 %v3010
    %v3012 = vand.u32 %v1650, 4294901760
    %3013 = vmatpush.msra.mxu0 %v3012
    %v3014 = vand.u32 %v1649, 4294901760
    %3015 = vmatpush.msra.mxu0 %v3014
    %v3016 = vand.u32 %v1648, 4294901760
    %3017 = vmatpush.msra.mxu0 %v3016
    %v3018 = vand.u32 %v1647, 4294901760
    %3019 = vmatpush.msra.mxu0 %v3018
    %v3020 = vand.u32 %v1646, 4294901760
    %3021 = vmatpush.msra.mxu0 %v3020
    %v3022 = vand.u32 %v1645, 4294901760
    %3023 = vmatpush.msra.mxu0 %v3022
    %v3024 = vand.u32 %v1661, 4294901760
    %v3025 = vsub.f32 %v1661, %v3024
    %v3026 = vand.u32 %v3025, 4294901760
    %3027 = vmatmul.f32.gmra.mxu0 %v3026
    %v3028 = vpop.f32.mrf.mxu0
    %v3029 = vadd.f32 %v2675, %v3028
    %v3030 = vand.u32 %v1662, 4294901760
    %v3031 = vsub.f32 %v1662, %v3030
    %v3032 = vand.u32 %v3031, 4294901760
    %3033 = vmatmul.f32.gmra.mxu0 %v3032
    %v3034 = vpop.f32.mrf.mxu0
    %v3035 = vadd.f32 %v2680, %v3034
    %v3036 = vand.u32 %v1663, 4294901760
    %v3037 = vsub.f32 %v1663, %v3036
    %v3038 = vand.u32 %v3037, 4294901760
    %3039 = vmatmul.f32.gmra.mxu0 %v3038
    %v3040 = vpop.f32.mrf.mxu0
    %v3041 = vadd.f32 %v2685, %v3040
    %v3042 = vand.u32 %v1664, 4294901760
    %v3043 = vsub.f32 %v1664, %v3042
    %v3044 = vand.u32 %v3043, 4294901760
    %3045 = vmatmul.f32.gmra.mxu0 %v3044
    %v3046 = vpop.f32.mrf.mxu0
    %v3047 = vadd.f32 %v2690, %v3046
    %v3048 = vand.u32 %v1665, 4294901760
    %v3049 = vsub.f32 %v1665, %v3048
    %v3050 = vand.u32 %v3049, 4294901760
    %3051 = vmatmul.f32.gmra.mxu0 %v3050
    %v3052 = vpop.f32.mrf.mxu0
    %v3053 = vadd.f32 %v2695, %v3052
    %v3054 = vand.u32 %v1666, 4294901760
    %v3055 = vsub.f32 %v1666, %v3054
    %v3056 = vand.u32 %v3055, 4294901760
    %3057 = vmatmul.f32.gmra.mxu0 %v3056
    %v3058 = vpop.f32.mrf.mxu0
    %v3059 = vadd.f32 %v2700, %v3058
    %v3060 = vand.u32 %v1667, 4294901760
    %v3061 = vsub.f32 %v1667, %v3060
    %v3062 = vand.u32 %v3061, 4294901760
    %3063 = vmatmul.f32.gmra.mxu0 %v3062
    %v3064 = vpop.f32.mrf.mxu0
    %v3065 = vadd.f32 %v2705, %v3064
    %v3066 = vand.u32 %v1668, 4294901760
    %v3067 = vsub.f32 %v1668, %v3066
    %v3068 = vand.u32 %v3067, 4294901760
    %3069 = vmatmul.f32.gmra.mxu0 %v3068
    %v3070 = vpop.f32.mrf.mxu0
    %v3071 = vadd.f32 %v2710, %v3070
    %v3072 = vand.u32 %v1669, 4294901760
    %v3073 = vsub.f32 %v1669, %v3072
    %v3074 = vand.u32 %v3073, 4294901760
    %3075 = vmatmul.f32.gmra.mxu0 %v3074
    %v3076 = vpop.f32.mrf.mxu0
    %v3077 = vadd.f32 %v2715, %v3076
    %v3078 = vand.u32 %v1670, 4294901760
    %v3079 = vsub.f32 %v1670, %v3078
    %v3080 = vand.u32 %v3079, 4294901760
    %3081 = vmatmul.f32.gmra.mxu0 %v3080
    %v3082 = vpop.f32.mrf.mxu0
    %v3083 = vadd.f32 %v2720, %v3082
    %v3084 = vand.u32 %v1671, 4294901760
    %v3085 = vsub.f32 %v1671, %v3084
    %v3086 = vand.u32 %v3085, 4294901760
    %3087 = vmatmul.f32.gmra.mxu0 %v3086
    %v3088 = vpop.f32.mrf.mxu0
    %v3089 = vadd.f32 %v2725, %v3088
    %v3090 = vand.u32 %v1672, 4294901760
    %v3091 = vsub.f32 %v1672, %v3090
    %v3092 = vand.u32 %v3091, 4294901760
    %3093 = vmatmul.f32.gmra.mxu0 %v3092
    %v3094 = vpop.f32.mrf.mxu0
    %v3095 = vadd.f32 %v2730, %v3094
    %v3096 = vand.u32 %v1673, 4294901760
    %v3097 = vsub.f32 %v1673, %v3096
    %v3098 = vand.u32 %v3097, 4294901760
    %3099 = vmatmul.f32.gmra.mxu0 %v3098
    %v3100 = vpop.f32.mrf.mxu0
    %v3101 = vadd.f32 %v2735, %v3100
    %v3102 = vand.u32 %v1674, 4294901760
    %v3103 = vsub.f32 %v1674, %v3102
    %v3104 = vand.u32 %v3103, 4294901760
    %3105 = vmatmul.f32.gmra.mxu0 %v3104
    %v3106 = vpop.f32.mrf.mxu0
    %v3107 = vadd.f32 %v2740, %v3106
    %v3108 = vand.u32 %v1675, 4294901760
    %v3109 = vsub.f32 %v1675, %v3108
    %v3110 = vand.u32 %v3109, 4294901760
    %3111 = vmatmul.f32.gmra.mxu0 %v3110
    %v3112 = vpop.f32.mrf.mxu0
    %v3113 = vadd.f32 %v2745, %v3112
    %v3114 = vand.u32 %v1676, 4294901760
    %v3115 = vsub.f32 %v1676, %v3114
    %v3116 = vand.u32 %v3115, 4294901760
    %3117 = vmatmul.f32.gmra.mxu0 %v3116
    %v3118 = vpop.f32.mrf.mxu0
    %v3119 = vadd.f32 %v2750, %v3118
    %v3120 = vand.u32 %v1677, 4294901760
    %v3121 = vsub.f32 %v1677, %v3120
    %v3122 = vand.u32 %v3121, 4294901760
    %3123 = vmatmul.f32.gmra.mxu0 %v3122
    %v3124 = vpop.f32.mrf.mxu0
    %v3125 = vadd.f32 %v2755, %v3124
    %v3126 = vand.u32 %v1678, 4294901760
    %v3127 = vsub.f32 %v1678, %v3126
    %v3128 = vand.u32 %v3127, 4294901760
    %3129 = vmatmul.f32.gmra.mxu0 %v3128
    %v3130 = vpop.f32.mrf.mxu0
    %v3131 = vadd.f32 %v2760, %v3130
    %v3132 = vand.u32 %v1679, 4294901760
    %v3133 = vsub.f32 %v1679, %v3132
    %v3134 = vand.u32 %v3133, 4294901760
    %3135 = vmatmul.f32.gmra.mxu0 %v3134
    %v3136 = vpop.f32.mrf.mxu0
    %v3137 = vadd.f32 %v2765, %v3136
    %v3138 = vand.u32 %v1680, 4294901760
    %v3139 = vsub.f32 %v1680, %v3138
    %v3140 = vand.u32 %v3139, 4294901760
    %3141 = vmatmul.f32.gmra.mxu0 %v3140
    %v3142 = vpop.f32.mrf.mxu0
    %v3143 = vadd.f32 %v2770, %v3142
    %v3144 = vand.u32 %v1681, 4294901760
    %v3145 = vsub.f32 %v1681, %v3144
    %v3146 = vand.u32 %v3145, 4294901760
    %3147 = vmatmul.f32.gmra.mxu0 %v3146
    %v3148 = vpop.f32.mrf.mxu0
    %v3149 = vadd.f32 %v2775, %v3148
    %v3150 = vand.u32 %v1682, 4294901760
    %v3151 = vsub.f32 %v1682, %v3150
    %v3152 = vand.u32 %v3151, 4294901760
    %3153 = vmatmul.f32.gmra.mxu0 %v3152
    %v3154 = vpop.f32.mrf.mxu0
    %v3155 = vadd.f32 %v2780, %v3154
    %v3156 = vand.u32 %v1683, 4294901760
    %v3157 = vsub.f32 %v1683, %v3156
    %v3158 = vand.u32 %v3157, 4294901760
    %3159 = vmatmul.f32.gmra.mxu0 %v3158
    %v3160 = vpop.f32.mrf.mxu0
    %v3161 = vadd.f32 %v2785, %v3160
    %v3162 = vand.u32 %v1684, 4294901760
    %v3163 = vsub.f32 %v1684, %v3162
    %v3164 = vand.u32 %v3163, 4294901760
    %3165 = vmatmul.f32.gmra.mxu0 %v3164
    %v3166 = vpop.f32.mrf.mxu0
    %v3167 = vadd.f32 %v2790, %v3166
    %v3168 = vand.u32 %v1685, 4294901760
    %v3169 = vsub.f32 %v1685, %v3168
    %v3170 = vand.u32 %v3169, 4294901760
    %3171 = vmatmul.f32.gmra.mxu0 %v3170
    %v3172 = vpop.f32.mrf.mxu0
    %v3173 = vadd.f32 %v2795, %v3172
    %v3174 = vand.u32 %v1686, 4294901760
    %v3175 = vsub.f32 %v1686, %v3174
    %v3176 = vand.u32 %v3175, 4294901760
    %3177 = vmatmul.f32.gmra.mxu0 %v3176
    %v3178 = vpop.f32.mrf.mxu0
    %v3179 = vadd.f32 %v2800, %v3178
    %v3180 = vand.u32 %v1687, 4294901760
    %v3181 = vsub.f32 %v1687, %v3180
    %v3182 = vand.u32 %v3181, 4294901760
    %3183 = vmatmul.f32.gmra.mxu0 %v3182
    %v3184 = vpop.f32.mrf.mxu0
    %v3185 = vadd.f32 %v2805, %v3184
    %v3186 = vand.u32 %v1688, 4294901760
    %v3187 = vsub.f32 %v1688, %v3186
    %v3188 = vand.u32 %v3187, 4294901760
    %3189 = vmatmul.f32.gmra.mxu0 %v3188
    %v3190 = vpop.f32.mrf.mxu0
    %v3191 = vadd.f32 %v2810, %v3190
    %v3192 = vand.u32 %v1689, 4294901760
    %v3193 = vsub.f32 %v1689, %v3192
    %v3194 = vand.u32 %v3193, 4294901760
    %3195 = vmatmul.f32.gmra.mxu0 %v3194
    %v3196 = vpop.f32.mrf.mxu0
    %v3197 = vadd.f32 %v2815, %v3196
    %v3198 = vand.u32 %v1690, 4294901760
    %v3199 = vsub.f32 %v1690, %v3198
    %v3200 = vand.u32 %v3199, 4294901760
    %3201 = vmatmul.f32.gmra.mxu0 %v3200
    %v3202 = vpop.f32.mrf.mxu0
    %v3203 = vadd.f32 %v2820, %v3202
    %v3204 = vand.u32 %v1691, 4294901760
    %v3205 = vsub.f32 %v1691, %v3204
    %v3206 = vand.u32 %v3205, 4294901760
    %3207 = vmatmul.f32.gmra.mxu0 %v3206
    %v3208 = vpop.f32.mrf.mxu0
    %v3209 = vadd.f32 %v2825, %v3208
    %v3210 = vand.u32 %v1692, 4294901760
    %v3211 = vsub.f32 %v1692, %v3210
    %v3212 = vand.u32 %v3211, 4294901760
    %3213 = vmatmul.f32.gmra.mxu0 %v3212
    %v3214 = vpop.f32.mrf.mxu0
    %v3215 = vadd.f32 %v2830, %v3214
    %v3216 = vand.u32 %v1693, 4294901760
    %v3217 = vsub.f32 %v1693, %v3216
    %v3218 = vand.u32 %v3217, 4294901760
    %3219 = vmatmul.f32.gmra.mxu0 %v3218
    %v3220 = vpop.f32.mrf.mxu0
    %v3221 = vadd.f32 %v2835, %v3220
    %v3222 = vand.u32 %v1694, 4294901760
    %v3223 = vsub.f32 %v1694, %v3222
    %v3224 = vand.u32 %v3223, 4294901760
    %3225 = vmatmul.f32.gmra.mxu0 %v3224
    %v3226 = vpop.f32.mrf.mxu0
    %v3227 = vadd.f32 %v2840, %v3226
    %v3228 = vand.u32 %v1695, 4294901760
    %v3229 = vsub.f32 %v1695, %v3228
    %v3230 = vand.u32 %v3229, 4294901760
    %3231 = vmatmul.f32.gmra.mxu0 %v3230
    %v3232 = vpop.f32.mrf.mxu0
    %v3233 = vadd.f32 %v2845, %v3232
    %v3234 = vand.u32 %v1696, 4294901760
    %v3235 = vsub.f32 %v1696, %v3234
    %v3236 = vand.u32 %v3235, 4294901760
    %3237 = vmatmul.f32.gmra.mxu0 %v3236
    %v3238 = vpop.f32.mrf.mxu0
    %v3239 = vadd.f32 %v2850, %v3238
    %v3240 = vand.u32 %v1697, 4294901760
    %v3241 = vsub.f32 %v1697, %v3240
    %v3242 = vand.u32 %v3241, 4294901760
    %3243 = vmatmul.f32.gmra.mxu0 %v3242
    %v3244 = vpop.f32.mrf.mxu0
    %v3245 = vadd.f32 %v2855, %v3244
    %v3246 = vand.u32 %v1698, 4294901760
    %v3247 = vsub.f32 %v1698, %v3246
    %v3248 = vand.u32 %v3247, 4294901760
    %3249 = vmatmul.f32.gmra.mxu0 %v3248
    %v3250 = vpop.f32.mrf.mxu0
    %v3251 = vadd.f32 %v2860, %v3250
    %v3252 = vand.u32 %v1699, 4294901760
    %v3253 = vsub.f32 %v1699, %v3252
    %v3254 = vand.u32 %v3253, 4294901760
    %3255 = vmatmul.f32.gmra.mxu0 %v3254
    %v3256 = vpop.f32.mrf.mxu0
    %v3257 = vadd.f32 %v2865, %v3256
    %v3258 = vand.u32 %v1700, 4294901760
    %v3259 = vsub.f32 %v1700, %v3258
    %v3260 = vand.u32 %v3259, 4294901760
    %3261 = vmatmul.f32.gmra.mxu0 %v3260
    %v3262 = vpop.f32.mrf.mxu0
    %v3263 = vadd.f32 %v2870, %v3262
    %v3264 = vand.u32 %v1701, 4294901760
    %v3265 = vsub.f32 %v1701, %v3264
    %v3266 = vand.u32 %v3265, 4294901760
    %3267 = vmatmul.f32.gmra.mxu0 %v3266
    %v3268 = vpop.f32.mrf.mxu0
    %v3269 = vadd.f32 %v2875, %v3268
    %v3270 = vand.u32 %v1702, 4294901760
    %v3271 = vsub.f32 %v1702, %v3270
    %v3272 = vand.u32 %v3271, 4294901760
    %3273 = vmatmul.f32.gmra.mxu0 %v3272
    %v3274 = vpop.f32.mrf.mxu0
    %v3275 = vadd.f32 %v2880, %v3274
    %v3276 = vand.u32 %v1703, 4294901760
    %v3277 = vsub.f32 %v1703, %v3276
    %v3278 = vand.u32 %v3277, 4294901760
    %3279 = vmatmul.f32.gmra.mxu0 %v3278
    %v3280 = vpop.f32.mrf.mxu0
    %v3281 = vadd.f32 %v2885, %v3280
    %v3282 = vand.u32 %v1704, 4294901760
    %v3283 = vsub.f32 %v1704, %v3282
    %v3284 = vand.u32 %v3283, 4294901760
    %3285 = vmatmul.f32.gmra.mxu0 %v3284
    %v3286 = vpop.f32.mrf.mxu0
    %v3287 = vadd.f32 %v2890, %v3286
    %v3288 = vand.u32 %v1705, 4294901760
    %v3289 = vsub.f32 %v1705, %v3288
    %v3290 = vand.u32 %v3289, 4294901760
    %3291 = vmatmul.f32.gmra.mxu0 %v3290
    %v3292 = vpop.f32.mrf.mxu0
    %v3293 = vadd.f32 %v2895, %v3292
    %v3294 = vand.u32 %v1706, 4294901760
    %v3295 = vsub.f32 %v1706, %v3294
    %v3296 = vand.u32 %v3295, 4294901760
    %3297 = vmatmul.f32.gmra.mxu0 %v3296
    %v3298 = vpop.f32.mrf.mxu0
    %v3299 = vadd.f32 %v2900, %v3298
    %v3300 = vand.u32 %v1707, 4294901760
    %v3301 = vsub.f32 %v1707, %v3300
    %v3302 = vand.u32 %v3301, 4294901760
    %3303 = vmatmul.f32.gmra.mxu0 %v3302
    %v3304 = vpop.f32.mrf.mxu0
    %v3305 = vadd.f32 %v2905, %v3304
    %v3306 = vand.u32 %v1708, 4294901760
    %v3307 = vsub.f32 %v1708, %v3306
    %v3308 = vand.u32 %v3307, 4294901760
    %3309 = vmatmul.f32.gmra.mxu0 %v3308
    %v3310 = vpop.f32.mrf.mxu0
    %v3311 = vadd.f32 %v2910, %v3310
    %v3312 = vand.u32 %v1709, 4294901760
    %v3313 = vsub.f32 %v1709, %v3312
    %v3314 = vand.u32 %v3313, 4294901760
    %3315 = vmatmul.f32.gmra.mxu0 %v3314
    %v3316 = vpop.f32.mrf.mxu0
    %v3317 = vadd.f32 %v2915, %v3316
    %v3318 = vand.u32 %v1710, 4294901760
    %v3319 = vsub.f32 %v1710, %v3318
    %v3320 = vand.u32 %v3319, 4294901760
    %3321 = vmatmul.f32.gmra.mxu0 %v3320
    %v3322 = vpop.f32.mrf.mxu0
    %v3323 = vadd.f32 %v2920, %v3322
    %v3324 = vand.u32 %v1711, 4294901760
    %v3325 = vsub.f32 %v1711, %v3324
    %v3326 = vand.u32 %v3325, 4294901760
    %3327 = vmatmul.f32.gmra.mxu0 %v3326
    %v3328 = vpop.f32.mrf.mxu0
    %v3329 = vadd.f32 %v2925, %v3328
    %v3330 = vand.u32 %v1712, 4294901760
    %v3331 = vsub.f32 %v1712, %v3330
    %v3332 = vand.u32 %v3331, 4294901760
    %3333 = vmatmul.f32.gmra.mxu0 %v3332
    %v3334 = vpop.f32.mrf.mxu0
    %v3335 = vadd.f32 %v2930, %v3334
    %v3336 = vand.u32 %v1713, 4294901760
    %v3337 = vsub.f32 %v1713, %v3336
    %v3338 = vand.u32 %v3337, 4294901760
    %3339 = vmatmul.f32.gmra.mxu0 %v3338
    %v3340 = vpop.f32.mrf.mxu0
    %v3341 = vadd.f32 %v2935, %v3340
    %v3342 = vand.u32 %v1714, 4294901760
    %v3343 = vsub.f32 %v1714, %v3342
    %v3344 = vand.u32 %v3343, 4294901760
    %3345 = vmatmul.f32.gmra.mxu0 %v3344
    %v3346 = vpop.f32.mrf.mxu0
    %v3347 = vadd.f32 %v2940, %v3346
    %v3348 = vand.u32 %v1715, 4294901760
    %v3349 = vsub.f32 %v1715, %v3348
    %v3350 = vand.u32 %v3349, 4294901760
    %3351 = vmatmul.f32.gmra.mxu0 %v3350
    %v3352 = vpop.f32.mrf.mxu0
    %v3353 = vadd.f32 %v2945, %v3352
    %v3354 = vand.u32 %v1716, 4294901760
    %v3355 = vsub.f32 %v1716, %v3354
    %v3356 = vand.u32 %v3355, 4294901760
    %3357 = vmatmul.f32.gmra.mxu0 %v3356
    %v3358 = vpop.f32.mrf.mxu0
    %v3359 = vadd.f32 %v2950, %v3358
    %v3360 = vand.u32 %v1717, 4294901760
    %v3361 = vsub.f32 %v1717, %v3360
    %v3362 = vand.u32 %v3361, 4294901760
    %3363 = vmatmul.f32.gmra.mxu0 %v3362
    %v3364 = vpop.f32.mrf.mxu0
    %v3365 = vadd.f32 %v2955, %v3364
    %v3366 = vand.u32 %v1718, 4294901760
    %v3367 = vsub.f32 %v1718, %v3366
    %v3368 = vand.u32 %v3367, 4294901760
    %3369 = vmatmul.f32.gmra.mxu0 %v3368
    %v3370 = vpop.f32.mrf.mxu0
    %v3371 = vadd.f32 %v2960, %v3370
    %v3372 = vand.u32 %v1719, 4294901760
    %v3373 = vsub.f32 %v1719, %v3372
    %v3374 = vand.u32 %v3373, 4294901760
    %3375 = vmatmul.f32.gmra.mxu0 %v3374
    %v3376 = vpop.f32.mrf.mxu0
    %v3377 = vadd.f32 %v2965, %v3376
    %v3378 = vand.u32 %v1720, 4294901760
    %v3379 = vsub.f32 %v1720, %v3378
    %v3380 = vand.u32 %v3379, 4294901760
    %3381 = vmatmul.f32.gmra.mxu0 %v3380
    %v3382 = vpop.f32.mrf.mxu0
    %v3383 = vadd.f32 %v2970, %v3382
    %v3384 = vand.u32 %v1721, 4294901760
    %v3385 = vsub.f32 %v1721, %v3384
    %v3386 = vand.u32 %v3385, 4294901760
    %3387 = vmatmul.f32.gmra.mxu0 %v3386
    %v3388 = vpop.f32.mrf.mxu0
    %v3389 = vadd.f32 %v2975, %v3388
    %v3390 = vand.u32 %v1722, 4294901760
    %v3391 = vsub.f32 %v1722, %v3390
    %v3392 = vand.u32 %v3391, 4294901760
    %3393 = vmatmul.f32.gmra.mxu0 %v3392
    %v3394 = vpop.f32.mrf.mxu0
    %v3395 = vadd.f32 %v2980, %v3394
    %v3396 = vand.u32 %v1723, 4294901760
    %v3397 = vsub.f32 %v1723, %v3396
    %v3398 = vand.u32 %v3397, 4294901760
    %3399 = vmatmul.f32.gmra.mxu0 %v3398
    %v3400 = vpop.f32.mrf.mxu0
    %v3401 = vadd.f32 %v2985, %v3400
    %v3402 = vand.u32 %v1724, 4294901760
    %v3403 = vsub.f32 %v1724, %v3402
    %v3404 = vand.u32 %v3403, 4294901760
    %3405 = vmatmul.f32.gmra.mxu0 %v3404
    %v3406 = vpop.f32.mrf.mxu0
    %v3407 = vadd.f32 %v2990, %v3406
    %3408 = vdwg.mxu0
    %v3409 = vand.u32 %v1660, 4294901760
    %v3410 = vsub.f32 %v1660, %v3409
    %v3411 = vand.u32 %v3410, 4294901760
    %3412 = vmatpush.msra.mxu0 %v3411
    %v3413 = vand.u32 %v1659, 4294901760
    %v3414 = vsub.f32 %v1659, %v3413
    %v3415 = vand.u32 %v3414, 4294901760
    %3416 = vmatpush.msra.mxu0 %v3415
    %v3417 = vand.u32 %v1658, 4294901760
    %v3418 = vsub.f32 %v1658, %v3417
    %v3419 = vand.u32 %v3418, 4294901760
    %3420 = vmatpush.msra.mxu0 %v3419
    %v3421 = vand.u32 %v1657, 4294901760
    %v3422 = vsub.f32 %v1657, %v3421
    %v3423 = vand.u32 %v3422, 4294901760
    %3424 = vmatpush.msra.mxu0 %v3423
    %v3425 = vand.u32 %v1656, 4294901760
    %v3426 = vsub.f32 %v1656, %v3425
    %v3427 = vand.u32 %v3426, 4294901760
    %3428 = vmatpush.msra.mxu0 %v3427
    %v3429 = vand.u32 %v1655, 4294901760
    %v3430 = vsub.f32 %v1655, %v3429
    %v3431 = vand.u32 %v3430, 4294901760
    %3432 = vmatpush.msra.mxu0 %v3431
    %v3433 = vand.u32 %v1654, 4294901760
    %v3434 = vsub.f32 %v1654, %v3433
    %v3435 = vand.u32 %v3434, 4294901760
    %3436 = vmatpush.msra.mxu0 %v3435
    %v3437 = vand.u32 %v1653, 4294901760
    %v3438 = vsub.f32 %v1653, %v3437
    %v3439 = vand.u32 %v3438, 4294901760
    %3440 = vmatpush.msra.mxu0 %v3439
    %v3441 = vand.u32 %v1652, 4294901760
    %v3442 = vsub.f32 %v1652, %v3441
    %v3443 = vand.u32 %v3442, 4294901760
    %3444 = vmatpush.msra.mxu0 %v3443
    %v3445 = vand.u32 %v1651, 4294901760
    %v3446 = vsub.f32 %v1651, %v3445
    %v3447 = vand.u32 %v3446, 4294901760
    %3448 = vmatpush.msra.mxu0 %v3447
    %v3449 = vand.u32 %v1650, 4294901760
    %v3450 = vsub.f32 %v1650, %v3449
    %v3451 = vand.u32 %v3450, 4294901760
    %3452 = vmatpush.msra.mxu0 %v3451
    %v3453 = vand.u32 %v1649, 4294901760
    %v3454 = vsub.f32 %v1649, %v3453
    %v3455 = vand.u32 %v3454, 4294901760
    %3456 = vmatpush.msra.mxu0 %v3455
    %v3457 = vand.u32 %v1648, 4294901760
    %v3458 = vsub.f32 %v1648, %v3457
    %v3459 = vand.u32 %v3458, 4294901760
    %3460 = vmatpush.msra.mxu0 %v3459
    %v3461 = vand.u32 %v1647, 4294901760
    %v3462 = vsub.f32 %v1647, %v3461
    %v3463 = vand.u32 %v3462, 4294901760
    %3464 = vmatpush.msra.mxu0 %v3463
    %v3465 = vand.u32 %v1646, 4294901760
    %v3466 = vsub.f32 %v1646, %v3465
    %v3467 = vand.u32 %v3466, 4294901760
    %3468 = vmatpush.msra.mxu0 %v3467
    %v3469 = vand.u32 %v1645, 4294901760
    %v3470 = vsub.f32 %v1645, %v3469
    %v3471 = vand.u32 %v3470, 4294901760
    %3472 = vmatpush.msra.mxu0 %v3471
    %v3473 = vand.u32 %v1661, 4294901760
    %3474 = vmatmul.f32.gmra.mxu0 %v3473
    %v3475 = vpop.f32.mrf.mxu0
    %v3476 = vadd.f32 %v3029, %v3475
    %v3477 = vand.u32 %v1662, 4294901760
    %3478 = vmatmul.f32.gmra.mxu0 %v3477
    %v3479 = vpop.f32.mrf.mxu0
    %v3480 = vadd.f32 %v3035, %v3479
    %v3481 = vand.u32 %v1663, 4294901760
    %3482 = vmatmul.f32.gmra.mxu0 %v3481
    %v3483 = vpop.f32.mrf.mxu0
    %v3484 = vadd.f32 %v3041, %v3483
    %v3485 = vand.u32 %v1664, 4294901760
    %3486 = vmatmul.f32.gmra.mxu0 %v3485
    %v3487 = vpop.f32.mrf.mxu0
    %v3488 = vadd.f32 %v3047, %v3487
    %v3489 = vand.u32 %v1665, 4294901760
    %3490 = vmatmul.f32.gmra.mxu0 %v3489
    %v3491 = vpop.f32.mrf.mxu0
    %v3492 = vadd.f32 %v3053, %v3491
    %v3493 = vand.u32 %v1666, 4294901760
    %3494 = vmatmul.f32.gmra.mxu0 %v3493
    %v3495 = vpop.f32.mrf.mxu0
    %v3496 = vadd.f32 %v3059, %v3495
    %v3497 = vand.u32 %v1667, 4294901760
    %3498 = vmatmul.f32.gmra.mxu0 %v3497
    %v3499 = vpop.f32.mrf.mxu0
    %v3500 = vadd.f32 %v3065, %v3499
    %v3501 = vand.u32 %v1668, 4294901760
    %3502 = vmatmul.f32.gmra.mxu0 %v3501
    %v3503 = vpop.f32.mrf.mxu0
    %v3504 = vadd.f32 %v3071, %v3503
    %v3505 = vand.u32 %v1669, 4294901760
    %3506 = vmatmul.f32.gmra.mxu0 %v3505
    %v3507 = vpop.f32.mrf.mxu0
    %v3508 = vadd.f32 %v3077, %v3507
    %v3509 = vand.u32 %v1670, 4294901760
    %3510 = vmatmul.f32.gmra.mxu0 %v3509
    %v3511 = vpop.f32.mrf.mxu0
    %v3512 = vadd.f32 %v3083, %v3511
    %v3513 = vand.u32 %v1671, 4294901760
    %3514 = vmatmul.f32.gmra.mxu0 %v3513
    %v3515 = vpop.f32.mrf.mxu0
    %v3516 = vadd.f32 %v3089, %v3515
    %v3517 = vand.u32 %v1672, 4294901760
    %3518 = vmatmul.f32.gmra.mxu0 %v3517
    %v3519 = vpop.f32.mrf.mxu0
    %v3520 = vadd.f32 %v3095, %v3519
    %v3521 = vand.u32 %v1673, 4294901760
    %3522 = vmatmul.f32.gmra.mxu0 %v3521
    %v3523 = vpop.f32.mrf.mxu0
    %v3524 = vadd.f32 %v3101, %v3523
    %v3525 = vand.u32 %v1674, 4294901760
    %3526 = vmatmul.f32.gmra.mxu0 %v3525
    %v3527 = vpop.f32.mrf.mxu0
    %v3528 = vadd.f32 %v3107, %v3527
    %v3529 = vand.u32 %v1675, 4294901760
    %3530 = vmatmul.f32.gmra.mxu0 %v3529
    %v3531 = vpop.f32.mrf.mxu0
    %v3532 = vadd.f32 %v3113, %v3531
    %v3533 = vand.u32 %v1676, 4294901760
    %3534 = vmatmul.f32.gmra.mxu0 %v3533
    %v3535 = vpop.f32.mrf.mxu0
    %v3536 = vadd.f32 %v3119, %v3535
    %v3537 = vand.u32 %v1677, 4294901760
    %3538 = vmatmul.f32.gmra.mxu0 %v3537
    %v3539 = vpop.f32.mrf.mxu0
    %v3540 = vadd.f32 %v3125, %v3539
    %v3541 = vand.u32 %v1678, 4294901760
    %3542 = vmatmul.f32.gmra.mxu0 %v3541
    %v3543 = vpop.f32.mrf.mxu0
    %v3544 = vadd.f32 %v3131, %v3543
    %v3545 = vand.u32 %v1679, 4294901760
    %3546 = vmatmul.f32.gmra.mxu0 %v3545
    %v3547 = vpop.f32.mrf.mxu0
    %v3548 = vadd.f32 %v3137, %v3547
    %v3549 = vand.u32 %v1680, 4294901760
    %3550 = vmatmul.f32.gmra.mxu0 %v3549
    %v3551 = vpop.f32.mrf.mxu0
    %v3552 = vadd.f32 %v3143, %v3551
    %v3553 = vand.u32 %v1681, 4294901760
    %3554 = vmatmul.f32.gmra.mxu0 %v3553
    %v3555 = vpop.f32.mrf.mxu0
    %v3556 = vadd.f32 %v3149, %v3555
    %v3557 = vand.u32 %v1682, 4294901760
    %3558 = vmatmul.f32.gmra.mxu0 %v3557
    %v3559 = vpop.f32.mrf.mxu0
    %v3560 = vadd.f32 %v3155, %v3559
    %v3561 = vand.u32 %v1683, 4294901760
    %3562 = vmatmul.f32.gmra.mxu0 %v3561
    %v3563 = vpop.f32.mrf.mxu0
    %v3564 = vadd.f32 %v3161, %v3563
    %v3565 = vand.u32 %v1684, 4294901760
    %3566 = vmatmul.f32.gmra.mxu0 %v3565
    %v3567 = vpop.f32.mrf.mxu0
    %v3568 = vadd.f32 %v3167, %v3567
    %v3569 = vand.u32 %v1685, 4294901760
    %3570 = vmatmul.f32.gmra.mxu0 %v3569
    %v3571 = vpop.f32.mrf.mxu0
    %v3572 = vadd.f32 %v3173, %v3571
    %v3573 = vand.u32 %v1686, 4294901760
    %3574 = vmatmul.f32.gmra.mxu0 %v3573
    %v3575 = vpop.f32.mrf.mxu0
    %v3576 = vadd.f32 %v3179, %v3575
    %v3577 = vand.u32 %v1687, 4294901760
    %3578 = vmatmul.f32.gmra.mxu0 %v3577
    %v3579 = vpop.f32.mrf.mxu0
    %v3580 = vadd.f32 %v3185, %v3579
    %v3581 = vand.u32 %v1688, 4294901760
    %3582 = vmatmul.f32.gmra.mxu0 %v3581
    %v3583 = vpop.f32.mrf.mxu0
    %v3584 = vadd.f32 %v3191, %v3583
    %v3585 = vand.u32 %v1689, 4294901760
    %3586 = vmatmul.f32.gmra.mxu0 %v3585
    %v3587 = vpop.f32.mrf.mxu0
    %v3588 = vadd.f32 %v3197, %v3587
    %v3589 = vand.u32 %v1690, 4294901760
    %3590 = vmatmul.f32.gmra.mxu0 %v3589
    %v3591 = vpop.f32.mrf.mxu0
    %v3592 = vadd.f32 %v3203, %v3591
    %v3593 = vand.u32 %v1691, 4294901760
    %3594 = vmatmul.f32.gmra.mxu0 %v3593
    %v3595 = vpop.f32.mrf.mxu0
    %v3596 = vadd.f32 %v3209, %v3595
    %v3597 = vand.u32 %v1692, 4294901760
    %3598 = vmatmul.f32.gmra.mxu0 %v3597
    %v3599 = vpop.f32.mrf.mxu0
    %v3600 = vadd.f32 %v3215, %v3599
    %v3601 = vand.u32 %v1693, 4294901760
    %3602 = vmatmul.f32.gmra.mxu0 %v3601
    %v3603 = vpop.f32.mrf.mxu0
    %v3604 = vadd.f32 %v3221, %v3603
    %v3605 = vand.u32 %v1694, 4294901760
    %3606 = vmatmul.f32.gmra.mxu0 %v3605
    %v3607 = vpop.f32.mrf.mxu0
    %v3608 = vadd.f32 %v3227, %v3607
    %v3609 = vand.u32 %v1695, 4294901760
    %3610 = vmatmul.f32.gmra.mxu0 %v3609
    %v3611 = vpop.f32.mrf.mxu0
    %v3612 = vadd.f32 %v3233, %v3611
    %v3613 = vand.u32 %v1696, 4294901760
    %3614 = vmatmul.f32.gmra.mxu0 %v3613
    %v3615 = vpop.f32.mrf.mxu0
    %v3616 = vadd.f32 %v3239, %v3615
    %v3617 = vand.u32 %v1697, 4294901760
    %3618 = vmatmul.f32.gmra.mxu0 %v3617
    %v3619 = vpop.f32.mrf.mxu0
    %v3620 = vadd.f32 %v3245, %v3619
    %v3621 = vand.u32 %v1698, 4294901760
    %3622 = vmatmul.f32.gmra.mxu0 %v3621
    %v3623 = vpop.f32.mrf.mxu0
    %v3624 = vadd.f32 %v3251, %v3623
    %v3625 = vand.u32 %v1699, 4294901760
    %3626 = vmatmul.f32.gmra.mxu0 %v3625
    %v3627 = vpop.f32.mrf.mxu0
    %v3628 = vadd.f32 %v3257, %v3627
    %v3629 = vand.u32 %v1700, 4294901760
    %3630 = vmatmul.f32.gmra.mxu0 %v3629
    %v3631 = vpop.f32.mrf.mxu0
    %v3632 = vadd.f32 %v3263, %v3631
    %v3633 = vand.u32 %v1701, 4294901760
    %3634 = vmatmul.f32.gmra.mxu0 %v3633
    %v3635 = vpop.f32.mrf.mxu0
    %v3636 = vadd.f32 %v3269, %v3635
    %v3637 = vand.u32 %v1702, 4294901760
    %3638 = vmatmul.f32.gmra.mxu0 %v3637
    %v3639 = vpop.f32.mrf.mxu0
    %v3640 = vadd.f32 %v3275, %v3639
    %v3641 = vand.u32 %v1703, 4294901760
    %3642 = vmatmul.f32.gmra.mxu0 %v3641
    %v3643 = vpop.f32.mrf.mxu0
    %v3644 = vadd.f32 %v3281, %v3643
    %v3645 = vand.u32 %v1704, 4294901760
    %3646 = vmatmul.f32.gmra.mxu0 %v3645
    %v3647 = vpop.f32.mrf.mxu0
    %v3648 = vadd.f32 %v3287, %v3647
    %v3649 = vand.u32 %v1705, 4294901760
    %3650 = vmatmul.f32.gmra.mxu0 %v3649
    %v3651 = vpop.f32.mrf.mxu0
    %v3652 = vadd.f32 %v3293, %v3651
    %v3653 = vand.u32 %v1706, 4294901760
    %3654 = vmatmul.f32.gmra.mxu0 %v3653
    %v3655 = vpop.f32.mrf.mxu0
    %v3656 = vadd.f32 %v3299, %v3655
    %v3657 = vand.u32 %v1707, 4294901760
    %3658 = vmatmul.f32.gmra.mxu0 %v3657
    %v3659 = vpop.f32.mrf.mxu0
    %v3660 = vadd.f32 %v3305, %v3659
    %v3661 = vand.u32 %v1708, 4294901760
    %3662 = vmatmul.f32.gmra.mxu0 %v3661
    %v3663 = vpop.f32.mrf.mxu0
    %v3664 = vadd.f32 %v3311, %v3663
    %v3665 = vand.u32 %v1709, 4294901760
    %3666 = vmatmul.f32.gmra.mxu0 %v3665
    %v3667 = vpop.f32.mrf.mxu0
    %v3668 = vadd.f32 %v3317, %v3667
    %v3669 = vand.u32 %v1710, 4294901760
    %3670 = vmatmul.f32.gmra.mxu0 %v3669
    %v3671 = vpop.f32.mrf.mxu0
    %v3672 = vadd.f32 %v3323, %v3671
    %v3673 = vand.u32 %v1711, 4294901760
    %3674 = vmatmul.f32.gmra.mxu0 %v3673
    %v3675 = vpop.f32.mrf.mxu0
    %v3676 = vadd.f32 %v3329, %v3675
    %v3677 = vand.u32 %v1712, 4294901760
    %3678 = vmatmul.f32.gmra.mxu0 %v3677
    %v3679 = vpop.f32.mrf.mxu0
    %v3680 = vadd.f32 %v3335, %v3679
    %v3681 = vand.u32 %v1713, 4294901760
    %3682 = vmatmul.f32.gmra.mxu0 %v3681
    %v3683 = vpop.f32.mrf.mxu0
    %v3684 = vadd.f32 %v3341, %v3683
    %v3685 = vand.u32 %v1714, 4294901760
    %3686 = vmatmul.f32.gmra.mxu0 %v3685
    %v3687 = vpop.f32.mrf.mxu0
    %v3688 = vadd.f32 %v3347, %v3687
    %v3689 = vand.u32 %v1715, 4294901760
    %3690 = vmatmul.f32.gmra.mxu0 %v3689
    %v3691 = vpop.f32.mrf.mxu0
    %v3692 = vadd.f32 %v3353, %v3691
    %v3693 = vand.u32 %v1716, 4294901760
    %3694 = vmatmul.f32.gmra.mxu0 %v3693
    %v3695 = vpop.f32.mrf.mxu0
    %v3696 = vadd.f32 %v3359, %v3695
    %v3697 = vand.u32 %v1717, 4294901760
    %3698 = vmatmul.f32.gmra.mxu0 %v3697
    %v3699 = vpop.f32.mrf.mxu0
    %v3700 = vadd.f32 %v3365, %v3699
    %v3701 = vand.u32 %v1718, 4294901760
    %3702 = vmatmul.f32.gmra.mxu0 %v3701
    %v3703 = vpop.f32.mrf.mxu0
    %v3704 = vadd.f32 %v3371, %v3703
    %v3705 = vand.u32 %v1719, 4294901760
    %3706 = vmatmul.f32.gmra.mxu0 %v3705
    %v3707 = vpop.f32.mrf.mxu0
    %v3708 = vadd.f32 %v3377, %v3707
    %v3709 = vand.u32 %v1720, 4294901760
    %3710 = vmatmul.f32.gmra.mxu0 %v3709
    %v3711 = vpop.f32.mrf.mxu0
    %v3712 = vadd.f32 %v3383, %v3711
    %v3713 = vand.u32 %v1721, 4294901760
    %3714 = vmatmul.f32.gmra.mxu0 %v3713
    %v3715 = vpop.f32.mrf.mxu0
    %v3716 = vadd.f32 %v3389, %v3715
    %v3717 = vand.u32 %v1722, 4294901760
    %3718 = vmatmul.f32.gmra.mxu0 %v3717
    %v3719 = vpop.f32.mrf.mxu0
    %v3720 = vadd.f32 %v3395, %v3719
    %v3721 = vand.u32 %v1723, 4294901760
    %3722 = vmatmul.f32.gmra.mxu0 %v3721
    %v3723 = vpop.f32.mrf.mxu0
    %v3724 = vadd.f32 %v3401, %v3723
    %v3725 = vand.u32 %v1724, 4294901760
    %3726 = vmatmul.f32.gmra.mxu0 %v3725
    %v3727 = vpop.f32.mrf.mxu0
    %v3728 = vadd.f32 %v3407, %v3727
    %3729 = vdwg.mxu0
    %v3730 = vand.u32 %v1660, 4294901760
    %3731 = vmatpush.msra.mxu0 %v3730
    %v3732 = vand.u32 %v1659, 4294901760
    %3733 = vmatpush.msra.mxu0 %v3732
    %v3734 = vand.u32 %v1658, 4294901760
    %3735 = vmatpush.msra.mxu0 %v3734
    %v3736 = vand.u32 %v1657, 4294901760
    %3737 = vmatpush.msra.mxu0 %v3736
    %v3738 = vand.u32 %v1656, 4294901760
    %3739 = vmatpush.msra.mxu0 %v3738
    %v3740 = vand.u32 %v1655, 4294901760
    %3741 = vmatpush.msra.mxu0 %v3740
    %v3742 = vand.u32 %v1654, 4294901760
    %3743 = vmatpush.msra.mxu0 %v3742
    %v3744 = vand.u32 %v1653, 4294901760
    %3745 = vmatpush.msra.mxu0 %v3744
    %v3746 = vand.u32 %v1652, 4294901760
    %3747 = vmatpush.msra.mxu0 %v3746
    %v3748 = vand.u32 %v1651, 4294901760
    %3749 = vmatpush.msra.mxu0 %v3748
    %v3750 = vand.u32 %v1650, 4294901760
    %3751 = vmatpush.msra.mxu0 %v3750
    %v3752 = vand.u32 %v1649, 4294901760
    %3753 = vmatpush.msra.mxu0 %v3752
    %v3754 = vand.u32 %v1648, 4294901760
    %3755 = vmatpush.msra.mxu0 %v3754
    %v3756 = vand.u32 %v1647, 4294901760
    %3757 = vmatpush.msra.mxu0 %v3756
    %v3758 = vand.u32 %v1646, 4294901760
    %3759 = vmatpush.msra.mxu0 %v3758
    %v3760 = vand.u32 %v1645, 4294901760
    %3761 = vmatpush.msra.mxu0 %v3760
    %v3762 = vand.u32 %v1661, 4294901760
    %3763 = vmatmul.f32.gmra.mxu0 %v3762
    %v3764 = vpop.f32.mrf.mxu0
    %v3765 = vadd.f32 %v3476, %v3764
    %v3766 = vand.u32 %v1662, 4294901760
    %3767 = vmatmul.f32.gmra.mxu0 %v3766
    %v3768 = vpop.f32.mrf.mxu0
    %v3769 = vadd.f32 %v3480, %v3768
    %v3770 = vand.u32 %v1663, 4294901760
    %3771 = vmatmul.f32.gmra.mxu0 %v3770
    %v3772 = vpop.f32.mrf.mxu0
    %v3773 = vadd.f32 %v3484, %v3772
    %v3774 = vand.u32 %v1664, 4294901760
    %3775 = vmatmul.f32.gmra.mxu0 %v3774
    %v3776 = vpop.f32.mrf.mxu0
    %v3777 = vadd.f32 %v3488, %v3776
    %v3778 = vand.u32 %v1665, 4294901760
    %3779 = vmatmul.f32.gmra.mxu0 %v3778
    %v3780 = vpop.f32.mrf.mxu0
    %v3781 = vadd.f32 %v3492, %v3780
    %v3782 = vand.u32 %v1666, 4294901760
    %3783 = vmatmul.f32.gmra.mxu0 %v3782
    %v3784 = vpop.f32.mrf.mxu0
    %v3785 = vadd.f32 %v3496, %v3784
    %v3786 = vand.u32 %v1667, 4294901760
    %3787 = vmatmul.f32.gmra.mxu0 %v3786
    %v3788 = vpop.f32.mrf.mxu0
    %v3789 = vadd.f32 %v3500, %v3788
    %v3790 = vand.u32 %v1668, 4294901760
    %3791 = vmatmul.f32.gmra.mxu0 %v3790
    %v3792 = vpop.f32.mrf.mxu0
    %v3793 = vadd.f32 %v3504, %v3792
    %v3794 = vand.u32 %v1669, 4294901760
    %3795 = vmatmul.f32.gmra.mxu0 %v3794
    %v3796 = vpop.f32.mrf.mxu0
    %v3797 = vadd.f32 %v3508, %v3796
    %v3798 = vand.u32 %v1670, 4294901760
    %3799 = vmatmul.f32.gmra.mxu0 %v3798
    %v3800 = vpop.f32.mrf.mxu0
    %v3801 = vadd.f32 %v3512, %v3800
    %v3802 = vand.u32 %v1671, 4294901760
    %3803 = vmatmul.f32.gmra.mxu0 %v3802
    %v3804 = vpop.f32.mrf.mxu0
    %v3805 = vadd.f32 %v3516, %v3804
    %v3806 = vand.u32 %v1672, 4294901760
    %3807 = vmatmul.f32.gmra.mxu0 %v3806
    %v3808 = vpop.f32.mrf.mxu0
    %v3809 = vadd.f32 %v3520, %v3808
    %v3810 = vand.u32 %v1673, 4294901760
    %3811 = vmatmul.f32.gmra.mxu0 %v3810
    %v3812 = vpop.f32.mrf.mxu0
    %v3813 = vadd.f32 %v3524, %v3812
    %v3814 = vand.u32 %v1674, 4294901760
    %3815 = vmatmul.f32.gmra.mxu0 %v3814
    %v3816 = vpop.f32.mrf.mxu0
    %v3817 = vadd.f32 %v3528, %v3816
    %v3818 = vand.u32 %v1675, 4294901760
    %3819 = vmatmul.f32.gmra.mxu0 %v3818
    %v3820 = vpop.f32.mrf.mxu0
    %v3821 = vadd.f32 %v3532, %v3820
    %v3822 = vand.u32 %v1676, 4294901760
    %3823 = vmatmul.f32.gmra.mxu0 %v3822
    %v3824 = vpop.f32.mrf.mxu0
    %v3825 = vadd.f32 %v3536, %v3824
    %v3826 = vand.u32 %v1677, 4294901760
    %3827 = vmatmul.f32.gmra.mxu0 %v3826
    %v3828 = vpop.f32.mrf.mxu0
    %v3829 = vadd.f32 %v3540, %v3828
    %v3830 = vand.u32 %v1678, 4294901760
    %3831 = vmatmul.f32.gmra.mxu0 %v3830
    %v3832 = vpop.f32.mrf.mxu0
    %v3833 = vadd.f32 %v3544, %v3832
    %v3834 = vand.u32 %v1679, 4294901760
    %3835 = vmatmul.f32.gmra.mxu0 %v3834
    %v3836 = vpop.f32.mrf.mxu0
    %v3837 = vadd.f32 %v3548, %v3836
    %v3838 = vand.u32 %v1680, 4294901760
    %3839 = vmatmul.f32.gmra.mxu0 %v3838
    %v3840 = vpop.f32.mrf.mxu0
    %v3841 = vadd.f32 %v3552, %v3840
    %v3842 = vand.u32 %v1681, 4294901760
    %3843 = vmatmul.f32.gmra.mxu0 %v3842
    %v3844 = vpop.f32.mrf.mxu0
    %v3845 = vadd.f32 %v3556, %v3844
    %v3846 = vand.u32 %v1682, 4294901760
    %3847 = vmatmul.f32.gmra.mxu0 %v3846
    %v3848 = vpop.f32.mrf.mxu0
    %v3849 = vadd.f32 %v3560, %v3848
    %v3850 = vand.u32 %v1683, 4294901760
    %3851 = vmatmul.f32.gmra.mxu0 %v3850
    %v3852 = vpop.f32.mrf.mxu0
    %v3853 = vadd.f32 %v3564, %v3852
    %v3854 = vand.u32 %v1684, 4294901760
    %3855 = vmatmul.f32.gmra.mxu0 %v3854
    %v3856 = vpop.f32.mrf.mxu0
    %v3857 = vadd.f32 %v3568, %v3856
    %v3858 = vand.u32 %v1685, 4294901760
    %3859 = vmatmul.f32.gmra.mxu0 %v3858
    %v3860 = vpop.f32.mrf.mxu0
    %v3861 = vadd.f32 %v3572, %v3860
    %v3862 = vand.u32 %v1686, 4294901760
    %3863 = vmatmul.f32.gmra.mxu0 %v3862
    %v3864 = vpop.f32.mrf.mxu0
    %v3865 = vadd.f32 %v3576, %v3864
    %v3866 = vand.u32 %v1687, 4294901760
    %3867 = vmatmul.f32.gmra.mxu0 %v3866
    %v3868 = vpop.f32.mrf.mxu0
    %v3869 = vadd.f32 %v3580, %v3868
    %v3870 = vand.u32 %v1688, 4294901760
    %3871 = vmatmul.f32.gmra.mxu0 %v3870
    %v3872 = vpop.f32.mrf.mxu0
    %v3873 = vadd.f32 %v3584, %v3872
    %v3874 = vand.u32 %v1689, 4294901760
    %3875 = vmatmul.f32.gmra.mxu0 %v3874
    %v3876 = vpop.f32.mrf.mxu0
    %v3877 = vadd.f32 %v3588, %v3876
    %v3878 = vand.u32 %v1690, 4294901760
    %3879 = vmatmul.f32.gmra.mxu0 %v3878
    %v3880 = vpop.f32.mrf.mxu0
    %v3881 = vadd.f32 %v3592, %v3880
    %v3882 = vand.u32 %v1691, 4294901760
    %3883 = vmatmul.f32.gmra.mxu0 %v3882
    %v3884 = vpop.f32.mrf.mxu0
    %v3885 = vadd.f32 %v3596, %v3884
    %v3886 = vand.u32 %v1692, 4294901760
    %3887 = vmatmul.f32.gmra.mxu0 %v3886
    %v3888 = vpop.f32.mrf.mxu0
    %v3889 = vadd.f32 %v3600, %v3888
    %v3890 = vand.u32 %v1693, 4294901760
    %3891 = vmatmul.f32.gmra.mxu0 %v3890
    %v3892 = vpop.f32.mrf.mxu0
    %v3893 = vadd.f32 %v3604, %v3892
    %v3894 = vand.u32 %v1694, 4294901760
    %3895 = vmatmul.f32.gmra.mxu0 %v3894
    %v3896 = vpop.f32.mrf.mxu0
    %v3897 = vadd.f32 %v3608, %v3896
    %v3898 = vand.u32 %v1695, 4294901760
    %3899 = vmatmul.f32.gmra.mxu0 %v3898
    %v3900 = vpop.f32.mrf.mxu0
    %v3901 = vadd.f32 %v3612, %v3900
    %v3902 = vand.u32 %v1696, 4294901760
    %3903 = vmatmul.f32.gmra.mxu0 %v3902
    %v3904 = vpop.f32.mrf.mxu0
    %v3905 = vadd.f32 %v3616, %v3904
    %v3906 = vand.u32 %v1697, 4294901760
    %3907 = vmatmul.f32.gmra.mxu0 %v3906
    %v3908 = vpop.f32.mrf.mxu0
    %v3909 = vadd.f32 %v3620, %v3908
    %v3910 = vand.u32 %v1698, 4294901760
    %3911 = vmatmul.f32.gmra.mxu0 %v3910
    %v3912 = vpop.f32.mrf.mxu0
    %v3913 = vadd.f32 %v3624, %v3912
    %v3914 = vand.u32 %v1699, 4294901760
    %3915 = vmatmul.f32.gmra.mxu0 %v3914
    %v3916 = vpop.f32.mrf.mxu0
    %v3917 = vadd.f32 %v3628, %v3916
    %v3918 = vand.u32 %v1700, 4294901760
    %3919 = vmatmul.f32.gmra.mxu0 %v3918
    %v3920 = vpop.f32.mrf.mxu0
    %v3921 = vadd.f32 %v3632, %v3920
    %v3922 = vand.u32 %v1701, 4294901760
    %3923 = vmatmul.f32.gmra.mxu0 %v3922
    %v3924 = vpop.f32.mrf.mxu0
    %v3925 = vadd.f32 %v3636, %v3924
    %v3926 = vand.u32 %v1702, 4294901760
    %3927 = vmatmul.f32.gmra.mxu0 %v3926
    %v3928 = vpop.f32.mrf.mxu0
    %v3929 = vadd.f32 %v3640, %v3928
    %v3930 = vand.u32 %v1703, 4294901760
    %3931 = vmatmul.f32.gmra.mxu0 %v3930
    %v3932 = vpop.f32.mrf.mxu0
    %v3933 = vadd.f32 %v3644, %v3932
    %v3934 = vand.u32 %v1704, 4294901760
    %3935 = vmatmul.f32.gmra.mxu0 %v3934
    %v3936 = vpop.f32.mrf.mxu0
    %v3937 = vadd.f32 %v3648, %v3936
    %v3938 = vand.u32 %v1705, 4294901760
    %3939 = vmatmul.f32.gmra.mxu0 %v3938
    %v3940 = vpop.f32.mrf.mxu0
    %v3941 = vadd.f32 %v3652, %v3940
    %v3942 = vand.u32 %v1706, 4294901760
    %3943 = vmatmul.f32.gmra.mxu0 %v3942
    %v3944 = vpop.f32.mrf.mxu0
    %v3945 = vadd.f32 %v3656, %v3944
    %v3946 = vand.u32 %v1707, 4294901760
    %3947 = vmatmul.f32.gmra.mxu0 %v3946
    %v3948 = vpop.f32.mrf.mxu0
    %v3949 = vadd.f32 %v3660, %v3948
    %v3950 = vand.u32 %v1708, 4294901760
    %3951 = vmatmul.f32.gmra.mxu0 %v3950
    %v3952 = vpop.f32.mrf.mxu0
    %v3953 = vadd.f32 %v3664, %v3952
    %v3954 = vand.u32 %v1709, 4294901760
    %3955 = vmatmul.f32.gmra.mxu0 %v3954
    %v3956 = vpop.f32.mrf.mxu0
    %v3957 = vadd.f32 %v3668, %v3956
    %v3958 = vand.u32 %v1710, 4294901760
    %3959 = vmatmul.f32.gmra.mxu0 %v3958
    %v3960 = vpop.f32.mrf.mxu0
    %v3961 = vadd.f32 %v3672, %v3960
    %v3962 = vand.u32 %v1711, 4294901760
    %3963 = vmatmul.f32.gmra.mxu0 %v3962
    %v3964 = vpop.f32.mrf.mxu0
    %v3965 = vadd.f32 %v3676, %v3964
    %v3966 = vand.u32 %v1712, 4294901760
    %3967 = vmatmul.f32.gmra.mxu0 %v3966
    %v3968 = vpop.f32.mrf.mxu0
    %v3969 = vadd.f32 %v3680, %v3968
    %v3970 = vand.u32 %v1713, 4294901760
    %3971 = vmatmul.f32.gmra.mxu0 %v3970
    %v3972 = vpop.f32.mrf.mxu0
    %v3973 = vadd.f32 %v3684, %v3972
    %v3974 = vand.u32 %v1714, 4294901760
    %3975 = vmatmul.f32.gmra.mxu0 %v3974
    %v3976 = vpop.f32.mrf.mxu0
    %v3977 = vadd.f32 %v3688, %v3976
    %v3978 = vand.u32 %v1715, 4294901760
    %3979 = vmatmul.f32.gmra.mxu0 %v3978
    %v3980 = vpop.f32.mrf.mxu0
    %v3981 = vadd.f32 %v3692, %v3980
    %v3982 = vand.u32 %v1716, 4294901760
    %3983 = vmatmul.f32.gmra.mxu0 %v3982
    %v3984 = vpop.f32.mrf.mxu0
    %v3985 = vadd.f32 %v3696, %v3984
    %v3986 = vand.u32 %v1717, 4294901760
    %3987 = vmatmul.f32.gmra.mxu0 %v3986
    %v3988 = vpop.f32.mrf.mxu0
    %v3989 = vadd.f32 %v3700, %v3988
    %v3990 = vand.u32 %v1718, 4294901760
    %3991 = vmatmul.f32.gmra.mxu0 %v3990
    %v3992 = vpop.f32.mrf.mxu0
    %v3993 = vadd.f32 %v3704, %v3992
    %v3994 = vand.u32 %v1719, 4294901760
    %3995 = vmatmul.f32.gmra.mxu0 %v3994
    %v3996 = vpop.f32.mrf.mxu0
    %v3997 = vadd.f32 %v3708, %v3996
    %v3998 = vand.u32 %v1720, 4294901760
    %3999 = vmatmul.f32.gmra.mxu0 %v3998
    %v4000 = vpop.f32.mrf.mxu0
    %v4001 = vadd.f32 %v3712, %v4000
    %v4002 = vand.u32 %v1721, 4294901760
    %4003 = vmatmul.f32.gmra.mxu0 %v4002
    %v4004 = vpop.f32.mrf.mxu0
    %v4005 = vadd.f32 %v3716, %v4004
    %v4006 = vand.u32 %v1722, 4294901760
    %4007 = vmatmul.f32.gmra.mxu0 %v4006
    %v4008 = vpop.f32.mrf.mxu0
    %v4009 = vadd.f32 %v3720, %v4008
    %v4010 = vand.u32 %v1723, 4294901760
    %4011 = vmatmul.f32.gmra.mxu0 %v4010
    %v4012 = vpop.f32.mrf.mxu0
    %v4013 = vadd.f32 %v3724, %v4012
    %v4014 = vand.u32 %v1724, 4294901760
    %4015 = vmatmul.f32.gmra.mxu0 %v4014
    %v4016 = vpop.f32.mrf.mxu0
    %v4017 = vadd.f32 %v3728, %v4016
    %4018 = vdwg.mxu0
    %vm4019 = vcmask 261120
    %4020 = vst.msk [vmem:[#allocation2] sm:$0xff] %vm4019, %v3765
    %4021 = vst.msk [vmem:[#allocation2 + $0x20] sm:$0xff] %vm4019, %v3769
    %4022 = vst.msk [vmem:[#allocation2 + $0x40] sm:$0xff] %vm4019, %v3773
    %4023 = vst.msk [vmem:[#allocation2 + $0x60] sm:$0xff] %vm4019, %v3777
    %4028 = vrot.lane.b32.xlu0 %v3781, 32
    %v4029 = vpop.permute.xlu0 %4028
    %4030 = vrot.lane.b32.xlu0 %v3785, 32
    %v4031 = vpop.permute.xlu0 %4030
    %4032 = vrot.lane.b32.xlu0 %v3789, 32
    %v4033 = vpop.permute.xlu0 %4032
    %4034 = vrot.lane.b32.xlu0 %v3793, 32
    %v4035 = vpop.permute.xlu0 %4034
    %vm4040 = vcmask 523520
    %4041 = vst.msk [vmem:[#allocation2] sm:$0xff] %vm4040, %v4029
    %4042 = vst.msk [vmem:[#allocation2 + $0x20] sm:$0xff] %vm4040, %v4031
    %4043 = vst.msk [vmem:[#allocation2 + $0x40] sm:$0xff] %vm4040, %v4033
    %4044 = vst.msk [vmem:[#allocation2 + $0x60] sm:$0xff] %vm4040, %v4035
    %4049 = vrot.lane.b32.xlu0 %v3797, 64
    %v4050 = vpop.permute.xlu0 %4049
    %4051 = vrot.lane.b32.xlu0 %v3801, 64
    %v4052 = vpop.permute.xlu0 %4051
    %4053 = vrot.lane.b32.xlu0 %v3805, 64
    %v4054 = vpop.permute.xlu0 %4053
    %4055 = vrot.lane.b32.xlu0 %v3809, 64
    %v4056 = vpop.permute.xlu0 %4055
    %vm4061 = vcmask 785920
    %4062 = vst.msk [vmem:[#allocation2] sm:$0xff] %vm4061, %v4050
    %4063 = vst.msk [vmem:[#allocation2 + $0x20] sm:$0xff] %vm4061, %v4052
    %4064 = vst.msk [vmem:[#allocation2 + $0x40] sm:$0xff] %vm4061, %v4054
    %4065 = vst.msk [vmem:[#allocation2 + $0x60] sm:$0xff] %vm4061, %v4056
    %4070 = vrot.lane.b32.xlu0 %v3813, 96
    %v4071 = vpop.permute.xlu0 %4070
    %4072 = vrot.lane.b32.xlu0 %v3817, 96
    %v4073 = vpop.permute.xlu0 %4072
    %4074 = vrot.lane.b32.xlu0 %v3821, 96
    %v4075 = vpop.permute.xlu0 %4074
    %4076 = vrot.lane.b32.xlu0 %v3825, 96
    %v4077 = vpop.permute.xlu0 %4076
    %vm4082 = vcmask 1048320
    %4083 = vst.msk [vmem:[#allocation2] sm:$0xff] %vm4082, %v4071
    %4084 = vst.msk [vmem:[#allocation2 + $0x20] sm:$0xff] %vm4082, %v4073
    %4085 = vst.msk [vmem:[#allocation2 + $0x40] sm:$0xff] %vm4082, %v4075
    %4086 = vst.msk [vmem:[#allocation2 + $0x60] sm:$0xff] %vm4082, %v4077
    %4087 = vst.msk [vmem:[#allocation2 + $0x8] sm:$0xff] %vm4019, %v3829
    %4088 = vst.msk [vmem:[#allocation2 + $0x28] sm:$0xff] %vm4019, %v3833
    %4089 = vst.msk [vmem:[#allocation2 + $0x48] sm:$0xff] %vm4019, %v3837
    %4090 = vst.msk [vmem:[#allocation2 + $0x68] sm:$0xff] %vm4019, %v3841
    %4095 = vrot.lane.b32.xlu0 %v3845, 32
    %v4096 = vpop.permute.xlu0 %4095
    %4097 = vrot.lane.b32.xlu0 %v3849, 32
    %v4098 = vpop.permute.xlu0 %4097
    %4099 = vrot.lane.b32.xlu0 %v3853, 32
    %v4100 = vpop.permute.xlu0 %4099
    %4101 = vrot.lane.b32.xlu0 %v3857, 32
    %v4102 = vpop.permute.xlu0 %4101
    %4107 = vst.msk [vmem:[#allocation2 + $0x8] sm:$0xff] %vm4040, %v4096
    %4108 = vst.msk [vmem:[#allocation2 + $0x28] sm:$0xff] %vm4040, %v4098
    %4109 = vst.msk [vmem:[#allocation2 + $0x48] sm:$0xff] %vm4040, %v4100
    %4110 = vst.msk [vmem:[#allocation2 + $0x68] sm:$0xff] %vm4040, %v4102
    %4115 = vrot.lane.b32.xlu0 %v3861, 64
    %v4116 = vpop.permute.xlu0 %4115
    %4117 = vrot.lane.b32.xlu0 %v3865, 64
    %v4118 = vpop.permute.xlu0 %4117
    %4119 = vrot.lane.b32.xlu0 %v3869, 64
    %v4120 = vpop.permute.xlu0 %4119
    %4121 = vrot.lane.b32.xlu0 %v3873, 64
    %v4122 = vpop.permute.xlu0 %4121
    %4127 = vst.msk [vmem:[#allocation2 + $0x8] sm:$0xff] %vm4061, %v4116
    %4128 = vst.msk [vmem:[#allocation2 + $0x28] sm:$0xff] %vm4061, %v4118
    %4129 = vst.msk [vmem:[#allocation2 + $0x48] sm:$0xff] %vm4061, %v4120
    %4130 = vst.msk [vmem:[#allocation2 + $0x68] sm:$0xff] %vm4061, %v4122
    %4135 = vrot.lane.b32.xlu0 %v3877, 96
    %v4136 = vpop.permute.xlu0 %4135
    %4137 = vrot.lane.b32.xlu0 %v3881, 96
    %v4138 = vpop.permute.xlu0 %4137
    %4139 = vrot.lane.b32.xlu0 %v3885, 96
    %v4140 = vpop.permute.xlu0 %4139
    %4141 = vrot.lane.b32.xlu0 %v3889, 96
    %v4142 = vpop.permute.xlu0 %4141
    %4147 = vst.msk [vmem:[#allocation2 + $0x8] sm:$0xff] %vm4082, %v4136
    %4148 = vst.msk [vmem:[#allocation2 + $0x28] sm:$0xff] %vm4082, %v4138
    %4149 = vst.msk [vmem:[#allocation2 + $0x48] sm:$0xff] %vm4082, %v4140
    %4150 = vst.msk [vmem:[#allocation2 + $0x68] sm:$0xff] %vm4082, %v4142
    %4151 = vst.msk [vmem:[#allocation2 + $0x10] sm:$0xff] %vm4019, %v3893
    %4152 = vst.msk [vmem:[#allocation2 + $0x30] sm:$0xff] %vm4019, %v3897
    %4153 = vst.msk [vmem:[#allocation2 + $0x50] sm:$0xff] %vm4019, %v3901
    %4154 = vst.msk [vmem:[#allocation2 + $0x70] sm:$0xff] %vm4019, %v3905
    %4159 = vrot.lane.b32.xlu0 %v3909, 32
    %v4160 = vpop.permute.xlu0 %4159
    %4161 = vrot.lane.b32.xlu0 %v3913, 32
    %v4162 = vpop.permute.xlu0 %4161
    %4163 = vrot.lane.b32.xlu0 %v3917, 32
    %v4164 = vpop.permute.xlu0 %4163
    %4165 = vrot.lane.b32.xlu0 %v3921, 32
    %v4166 = vpop.permute.xlu0 %4165
    %4171 = vst.msk [vmem:[#allocation2 + $0x10] sm:$0xff] %vm4040, %v4160
    %4172 = vst.msk [vmem:[#allocation2 + $0x30] sm:$0xff] %vm4040, %v4162
    %4173 = vst.msk [vmem:[#allocation2 + $0x50] sm:$0xff] %vm4040, %v4164
    %4174 = vst.msk [vmem:[#allocation2 + $0x70] sm:$0xff] %vm4040, %v4166
    %4179 = vrot.lane.b32.xlu0 %v3925, 64
    %v4180 = vpop.permute.xlu0 %4179
    %4181 = vrot.lane.b32.xlu0 %v3929, 64
    %v4182 = vpop.permute.xlu0 %4181
    %4183 = vrot.lane.b32.xlu0 %v3933, 64
    %v4184 = vpop.permute.xlu0 %4183
    %4185 = vrot.lane.b32.xlu0 %v3937, 64
    %v4186 = vpop.permute.xlu0 %4185
    %4191 = vst.msk [vmem:[#allocation2 + $0x10] sm:$0xff] %vm4061, %v4180
    %4192 = vst.msk [vmem:[#allocation2 + $0x30] sm:$0xff] %vm4061, %v4182
    %4193 = vst.msk [vmem:[#allocation2 + $0x50] sm:$0xff] %vm4061, %v4184
    %4194 = vst.msk [vmem:[#allocation2 + $0x70] sm:$0xff] %vm4061, %v4186
    %4199 = vrot.lane.b32.xlu0 %v3941, 96
    %v4200 = vpop.permute.xlu0 %4199
    %4201 = vrot.lane.b32.xlu0 %v3945, 96
    %v4202 = vpop.permute.xlu0 %4201
    %4203 = vrot.lane.b32.xlu0 %v3949, 96
    %v4204 = vpop.permute.xlu0 %4203
    %4205 = vrot.lane.b32.xlu0 %v3953, 96
    %v4206 = vpop.permute.xlu0 %4205
    %4211 = vst.msk [vmem:[#allocation2 + $0x10] sm:$0xff] %vm4082, %v4200
    %4212 = vst.msk [vmem:[#allocation2 + $0x30] sm:$0xff] %vm4082, %v4202
    %4213 = vst.msk [vmem:[#allocation2 + $0x50] sm:$0xff] %vm4082, %v4204
    %4214 = vst.msk [vmem:[#allocation2 + $0x70] sm:$0xff] %vm4082, %v4206
    %4215 = vst.msk [vmem:[#allocation2 + $0x18] sm:$0xff] %vm4019, %v3957
    %4216 = vst.msk [vmem:[#allocation2 + $0x38] sm:$0xff] %vm4019, %v3961
    %4217 = vst.msk [vmem:[#allocation2 + $0x58] sm:$0xff] %vm4019, %v3965
    %4218 = vst.msk [vmem:[#allocation2 + $0x78] sm:$0xff] %vm4019, %v3969
    %4223 = vrot.lane.b32.xlu0 %v3973, 32
    %v4224 = vpop.permute.xlu0 %4223
    %4225 = vrot.lane.b32.xlu0 %v3977, 32
    %v4226 = vpop.permute.xlu0 %4225
    %4227 = vrot.lane.b32.xlu0 %v3981, 32
    %v4228 = vpop.permute.xlu0 %4227
    %4229 = vrot.lane.b32.xlu0 %v3985, 32
    %v4230 = vpop.permute.xlu0 %4229
    %4235 = vst.msk [vmem:[#allocation2 + $0x18] sm:$0xff] %vm4040, %v4224
    %4236 = vst.msk [vmem:[#allocation2 + $0x38] sm:$0xff] %vm4040, %v4226
    %4237 = vst.msk [vmem:[#allocation2 + $0x58] sm:$0xff] %vm4040, %v4228
    %4238 = vst.msk [vmem:[#allocation2 + $0x78] sm:$0xff] %vm4040, %v4230
    %4243 = vrot.lane.b32.xlu0 %v3989, 64
    %v4244 = vpop.permute.xlu0 %4243
    %4245 = vrot.lane.b32.xlu0 %v3993, 64
    %v4246 = vpop.permute.xlu0 %4245
    %4247 = vrot.lane.b32.xlu0 %v3997, 64
    %v4248 = vpop.permute.xlu0 %4247
    %4249 = vrot.lane.b32.xlu0 %v4001, 64
    %v4250 = vpop.permute.xlu0 %4249
    %4255 = vst.msk [vmem:[#allocation2 + $0x18] sm:$0xff] %vm4061, %v4244
    %4256 = vst.msk [vmem:[#allocation2 + $0x38] sm:$0xff] %vm4061, %v4246
    %4257 = vst.msk [vmem:[#allocation2 + $0x58] sm:$0xff] %vm4061, %v4248
    %4258 = vst.msk [vmem:[#allocation2 + $0x78] sm:$0xff] %vm4061, %v4250
    %4263 = vrot.lane.b32.xlu0 %v4005, 96
    %v4264 = vpop.permute.xlu0 %4263
    %4265 = vrot.lane.b32.xlu0 %v4009, 96
    %v4266 = vpop.permute.xlu0 %4265
    %4267 = vrot.lane.b32.xlu0 %v4013, 96
    %v4268 = vpop.permute.xlu0 %4267
    %4269 = vrot.lane.b32.xlu0 %v4017, 96
    %v4270 = vpop.permute.xlu0 %4269
    %4275 = vst.msk [vmem:[#allocation2 + $0x18] sm:$0xff] %vm4082, %v4264
    %4276 = vst.msk [vmem:[#allocation2 + $0x38] sm:$0xff] %vm4082, %v4266
    %4277 = vst.msk [vmem:[#allocation2 + $0x58] sm:$0xff] %vm4082, %v4268
    %4278 = vst.msk [vmem:[#allocation2 + $0x78] sm:$0xff] %vm4082, %v4270
    %v4279 = vld [vmem:[#allocation2] sm:$0xff]
    %v4280 = vld [vmem:[#allocation2 + $0x8] sm:$0xff]
    %v4281 = vld [vmem:[#allocation2 + $0x10] sm:$0xff]
    %v4282 = vld [vmem:[#allocation2 + $0x18] sm:$0xff]
    %v4283 = vld [vmem:[#allocation2 + $0x20] sm:$0xff]
    %v4284 = vld [vmem:[#allocation2 + $0x28] sm:$0xff]
    %v4285 = vld [vmem:[#allocation2 + $0x30] sm:$0xff]
    %v4286 = vld [vmem:[#allocation2 + $0x38] sm:$0xff]
    %v4287 = vld [vmem:[#allocation2 + $0x40] sm:$0xff]
    %v4288 = vld [vmem:[#allocation2 + $0x48] sm:$0xff]
    %v4289 = vld [vmem:[#allocation2 + $0x50] sm:$0xff]
    %v4290 = vld [vmem:[#allocation2 + $0x58] sm:$0xff]
    %v4291 = vld [vmem:[#allocation2 + $0x60] sm:$0xff]
    %v4292 = vld [vmem:[#allocation2 + $0x68] sm:$0xff]
    %v4293 = vld [vmem:[#allocation2 + $0x70] sm:$0xff]
    %v4294 = vld [vmem:[#allocation2 + $0x78] sm:$0xff]
    %v4295 = vld [vmem:[%s4 + $0xc0] sm:$0xff]
    %v4296 = vld [vmem:[%s4 + $0xc8] sm:$0xff]
    %v4297 = vld [vmem:[%s4 + $0xd0] sm:$0xff]
    %v4298 = vld [vmem:[%s4 + $0xd8] sm:$0xff]
    %v4299 = vld [vmem:[%s4 + $0xe0] sm:$0xff]
    %v4300 = vld [vmem:[%s4 + $0xe8] sm:$0xff]
    %v4301 = vld [vmem:[%s4 + $0xf0] sm:$0xff]
    %v4302 = vld [vmem:[%s4 + $0xf8] sm:$0xff]
    %v4303 = vld [vmem:[%s4 + $0x100] sm:$0xff]
    %v4304 = vld [vmem:[%s4 + $0x108] sm:$0xff]
    %v4305 = vld [vmem:[%s4 + $0x110] sm:$0xff]
    %v4306 = vld [vmem:[%s4 + $0x118] sm:$0xff]
    %v4307 = vld [vmem:[%s4 + $0x120] sm:$0xff]
    %v4308 = vld [vmem:[%s4 + $0x128] sm:$0xff]
    %v4309 = vld [vmem:[%s4 + $0x130] sm:$0xff]
    %v4310 = vld [vmem:[%s4 + $0x138] sm:$0xff]
    %v4311 = vld [vmem:[%s4 + $0x140] sm:$0xff]
    %v4312 = vld [vmem:[%s4 + $0x148] sm:$0xff]
    %v4313 = vld [vmem:[%s4 + $0x150] sm:$0xff]
    %v4314 = vld [vmem:[%s4 + $0x158] sm:$0xff]
    %v4315 = vld [vmem:[%s4 + $0x160] sm:$0xff]
    %v4316 = vld [vmem:[%s4 + $0x168] sm:$0xff]
    %v4317 = vld [vmem:[%s4 + $0x170] sm:$0xff]
    %v4318 = vld [vmem:[%s4 + $0x178] sm:$0xff]
    %v4319 = vld [vmem:[%s4 + $0x180] sm:$0xff]
    %v4320 = vld [vmem:[%s4 + $0x188] sm:$0xff]
    %v4321 = vld [vmem:[%s4 + $0x190] sm:$0xff]
    %v4322 = vld [vmem:[%s4 + $0x198] sm:$0xff]
    %v4323 = vld [vmem:[%s4 + $0x1a0] sm:$0xff]
    %v4324 = vld [vmem:[%s4 + $0x1a8] sm:$0xff]
    %v4325 = vld [vmem:[%s4 + $0x1b0] sm:$0xff]
    %v4326 = vld [vmem:[%s4 + $0x1b8] sm:$0xff]
    %v4327 = vld [vmem:[%s4 + $0x1c0] sm:$0xff]
    %v4328 = vld [vmem:[%s4 + $0x1c8] sm:$0xff]
    %v4329 = vld [vmem:[%s4 + $0x1d0] sm:$0xff]
    %v4330 = vld [vmem:[%s4 + $0x1d8] sm:$0xff]
    %v4331 = vld [vmem:[%s4 + $0x1e0] sm:$0xff]
    %v4332 = vld [vmem:[%s4 + $0x1e8] sm:$0xff]
    %v4333 = vld [vmem:[%s4 + $0x1f0] sm:$0xff]
    %v4334 = vld [vmem:[%s4 + $0x1f8] sm:$0xff]
    %v4335 = vld [vmem:[%s4 + $0x200] sm:$0xff]
    %v4336 = vld [vmem:[%s4 + $0x208] sm:$0xff]
    %v4337 = vld [vmem:[%s4 + $0x210] sm:$0xff]
    %v4338 = vld [vmem:[%s4 + $0x218] sm:$0xff]
    %v4339 = vld [vmem:[%s4 + $0x220] sm:$0xff]
    %v4340 = vld [vmem:[%s4 + $0x228] sm:$0xff]
    %v4341 = vld [vmem:[%s4 + $0x230] sm:$0xff]
    %v4342 = vld [vmem:[%s4 + $0x238] sm:$0xff]
    %v4343 = vld [vmem:[%s4 + $0x240] sm:$0xff]
    %v4344 = vld [vmem:[%s4 + $0x248] sm:$0xff]
    %v4345 = vld [vmem:[%s4 + $0x250] sm:$0xff]
    %v4346 = vld [vmem:[%s4 + $0x258] sm:$0xff]
    %v4347 = vld [vmem:[%s4 + $0x260] sm:$0xff]
    %v4348 = vld [vmem:[%s4 + $0x268] sm:$0xff]
    %v4349 = vld [vmem:[%s4 + $0x270] sm:$0xff]
    %v4350 = vld [vmem:[%s4 + $0x278] sm:$0xff]
    %v4351 = vld [vmem:[%s4 + $0x280] sm:$0xff]
    %v4352 = vld [vmem:[%s4 + $0x288] sm:$0xff]
    %v4353 = vld [vmem:[%s4 + $0x290] sm:$0xff]
    %v4354 = vld [vmem:[%s4 + $0x298] sm:$0xff]
    %v4355 = vld [vmem:[%s4 + $0x2a0] sm:$0xff]
    %v4356 = vld [vmem:[%s4 + $0x2a8] sm:$0xff]
    %v4357 = vld [vmem:[%s4 + $0x2b0] sm:$0xff]
    %v4358 = vld [vmem:[%s4 + $0x2b8] sm:$0xff]
    %v4359 = vld [vmem:[%s7 + $0x1] sm:$0x1]
    %v4360 = vperm.slane %v4359, 0
    %v4361 = vand.u32 %v4310, 4294901760
    %4362 = vmatpush.msra.mxu0 %v4361
    %v4363 = vand.u32 %v4309, 4294901760
    %4364 = vmatpush.msra.mxu0 %v4363
    %v4365 = vand.u32 %v4308, 4294901760
    %4366 = vmatpush.msra.mxu0 %v4365
    %v4367 = vand.u32 %v4307, 4294901760
    %4368 = vmatpush.msra.mxu0 %v4367
    %v4369 = vand.u32 %v4306, 4294901760
    %4370 = vmatpush.msra.mxu0 %v4369
    %v4371 = vand.u32 %v4305, 4294901760
    %4372 = vmatpush.msra.mxu0 %v4371
    %v4373 = vand.u32 %v4304, 4294901760
    %4374 = vmatpush.msra.mxu0 %v4373
    %v4375 = vand.u32 %v4303, 4294901760
    %4376 = vmatpush.msra.mxu0 %v4375
    %v4377 = vand.u32 %v4302, 4294901760
    %4378 = vmatpush.msra.mxu0 %v4377
    %v4379 = vand.u32 %v4301, 4294901760
    %4380 = vmatpush.msra.mxu0 %v4379
    %v4381 = vand.u32 %v4300, 4294901760
    %4382 = vmatpush.msra.mxu0 %v4381
    %v4383 = vand.u32 %v4299, 4294901760
    %4384 = vmatpush.msra.mxu0 %v4383
    %v4385 = vand.u32 %v4298, 4294901760
    %4386 = vmatpush.msra.mxu0 %v4385
    %v4387 = vand.u32 %v4297, 4294901760
    %4388 = vmatpush.msra.mxu0 %v4387
    %v4389 = vand.u32 %v4296, 4294901760
    %4390 = vmatpush.msra.mxu0 %v4389
    %v4391 = vand.u32 %v4295, 4294901760
    %4392 = vmatpush.msra.mxu0 %v4391
    %v4393 = vand.u32 %v4279, 4294901760
    %v4394 = vsub.f32 %v4279, %v4393
    %v4395 = vand.u32 %v4394, 4294901760
    %v4396 = vsub.f32 %v4394, %v4395
    %v4397 = vand.u32 %v4396, 4294901760
    %4398 = vmatmul.f32.gmra.mxu0 %v4397
    %v4399 = vpop.f32.mrf.mxu0
    %v4400 = vadd.f32 %v4360, %v4399
    %v4401 = vand.u32 %v4283, 4294901760
    %v4402 = vsub.f32 %v4283, %v4401
    %v4403 = vand.u32 %v4402, 4294901760
    %v4404 = vsub.f32 %v4402, %v4403
    %v4405 = vand.u32 %v4404, 4294901760
    %4406 = vmatmul.f32.gmra.mxu0 %v4405
    %v4407 = vpop.f32.mrf.mxu0
    %v4408 = vadd.f32 %v4360, %v4407
    %v4409 = vand.u32 %v4287, 4294901760
    %v4410 = vsub.f32 %v4287, %v4409
    %v4411 = vand.u32 %v4410, 4294901760
    %v4412 = vsub.f32 %v4410, %v4411
    %v4413 = vand.u32 %v4412, 4294901760
    %4414 = vmatmul.f32.gmra.mxu0 %v4413
    %v4415 = vpop.f32.mrf.mxu0
    %v4416 = vadd.f32 %v4360, %v4415
    %v4417 = vand.u32 %v4291, 4294901760
    %v4418 = vsub.f32 %v4291, %v4417
    %v4419 = vand.u32 %v4418, 4294901760
    %v4420 = vsub.f32 %v4418, %v4419
    %v4421 = vand.u32 %v4420, 4294901760
    %4422 = vmatmul.f32.gmra.mxu0 %v4421
    %v4423 = vpop.f32.mrf.mxu0
    %v4424 = vadd.f32 %v4360, %v4423
    %4425 = vdwg.mxu0
    %v4426 = vand.u32 %v4310, 4294901760
    %v4427 = vsub.f32 %v4310, %v4426
    %v4428 = vand.u32 %v4427, 4294901760
    %v4429 = vsub.f32 %v4427, %v4428
    %v4430 = vand.u32 %v4429, 4294901760
    %4431 = vmatpush.msra.mxu0 %v4430
    %v4432 = vand.u32 %v4309, 4294901760
    %v4433 = vsub.f32 %v4309, %v4432
    %v4434 = vand.u32 %v4433, 4294901760
    %v4435 = vsub.f32 %v4433, %v4434
    %v4436 = vand.u32 %v4435, 4294901760
    %4437 = vmatpush.msra.mxu0 %v4436
    %v4438 = vand.u32 %v4308, 4294901760
    %v4439 = vsub.f32 %v4308, %v4438
    %v4440 = vand.u32 %v4439, 4294901760
    %v4441 = vsub.f32 %v4439, %v4440
    %v4442 = vand.u32 %v4441, 4294901760
    %4443 = vmatpush.msra.mxu0 %v4442
    %v4444 = vand.u32 %v4307, 4294901760
    %v4445 = vsub.f32 %v4307, %v4444
    %v4446 = vand.u32 %v4445, 4294901760
    %v4447 = vsub.f32 %v4445, %v4446
    %v4448 = vand.u32 %v4447, 4294901760
    %4449 = vmatpush.msra.mxu0 %v4448
    %v4450 = vand.u32 %v4306, 4294901760
    %v4451 = vsub.f32 %v4306, %v4450
    %v4452 = vand.u32 %v4451, 4294901760
    %v4453 = vsub.f32 %v4451, %v4452
    %v4454 = vand.u32 %v4453, 4294901760
    %4455 = vmatpush.msra.mxu0 %v4454
    %v4456 = vand.u32 %v4305, 4294901760
    %v4457 = vsub.f32 %v4305, %v4456
    %v4458 = vand.u32 %v4457, 4294901760
    %v4459 = vsub.f32 %v4457, %v4458
    %v4460 = vand.u32 %v4459, 4294901760
    %4461 = vmatpush.msra.mxu0 %v4460
    %v4462 = vand.u32 %v4304, 4294901760
    %v4463 = vsub.f32 %v4304, %v4462
    %v4464 = vand.u32 %v4463, 4294901760
    %v4465 = vsub.f32 %v4463, %v4464
    %v4466 = vand.u32 %v4465, 4294901760
    %4467 = vmatpush.msra.mxu0 %v4466
    %v4468 = vand.u32 %v4303, 4294901760
    %v4469 = vsub.f32 %v4303, %v4468
    %v4470 = vand.u32 %v4469, 4294901760
    %v4471 = vsub.f32 %v4469, %v4470
    %v4472 = vand.u32 %v4471, 4294901760
    %4473 = vmatpush.msra.mxu0 %v4472
    %v4474 = vand.u32 %v4302, 4294901760
    %v4475 = vsub.f32 %v4302, %v4474
    %v4476 = vand.u32 %v4475, 4294901760
    %v4477 = vsub.f32 %v4475, %v4476
    %v4478 = vand.u32 %v4477, 4294901760
    %4479 = vmatpush.msra.mxu0 %v4478
    %v4480 = vand.u32 %v4301, 4294901760
    %v4481 = vsub.f32 %v4301, %v4480
    %v4482 = vand.u32 %v4481, 4294901760
    %v4483 = vsub.f32 %v4481, %v4482
    %v4484 = vand.u32 %v4483, 4294901760
    %4485 = vmatpush.msra.mxu0 %v4484
    %v4486 = vand.u32 %v4300, 4294901760
    %v4487 = vsub.f32 %v4300, %v4486
    %v4488 = vand.u32 %v4487, 4294901760
    %v4489 = vsub.f32 %v4487, %v4488
    %v4490 = vand.u32 %v4489, 4294901760
    %4491 = vmatpush.msra.mxu0 %v4490
    %v4492 = vand.u32 %v4299, 4294901760
    %v4493 = vsub.f32 %v4299, %v4492
    %v4494 = vand.u32 %v4493, 4294901760
    %v4495 = vsub.f32 %v4493, %v4494
    %v4496 = vand.u32 %v4495, 4294901760
    %4497 = vmatpush.msra.mxu0 %v4496
    %v4498 = vand.u32 %v4298, 4294901760
    %v4499 = vsub.f32 %v4298, %v4498
    %v4500 = vand.u32 %v4499, 4294901760
    %v4501 = vsub.f32 %v4499, %v4500
    %v4502 = vand.u32 %v4501, 4294901760
    %4503 = vmatpush.msra.mxu0 %v4502
    %v4504 = vand.u32 %v4297, 4294901760
    %v4505 = vsub.f32 %v4297, %v4504
    %v4506 = vand.u32 %v4505, 4294901760
    %v4507 = vsub.f32 %v4505, %v4506
    %v4508 = vand.u32 %v4507, 4294901760
    %4509 = vmatpush.msra.mxu0 %v4508
    %v4510 = vand.u32 %v4296, 4294901760
    %v4511 = vsub.f32 %v4296, %v4510
    %v4512 = vand.u32 %v4511, 4294901760
    %v4513 = vsub.f32 %v4511, %v4512
    %v4514 = vand.u32 %v4513, 4294901760
    %4515 = vmatpush.msra.mxu0 %v4514
    %v4516 = vand.u32 %v4295, 4294901760
    %v4517 = vsub.f32 %v4295, %v4516
    %v4518 = vand.u32 %v4517, 4294901760
    %v4519 = vsub.f32 %v4517, %v4518
    %v4520 = vand.u32 %v4519, 4294901760
    %4521 = vmatpush.msra.mxu0 %v4520
    %v4522 = vand.u32 %v4279, 4294901760
    %4523 = vmatmul.f32.gmra.mxu0 %v4522
    %v4524 = vpop.f32.mrf.mxu0
    %v4525 = vadd.f32 %v4400, %v4524
    %v4526 = vand.u32 %v4283, 4294901760
    %4527 = vmatmul.f32.gmra.mxu0 %v4526
    %v4528 = vpop.f32.mrf.mxu0
    %v4529 = vadd.f32 %v4408, %v4528
    %v4530 = vand.u32 %v4287, 4294901760
    %4531 = vmatmul.f32.gmra.mxu0 %v4530
    %v4532 = vpop.f32.mrf.mxu0
    %v4533 = vadd.f32 %v4416, %v4532
    %v4534 = vand.u32 %v4291, 4294901760
    %4535 = vmatmul.f32.gmra.mxu0 %v4534
    %v4536 = vpop.f32.mrf.mxu0
    %v4537 = vadd.f32 %v4424, %v4536
    %4538 = vdwg.mxu0
    %v4539 = vand.u32 %v4310, 4294901760
    %v4540 = vsub.f32 %v4310, %v4539
    %4541 = vmatpush.msra.mxu0 %v4540
    %v4542 = vand.u32 %v4309, 4294901760
    %v4543 = vsub.f32 %v4309, %v4542
    %4544 = vmatpush.msra.mxu0 %v4543
    %v4545 = vand.u32 %v4308, 4294901760
    %v4546 = vsub.f32 %v4308, %v4545
    %4547 = vmatpush.msra.mxu0 %v4546
    %v4548 = vand.u32 %v4307, 4294901760
    %v4549 = vsub.f32 %v4307, %v4548
    %4550 = vmatpush.msra.mxu0 %v4549
    %v4551 = vand.u32 %v4306, 4294901760
    %v4552 = vsub.f32 %v4306, %v4551
    %4553 = vmatpush.msra.mxu0 %v4552
    %v4554 = vand.u32 %v4305, 4294901760
    %v4555 = vsub.f32 %v4305, %v4554
    %4556 = vmatpush.msra.mxu0 %v4555
    %v4557 = vand.u32 %v4304, 4294901760
    %v4558 = vsub.f32 %v4304, %v4557
    %4559 = vmatpush.msra.mxu0 %v4558
    %v4560 = vand.u32 %v4303, 4294901760
    %v4561 = vsub.f32 %v4303, %v4560
    %4562 = vmatpush.msra.mxu0 %v4561
    %v4563 = vand.u32 %v4302, 4294901760
    %v4564 = vsub.f32 %v4302, %v4563
    %4565 = vmatpush.msra.mxu0 %v4564
    %v4566 = vand.u32 %v4301, 4294901760
    %v4567 = vsub.f32 %v4301, %v4566
    %4568 = vmatpush.msra.mxu0 %v4567
    %v4569 = vand.u32 %v4300, 4294901760
    %v4570 = vsub.f32 %v4300, %v4569
    %4571 = vmatpush.msra.mxu0 %v4570
    %v4572 = vand.u32 %v4299, 4294901760
    %v4573 = vsub.f32 %v4299, %v4572
    %4574 = vmatpush.msra.mxu0 %v4573
    %v4575 = vand.u32 %v4298, 4294901760
    %v4576 = vsub.f32 %v4298, %v4575
    %4577 = vmatpush.msra.mxu0 %v4576
    %v4578 = vand.u32 %v4297, 4294901760
    %v4579 = vsub.f32 %v4297, %v4578
    %4580 = vmatpush.msra.mxu0 %v4579
    %v4581 = vand.u32 %v4296, 4294901760
    %v4582 = vsub.f32 %v4296, %v4581
    %4583 = vmatpush.msra.mxu0 %v4582
    %v4584 = vand.u32 %v4295, 4294901760
    %v4585 = vsub.f32 %v4295, %v4584
    %4586 = vmatpush.msra.mxu0 %v4585
    %v4587 = vand.u32 %v4279, 4294901760
    %v4588 = vsub.f32 %v4279, %v4587
    %4589 = vmatmul.f32.gmra.mxu0 %v4588
    %v4590 = vpop.f32.mrf.mxu0
    %v4591 = vadd.f32 %v4525, %v4590
    %v4592 = vand.u32 %v4283, 4294901760
    %v4593 = vsub.f32 %v4283, %v4592
    %4594 = vmatmul.f32.gmra.mxu0 %v4593
    %v4595 = vpop.f32.mrf.mxu0
    %v4596 = vadd.f32 %v4529, %v4595
    %v4597 = vand.u32 %v4287, 4294901760
    %v4598 = vsub.f32 %v4287, %v4597
    %4599 = vmatmul.f32.gmra.mxu0 %v4598
    %v4600 = vpop.f32.mrf.mxu0
    %v4601 = vadd.f32 %v4533, %v4600
    %v4602 = vand.u32 %v4291, 4294901760
    %v4603 = vsub.f32 %v4291, %v4602
    %4604 = vmatmul.f32.gmra.mxu0 %v4603
    %v4605 = vpop.f32.mrf.mxu0
    %v4606 = vadd.f32 %v4537, %v4605
    %4607 = vdwg.mxu0
    %v4608 = vand.u32 %v4310, 4294901760
    %4609 = vmatpush.msra.mxu0 %v4608
    %v4610 = vand.u32 %v4309, 4294901760
    %4611 = vmatpush.msra.mxu0 %v4610
    %v4612 = vand.u32 %v4308, 4294901760
    %4613 = vmatpush.msra.mxu0 %v4612
    %v4614 = vand.u32 %v4307, 4294901760
    %4615 = vmatpush.msra.mxu0 %v4614
    %v4616 = vand.u32 %v4306, 4294901760
    %4617 = vmatpush.msra.mxu0 %v4616
    %v4618 = vand.u32 %v4305, 4294901760
    %4619 = vmatpush.msra.mxu0 %v4618
    %v4620 = vand.u32 %v4304, 4294901760
    %4621 = vmatpush.msra.mxu0 %v4620
    %v4622 = vand.u32 %v4303, 4294901760
    %4623 = vmatpush.msra.mxu0 %v4622
    %v4624 = vand.u32 %v4302, 4294901760
    %4625 = vmatpush.msra.mxu0 %v4624
    %v4626 = vand.u32 %v4301, 4294901760
    %4627 = vmatpush.msra.mxu0 %v4626
    %v4628 = vand.u32 %v4300, 4294901760
    %4629 = vmatpush.msra.mxu0 %v4628
    %v4630 = vand.u32 %v4299, 4294901760
    %4631 = vmatpush.msra.mxu0 %v4630
    %v4632 = vand.u32 %v4298, 4294901760
    %4633 = vmatpush.msra.mxu0 %v4632
    %v4634 = vand.u32 %v4297, 4294901760
    %4635 = vmatpush.msra.mxu0 %v4634
    %v4636 = vand.u32 %v4296, 4294901760
    %4637 = vmatpush.msra.mxu0 %v4636
    %v4638 = vand.u32 %v4295, 4294901760
    %4639 = vmatpush.msra.mxu0 %v4638
    %v4640 = vand.u32 %v4279, 4294901760
    %v4641 = vsub.f32 %v4279, %v4640
    %v4642 = vand.u32 %v4641, 4294901760
    %4643 = vmatmul.f32.gmra.mxu0 %v4642
    %v4644 = vpop.f32.mrf.mxu0
    %v4645 = vadd.f32 %v4591, %v4644
    %v4646 = vand.u32 %v4283, 4294901760
    %v4647 = vsub.f32 %v4283, %v4646
    %v4648 = vand.u32 %v4647, 4294901760
    %4649 = vmatmul.f32.gmra.mxu0 %v4648
    %v4650 = vpop.f32.mrf.mxu0
    %v4651 = vadd.f32 %v4596, %v4650
    %v4652 = vand.u32 %v4287, 4294901760
    %v4653 = vsub.f32 %v4287, %v4652
    %v4654 = vand.u32 %v4653, 4294901760
    %4655 = vmatmul.f32.gmra.mxu0 %v4654
    %v4656 = vpop.f32.mrf.mxu0
    %v4657 = vadd.f32 %v4601, %v4656
    %v4658 = vand.u32 %v4291, 4294901760
    %v4659 = vsub.f32 %v4291, %v4658
    %v4660 = vand.u32 %v4659, 4294901760
    %4661 = vmatmul.f32.gmra.mxu0 %v4660
    %v4662 = vpop.f32.mrf.mxu0
    %v4663 = vadd.f32 %v4606, %v4662
    %4664 = vdwg.mxu0
    %v4665 = vand.u32 %v4310, 4294901760
    %v4666 = vsub.f32 %v4310, %v4665
    %v4667 = vand.u32 %v4666, 4294901760
    %4668 = vmatpush.msra.mxu0 %v4667
    %v4669 = vand.u32 %v4309, 4294901760
    %v4670 = vsub.f32 %v4309, %v4669
    %v4671 = vand.u32 %v4670, 4294901760
    %4672 = vmatpush.msra.mxu0 %v4671
    %v4673 = vand.u32 %v4308, 4294901760
    %v4674 = vsub.f32 %v4308, %v4673
    %v4675 = vand.u32 %v4674, 4294901760
    %4676 = vmatpush.msra.mxu0 %v4675
    %v4677 = vand.u32 %v4307, 4294901760
    %v4678 = vsub.f32 %v4307, %v4677
    %v4679 = vand.u32 %v4678, 4294901760
    %4680 = vmatpush.msra.mxu0 %v4679
    %v4681 = vand.u32 %v4306, 4294901760
    %v4682 = vsub.f32 %v4306, %v4681
    %v4683 = vand.u32 %v4682, 4294901760
    %4684 = vmatpush.msra.mxu0 %v4683
    %v4685 = vand.u32 %v4305, 4294901760
    %v4686 = vsub.f32 %v4305, %v4685
    %v4687 = vand.u32 %v4686, 4294901760
    %4688 = vmatpush.msra.mxu0 %v4687
    %v4689 = vand.u32 %v4304, 4294901760
    %v4690 = vsub.f32 %v4304, %v4689
    %v4691 = vand.u32 %v4690, 4294901760
    %4692 = vmatpush.msra.mxu0 %v4691
    %v4693 = vand.u32 %v4303, 4294901760
    %v4694 = vsub.f32 %v4303, %v4693
    %v4695 = vand.u32 %v4694, 4294901760
    %4696 = vmatpush.msra.mxu0 %v4695
    %v4697 = vand.u32 %v4302, 4294901760
    %v4698 = vsub.f32 %v4302, %v4697
    %v4699 = vand.u32 %v4698, 4294901760
    %4700 = vmatpush.msra.mxu0 %v4699
    %v4701 = vand.u32 %v4301, 4294901760
    %v4702 = vsub.f32 %v4301, %v4701
    %v4703 = vand.u32 %v4702, 4294901760
    %4704 = vmatpush.msra.mxu0 %v4703
    %v4705 = vand.u32 %v4300, 4294901760
    %v4706 = vsub.f32 %v4300, %v4705
    %v4707 = vand.u32 %v4706, 4294901760
    %4708 = vmatpush.msra.mxu0 %v4707
    %v4709 = vand.u32 %v4299, 4294901760
    %v4710 = vsub.f32 %v4299, %v4709
    %v4711 = vand.u32 %v4710, 4294901760
    %4712 = vmatpush.msra.mxu0 %v4711
    %v4713 = vand.u32 %v4298, 4294901760
    %v4714 = vsub.f32 %v4298, %v4713
    %v4715 = vand.u32 %v4714, 4294901760
    %4716 = vmatpush.msra.mxu0 %v4715
    %v4717 = vand.u32 %v4297, 4294901760
    %v4718 = vsub.f32 %v4297, %v4717
    %v4719 = vand.u32 %v4718, 4294901760
    %4720 = vmatpush.msra.mxu0 %v4719
    %v4721 = vand.u32 %v4296, 4294901760
    %v4722 = vsub.f32 %v4296, %v4721
    %v4723 = vand.u32 %v4722, 4294901760
    %4724 = vmatpush.msra.mxu0 %v4723
    %v4725 = vand.u32 %v4295, 4294901760
    %v4726 = vsub.f32 %v4295, %v4725
    %v4727 = vand.u32 %v4726, 4294901760
    %4728 = vmatpush.msra.mxu0 %v4727
    %v4729 = vand.u32 %v4279, 4294901760
    %4730 = vmatmul.f32.gmra.mxu0 %v4729
    %v4731 = vpop.f32.mrf.mxu0
    %v4732 = vadd.f32 %v4645, %v4731
    %v4733 = vand.u32 %v4283, 4294901760
    %4734 = vmatmul.f32.gmra.mxu0 %v4733
    %v4735 = vpop.f32.mrf.mxu0
    %v4736 = vadd.f32 %v4651, %v4735
    %v4737 = vand.u32 %v4287, 4294901760
    %4738 = vmatmul.f32.gmra.mxu0 %v4737
    %v4739 = vpop.f32.mrf.mxu0
    %v4740 = vadd.f32 %v4657, %v4739
    %v4741 = vand.u32 %v4291, 4294901760
    %4742 = vmatmul.f32.gmra.mxu0 %v4741
    %v4743 = vpop.f32.mrf.mxu0
    %v4744 = vadd.f32 %v4663, %v4743
    %4745 = vdwg.mxu0
    %v4746 = vand.u32 %v4310, 4294901760
    %4747 = vmatpush.msra.mxu0 %v4746
    %v4748 = vand.u32 %v4309, 4294901760
    %4749 = vmatpush.msra.mxu0 %v4748
    %v4750 = vand.u32 %v4308, 4294901760
    %4751 = vmatpush.msra.mxu0 %v4750
    %v4752 = vand.u32 %v4307, 4294901760
    %4753 = vmatpush.msra.mxu0 %v4752
    %v4754 = vand.u32 %v4306, 4294901760
    %4755 = vmatpush.msra.mxu0 %v4754
    %v4756 = vand.u32 %v4305, 4294901760
    %4757 = vmatpush.msra.mxu0 %v4756
    %v4758 = vand.u32 %v4304, 4294901760
    %4759 = vmatpush.msra.mxu0 %v4758
    %v4760 = vand.u32 %v4303, 4294901760
    %4761 = vmatpush.msra.mxu0 %v4760
    %v4762 = vand.u32 %v4302, 4294901760
    %4763 = vmatpush.msra.mxu0 %v4762
    %v4764 = vand.u32 %v4301, 4294901760
    %4765 = vmatpush.msra.mxu0 %v4764
    %v4766 = vand.u32 %v4300, 4294901760
    %4767 = vmatpush.msra.mxu0 %v4766
    %v4768 = vand.u32 %v4299, 4294901760
    %4769 = vmatpush.msra.mxu0 %v4768
    %v4770 = vand.u32 %v4298, 4294901760
    %4771 = vmatpush.msra.mxu0 %v4770
    %v4772 = vand.u32 %v4297, 4294901760
    %4773 = vmatpush.msra.mxu0 %v4772
    %v4774 = vand.u32 %v4296, 4294901760
    %4775 = vmatpush.msra.mxu0 %v4774
    %v4776 = vand.u32 %v4295, 4294901760
    %4777 = vmatpush.msra.mxu0 %v4776
    %v4778 = vand.u32 %v4279, 4294901760
    %4779 = vmatmul.f32.gmra.mxu0 %v4778
    %v4780 = vpop.f32.mrf.mxu0
    %v4781 = vadd.f32 %v4732, %v4780
    %v4782 = vand.u32 %v4283, 4294901760
    %4783 = vmatmul.f32.gmra.mxu0 %v4782
    %v4784 = vpop.f32.mrf.mxu0
    %v4785 = vadd.f32 %v4736, %v4784
    %v4786 = vand.u32 %v4287, 4294901760
    %4787 = vmatmul.f32.gmra.mxu0 %v4786
    %v4788 = vpop.f32.mrf.mxu0
    %v4789 = vadd.f32 %v4740, %v4788
    %v4790 = vand.u32 %v4291, 4294901760
    %4791 = vmatmul.f32.gmra.mxu0 %v4790
    %v4792 = vpop.f32.mrf.mxu0
    %v4793 = vadd.f32 %v4744, %v4792
    %4794 = vdwg.mxu0
    %v4795 = vand.u32 %v4326, 4294901760
    %4796 = vmatpush.msra.mxu0 %v4795
    %v4797 = vand.u32 %v4325, 4294901760
    %4798 = vmatpush.msra.mxu0 %v4797
    %v4799 = vand.u32 %v4324, 4294901760
    %4800 = vmatpush.msra.mxu0 %v4799
    %v4801 = vand.u32 %v4323, 4294901760
    %4802 = vmatpush.msra.mxu0 %v4801
    %v4803 = vand.u32 %v4322, 4294901760
    %4804 = vmatpush.msra.mxu0 %v4803
    %v4805 = vand.u32 %v4321, 4294901760
    %4806 = vmatpush.msra.mxu0 %v4805
    %v4807 = vand.u32 %v4320, 4294901760
    %4808 = vmatpush.msra.mxu0 %v4807
    %v4809 = vand.u32 %v4319, 4294901760
    %4810 = vmatpush.msra.mxu0 %v4809
    %v4811 = vand.u32 %v4318, 4294901760
    %4812 = vmatpush.msra.mxu0 %v4811
    %v4813 = vand.u32 %v4317, 4294901760
    %4814 = vmatpush.msra.mxu0 %v4813
    %v4815 = vand.u32 %v4316, 4294901760
    %4816 = vmatpush.msra.mxu0 %v4815
    %v4817 = vand.u32 %v4315, 4294901760
    %4818 = vmatpush.msra.mxu0 %v4817
    %v4819 = vand.u32 %v4314, 4294901760
    %4820 = vmatpush.msra.mxu0 %v4819
    %v4821 = vand.u32 %v4313, 4294901760
    %4822 = vmatpush.msra.mxu0 %v4821
    %v4823 = vand.u32 %v4312, 4294901760
    %4824 = vmatpush.msra.mxu0 %v4823
    %v4825 = vand.u32 %v4311, 4294901760
    %4826 = vmatpush.msra.mxu0 %v4825
    %v4827 = vand.u32 %v4280, 4294901760
    %v4828 = vsub.f32 %v4280, %v4827
    %v4829 = vand.u32 %v4828, 4294901760
    %v4830 = vsub.f32 %v4828, %v4829
    %v4831 = vand.u32 %v4830, 4294901760
    %4832 = vmatmul.f32.gmra.mxu0 %v4831
    %v4833 = vpop.f32.mrf.mxu0
    %v4834 = vadd.f32 %v4781, %v4833
    %v4835 = vand.u32 %v4284, 4294901760
    %v4836 = vsub.f32 %v4284, %v4835
    %v4837 = vand.u32 %v4836, 4294901760
    %v4838 = vsub.f32 %v4836, %v4837
    %v4839 = vand.u32 %v4838, 4294901760
    %4840 = vmatmul.f32.gmra.mxu0 %v4839
    %v4841 = vpop.f32.mrf.mxu0
    %v4842 = vadd.f32 %v4785, %v4841
    %v4843 = vand.u32 %v4288, 4294901760
    %v4844 = vsub.f32 %v4288, %v4843
    %v4845 = vand.u32 %v4844, 4294901760
    %v4846 = vsub.f32 %v4844, %v4845
    %v4847 = vand.u32 %v4846, 4294901760
    %4848 = vmatmul.f32.gmra.mxu0 %v4847
    %v4849 = vpop.f32.mrf.mxu0
    %v4850 = vadd.f32 %v4789, %v4849
    %v4851 = vand.u32 %v4292, 4294901760
    %v4852 = vsub.f32 %v4292, %v4851
    %v4853 = vand.u32 %v4852, 4294901760
    %v4854 = vsub.f32 %v4852, %v4853
    %v4855 = vand.u32 %v4854, 4294901760
    %4856 = vmatmul.f32.gmra.mxu0 %v4855
    %v4857 = vpop.f32.mrf.mxu0
    %v4858 = vadd.f32 %v4793, %v4857
    %4859 = vdwg.mxu0
    %v4860 = vand.u32 %v4326, 4294901760
    %v4861 = vsub.f32 %v4326, %v4860
    %v4862 = vand.u32 %v4861, 4294901760
    %v4863 = vsub.f32 %v4861, %v4862
    %v4864 = vand.u32 %v4863, 4294901760
    %4865 = vmatpush.msra.mxu0 %v4864
    %v4866 = vand.u32 %v4325, 4294901760
    %v4867 = vsub.f32 %v4325, %v4866
    %v4868 = vand.u32 %v4867, 4294901760
    %v4869 = vsub.f32 %v4867, %v4868
    %v4870 = vand.u32 %v4869, 4294901760
    %4871 = vmatpush.msra.mxu0 %v4870
    %v4872 = vand.u32 %v4324, 4294901760
    %v4873 = vsub.f32 %v4324, %v4872
    %v4874 = vand.u32 %v4873, 4294901760
    %v4875 = vsub.f32 %v4873, %v4874
    %v4876 = vand.u32 %v4875, 4294901760
    %4877 = vmatpush.msra.mxu0 %v4876
    %v4878 = vand.u32 %v4323, 4294901760
    %v4879 = vsub.f32 %v4323, %v4878
    %v4880 = vand.u32 %v4879, 4294901760
    %v4881 = vsub.f32 %v4879, %v4880
    %v4882 = vand.u32 %v4881, 4294901760
    %4883 = vmatpush.msra.mxu0 %v4882
    %v4884 = vand.u32 %v4322, 4294901760
    %v4885 = vsub.f32 %v4322, %v4884
    %v4886 = vand.u32 %v4885, 4294901760
    %v4887 = vsub.f32 %v4885, %v4886
    %v4888 = vand.u32 %v4887, 4294901760
    %4889 = vmatpush.msra.mxu0 %v4888
    %v4890 = vand.u32 %v4321, 4294901760
    %v4891 = vsub.f32 %v4321, %v4890
    %v4892 = vand.u32 %v4891, 4294901760
    %v4893 = vsub.f32 %v4891, %v4892
    %v4894 = vand.u32 %v4893, 4294901760
    %4895 = vmatpush.msra.mxu0 %v4894
    %v4896 = vand.u32 %v4320, 4294901760
    %v4897 = vsub.f32 %v4320, %v4896
    %v4898 = vand.u32 %v4897, 4294901760
    %v4899 = vsub.f32 %v4897, %v4898
    %v4900 = vand.u32 %v4899, 4294901760
    %4901 = vmatpush.msra.mxu0 %v4900
    %v4902 = vand.u32 %v4319, 4294901760
    %v4903 = vsub.f32 %v4319, %v4902
    %v4904 = vand.u32 %v4903, 4294901760
    %v4905 = vsub.f32 %v4903, %v4904
    %v4906 = vand.u32 %v4905, 4294901760
    %4907 = vmatpush.msra.mxu0 %v4906
    %v4908 = vand.u32 %v4318, 4294901760
    %v4909 = vsub.f32 %v4318, %v4908
    %v4910 = vand.u32 %v4909, 4294901760
    %v4911 = vsub.f32 %v4909, %v4910
    %v4912 = vand.u32 %v4911, 4294901760
    %4913 = vmatpush.msra.mxu0 %v4912
    %v4914 = vand.u32 %v4317, 4294901760
    %v4915 = vsub.f32 %v4317, %v4914
    %v4916 = vand.u32 %v4915, 4294901760
    %v4917 = vsub.f32 %v4915, %v4916
    %v4918 = vand.u32 %v4917, 4294901760
    %4919 = vmatpush.msra.mxu0 %v4918
    %v4920 = vand.u32 %v4316, 4294901760
    %v4921 = vsub.f32 %v4316, %v4920
    %v4922 = vand.u32 %v4921, 4294901760
    %v4923 = vsub.f32 %v4921, %v4922
    %v4924 = vand.u32 %v4923, 4294901760
    %4925 = vmatpush.msra.mxu0 %v4924
    %v4926 = vand.u32 %v4315, 4294901760
    %v4927 = vsub.f32 %v4315, %v4926
    %v4928 = vand.u32 %v4927, 4294901760
    %v4929 = vsub.f32 %v4927, %v4928
    %v4930 = vand.u32 %v4929, 4294901760
    %4931 = vmatpush.msra.mxu0 %v4930
    %v4932 = vand.u32 %v4314, 4294901760
    %v4933 = vsub.f32 %v4314, %v4932
    %v4934 = vand.u32 %v4933, 4294901760
    %v4935 = vsub.f32 %v4933, %v4934
    %v4936 = vand.u32 %v4935, 4294901760
    %4937 = vmatpush.msra.mxu0 %v4936
    %v4938 = vand.u32 %v4313, 4294901760
    %v4939 = vsub.f32 %v4313, %v4938
    %v4940 = vand.u32 %v4939, 4294901760
    %v4941 = vsub.f32 %v4939, %v4940
    %v4942 = vand.u32 %v4941, 4294901760
    %4943 = vmatpush.msra.mxu0 %v4942
    %v4944 = vand.u32 %v4312, 4294901760
    %v4945 = vsub.f32 %v4312, %v4944
    %v4946 = vand.u32 %v4945, 4294901760
    %v4947 = vsub.f32 %v4945, %v4946
    %v4948 = vand.u32 %v4947, 4294901760
    %4949 = vmatpush.msra.mxu0 %v4948
    %v4950 = vand.u32 %v4311, 4294901760
    %v4951 = vsub.f32 %v4311, %v4950
    %v4952 = vand.u32 %v4951, 4294901760
    %v4953 = vsub.f32 %v4951, %v4952
    %v4954 = vand.u32 %v4953, 4294901760
    %4955 = vmatpush.msra.mxu0 %v4954
    %v4956 = vand.u32 %v4280, 4294901760
    %4957 = vmatmul.f32.gmra.mxu0 %v4956
    %v4958 = vpop.f32.mrf.mxu0
    %v4959 = vadd.f32 %v4834, %v4958
    %v4960 = vand.u32 %v4284, 4294901760
    %4961 = vmatmul.f32.gmra.mxu0 %v4960
    %v4962 = vpop.f32.mrf.mxu0
    %v4963 = vadd.f32 %v4842, %v4962
    %v4964 = vand.u32 %v4288, 4294901760
    %4965 = vmatmul.f32.gmra.mxu0 %v4964
    %v4966 = vpop.f32.mrf.mxu0
    %v4967 = vadd.f32 %v4850, %v4966
    %v4968 = vand.u32 %v4292, 4294901760
    %4969 = vmatmul.f32.gmra.mxu0 %v4968
    %v4970 = vpop.f32.mrf.mxu0
    %v4971 = vadd.f32 %v4858, %v4970
    %4972 = vdwg.mxu0
    %v4973 = vand.u32 %v4326, 4294901760
    %v4974 = vsub.f32 %v4326, %v4973
    %4975 = vmatpush.msra.mxu0 %v4974
    %v4976 = vand.u32 %v4325, 4294901760
    %v4977 = vsub.f32 %v4325, %v4976
    %4978 = vmatpush.msra.mxu0 %v4977
    %v4979 = vand.u32 %v4324, 4294901760
    %v4980 = vsub.f32 %v4324, %v4979
    %4981 = vmatpush.msra.mxu0 %v4980
    %v4982 = vand.u32 %v4323, 4294901760
    %v4983 = vsub.f32 %v4323, %v4982
    %4984 = vmatpush.msra.mxu0 %v4983
    %v4985 = vand.u32 %v4322, 4294901760
    %v4986 = vsub.f32 %v4322, %v4985
    %4987 = vmatpush.msra.mxu0 %v4986
    %v4988 = vand.u32 %v4321, 4294901760
    %v4989 = vsub.f32 %v4321, %v4988
    %4990 = vmatpush.msra.mxu0 %v4989
    %v4991 = vand.u32 %v4320, 4294901760
    %v4992 = vsub.f32 %v4320, %v4991
    %4993 = vmatpush.msra.mxu0 %v4992
    %v4994 = vand.u32 %v4319, 4294901760
    %v4995 = vsub.f32 %v4319, %v4994
    %4996 = vmatpush.msra.mxu0 %v4995
    %v4997 = vand.u32 %v4318, 4294901760
    %v4998 = vsub.f32 %v4318, %v4997
    %4999 = vmatpush.msra.mxu0 %v4998
    %v5000 = vand.u32 %v4317, 4294901760
    %v5001 = vsub.f32 %v4317, %v5000
    %5002 = vmatpush.msra.mxu0 %v5001
    %v5003 = vand.u32 %v4316, 4294901760
    %v5004 = vsub.f32 %v4316, %v5003
    %5005 = vmatpush.msra.mxu0 %v5004
    %v5006 = vand.u32 %v4315, 4294901760
    %v5007 = vsub.f32 %v4315, %v5006
    %5008 = vmatpush.msra.mxu0 %v5007
    %v5009 = vand.u32 %v4314, 4294901760
    %v5010 = vsub.f32 %v4314, %v5009
    %5011 = vmatpush.msra.mxu0 %v5010
    %v5012 = vand.u32 %v4313, 4294901760
    %v5013 = vsub.f32 %v4313, %v5012
    %5014 = vmatpush.msra.mxu0 %v5013
    %v5015 = vand.u32 %v4312, 4294901760
    %v5016 = vsub.f32 %v4312, %v5015
    %5017 = vmatpush.msra.mxu0 %v5016
    %v5018 = vand.u32 %v4311, 4294901760
    %v5019 = vsub.f32 %v4311, %v5018
    %5020 = vmatpush.msra.mxu0 %v5019
    %v5021 = vand.u32 %v4280, 4294901760
    %v5022 = vsub.f32 %v4280, %v5021
    %5023 = vmatmul.f32.gmra.mxu0 %v5022
    %v5024 = vpop.f32.mrf.mxu0
    %v5025 = vadd.f32 %v4959, %v5024
    %v5026 = vand.u32 %v4284, 4294901760
    %v5027 = vsub.f32 %v4284, %v5026
    %5028 = vmatmul.f32.gmra.mxu0 %v5027
    %v5029 = vpop.f32.mrf.mxu0
    %v5030 = vadd.f32 %v4963, %v5029
    %v5031 = vand.u32 %v4288, 4294901760
    %v5032 = vsub.f32 %v4288, %v5031
    %5033 = vmatmul.f32.gmra.mxu0 %v5032
    %v5034 = vpop.f32.mrf.mxu0
    %v5035 = vadd.f32 %v4967, %v5034
    %v5036 = vand.u32 %v4292, 4294901760
    %v5037 = vsub.f32 %v4292, %v5036
    %5038 = vmatmul.f32.gmra.mxu0 %v5037
    %v5039 = vpop.f32.mrf.mxu0
    %v5040 = vadd.f32 %v4971, %v5039
    %5041 = vdwg.mxu0
    %v5042 = vand.u32 %v4326, 4294901760
    %5043 = vmatpush.msra.mxu0 %v5042
    %v5044 = vand.u32 %v4325, 4294901760
    %5045 = vmatpush.msra.mxu0 %v5044
    %v5046 = vand.u32 %v4324, 4294901760
    %5047 = vmatpush.msra.mxu0 %v5046
    %v5048 = vand.u32 %v4323, 4294901760
    %5049 = vmatpush.msra.mxu0 %v5048
    %v5050 = vand.u32 %v4322, 4294901760
    %5051 = vmatpush.msra.mxu0 %v5050
    %v5052 = vand.u32 %v4321, 4294901760
    %5053 = vmatpush.msra.mxu0 %v5052
    %v5054 = vand.u32 %v4320, 4294901760
    %5055 = vmatpush.msra.mxu0 %v5054
    %v5056 = vand.u32 %v4319, 4294901760
    %5057 = vmatpush.msra.mxu0 %v5056
    %v5058 = vand.u32 %v4318, 4294901760
    %5059 = vmatpush.msra.mxu0 %v5058
    %v5060 = vand.u32 %v4317, 4294901760
    %5061 = vmatpush.msra.mxu0 %v5060
    %v5062 = vand.u32 %v4316, 4294901760
    %5063 = vmatpush.msra.mxu0 %v5062
    %v5064 = vand.u32 %v4315, 4294901760
    %5065 = vmatpush.msra.mxu0 %v5064
    %v5066 = vand.u32 %v4314, 4294901760
    %5067 = vmatpush.msra.mxu0 %v5066
    %v5068 = vand.u32 %v4313, 4294901760
    %5069 = vmatpush.msra.mxu0 %v5068
    %v5070 = vand.u32 %v4312, 4294901760
    %5071 = vmatpush.msra.mxu0 %v5070
    %v5072 = vand.u32 %v4311, 4294901760
    %5073 = vmatpush.msra.mxu0 %v5072
    %v5074 = vand.u32 %v4280, 4294901760
    %v5075 = vsub.f32 %v4280, %v5074
    %v5076 = vand.u32 %v5075, 4294901760
    %5077 = vmatmul.f32.gmra.mxu0 %v5076
    %v5078 = vpop.f32.mrf.mxu0
    %v5079 = vadd.f32 %v5025, %v5078
    %v5080 = vand.u32 %v4284, 4294901760
    %v5081 = vsub.f32 %v4284, %v5080
    %v5082 = vand.u32 %v5081, 4294901760
    %5083 = vmatmul.f32.gmra.mxu0 %v5082
    %v5084 = vpop.f32.mrf.mxu0
    %v5085 = vadd.f32 %v5030, %v5084
    %v5086 = vand.u32 %v4288, 4294901760
    %v5087 = vsub.f32 %v4288, %v5086
    %v5088 = vand.u32 %v5087, 4294901760
    %5089 = vmatmul.f32.gmra.mxu0 %v5088
    %v5090 = vpop.f32.mrf.mxu0
    %v5091 = vadd.f32 %v5035, %v5090
    %v5092 = vand.u32 %v4292, 4294901760
    %v5093 = vsub.f32 %v4292, %v5092
    %v5094 = vand.u32 %v5093, 4294901760
    %5095 = vmatmul.f32.gmra.mxu0 %v5094
    %v5096 = vpop.f32.mrf.mxu0
    %v5097 = vadd.f32 %v5040, %v5096
    %5098 = vdwg.mxu0
    %v5099 = vand.u32 %v4326, 4294901760
    %v5100 = vsub.f32 %v4326, %v5099
    %v5101 = vand.u32 %v5100, 4294901760
    %5102 = vmatpush.msra.mxu0 %v5101
    %v5103 = vand.u32 %v4325, 4294901760
    %v5104 = vsub.f32 %v4325, %v5103
    %v5105 = vand.u32 %v5104, 4294901760
    %5106 = vmatpush.msra.mxu0 %v5105
    %v5107 = vand.u32 %v4324, 4294901760
    %v5108 = vsub.f32 %v4324, %v5107
    %v5109 = vand.u32 %v5108, 4294901760
    %5110 = vmatpush.msra.mxu0 %v5109
    %v5111 = vand.u32 %v4323, 4294901760
    %v5112 = vsub.f32 %v4323, %v5111
    %v5113 = vand.u32 %v5112, 4294901760
    %5114 = vmatpush.msra.mxu0 %v5113
    %v5115 = vand.u32 %v4322, 4294901760
    %v5116 = vsub.f32 %v4322, %v5115
    %v5117 = vand.u32 %v5116, 4294901760
    %5118 = vmatpush.msra.mxu0 %v5117
    %v5119 = vand.u32 %v4321, 4294901760
    %v5120 = vsub.f32 %v4321, %v5119
    %v5121 = vand.u32 %v5120, 4294901760
    %5122 = vmatpush.msra.mxu0 %v5121
    %v5123 = vand.u32 %v4320, 4294901760
    %v5124 = vsub.f32 %v4320, %v5123
    %v5125 = vand.u32 %v5124, 4294901760
    %5126 = vmatpush.msra.mxu0 %v5125
    %v5127 = vand.u32 %v4319, 4294901760
    %v5128 = vsub.f32 %v4319, %v5127
    %v5129 = vand.u32 %v5128, 4294901760
    %5130 = vmatpush.msra.mxu0 %v5129
    %v5131 = vand.u32 %v4318, 4294901760
    %v5132 = vsub.f32 %v4318, %v5131
    %v5133 = vand.u32 %v5132, 4294901760
    %5134 = vmatpush.msra.mxu0 %v5133
    %v5135 = vand.u32 %v4317, 4294901760
    %v5136 = vsub.f32 %v4317, %v5135
    %v5137 = vand.u32 %v5136, 4294901760
    %5138 = vmatpush.msra.mxu0 %v5137
    %v5139 = vand.u32 %v4316, 4294901760
    %v5140 = vsub.f32 %v4316, %v5139
    %v5141 = vand.u32 %v5140, 4294901760
    %5142 = vmatpush.msra.mxu0 %v5141
    %v5143 = vand.u32 %v4315, 4294901760
    %v5144 = vsub.f32 %v4315, %v5143
    %v5145 = vand.u32 %v5144, 4294901760
    %5146 = vmatpush.msra.mxu0 %v5145
    %v5147 = vand.u32 %v4314, 4294901760
    %v5148 = vsub.f32 %v4314, %v5147
    %v5149 = vand.u32 %v5148, 4294901760
    %5150 = vmatpush.msra.mxu0 %v5149
    %v5151 = vand.u32 %v4313, 4294901760
    %v5152 = vsub.f32 %v4313, %v5151
    %v5153 = vand.u32 %v5152, 4294901760
    %5154 = vmatpush.msra.mxu0 %v5153
    %v5155 = vand.u32 %v4312, 4294901760
    %v5156 = vsub.f32 %v4312, %v5155
    %v5157 = vand.u32 %v5156, 4294901760
    %5158 = vmatpush.msra.mxu0 %v5157
    %v5159 = vand.u32 %v4311, 4294901760
    %v5160 = vsub.f32 %v4311, %v5159
    %v5161 = vand.u32 %v5160, 4294901760
    %5162 = vmatpush.msra.mxu0 %v5161
    %v5163 = vand.u32 %v4280, 4294901760
    %5164 = vmatmul.f32.gmra.mxu0 %v5163
    %v5165 = vpop.f32.mrf.mxu0
    %v5166 = vadd.f32 %v5079, %v5165
    %v5167 = vand.u32 %v4284, 4294901760
    %5168 = vmatmul.f32.gmra.mxu0 %v5167
    %v5169 = vpop.f32.mrf.mxu0
    %v5170 = vadd.f32 %v5085, %v5169
    %v5171 = vand.u32 %v4288, 4294901760
    %5172 = vmatmul.f32.gmra.mxu0 %v5171
    %v5173 = vpop.f32.mrf.mxu0
    %v5174 = vadd.f32 %v5091, %v5173
    %v5175 = vand.u32 %v4292, 4294901760
    %5176 = vmatmul.f32.gmra.mxu0 %v5175
    %v5177 = vpop.f32.mrf.mxu0
    %v5178 = vadd.f32 %v5097, %v5177
    %5179 = vdwg.mxu0
    %v5180 = vand.u32 %v4326, 4294901760
    %5181 = vmatpush.msra.mxu0 %v5180
    %v5182 = vand.u32 %v4325, 4294901760
    %5183 = vmatpush.msra.mxu0 %v5182
    %v5184 = vand.u32 %v4324, 4294901760
    %5185 = vmatpush.msra.mxu0 %v5184
    %v5186 = vand.u32 %v4323, 4294901760
    %5187 = vmatpush.msra.mxu0 %v5186
    %v5188 = vand.u32 %v4322, 4294901760
    %5189 = vmatpush.msra.mxu0 %v5188
    %v5190 = vand.u32 %v4321, 4294901760
    %5191 = vmatpush.msra.mxu0 %v5190
    %v5192 = vand.u32 %v4320, 4294901760
    %5193 = vmatpush.msra.mxu0 %v5192
    %v5194 = vand.u32 %v4319, 4294901760
    %5195 = vmatpush.msra.mxu0 %v5194
    %v5196 = vand.u32 %v4318, 4294901760
    %5197 = vmatpush.msra.mxu0 %v5196
    %v5198 = vand.u32 %v4317, 4294901760
    %5199 = vmatpush.msra.mxu0 %v5198
    %v5200 = vand.u32 %v4316, 4294901760
    %5201 = vmatpush.msra.mxu0 %v5200
    %v5202 = vand.u32 %v4315, 4294901760
    %5203 = vmatpush.msra.mxu0 %v5202
    %v5204 = vand.u32 %v4314, 4294901760
    %5205 = vmatpush.msra.mxu0 %v5204
    %v5206 = vand.u32 %v4313, 4294901760
    %5207 = vmatpush.msra.mxu0 %v5206
    %v5208 = vand.u32 %v4312, 4294901760
    %5209 = vmatpush.msra.mxu0 %v5208
    %v5210 = vand.u32 %v4311, 4294901760
    %5211 = vmatpush.msra.mxu0 %v5210
    %v5212 = vand.u32 %v4280, 4294901760
    %5213 = vmatmul.f32.gmra.mxu0 %v5212
    %v5214 = vpop.f32.mrf.mxu0
    %v5215 = vadd.f32 %v5166, %v5214
    %v5216 = vand.u32 %v4284, 4294901760
    %5217 = vmatmul.f32.gmra.mxu0 %v5216
    %v5218 = vpop.f32.mrf.mxu0
    %v5219 = vadd.f32 %v5170, %v5218
    %v5220 = vand.u32 %v4288, 4294901760
    %5221 = vmatmul.f32.gmra.mxu0 %v5220
    %v5222 = vpop.f32.mrf.mxu0
    %v5223 = vadd.f32 %v5174, %v5222
    %v5224 = vand.u32 %v4292, 4294901760
    %5225 = vmatmul.f32.gmra.mxu0 %v5224
    %v5226 = vpop.f32.mrf.mxu0
    %v5227 = vadd.f32 %v5178, %v5226
    %5228 = vdwg.mxu0
    %v5229 = vand.u32 %v4342, 4294901760
    %5230 = vmatpush.msra.mxu0 %v5229
    %v5231 = vand.u32 %v4341, 4294901760
    %5232 = vmatpush.msra.mxu0 %v5231
    %v5233 = vand.u32 %v4340, 4294901760
    %5234 = vmatpush.msra.mxu0 %v5233
    %v5235 = vand.u32 %v4339, 4294901760
    %5236 = vmatpush.msra.mxu0 %v5235
    %v5237 = vand.u32 %v4338, 4294901760
    %5238 = vmatpush.msra.mxu0 %v5237
    %v5239 = vand.u32 %v4337, 4294901760
    %5240 = vmatpush.msra.mxu0 %v5239
    %v5241 = vand.u32 %v4336, 4294901760
    %5242 = vmatpush.msra.mxu0 %v5241
    %v5243 = vand.u32 %v4335, 4294901760
    %5244 = vmatpush.msra.mxu0 %v5243
    %v5245 = vand.u32 %v4334, 4294901760
    %5246 = vmatpush.msra.mxu0 %v5245
    %v5247 = vand.u32 %v4333, 4294901760
    %5248 = vmatpush.msra.mxu0 %v5247
    %v5249 = vand.u32 %v4332, 4294901760
    %5250 = vmatpush.msra.mxu0 %v5249
    %v5251 = vand.u32 %v4331, 4294901760
    %5252 = vmatpush.msra.mxu0 %v5251
    %v5253 = vand.u32 %v4330, 4294901760
    %5254 = vmatpush.msra.mxu0 %v5253
    %v5255 = vand.u32 %v4329, 4294901760
    %5256 = vmatpush.msra.mxu0 %v5255
    %v5257 = vand.u32 %v4328, 4294901760
    %5258 = vmatpush.msra.mxu0 %v5257
    %v5259 = vand.u32 %v4327, 4294901760
    %5260 = vmatpush.msra.mxu0 %v5259
    %v5261 = vand.u32 %v4281, 4294901760
    %v5262 = vsub.f32 %v4281, %v5261
    %v5263 = vand.u32 %v5262, 4294901760
    %v5264 = vsub.f32 %v5262, %v5263
    %v5265 = vand.u32 %v5264, 4294901760
    %5266 = vmatmul.f32.gmra.mxu0 %v5265
    %v5267 = vpop.f32.mrf.mxu0
    %v5268 = vadd.f32 %v5215, %v5267
    %v5269 = vand.u32 %v4285, 4294901760
    %v5270 = vsub.f32 %v4285, %v5269
    %v5271 = vand.u32 %v5270, 4294901760
    %v5272 = vsub.f32 %v5270, %v5271
    %v5273 = vand.u32 %v5272, 4294901760
    %5274 = vmatmul.f32.gmra.mxu0 %v5273
    %v5275 = vpop.f32.mrf.mxu0
    %v5276 = vadd.f32 %v5219, %v5275
    %v5277 = vand.u32 %v4289, 4294901760
    %v5278 = vsub.f32 %v4289, %v5277
    %v5279 = vand.u32 %v5278, 4294901760
    %v5280 = vsub.f32 %v5278, %v5279
    %v5281 = vand.u32 %v5280, 4294901760
    %5282 = vmatmul.f32.gmra.mxu0 %v5281
    %v5283 = vpop.f32.mrf.mxu0
    %v5284 = vadd.f32 %v5223, %v5283
    %v5285 = vand.u32 %v4293, 4294901760
    %v5286 = vsub.f32 %v4293, %v5285
    %v5287 = vand.u32 %v5286, 4294901760
    %v5288 = vsub.f32 %v5286, %v5287
    %v5289 = vand.u32 %v5288, 4294901760
    %5290 = vmatmul.f32.gmra.mxu0 %v5289
    %v5291 = vpop.f32.mrf.mxu0
    %v5292 = vadd.f32 %v5227, %v5291
    %5293 = vdwg.mxu0
    %v5294 = vand.u32 %v4342, 4294901760
    %v5295 = vsub.f32 %v4342, %v5294
    %v5296 = vand.u32 %v5295, 4294901760
    %v5297 = vsub.f32 %v5295, %v5296
    %v5298 = vand.u32 %v5297, 4294901760
    %5299 = vmatpush.msra.mxu0 %v5298
    %v5300 = vand.u32 %v4341, 4294901760
    %v5301 = vsub.f32 %v4341, %v5300
    %v5302 = vand.u32 %v5301, 4294901760
    %v5303 = vsub.f32 %v5301, %v5302
    %v5304 = vand.u32 %v5303, 4294901760
    %5305 = vmatpush.msra.mxu0 %v5304
    %v5306 = vand.u32 %v4340, 4294901760
    %v5307 = vsub.f32 %v4340, %v5306
    %v5308 = vand.u32 %v5307, 4294901760
    %v5309 = vsub.f32 %v5307, %v5308
    %v5310 = vand.u32 %v5309, 4294901760
    %5311 = vmatpush.msra.mxu0 %v5310
    %v5312 = vand.u32 %v4339, 4294901760
    %v5313 = vsub.f32 %v4339, %v5312
    %v5314 = vand.u32 %v5313, 4294901760
    %v5315 = vsub.f32 %v5313, %v5314
    %v5316 = vand.u32 %v5315, 4294901760
    %5317 = vmatpush.msra.mxu0 %v5316
    %v5318 = vand.u32 %v4338, 4294901760
    %v5319 = vsub.f32 %v4338, %v5318
    %v5320 = vand.u32 %v5319, 4294901760
    %v5321 = vsub.f32 %v5319, %v5320
    %v5322 = vand.u32 %v5321, 4294901760
    %5323 = vmatpush.msra.mxu0 %v5322
    %v5324 = vand.u32 %v4337, 4294901760
    %v5325 = vsub.f32 %v4337, %v5324
    %v5326 = vand.u32 %v5325, 4294901760
    %v5327 = vsub.f32 %v5325, %v5326
    %v5328 = vand.u32 %v5327, 4294901760
    %5329 = vmatpush.msra.mxu0 %v5328
    %v5330 = vand.u32 %v4336, 4294901760
    %v5331 = vsub.f32 %v4336, %v5330
    %v5332 = vand.u32 %v5331, 4294901760
    %v5333 = vsub.f32 %v5331, %v5332
    %v5334 = vand.u32 %v5333, 4294901760
    %5335 = vmatpush.msra.mxu0 %v5334
    %v5336 = vand.u32 %v4335, 4294901760
    %v5337 = vsub.f32 %v4335, %v5336
    %v5338 = vand.u32 %v5337, 4294901760
    %v5339 = vsub.f32 %v5337, %v5338
    %v5340 = vand.u32 %v5339, 4294901760
    %5341 = vmatpush.msra.mxu0 %v5340
    %v5342 = vand.u32 %v4334, 4294901760
    %v5343 = vsub.f32 %v4334, %v5342
    %v5344 = vand.u32 %v5343, 4294901760
    %v5345 = vsub.f32 %v5343, %v5344
    %v5346 = vand.u32 %v5345, 4294901760
    %5347 = vmatpush.msra.mxu0 %v5346
    %v5348 = vand.u32 %v4333, 4294901760
    %v5349 = vsub.f32 %v4333, %v5348
    %v5350 = vand.u32 %v5349, 4294901760
    %v5351 = vsub.f32 %v5349, %v5350
    %v5352 = vand.u32 %v5351, 4294901760
    %5353 = vmatpush.msra.mxu0 %v5352
    %v5354 = vand.u32 %v4332, 4294901760
    %v5355 = vsub.f32 %v4332, %v5354
    %v5356 = vand.u32 %v5355, 4294901760
    %v5357 = vsub.f32 %v5355, %v5356
    %v5358 = vand.u32 %v5357, 4294901760
    %5359 = vmatpush.msra.mxu0 %v5358
    %v5360 = vand.u32 %v4331, 4294901760
    %v5361 = vsub.f32 %v4331, %v5360
    %v5362 = vand.u32 %v5361, 4294901760
    %v5363 = vsub.f32 %v5361, %v5362
    %v5364 = vand.u32 %v5363, 4294901760
    %5365 = vmatpush.msra.mxu0 %v5364
    %v5366 = vand.u32 %v4330, 4294901760
    %v5367 = vsub.f32 %v4330, %v5366
    %v5368 = vand.u32 %v5367, 4294901760
    %v5369 = vsub.f32 %v5367, %v5368
    %v5370 = vand.u32 %v5369, 4294901760
    %5371 = vmatpush.msra.mxu0 %v5370
    %v5372 = vand.u32 %v4329, 4294901760
    %v5373 = vsub.f32 %v4329, %v5372
    %v5374 = vand.u32 %v5373, 4294901760
    %v5375 = vsub.f32 %v5373, %v5374
    %v5376 = vand.u32 %v5375, 4294901760
    %5377 = vmatpush.msra.mxu0 %v5376
    %v5378 = vand.u32 %v4328, 4294901760
    %v5379 = vsub.f32 %v4328, %v5378
    %v5380 = vand.u32 %v5379, 4294901760
    %v5381 = vsub.f32 %v5379, %v5380
    %v5382 = vand.u32 %v5381, 4294901760
    %5383 = vmatpush.msra.mxu0 %v5382
    %v5384 = vand.u32 %v4327, 4294901760
    %v5385 = vsub.f32 %v4327, %v5384
    %v5386 = vand.u32 %v5385, 4294901760
    %v5387 = vsub.f32 %v5385, %v5386
    %v5388 = vand.u32 %v5387, 4294901760
    %5389 = vmatpush.msra.mxu0 %v5388
    %v5390 = vand.u32 %v4281, 4294901760
    %5391 = vmatmul.f32.gmra.mxu0 %v5390
    %v5392 = vpop.f32.mrf.mxu0
    %v5393 = vadd.f32 %v5268, %v5392
    %v5394 = vand.u32 %v4285, 4294901760
    %5395 = vmatmul.f32.gmra.mxu0 %v5394
    %v5396 = vpop.f32.mrf.mxu0
    %v5397 = vadd.f32 %v5276, %v5396
    %v5398 = vand.u32 %v4289, 4294901760
    %5399 = vmatmul.f32.gmra.mxu0 %v5398
    %v5400 = vpop.f32.mrf.mxu0
    %v5401 = vadd.f32 %v5284, %v5400
    %v5402 = vand.u32 %v4293, 4294901760
    %5403 = vmatmul.f32.gmra.mxu0 %v5402
    %v5404 = vpop.f32.mrf.mxu0
    %v5405 = vadd.f32 %v5292, %v5404
    %5406 = vdwg.mxu0
    %v5407 = vand.u32 %v4342, 4294901760
    %v5408 = vsub.f32 %v4342, %v5407
    %5409 = vmatpush.msra.mxu0 %v5408
    %v5410 = vand.u32 %v4341, 4294901760
    %v5411 = vsub.f32 %v4341, %v5410
    %5412 = vmatpush.msra.mxu0 %v5411
    %v5413 = vand.u32 %v4340, 4294901760
    %v5414 = vsub.f32 %v4340, %v5413
    %5415 = vmatpush.msra.mxu0 %v5414
    %v5416 = vand.u32 %v4339, 4294901760
    %v5417 = vsub.f32 %v4339, %v5416
    %5418 = vmatpush.msra.mxu0 %v5417
    %v5419 = vand.u32 %v4338, 4294901760
    %v5420 = vsub.f32 %v4338, %v5419
    %5421 = vmatpush.msra.mxu0 %v5420
    %v5422 = vand.u32 %v4337, 4294901760
    %v5423 = vsub.f32 %v4337, %v5422
    %5424 = vmatpush.msra.mxu0 %v5423
    %v5425 = vand.u32 %v4336, 4294901760
    %v5426 = vsub.f32 %v4336, %v5425
    %5427 = vmatpush.msra.mxu0 %v5426
    %v5428 = vand.u32 %v4335, 4294901760
    %v5429 = vsub.f32 %v4335, %v5428
    %5430 = vmatpush.msra.mxu0 %v5429
    %v5431 = vand.u32 %v4334, 4294901760
    %v5432 = vsub.f32 %v4334, %v5431
    %5433 = vmatpush.msra.mxu0 %v5432
    %v5434 = vand.u32 %v4333, 4294901760
    %v5435 = vsub.f32 %v4333, %v5434
    %5436 = vmatpush.msra.mxu0 %v5435
    %v5437 = vand.u32 %v4332, 4294901760
    %v5438 = vsub.f32 %v4332, %v5437
    %5439 = vmatpush.msra.mxu0 %v5438
    %v5440 = vand.u32 %v4331, 4294901760
    %v5441 = vsub.f32 %v4331, %v5440
    %5442 = vmatpush.msra.mxu0 %v5441
    %v5443 = vand.u32 %v4330, 4294901760
    %v5444 = vsub.f32 %v4330, %v5443
    %5445 = vmatpush.msra.mxu0 %v5444
    %v5446 = vand.u32 %v4329, 4294901760
    %v5447 = vsub.f32 %v4329, %v5446
    %5448 = vmatpush.msra.mxu0 %v5447
    %v5449 = vand.u32 %v4328, 4294901760
    %v5450 = vsub.f32 %v4328, %v5449
    %5451 = vmatpush.msra.mxu0 %v5450
    %v5452 = vand.u32 %v4327, 4294901760
    %v5453 = vsub.f32 %v4327, %v5452
    %5454 = vmatpush.msra.mxu0 %v5453
    %v5455 = vand.u32 %v4281, 4294901760
    %v5456 = vsub.f32 %v4281, %v5455
    %5457 = vmatmul.f32.gmra.mxu0 %v5456
    %v5458 = vpop.f32.mrf.mxu0
    %v5459 = vadd.f32 %v5393, %v5458
    %v5460 = vand.u32 %v4285, 4294901760
    %v5461 = vsub.f32 %v4285, %v5460
    %5462 = vmatmul.f32.gmra.mxu0 %v5461
    %v5463 = vpop.f32.mrf.mxu0
    %v5464 = vadd.f32 %v5397, %v5463
    %v5465 = vand.u32 %v4289, 4294901760
    %v5466 = vsub.f32 %v4289, %v5465
    %5467 = vmatmul.f32.gmra.mxu0 %v5466
    %v5468 = vpop.f32.mrf.mxu0
    %v5469 = vadd.f32 %v5401, %v5468
    %v5470 = vand.u32 %v4293, 4294901760
    %v5471 = vsub.f32 %v4293, %v5470
    %5472 = vmatmul.f32.gmra.mxu0 %v5471
    %v5473 = vpop.f32.mrf.mxu0
    %v5474 = vadd.f32 %v5405, %v5473
    %5475 = vdwg.mxu0
    %v5476 = vand.u32 %v4342, 4294901760
    %5477 = vmatpush.msra.mxu0 %v5476
    %v5478 = vand.u32 %v4341, 4294901760
    %5479 = vmatpush.msra.mxu0 %v5478
    %v5480 = vand.u32 %v4340, 4294901760
    %5481 = vmatpush.msra.mxu0 %v5480
    %v5482 = vand.u32 %v4339, 4294901760
    %5483 = vmatpush.msra.mxu0 %v5482
    %v5484 = vand.u32 %v4338, 4294901760
    %5485 = vmatpush.msra.mxu0 %v5484
    %v5486 = vand.u32 %v4337, 4294901760
    %5487 = vmatpush.msra.mxu0 %v5486
    %v5488 = vand.u32 %v4336, 4294901760
    %5489 = vmatpush.msra.mxu0 %v5488
    %v5490 = vand.u32 %v4335, 4294901760
    %5491 = vmatpush.msra.mxu0 %v5490
    %v5492 = vand.u32 %v4334, 4294901760
    %5493 = vmatpush.msra.mxu0 %v5492
    %v5494 = vand.u32 %v4333, 4294901760
    %5495 = vmatpush.msra.mxu0 %v5494
    %v5496 = vand.u32 %v4332, 4294901760
    %5497 = vmatpush.msra.mxu0 %v5496
    %v5498 = vand.u32 %v4331, 4294901760
    %5499 = vmatpush.msra.mxu0 %v5498
    %v5500 = vand.u32 %v4330, 4294901760
    %5501 = vmatpush.msra.mxu0 %v5500
    %v5502 = vand.u32 %v4329, 4294901760
    %5503 = vmatpush.msra.mxu0 %v5502
    %v5504 = vand.u32 %v4328, 4294901760
    %5505 = vmatpush.msra.mxu0 %v5504
    %v5506 = vand.u32 %v4327, 4294901760
    %5507 = vmatpush.msra.mxu0 %v5506
    %v5508 = vand.u32 %v4281, 4294901760
    %v5509 = vsub.f32 %v4281, %v5508
    %v5510 = vand.u32 %v5509, 4294901760
    %5511 = vmatmul.f32.gmra.mxu0 %v5510
    %v5512 = vpop.f32.mrf.mxu0
    %v5513 = vadd.f32 %v5459, %v5512
    %v5514 = vand.u32 %v4285, 4294901760
    %v5515 = vsub.f32 %v4285, %v5514
    %v5516 = vand.u32 %v5515, 4294901760
    %5517 = vmatmul.f32.gmra.mxu0 %v5516
    %v5518 = vpop.f32.mrf.mxu0
    %v5519 = vadd.f32 %v5464, %v5518
    %v5520 = vand.u32 %v4289, 4294901760
    %v5521 = vsub.f32 %v4289, %v5520
    %v5522 = vand.u32 %v5521, 4294901760
    %5523 = vmatmul.f32.gmra.mxu0 %v5522
    %v5524 = vpop.f32.mrf.mxu0
    %v5525 = vadd.f32 %v5469, %v5524
    %v5526 = vand.u32 %v4293, 4294901760
    %v5527 = vsub.f32 %v4293, %v5526
    %v5528 = vand.u32 %v5527, 4294901760
    %5529 = vmatmul.f32.gmra.mxu0 %v5528
    %v5530 = vpop.f32.mrf.mxu0
    %v5531 = vadd.f32 %v5474, %v5530
    %5532 = vdwg.mxu0
    %v5533 = vand.u32 %v4342, 4294901760
    %v5534 = vsub.f32 %v4342, %v5533
    %v5535 = vand.u32 %v5534, 4294901760
    %5536 = vmatpush.msra.mxu0 %v5535
    %v5537 = vand.u32 %v4341, 4294901760
    %v5538 = vsub.f32 %v4341, %v5537
    %v5539 = vand.u32 %v5538, 4294901760
    %5540 = vmatpush.msra.mxu0 %v5539
    %v5541 = vand.u32 %v4340, 4294901760
    %v5542 = vsub.f32 %v4340, %v5541
    %v5543 = vand.u32 %v5542, 4294901760
    %5544 = vmatpush.msra.mxu0 %v5543
    %v5545 = vand.u32 %v4339, 4294901760
    %v5546 = vsub.f32 %v4339, %v5545
    %v5547 = vand.u32 %v5546, 4294901760
    %5548 = vmatpush.msra.mxu0 %v5547
    %v5549 = vand.u32 %v4338, 4294901760
    %v5550 = vsub.f32 %v4338, %v5549
    %v5551 = vand.u32 %v5550, 4294901760
    %5552 = vmatpush.msra.mxu0 %v5551
    %v5553 = vand.u32 %v4337, 4294901760
    %v5554 = vsub.f32 %v4337, %v5553
    %v5555 = vand.u32 %v5554, 4294901760
    %5556 = vmatpush.msra.mxu0 %v5555
    %v5557 = vand.u32 %v4336, 4294901760
    %v5558 = vsub.f32 %v4336, %v5557
    %v5559 = vand.u32 %v5558, 4294901760
    %5560 = vmatpush.msra.mxu0 %v5559
    %v5561 = vand.u32 %v4335, 4294901760
    %v5562 = vsub.f32 %v4335, %v5561
    %v5563 = vand.u32 %v5562, 4294901760
    %5564 = vmatpush.msra.mxu0 %v5563
    %v5565 = vand.u32 %v4334, 4294901760
    %v5566 = vsub.f32 %v4334, %v5565
    %v5567 = vand.u32 %v5566, 4294901760
    %5568 = vmatpush.msra.mxu0 %v5567
    %v5569 = vand.u32 %v4333, 4294901760
    %v5570 = vsub.f32 %v4333, %v5569
    %v5571 = vand.u32 %v5570, 4294901760
    %5572 = vmatpush.msra.mxu0 %v5571
    %v5573 = vand.u32 %v4332, 4294901760
    %v5574 = vsub.f32 %v4332, %v5573
    %v5575 = vand.u32 %v5574, 4294901760
    %5576 = vmatpush.msra.mxu0 %v5575
    %v5577 = vand.u32 %v4331, 4294901760
    %v5578 = vsub.f32 %v4331, %v5577
    %v5579 = vand.u32 %v5578, 4294901760
    %5580 = vmatpush.msra.mxu0 %v5579
    %v5581 = vand.u32 %v4330, 4294901760
    %v5582 = vsub.f32 %v4330, %v5581
    %v5583 = vand.u32 %v5582, 4294901760
    %5584 = vmatpush.msra.mxu0 %v5583
    %v5585 = vand.u32 %v4329, 4294901760
    %v5586 = vsub.f32 %v4329, %v5585
    %v5587 = vand.u32 %v5586, 4294901760
    %5588 = vmatpush.msra.mxu0 %v5587
    %v5589 = vand.u32 %v4328, 4294901760
    %v5590 = vsub.f32 %v4328, %v5589
    %v5591 = vand.u32 %v5590, 4294901760
    %5592 = vmatpush.msra.mxu0 %v5591
    %v5593 = vand.u32 %v4327, 4294901760
    %v5594 = vsub.f32 %v4327, %v5593
    %v5595 = vand.u32 %v5594, 4294901760
    %5596 = vmatpush.msra.mxu0 %v5595
    %v5597 = vand.u32 %v4281, 4294901760
    %5598 = vmatmul.f32.gmra.mxu0 %v5597
    %v5599 = vpop.f32.mrf.mxu0
    %v5600 = vadd.f32 %v5513, %v5599
    %v5601 = vand.u32 %v4285, 4294901760
    %5602 = vmatmul.f32.gmra.mxu0 %v5601
    %v5603 = vpop.f32.mrf.mxu0
    %v5604 = vadd.f32 %v5519, %v5603
    %v5605 = vand.u32 %v4289, 4294901760
    %5606 = vmatmul.f32.gmra.mxu0 %v5605
    %v5607 = vpop.f32.mrf.mxu0
    %v5608 = vadd.f32 %v5525, %v5607
    %v5609 = vand.u32 %v4293, 4294901760
    %5610 = vmatmul.f32.gmra.mxu0 %v5609
    %v5611 = vpop.f32.mrf.mxu0
    %v5612 = vadd.f32 %v5531, %v5611
    %5613 = vdwg.mxu0
    %v5614 = vand.u32 %v4342, 4294901760
    %5615 = vmatpush.msra.mxu0 %v5614
    %v5616 = vand.u32 %v4341, 4294901760
    %5617 = vmatpush.msra.mxu0 %v5616
    %v5618 = vand.u32 %v4340, 4294901760
    %5619 = vmatpush.msra.mxu0 %v5618
    %v5620 = vand.u32 %v4339, 4294901760
    %5621 = vmatpush.msra.mxu0 %v5620
    %v5622 = vand.u32 %v4338, 4294901760
    %5623 = vmatpush.msra.mxu0 %v5622
    %v5624 = vand.u32 %v4337, 4294901760
    %5625 = vmatpush.msra.mxu0 %v5624
    %v5626 = vand.u32 %v4336, 4294901760
    %5627 = vmatpush.msra.mxu0 %v5626
    %v5628 = vand.u32 %v4335, 4294901760
    %5629 = vmatpush.msra.mxu0 %v5628
    %v5630 = vand.u32 %v4334, 4294901760
    %5631 = vmatpush.msra.mxu0 %v5630
    %v5632 = vand.u32 %v4333, 4294901760
    %5633 = vmatpush.msra.mxu0 %v5632
    %v5634 = vand.u32 %v4332, 4294901760
    %5635 = vmatpush.msra.mxu0 %v5634
    %v5636 = vand.u32 %v4331, 4294901760
    %5637 = vmatpush.msra.mxu0 %v5636
    %v5638 = vand.u32 %v4330, 4294901760
    %5639 = vmatpush.msra.mxu0 %v5638
    %v5640 = vand.u32 %v4329, 4294901760
    %5641 = vmatpush.msra.mxu0 %v5640
    %v5642 = vand.u32 %v4328, 4294901760
    %5643 = vmatpush.msra.mxu0 %v5642
    %v5644 = vand.u32 %v4327, 4294901760
    %5645 = vmatpush.msra.mxu0 %v5644
    %v5646 = vand.u32 %v4281, 4294901760
    %5647 = vmatmul.f32.gmra.mxu0 %v5646
    %v5648 = vpop.f32.mrf.mxu0
    %v5649 = vadd.f32 %v5600, %v5648
    %v5650 = vand.u32 %v4285, 4294901760
    %5651 = vmatmul.f32.gmra.mxu0 %v5650
    %v5652 = vpop.f32.mrf.mxu0
    %v5653 = vadd.f32 %v5604, %v5652
    %v5654 = vand.u32 %v4289, 4294901760
    %5655 = vmatmul.f32.gmra.mxu0 %v5654
    %v5656 = vpop.f32.mrf.mxu0
    %v5657 = vadd.f32 %v5608, %v5656
    %v5658 = vand.u32 %v4293, 4294901760
    %5659 = vmatmul.f32.gmra.mxu0 %v5658
    %v5660 = vpop.f32.mrf.mxu0
    %v5661 = vadd.f32 %v5612, %v5660
    %5662 = vdwg.mxu0
    %v5663 = vand.u32 %v4358, 4294901760
    %5664 = vmatpush.msra.mxu0 %v5663
    %v5665 = vand.u32 %v4357, 4294901760
    %5666 = vmatpush.msra.mxu0 %v5665
    %v5667 = vand.u32 %v4356, 4294901760
    %5668 = vmatpush.msra.mxu0 %v5667
    %v5669 = vand.u32 %v4355, 4294901760
    %5670 = vmatpush.msra.mxu0 %v5669
    %v5671 = vand.u32 %v4354, 4294901760
    %5672 = vmatpush.msra.mxu0 %v5671
    %v5673 = vand.u32 %v4353, 4294901760
    %5674 = vmatpush.msra.mxu0 %v5673
    %v5675 = vand.u32 %v4352, 4294901760
    %5676 = vmatpush.msra.mxu0 %v5675
    %v5677 = vand.u32 %v4351, 4294901760
    %5678 = vmatpush.msra.mxu0 %v5677
    %v5679 = vand.u32 %v4350, 4294901760
    %5680 = vmatpush.msra.mxu0 %v5679
    %v5681 = vand.u32 %v4349, 4294901760
    %5682 = vmatpush.msra.mxu0 %v5681
    %v5683 = vand.u32 %v4348, 4294901760
    %5684 = vmatpush.msra.mxu0 %v5683
    %v5685 = vand.u32 %v4347, 4294901760
    %5686 = vmatpush.msra.mxu0 %v5685
    %v5687 = vand.u32 %v4346, 4294901760
    %5688 = vmatpush.msra.mxu0 %v5687
    %v5689 = vand.u32 %v4345, 4294901760
    %5690 = vmatpush.msra.mxu0 %v5689
    %v5691 = vand.u32 %v4344, 4294901760
    %5692 = vmatpush.msra.mxu0 %v5691
    %v5693 = vand.u32 %v4343, 4294901760
    %5694 = vmatpush.msra.mxu0 %v5693
    %v5695 = vand.u32 %v4282, 4294901760
    %v5696 = vsub.f32 %v4282, %v5695
    %v5697 = vand.u32 %v5696, 4294901760
    %v5698 = vsub.f32 %v5696, %v5697
    %v5699 = vand.u32 %v5698, 4294901760
    %5700 = vmatmul.f32.gmra.mxu0 %v5699
    %v5701 = vpop.f32.mrf.mxu0
    %v5702 = vadd.f32 %v5649, %v5701
    %v5703 = vand.u32 %v4286, 4294901760
    %v5704 = vsub.f32 %v4286, %v5703
    %v5705 = vand.u32 %v5704, 4294901760
    %v5706 = vsub.f32 %v5704, %v5705
    %v5707 = vand.u32 %v5706, 4294901760
    %5708 = vmatmul.f32.gmra.mxu0 %v5707
    %v5709 = vpop.f32.mrf.mxu0
    %v5710 = vadd.f32 %v5653, %v5709
    %v5711 = vand.u32 %v4290, 4294901760
    %v5712 = vsub.f32 %v4290, %v5711
    %v5713 = vand.u32 %v5712, 4294901760
    %v5714 = vsub.f32 %v5712, %v5713
    %v5715 = vand.u32 %v5714, 4294901760
    %5716 = vmatmul.f32.gmra.mxu0 %v5715
    %v5717 = vpop.f32.mrf.mxu0
    %v5718 = vadd.f32 %v5657, %v5717
    %v5719 = vand.u32 %v4294, 4294901760
    %v5720 = vsub.f32 %v4294, %v5719
    %v5721 = vand.u32 %v5720, 4294901760
    %v5722 = vsub.f32 %v5720, %v5721
    %v5723 = vand.u32 %v5722, 4294901760
    %5724 = vmatmul.f32.gmra.mxu0 %v5723
    %v5725 = vpop.f32.mrf.mxu0
    %v5726 = vadd.f32 %v5661, %v5725
    %5727 = vdwg.mxu0
    %v5728 = vand.u32 %v4358, 4294901760
    %v5729 = vsub.f32 %v4358, %v5728
    %v5730 = vand.u32 %v5729, 4294901760
    %v5731 = vsub.f32 %v5729, %v5730
    %v5732 = vand.u32 %v5731, 4294901760
    %5733 = vmatpush.msra.mxu0 %v5732
    %v5734 = vand.u32 %v4357, 4294901760
    %v5735 = vsub.f32 %v4357, %v5734
    %v5736 = vand.u32 %v5735, 4294901760
    %v5737 = vsub.f32 %v5735, %v5736
    %v5738 = vand.u32 %v5737, 4294901760
    %5739 = vmatpush.msra.mxu0 %v5738
    %v5740 = vand.u32 %v4356, 4294901760
    %v5741 = vsub.f32 %v4356, %v5740
    %v5742 = vand.u32 %v5741, 4294901760
    %v5743 = vsub.f32 %v5741, %v5742
    %v5744 = vand.u32 %v5743, 4294901760
    %5745 = vmatpush.msra.mxu0 %v5744
    %v5746 = vand.u32 %v4355, 4294901760
    %v5747 = vsub.f32 %v4355, %v5746
    %v5748 = vand.u32 %v5747, 4294901760
    %v5749 = vsub.f32 %v5747, %v5748
    %v5750 = vand.u32 %v5749, 4294901760
    %5751 = vmatpush.msra.mxu0 %v5750
    %v5752 = vand.u32 %v4354, 4294901760
    %v5753 = vsub.f32 %v4354, %v5752
    %v5754 = vand.u32 %v5753, 4294901760
    %v5755 = vsub.f32 %v5753, %v5754
    %v5756 = vand.u32 %v5755, 4294901760
    %5757 = vmatpush.msra.mxu0 %v5756
    %v5758 = vand.u32 %v4353, 4294901760
    %v5759 = vsub.f32 %v4353, %v5758
    %v5760 = vand.u32 %v5759, 4294901760
    %v5761 = vsub.f32 %v5759, %v5760
    %v5762 = vand.u32 %v5761, 4294901760
    %5763 = vmatpush.msra.mxu0 %v5762
    %v5764 = vand.u32 %v4352, 4294901760
    %v5765 = vsub.f32 %v4352, %v5764
    %v5766 = vand.u32 %v5765, 4294901760
    %v5767 = vsub.f32 %v5765, %v5766
    %v5768 = vand.u32 %v5767, 4294901760
    %5769 = vmatpush.msra.mxu0 %v5768
    %v5770 = vand.u32 %v4351, 4294901760
    %v5771 = vsub.f32 %v4351, %v5770
    %v5772 = vand.u32 %v5771, 4294901760
    %v5773 = vsub.f32 %v5771, %v5772
    %v5774 = vand.u32 %v5773, 4294901760
    %5775 = vmatpush.msra.mxu0 %v5774
    %v5776 = vand.u32 %v4350, 4294901760
    %v5777 = vsub.f32 %v4350, %v5776
    %v5778 = vand.u32 %v5777, 4294901760
    %v5779 = vsub.f32 %v5777, %v5778
    %v5780 = vand.u32 %v5779, 4294901760
    %5781 = vmatpush.msra.mxu0 %v5780
    %v5782 = vand.u32 %v4349, 4294901760
    %v5783 = vsub.f32 %v4349, %v5782
    %v5784 = vand.u32 %v5783, 4294901760
    %v5785 = vsub.f32 %v5783, %v5784
    %v5786 = vand.u32 %v5785, 4294901760
    %5787 = vmatpush.msra.mxu0 %v5786
    %v5788 = vand.u32 %v4348, 4294901760
    %v5789 = vsub.f32 %v4348, %v5788
    %v5790 = vand.u32 %v5789, 4294901760
    %v5791 = vsub.f32 %v5789, %v5790
    %v5792 = vand.u32 %v5791, 4294901760
    %5793 = vmatpush.msra.mxu0 %v5792
    %v5794 = vand.u32 %v4347, 4294901760
    %v5795 = vsub.f32 %v4347, %v5794
    %v5796 = vand.u32 %v5795, 4294901760
    %v5797 = vsub.f32 %v5795, %v5796
    %v5798 = vand.u32 %v5797, 4294901760
    %5799 = vmatpush.msra.mxu0 %v5798
    %v5800 = vand.u32 %v4346, 4294901760
    %v5801 = vsub.f32 %v4346, %v5800
    %v5802 = vand.u32 %v5801, 4294901760
    %v5803 = vsub.f32 %v5801, %v5802
    %v5804 = vand.u32 %v5803, 4294901760
    %5805 = vmatpush.msra.mxu0 %v5804
    %v5806 = vand.u32 %v4345, 4294901760
    %v5807 = vsub.f32 %v4345, %v5806
    %v5808 = vand.u32 %v5807, 4294901760
    %v5809 = vsub.f32 %v5807, %v5808
    %v5810 = vand.u32 %v5809, 4294901760
    %5811 = vmatpush.msra.mxu0 %v5810
    %v5812 = vand.u32 %v4344, 4294901760
    %v5813 = vsub.f32 %v4344, %v5812
    %v5814 = vand.u32 %v5813, 4294901760
    %v5815 = vsub.f32 %v5813, %v5814
    %v5816 = vand.u32 %v5815, 4294901760
    %5817 = vmatpush.msra.mxu0 %v5816
    %v5818 = vand.u32 %v4343, 4294901760
    %v5819 = vsub.f32 %v4343, %v5818
    %v5820 = vand.u32 %v5819, 4294901760
    %v5821 = vsub.f32 %v5819, %v5820
    %v5822 = vand.u32 %v5821, 4294901760
    %5823 = vmatpush.msra.mxu0 %v5822
    %v5824 = vand.u32 %v4282, 4294901760
    %5825 = vmatmul.f32.gmra.mxu0 %v5824
    %v5826 = vpop.f32.mrf.mxu0
    %v5827 = vadd.f32 %v5702, %v5826
    %v5828 = vand.u32 %v4286, 4294901760
    %5829 = vmatmul.f32.gmra.mxu0 %v5828
    %v5830 = vpop.f32.mrf.mxu0
    %v5831 = vadd.f32 %v5710, %v5830
    %v5832 = vand.u32 %v4290, 4294901760
    %5833 = vmatmul.f32.gmra.mxu0 %v5832
    %v5834 = vpop.f32.mrf.mxu0
    %v5835 = vadd.f32 %v5718, %v5834
    %v5836 = vand.u32 %v4294, 4294901760
    %5837 = vmatmul.f32.gmra.mxu0 %v5836
    %v5838 = vpop.f32.mrf.mxu0
    %v5839 = vadd.f32 %v5726, %v5838
    %5840 = vdwg.mxu0
    %v5841 = vand.u32 %v4358, 4294901760
    %v5842 = vsub.f32 %v4358, %v5841
    %5843 = vmatpush.msra.mxu0 %v5842
    %v5844 = vand.u32 %v4357, 4294901760
    %v5845 = vsub.f32 %v4357, %v5844
    %5846 = vmatpush.msra.mxu0 %v5845
    %v5847 = vand.u32 %v4356, 4294901760
    %v5848 = vsub.f32 %v4356, %v5847
    %5849 = vmatpush.msra.mxu0 %v5848
    %v5850 = vand.u32 %v4355, 4294901760
    %v5851 = vsub.f32 %v4355, %v5850
    %5852 = vmatpush.msra.mxu0 %v5851
    %v5853 = vand.u32 %v4354, 4294901760
    %v5854 = vsub.f32 %v4354, %v5853
    %5855 = vmatpush.msra.mxu0 %v5854
    %v5856 = vand.u32 %v4353, 4294901760
    %v5857 = vsub.f32 %v4353, %v5856
    %5858 = vmatpush.msra.mxu0 %v5857
    %v5859 = vand.u32 %v4352, 4294901760
    %v5860 = vsub.f32 %v4352, %v5859
    %5861 = vmatpush.msra.mxu0 %v5860
    %v5862 = vand.u32 %v4351, 4294901760
    %v5863 = vsub.f32 %v4351, %v5862
    %5864 = vmatpush.msra.mxu0 %v5863
    %v5865 = vand.u32 %v4350, 4294901760
    %v5866 = vsub.f32 %v4350, %v5865
    %5867 = vmatpush.msra.mxu0 %v5866
    %v5868 = vand.u32 %v4349, 4294901760
    %v5869 = vsub.f32 %v4349, %v5868
    %5870 = vmatpush.msra.mxu0 %v5869
    %v5871 = vand.u32 %v4348, 4294901760
    %v5872 = vsub.f32 %v4348, %v5871
    %5873 = vmatpush.msra.mxu0 %v5872
    %v5874 = vand.u32 %v4347, 4294901760
    %v5875 = vsub.f32 %v4347, %v5874
    %5876 = vmatpush.msra.mxu0 %v5875
    %v5877 = vand.u32 %v4346, 4294901760
    %v5878 = vsub.f32 %v4346, %v5877
    %5879 = vmatpush.msra.mxu0 %v5878
    %v5880 = vand.u32 %v4345, 4294901760
    %v5881 = vsub.f32 %v4345, %v5880
    %5882 = vmatpush.msra.mxu0 %v5881
    %v5883 = vand.u32 %v4344, 4294901760
    %v5884 = vsub.f32 %v4344, %v5883
    %5885 = vmatpush.msra.mxu0 %v5884
    %v5886 = vand.u32 %v4343, 4294901760
    %v5887 = vsub.f32 %v4343, %v5886
    %5888 = vmatpush.msra.mxu0 %v5887
    %v5889 = vand.u32 %v4282, 4294901760
    %v5890 = vsub.f32 %v4282, %v5889
    %5891 = vmatmul.f32.gmra.mxu0 %v5890
    %v5892 = vpop.f32.mrf.mxu0
    %v5893 = vadd.f32 %v5827, %v5892
    %v5894 = vand.u32 %v4286, 4294901760
    %v5895 = vsub.f32 %v4286, %v5894
    %5896 = vmatmul.f32.gmra.mxu0 %v5895
    %v5897 = vpop.f32.mrf.mxu0
    %v5898 = vadd.f32 %v5831, %v5897
    %v5899 = vand.u32 %v4290, 4294901760
    %v5900 = vsub.f32 %v4290, %v5899
    %5901 = vmatmul.f32.gmra.mxu0 %v5900
    %v5902 = vpop.f32.mrf.mxu0
    %v5903 = vadd.f32 %v5835, %v5902
    %v5904 = vand.u32 %v4294, 4294901760
    %v5905 = vsub.f32 %v4294, %v5904
    %5906 = vmatmul.f32.gmra.mxu0 %v5905
    %v5907 = vpop.f32.mrf.mxu0
    %v5908 = vadd.f32 %v5839, %v5907
    %5909 = vdwg.mxu0
    %v5910 = vand.u32 %v4358, 4294901760
    %5911 = vmatpush.msra.mxu0 %v5910
    %v5912 = vand.u32 %v4357, 4294901760
    %5913 = vmatpush.msra.mxu0 %v5912
    %v5914 = vand.u32 %v4356, 4294901760
    %5915 = vmatpush.msra.mxu0 %v5914
    %v5916 = vand.u32 %v4355, 4294901760
    %5917 = vmatpush.msra.mxu0 %v5916
    %v5918 = vand.u32 %v4354, 4294901760
    %5919 = vmatpush.msra.mxu0 %v5918
    %v5920 = vand.u32 %v4353, 4294901760
    %5921 = vmatpush.msra.mxu0 %v5920
    %v5922 = vand.u32 %v4352, 4294901760
    %5923 = vmatpush.msra.mxu0 %v5922
    %v5924 = vand.u32 %v4351, 4294901760
    %5925 = vmatpush.msra.mxu0 %v5924
    %v5926 = vand.u32 %v4350, 4294901760
    %5927 = vmatpush.msra.mxu0 %v5926
    %v5928 = vand.u32 %v4349, 4294901760
    %5929 = vmatpush.msra.mxu0 %v5928
    %v5930 = vand.u32 %v4348, 4294901760
    %5931 = vmatpush.msra.mxu0 %v5930
    %v5932 = vand.u32 %v4347, 4294901760
    %5933 = vmatpush.msra.mxu0 %v5932
    %v5934 = vand.u32 %v4346, 4294901760
    %5935 = vmatpush.msra.mxu0 %v5934
    %v5936 = vand.u32 %v4345, 4294901760
    %5937 = vmatpush.msra.mxu0 %v5936
    %v5938 = vand.u32 %v4344, 4294901760
    %5939 = vmatpush.msra.mxu0 %v5938
    %v5940 = vand.u32 %v4343, 4294901760
    %5941 = vmatpush.msra.mxu0 %v5940
    %v5942 = vand.u32 %v4282, 4294901760
    %v5943 = vsub.f32 %v4282, %v5942
    %v5944 = vand.u32 %v5943, 4294901760
    %5945 = vmatmul.f32.gmra.mxu0 %v5944
    %v5946 = vpop.f32.mrf.mxu0
    %v5947 = vadd.f32 %v5893, %v5946
    %v5948 = vand.u32 %v4286, 4294901760
    %v5949 = vsub.f32 %v4286, %v5948
    %v5950 = vand.u32 %v5949, 4294901760
    %5951 = vmatmul.f32.gmra.mxu0 %v5950
    %v5952 = vpop.f32.mrf.mxu0
    %v5953 = vadd.f32 %v5898, %v5952
    %v5954 = vand.u32 %v4290, 4294901760
    %v5955 = vsub.f32 %v4290, %v5954
    %v5956 = vand.u32 %v5955, 4294901760
    %5957 = vmatmul.f32.gmra.mxu0 %v5956
    %v5958 = vpop.f32.mrf.mxu0
    %v5959 = vadd.f32 %v5903, %v5958
    %v5960 = vand.u32 %v4294, 4294901760
    %v5961 = vsub.f32 %v4294, %v5960
    %v5962 = vand.u32 %v5961, 4294901760
    %5963 = vmatmul.f32.gmra.mxu0 %v5962
    %v5964 = vpop.f32.mrf.mxu0
    %v5965 = vadd.f32 %v5908, %v5964
    %5966 = vdwg.mxu0
    %v5967 = vand.u32 %v4358, 4294901760
    %v5968 = vsub.f32 %v4358, %v5967
    %v5969 = vand.u32 %v5968, 4294901760
    %5970 = vmatpush.msra.mxu0 %v5969
    %v5971 = vand.u32 %v4357, 4294901760
    %v5972 = vsub.f32 %v4357, %v5971
    %v5973 = vand.u32 %v5972, 4294901760
    %5974 = vmatpush.msra.mxu0 %v5973
    %v5975 = vand.u32 %v4356, 4294901760
    %v5976 = vsub.f32 %v4356, %v5975
    %v5977 = vand.u32 %v5976, 4294901760
    %5978 = vmatpush.msra.mxu0 %v5977
    %v5979 = vand.u32 %v4355, 4294901760
    %v5980 = vsub.f32 %v4355, %v5979
    %v5981 = vand.u32 %v5980, 4294901760
    %5982 = vmatpush.msra.mxu0 %v5981
    %v5983 = vand.u32 %v4354, 4294901760
    %v5984 = vsub.f32 %v4354, %v5983
    %v5985 = vand.u32 %v5984, 4294901760
    %5986 = vmatpush.msra.mxu0 %v5985
    %v5987 = vand.u32 %v4353, 4294901760
    %v5988 = vsub.f32 %v4353, %v5987
    %v5989 = vand.u32 %v5988, 4294901760
    %5990 = vmatpush.msra.mxu0 %v5989
    %v5991 = vand.u32 %v4352, 4294901760
    %v5992 = vsub.f32 %v4352, %v5991
    %v5993 = vand.u32 %v5992, 4294901760
    %5994 = vmatpush.msra.mxu0 %v5993
    %v5995 = vand.u32 %v4351, 4294901760
    %v5996 = vsub.f32 %v4351, %v5995
    %v5997 = vand.u32 %v5996, 4294901760
    %5998 = vmatpush.msra.mxu0 %v5997
    %v5999 = vand.u32 %v4350, 4294901760
    %v6000 = vsub.f32 %v4350, %v5999
    %v6001 = vand.u32 %v6000, 4294901760
    %6002 = vmatpush.msra.mxu0 %v6001
    %v6003 = vand.u32 %v4349, 4294901760
    %v6004 = vsub.f32 %v4349, %v6003
    %v6005 = vand.u32 %v6004, 4294901760
    %6006 = vmatpush.msra.mxu0 %v6005
    %v6007 = vand.u32 %v4348, 4294901760
    %v6008 = vsub.f32 %v4348, %v6007
    %v6009 = vand.u32 %v6008, 4294901760
    %6010 = vmatpush.msra.mxu0 %v6009
    %v6011 = vand.u32 %v4347, 4294901760
    %v6012 = vsub.f32 %v4347, %v6011
    %v6013 = vand.u32 %v6012, 4294901760
    %6014 = vmatpush.msra.mxu0 %v6013
    %v6015 = vand.u32 %v4346, 4294901760
    %v6016 = vsub.f32 %v4346, %v6015
    %v6017 = vand.u32 %v6016, 4294901760
    %6018 = vmatpush.msra.mxu0 %v6017
    %v6019 = vand.u32 %v4345, 4294901760
    %v6020 = vsub.f32 %v4345, %v6019
    %v6021 = vand.u32 %v6020, 4294901760
    %6022 = vmatpush.msra.mxu0 %v6021
    %v6023 = vand.u32 %v4344, 4294901760
    %v6024 = vsub.f32 %v4344, %v6023
    %v6025 = vand.u32 %v6024, 4294901760
    %6026 = vmatpush.msra.mxu0 %v6025
    %v6027 = vand.u32 %v4343, 4294901760
    %v6028 = vsub.f32 %v4343, %v6027
    %v6029 = vand.u32 %v6028, 4294901760
    %6030 = vmatpush.msra.mxu0 %v6029
    %v6031 = vand.u32 %v4282, 4294901760
    %6032 = vmatmul.f32.gmra.mxu0 %v6031
    %v6033 = vpop.f32.mrf.mxu0
    %v6034 = vadd.f32 %v5947, %v6033
    %v6035 = vand.u32 %v4286, 4294901760
    %6036 = vmatmul.f32.gmra.mxu0 %v6035
    %v6037 = vpop.f32.mrf.mxu0
    %v6038 = vadd.f32 %v5953, %v6037
    %v6039 = vand.u32 %v4290, 4294901760
    %6040 = vmatmul.f32.gmra.mxu0 %v6039
    %v6041 = vpop.f32.mrf.mxu0
    %v6042 = vadd.f32 %v5959, %v6041
    %v6043 = vand.u32 %v4294, 4294901760
    %6044 = vmatmul.f32.gmra.mxu0 %v6043
    %v6045 = vpop.f32.mrf.mxu0
    %v6046 = vadd.f32 %v5965, %v6045
    %6047 = vdwg.mxu0
    %v6048 = vand.u32 %v4358, 4294901760
    %6049 = vmatpush.msra.mxu0 %v6048
    %v6050 = vand.u32 %v4357, 4294901760
    %6051 = vmatpush.msra.mxu0 %v6050
    %v6052 = vand.u32 %v4356, 4294901760
    %6053 = vmatpush.msra.mxu0 %v6052
    %v6054 = vand.u32 %v4355, 4294901760
    %6055 = vmatpush.msra.mxu0 %v6054
    %v6056 = vand.u32 %v4354, 4294901760
    %6057 = vmatpush.msra.mxu0 %v6056
    %v6058 = vand.u32 %v4353, 4294901760
    %6059 = vmatpush.msra.mxu0 %v6058
    %v6060 = vand.u32 %v4352, 4294901760
    %6061 = vmatpush.msra.mxu0 %v6060
    %v6062 = vand.u32 %v4351, 4294901760
    %6063 = vmatpush.msra.mxu0 %v6062
    %v6064 = vand.u32 %v4350, 4294901760
    %6065 = vmatpush.msra.mxu0 %v6064
    %v6066 = vand.u32 %v4349, 4294901760
    %6067 = vmatpush.msra.mxu0 %v6066
    %v6068 = vand.u32 %v4348, 4294901760
    %6069 = vmatpush.msra.mxu0 %v6068
    %v6070 = vand.u32 %v4347, 4294901760
    %6071 = vmatpush.msra.mxu0 %v6070
    %v6072 = vand.u32 %v4346, 4294901760
    %6073 = vmatpush.msra.mxu0 %v6072
    %v6074 = vand.u32 %v4345, 4294901760
    %6075 = vmatpush.msra.mxu0 %v6074
    %v6076 = vand.u32 %v4344, 4294901760
    %6077 = vmatpush.msra.mxu0 %v6076
    %v6078 = vand.u32 %v4343, 4294901760
    %6079 = vmatpush.msra.mxu0 %v6078
    %v6080 = vand.u32 %v4282, 4294901760
    %6081 = vmatmul.f32.gmra.mxu0 %v6080
    %v6082 = vpop.f32.mrf.mxu0
    %v6083 = vadd.f32 %v6034, %v6082
    %v6084 = vand.u32 %v4286, 4294901760
    %6085 = vmatmul.f32.gmra.mxu0 %v6084
    %v6086 = vpop.f32.mrf.mxu0
    %v6087 = vadd.f32 %v6038, %v6086
    %v6088 = vand.u32 %v4290, 4294901760
    %6089 = vmatmul.f32.gmra.mxu0 %v6088
    %v6090 = vpop.f32.mrf.mxu0
    %v6091 = vadd.f32 %v6042, %v6090
    %v6092 = vand.u32 %v4294, 4294901760
    %6093 = vmatmul.f32.gmra.mxu0 %v6092
    %v6094 = vpop.f32.mrf.mxu0
    %v6095 = vadd.f32 %v6046, %v6094
    %6096 = vdwg.mxu0
    %v6097 = vmax.f32 %v6083, 0.0
    %v6098 = vmax.f32 %v6087, 0.0
    %v6099 = vmax.f32 %v6091, 0.0
    %v6100 = vmax.f32 %v6095, 0.0
    %v6101 = vld [vmem:[%s3] sm:$0xff]
    %v6102 = vld [vmem:[%s3 + $0x8] sm:$0xff]
    %v6103 = vld [vmem:[%s3 + $0x10] sm:$0xff]
    %v6104 = vld [vmem:[%s3 + $0x18] sm:$0xff]
    %v6105 = vld [vmem:[%s3 + $0x20] sm:$0xff]
    %v6106 = vld [vmem:[%s3 + $0x28] sm:$0xff]
    %v6107 = vld [vmem:[%s3 + $0x30] sm:$0xff]
    %v6108 = vld [vmem:[%s3 + $0x38] sm:$0xff]
    %v6109 = vld [vmem:[%s3 + $0x40] sm:$0xff]
    %v6110 = vld [vmem:[%s3 + $0x48] sm:$0xff]
    %v6111 = vld [vmem:[%s3 + $0x50] sm:$0xff]
    %v6112 = vld [vmem:[%s3 + $0x58] sm:$0xff]
    %v6113 = vld [vmem:[%s3 + $0x60] sm:$0xff]
    %v6114 = vld [vmem:[%s3 + $0x68] sm:$0xff]
    %v6115 = vld [vmem:[%s3 + $0x70] sm:$0xff]
    %v6116 = vld [vmem:[%s3 + $0x78] sm:$0xff]
    %v6118 = vsel %vm4019, %v6101, 0
    %v6121 = vsel %vm4019, %v6102, 0
    %v6124 = vsel %vm4019, %v6103, 0
    %v6127 = vsel %vm4019, %v6104, 0
    %v6130 = vsel %vm4019, %v6105, 0
    %v6133 = vsel %vm4019, %v6106, 0
    %v6136 = vsel %vm4019, %v6107, 0
    %v6139 = vsel %vm4019, %v6108, 0
    %v6142 = vsel %vm4019, %v6109, 0
    %v6145 = vsel %vm4019, %v6110, 0
    %v6148 = vsel %vm4019, %v6111, 0
    %v6151 = vsel %vm4019, %v6112, 0
    %v6154 = vsel %vm4019, %v6113, 0
    %v6157 = vsel %vm4019, %v6114, 0
    %v6160 = vsel %vm4019, %v6115, 0
    %v6163 = vsel %vm4019, %v6116, 0
    %6165 = vmatpush.msra.mxu0 0.0
    %6166 = vmatpush.msra.mxu0 0.0
    %6167 = vmatpush.msra.mxu0 0.0
    %6168 = vmatpush.msra.mxu0 0.0
    %6169 = vmatpush.msra.mxu0 0.0
    %6170 = vmatpush.msra.mxu0 0.0
    %6171 = vmatpush.msra.mxu0 0.0
    %6172 = vmatpush.msra.mxu0 0.0
    %6173 = vmatpush.msra.mxu0 0.0
    %6174 = vmatpush.msra.mxu0 0.0
    %6175 = vmatpush.msra.mxu0 0.0
    %6176 = vmatpush.msra.mxu0 0.0
    %v6177 = vand.u32 %v6100, 4294901760
    %6178 = vmatpush.msra.mxu0 %v6177
    %v6179 = vand.u32 %v6099, 4294901760
    %6180 = vmatpush.msra.mxu0 %v6179
    %v6181 = vand.u32 %v6098, 4294901760
    %6182 = vmatpush.msra.mxu0 %v6181
    %v6183 = vand.u32 %v6097, 4294901760
    %6184 = vmatpush.msra.mxu0 %v6183
    %v6185 = vand.u32 %v6118, 4294901760
    %v6186 = vsub.f32 %v6118, %v6185
    %v6187 = vand.u32 %v6186, 4294901760
    %v6188 = vsub.f32 %v6186, %v6187
    %v6189 = vand.u32 %v6188, 4294901760
    %6190 = vmatmul.f32.gmra.mxu0 %v6189
    %v6191 = vpop.f32.mrf.mxu0
    %v6192 = vadd.f32 0.0, %v6191
    %v6193 = vand.u32 %v6121, 4294901760
    %v6194 = vsub.f32 %v6121, %v6193
    %v6195 = vand.u32 %v6194, 4294901760
    %v6196 = vsub.f32 %v6194, %v6195
    %v6197 = vand.u32 %v6196, 4294901760
    %6198 = vmatmul.f32.gmra.mxu0 %v6197
    %v6199 = vpop.f32.mrf.mxu0
    %v6200 = vadd.f32 0.0, %v6199
    %v6201 = vand.u32 %v6124, 4294901760
    %v6202 = vsub.f32 %v6124, %v6201
    %v6203 = vand.u32 %v6202, 4294901760
    %v6204 = vsub.f32 %v6202, %v6203
    %v6205 = vand.u32 %v6204, 4294901760
    %6206 = vmatmul.f32.gmra.mxu0 %v6205
    %v6207 = vpop.f32.mrf.mxu0
    %v6208 = vadd.f32 0.0, %v6207
    %v6209 = vand.u32 %v6127, 4294901760
    %v6210 = vsub.f32 %v6127, %v6209
    %v6211 = vand.u32 %v6210, 4294901760
    %v6212 = vsub.f32 %v6210, %v6211
    %v6213 = vand.u32 %v6212, 4294901760
    %6214 = vmatmul.f32.gmra.mxu0 %v6213
    %v6215 = vpop.f32.mrf.mxu0
    %v6216 = vadd.f32 0.0, %v6215
    %v6217 = vand.u32 %v6130, 4294901760
    %v6218 = vsub.f32 %v6130, %v6217
    %v6219 = vand.u32 %v6218, 4294901760
    %v6220 = vsub.f32 %v6218, %v6219
    %v6221 = vand.u32 %v6220, 4294901760
    %6222 = vmatmul.f32.gmra.mxu0 %v6221
    %v6223 = vpop.f32.mrf.mxu0
    %v6224 = vadd.f32 0.0, %v6223
    %v6225 = vand.u32 %v6133, 4294901760
    %v6226 = vsub.f32 %v6133, %v6225
    %v6227 = vand.u32 %v6226, 4294901760
    %v6228 = vsub.f32 %v6226, %v6227
    %v6229 = vand.u32 %v6228, 4294901760
    %6230 = vmatmul.f32.gmra.mxu0 %v6229
    %v6231 = vpop.f32.mrf.mxu0
    %v6232 = vadd.f32 0.0, %v6231
    %v6233 = vand.u32 %v6136, 4294901760
    %v6234 = vsub.f32 %v6136, %v6233
    %v6235 = vand.u32 %v6234, 4294901760
    %v6236 = vsub.f32 %v6234, %v6235
    %v6237 = vand.u32 %v6236, 4294901760
    %6238 = vmatmul.f32.gmra.mxu0 %v6237
    %v6239 = vpop.f32.mrf.mxu0
    %v6240 = vadd.f32 0.0, %v6239
    %v6241 = vand.u32 %v6139, 4294901760
    %v6242 = vsub.f32 %v6139, %v6241
    %v6243 = vand.u32 %v6242, 4294901760
    %v6244 = vsub.f32 %v6242, %v6243
    %v6245 = vand.u32 %v6244, 4294901760
    %6246 = vmatmul.f32.gmra.mxu0 %v6245
    %v6247 = vpop.f32.mrf.mxu0
    %v6248 = vadd.f32 0.0, %v6247
    %v6249 = vand.u32 %v6142, 4294901760
    %v6250 = vsub.f32 %v6142, %v6249
    %v6251 = vand.u32 %v6250, 4294901760
    %v6252 = vsub.f32 %v6250, %v6251
    %v6253 = vand.u32 %v6252, 4294901760
    %6254 = vmatmul.f32.gmra.mxu0 %v6253
    %v6255 = vpop.f32.mrf.mxu0
    %v6256 = vadd.f32 0.0, %v6255
    %v6257 = vand.u32 %v6145, 4294901760
    %v6258 = vsub.f32 %v6145, %v6257
    %v6259 = vand.u32 %v6258, 4294901760
    %v6260 = vsub.f32 %v6258, %v6259
    %v6261 = vand.u32 %v6260, 4294901760
    %6262 = vmatmul.f32.gmra.mxu0 %v6261
    %v6263 = vpop.f32.mrf.mxu0
    %v6264 = vadd.f32 0.0, %v6263
    %v6265 = vand.u32 %v6148, 4294901760
    %v6266 = vsub.f32 %v6148, %v6265
    %v6267 = vand.u32 %v6266, 4294901760
    %v6268 = vsub.f32 %v6266, %v6267
    %v6269 = vand.u32 %v6268, 4294901760
    %6270 = vmatmul.f32.gmra.mxu0 %v6269
    %v6271 = vpop.f32.mrf.mxu0
    %v6272 = vadd.f32 0.0, %v6271
    %v6273 = vand.u32 %v6151, 4294901760
    %v6274 = vsub.f32 %v6151, %v6273
    %v6275 = vand.u32 %v6274, 4294901760
    %v6276 = vsub.f32 %v6274, %v6275
    %v6277 = vand.u32 %v6276, 4294901760
    %6278 = vmatmul.f32.gmra.mxu0 %v6277
    %v6279 = vpop.f32.mrf.mxu0
    %v6280 = vadd.f32 0.0, %v6279
    %v6281 = vand.u32 %v6154, 4294901760
    %v6282 = vsub.f32 %v6154, %v6281
    %v6283 = vand.u32 %v6282, 4294901760
    %v6284 = vsub.f32 %v6282, %v6283
    %v6285 = vand.u32 %v6284, 4294901760
    %6286 = vmatmul.f32.gmra.mxu0 %v6285
    %v6287 = vpop.f32.mrf.mxu0
    %v6288 = vadd.f32 0.0, %v6287
    %v6289 = vand.u32 %v6157, 4294901760
    %v6290 = vsub.f32 %v6157, %v6289
    %v6291 = vand.u32 %v6290, 4294901760
    %v6292 = vsub.f32 %v6290, %v6291
    %v6293 = vand.u32 %v6292, 4294901760
    %6294 = vmatmul.f32.gmra.mxu0 %v6293
    %v6295 = vpop.f32.mrf.mxu0
    %v6296 = vadd.f32 0.0, %v6295
    %v6297 = vand.u32 %v6160, 4294901760
    %v6298 = vsub.f32 %v6160, %v6297
    %v6299 = vand.u32 %v6298, 4294901760
    %v6300 = vsub.f32 %v6298, %v6299
    %v6301 = vand.u32 %v6300, 4294901760
    %6302 = vmatmul.f32.gmra.mxu0 %v6301
    %v6303 = vpop.f32.mrf.mxu0
    %v6304 = vadd.f32 0.0, %v6303
    %v6305 = vand.u32 %v6163, 4294901760
    %v6306 = vsub.f32 %v6163, %v6305
    %v6307 = vand.u32 %v6306, 4294901760
    %v6308 = vsub.f32 %v6306, %v6307
    %v6309 = vand.u32 %v6308, 4294901760
    %6310 = vmatmul.f32.gmra.mxu0 %v6309
    %v6311 = vpop.f32.mrf.mxu0
    %v6312 = vadd.f32 0.0, %v6311
    %6313 = vdwg.mxu0
    %6314 = vmatpush.msra.mxu0 0.0
    %6315 = vmatpush.msra.mxu0 0.0
    %6316 = vmatpush.msra.mxu0 0.0
    %6317 = vmatpush.msra.mxu0 0.0
    %6318 = vmatpush.msra.mxu0 0.0
    %6319 = vmatpush.msra.mxu0 0.0
    %6320 = vmatpush.msra.mxu0 0.0
    %6321 = vmatpush.msra.mxu0 0.0
    %6322 = vmatpush.msra.mxu0 0.0
    %6323 = vmatpush.msra.mxu0 0.0
    %6324 = vmatpush.msra.mxu0 0.0
    %6325 = vmatpush.msra.mxu0 0.0
    %v6326 = vand.u32 %v6100, 4294901760
    %v6327 = vsub.f32 %v6100, %v6326
    %v6328 = vand.u32 %v6327, 4294901760
    %v6329 = vsub.f32 %v6327, %v6328
    %v6330 = vand.u32 %v6329, 4294901760
    %6331 = vmatpush.msra.mxu0 %v6330
    %v6332 = vand.u32 %v6099, 4294901760
    %v6333 = vsub.f32 %v6099, %v6332
    %v6334 = vand.u32 %v6333, 4294901760
    %v6335 = vsub.f32 %v6333, %v6334
    %v6336 = vand.u32 %v6335, 4294901760
    %6337 = vmatpush.msra.mxu0 %v6336
    %v6338 = vand.u32 %v6098, 4294901760
    %v6339 = vsub.f32 %v6098, %v6338
    %v6340 = vand.u32 %v6339, 4294901760
    %v6341 = vsub.f32 %v6339, %v6340
    %v6342 = vand.u32 %v6341, 4294901760
    %6343 = vmatpush.msra.mxu0 %v6342
    %v6344 = vand.u32 %v6097, 4294901760
    %v6345 = vsub.f32 %v6097, %v6344
    %v6346 = vand.u32 %v6345, 4294901760
    %v6347 = vsub.f32 %v6345, %v6346
    %v6348 = vand.u32 %v6347, 4294901760
    %6349 = vmatpush.msra.mxu0 %v6348
    %v6350 = vand.u32 %v6118, 4294901760
    %6351 = vmatmul.f32.gmra.mxu0 %v6350
    %v6352 = vpop.f32.mrf.mxu0
    %v6353 = vadd.f32 %v6192, %v6352
    %v6354 = vand.u32 %v6121, 4294901760
    %6355 = vmatmul.f32.gmra.mxu0 %v6354
    %v6356 = vpop.f32.mrf.mxu0
    %v6357 = vadd.f32 %v6200, %v6356
    %v6358 = vand.u32 %v6124, 4294901760
    %6359 = vmatmul.f32.gmra.mxu0 %v6358
    %v6360 = vpop.f32.mrf.mxu0
    %v6361 = vadd.f32 %v6208, %v6360
    %v6362 = vand.u32 %v6127, 4294901760
    %6363 = vmatmul.f32.gmra.mxu0 %v6362
    %v6364 = vpop.f32.mrf.mxu0
    %v6365 = vadd.f32 %v6216, %v6364
    %v6366 = vand.u32 %v6130, 4294901760
    %6367 = vmatmul.f32.gmra.mxu0 %v6366
    %v6368 = vpop.f32.mrf.mxu0
    %v6369 = vadd.f32 %v6224, %v6368
    %v6370 = vand.u32 %v6133, 4294901760
    %6371 = vmatmul.f32.gmra.mxu0 %v6370
    %v6372 = vpop.f32.mrf.mxu0
    %v6373 = vadd.f32 %v6232, %v6372
    %v6374 = vand.u32 %v6136, 4294901760
    %6375 = vmatmul.f32.gmra.mxu0 %v6374
    %v6376 = vpop.f32.mrf.mxu0
    %v6377 = vadd.f32 %v6240, %v6376
    %v6378 = vand.u32 %v6139, 4294901760
    %6379 = vmatmul.f32.gmra.mxu0 %v6378
    %v6380 = vpop.f32.mrf.mxu0
    %v6381 = vadd.f32 %v6248, %v6380
    %v6382 = vand.u32 %v6142, 4294901760
    %6383 = vmatmul.f32.gmra.mxu0 %v6382
    %v6384 = vpop.f32.mrf.mxu0
    %v6385 = vadd.f32 %v6256, %v6384
    %v6386 = vand.u32 %v6145, 4294901760
    %6387 = vmatmul.f32.gmra.mxu0 %v6386
    %v6388 = vpop.f32.mrf.mxu0
    %v6389 = vadd.f32 %v6264, %v6388
    %v6390 = vand.u32 %v6148, 4294901760
    %6391 = vmatmul.f32.gmra.mxu0 %v6390
    %v6392 = vpop.f32.mrf.mxu0
    %v6393 = vadd.f32 %v6272, %v6392
    %v6394 = vand.u32 %v6151, 4294901760
    %6395 = vmatmul.f32.gmra.mxu0 %v6394
    %v6396 = vpop.f32.mrf.mxu0
    %v6397 = vadd.f32 %v6280, %v6396
    %v6398 = vand.u32 %v6154, 4294901760
    %6399 = vmatmul.f32.gmra.mxu0 %v6398
    %v6400 = vpop.f32.mrf.mxu0
    %v6401 = vadd.f32 %v6288, %v6400
    %v6402 = vand.u32 %v6157, 4294901760
    %6403 = vmatmul.f32.gmra.mxu0 %v6402
    %v6404 = vpop.f32.mrf.mxu0
    %v6405 = vadd.f32 %v6296, %v6404
    %v6406 = vand.u32 %v6160, 4294901760
    %6407 = vmatmul.f32.gmra.mxu0 %v6406
    %v6408 = vpop.f32.mrf.mxu0
    %v6409 = vadd.f32 %v6304, %v6408
    %v6410 = vand.u32 %v6163, 4294901760
    %6411 = vmatmul.f32.gmra.mxu0 %v6410
    %v6412 = vpop.f32.mrf.mxu0
    %v6413 = vadd.f32 %v6312, %v6412
    %6414 = vdwg.mxu0
    %6415 = vmatpush.msra.mxu0 0.0
    %6416 = vmatpush.msra.mxu0 0.0
    %6417 = vmatpush.msra.mxu0 0.0
    %6418 = vmatpush.msra.mxu0 0.0
    %6419 = vmatpush.msra.mxu0 0.0
    %6420 = vmatpush.msra.mxu0 0.0
    %6421 = vmatpush.msra.mxu0 0.0
    %6422 = vmatpush.msra.mxu0 0.0
    %6423 = vmatpush.msra.mxu0 0.0
    %6424 = vmatpush.msra.mxu0 0.0
    %6425 = vmatpush.msra.mxu0 0.0
    %6426 = vmatpush.msra.mxu0 0.0
    %v6427 = vand.u32 %v6100, 4294901760
    %v6428 = vsub.f32 %v6100, %v6427
    %6429 = vmatpush.msra.mxu0 %v6428
    %v6430 = vand.u32 %v6099, 4294901760
    %v6431 = vsub.f32 %v6099, %v6430
    %6432 = vmatpush.msra.mxu0 %v6431
    %v6433 = vand.u32 %v6098, 4294901760
    %v6434 = vsub.f32 %v6098, %v6433
    %6435 = vmatpush.msra.mxu0 %v6434
    %v6436 = vand.u32 %v6097, 4294901760
    %v6437 = vsub.f32 %v6097, %v6436
    %6438 = vmatpush.msra.mxu0 %v6437
    %v6439 = vand.u32 %v6118, 4294901760
    %v6440 = vsub.f32 %v6118, %v6439
    %6441 = vmatmul.f32.gmra.mxu0 %v6440
    %v6442 = vpop.f32.mrf.mxu0
    %v6443 = vadd.f32 %v6353, %v6442
    %v6444 = vand.u32 %v6121, 4294901760
    %v6445 = vsub.f32 %v6121, %v6444
    %6446 = vmatmul.f32.gmra.mxu0 %v6445
    %v6447 = vpop.f32.mrf.mxu0
    %v6448 = vadd.f32 %v6357, %v6447
    %v6449 = vand.u32 %v6124, 4294901760
    %v6450 = vsub.f32 %v6124, %v6449
    %6451 = vmatmul.f32.gmra.mxu0 %v6450
    %v6452 = vpop.f32.mrf.mxu0
    %v6453 = vadd.f32 %v6361, %v6452
    %v6454 = vand.u32 %v6127, 4294901760
    %v6455 = vsub.f32 %v6127, %v6454
    %6456 = vmatmul.f32.gmra.mxu0 %v6455
    %v6457 = vpop.f32.mrf.mxu0
    %v6458 = vadd.f32 %v6365, %v6457
    %v6459 = vand.u32 %v6130, 4294901760
    %v6460 = vsub.f32 %v6130, %v6459
    %6461 = vmatmul.f32.gmra.mxu0 %v6460
    %v6462 = vpop.f32.mrf.mxu0
    %v6463 = vadd.f32 %v6369, %v6462
    %v6464 = vand.u32 %v6133, 4294901760
    %v6465 = vsub.f32 %v6133, %v6464
    %6466 = vmatmul.f32.gmra.mxu0 %v6465
    %v6467 = vpop.f32.mrf.mxu0
    %v6468 = vadd.f32 %v6373, %v6467
    %v6469 = vand.u32 %v6136, 4294901760
    %v6470 = vsub.f32 %v6136, %v6469
    %6471 = vmatmul.f32.gmra.mxu0 %v6470
    %v6472 = vpop.f32.mrf.mxu0
    %v6473 = vadd.f32 %v6377, %v6472
    %v6474 = vand.u32 %v6139, 4294901760
    %v6475 = vsub.f32 %v6139, %v6474
    %6476 = vmatmul.f32.gmra.mxu0 %v6475
    %v6477 = vpop.f32.mrf.mxu0
    %v6478 = vadd.f32 %v6381, %v6477
    %v6479 = vand.u32 %v6142, 4294901760
    %v6480 = vsub.f32 %v6142, %v6479
    %6481 = vmatmul.f32.gmra.mxu0 %v6480
    %v6482 = vpop.f32.mrf.mxu0
    %v6483 = vadd.f32 %v6385, %v6482
    %v6484 = vand.u32 %v6145, 4294901760
    %v6485 = vsub.f32 %v6145, %v6484
    %6486 = vmatmul.f32.gmra.mxu0 %v6485
    %v6487 = vpop.f32.mrf.mxu0
    %v6488 = vadd.f32 %v6389, %v6487
    %v6489 = vand.u32 %v6148, 4294901760
    %v6490 = vsub.f32 %v6148, %v6489
    %6491 = vmatmul.f32.gmra.mxu0 %v6490
    %v6492 = vpop.f32.mrf.mxu0
    %v6493 = vadd.f32 %v6393, %v6492
    %v6494 = vand.u32 %v6151, 4294901760
    %v6495 = vsub.f32 %v6151, %v6494
    %6496 = vmatmul.f32.gmra.mxu0 %v6495
    %v6497 = vpop.f32.mrf.mxu0
    %v6498 = vadd.f32 %v6397, %v6497
    %v6499 = vand.u32 %v6154, 4294901760
    %v6500 = vsub.f32 %v6154, %v6499
    %6501 = vmatmul.f32.gmra.mxu0 %v6500
    %v6502 = vpop.f32.mrf.mxu0
    %v6503 = vadd.f32 %v6401, %v6502
    %v6504 = vand.u32 %v6157, 4294901760
    %v6505 = vsub.f32 %v6157, %v6504
    %6506 = vmatmul.f32.gmra.mxu0 %v6505
    %v6507 = vpop.f32.mrf.mxu0
    %v6508 = vadd.f32 %v6405, %v6507
    %v6509 = vand.u32 %v6160, 4294901760
    %v6510 = vsub.f32 %v6160, %v6509
    %6511 = vmatmul.f32.gmra.mxu0 %v6510
    %v6512 = vpop.f32.mrf.mxu0
    %v6513 = vadd.f32 %v6409, %v6512
    %v6514 = vand.u32 %v6163, 4294901760
    %v6515 = vsub.f32 %v6163, %v6514
    %6516 = vmatmul.f32.gmra.mxu0 %v6515
    %v6517 = vpop.f32.mrf.mxu0
    %v6518 = vadd.f32 %v6413, %v6517
    %6519 = vdwg.mxu0
    %6520 = vmatpush.msra.mxu0 0.0
    %6521 = vmatpush.msra.mxu0 0.0
    %6522 = vmatpush.msra.mxu0 0.0
    %6523 = vmatpush.msra.mxu0 0.0
    %6524 = vmatpush.msra.mxu0 0.0
    %6525 = vmatpush.msra.mxu0 0.0
    %6526 = vmatpush.msra.mxu0 0.0
    %6527 = vmatpush.msra.mxu0 0.0
    %6528 = vmatpush.msra.mxu0 0.0
    %6529 = vmatpush.msra.mxu0 0.0
    %6530 = vmatpush.msra.mxu0 0.0
    %6531 = vmatpush.msra.mxu0 0.0
    %v6532 = vand.u32 %v6100, 4294901760
    %6533 = vmatpush.msra.mxu0 %v6532
    %v6534 = vand.u32 %v6099, 4294901760
    %6535 = vmatpush.msra.mxu0 %v6534
    %v6536 = vand.u32 %v6098, 4294901760
    %6537 = vmatpush.msra.mxu0 %v6536
    %v6538 = vand.u32 %v6097, 4294901760
    %6539 = vmatpush.msra.mxu0 %v6538
    %v6540 = vand.u32 %v6118, 4294901760
    %v6541 = vsub.f32 %v6118, %v6540
    %v6542 = vand.u32 %v6541, 4294901760
    %6543 = vmatmul.f32.gmra.mxu0 %v6542
    %v6544 = vpop.f32.mrf.mxu0
    %v6545 = vadd.f32 %v6443, %v6544
    %v6546 = vand.u32 %v6121, 4294901760
    %v6547 = vsub.f32 %v6121, %v6546
    %v6548 = vand.u32 %v6547, 4294901760
    %6549 = vmatmul.f32.gmra.mxu0 %v6548
    %v6550 = vpop.f32.mrf.mxu0
    %v6551 = vadd.f32 %v6448, %v6550
    %v6552 = vand.u32 %v6124, 4294901760
    %v6553 = vsub.f32 %v6124, %v6552
    %v6554 = vand.u32 %v6553, 4294901760
    %6555 = vmatmul.f32.gmra.mxu0 %v6554
    %v6556 = vpop.f32.mrf.mxu0
    %v6557 = vadd.f32 %v6453, %v6556
    %v6558 = vand.u32 %v6127, 4294901760
    %v6559 = vsub.f32 %v6127, %v6558
    %v6560 = vand.u32 %v6559, 4294901760
    %6561 = vmatmul.f32.gmra.mxu0 %v6560
    %v6562 = vpop.f32.mrf.mxu0
    %v6563 = vadd.f32 %v6458, %v6562
    %v6564 = vand.u32 %v6130, 4294901760
    %v6565 = vsub.f32 %v6130, %v6564
    %v6566 = vand.u32 %v6565, 4294901760
    %6567 = vmatmul.f32.gmra.mxu0 %v6566
    %v6568 = vpop.f32.mrf.mxu0
    %v6569 = vadd.f32 %v6463, %v6568
    %v6570 = vand.u32 %v6133, 4294901760
    %v6571 = vsub.f32 %v6133, %v6570
    %v6572 = vand.u32 %v6571, 4294901760
    %6573 = vmatmul.f32.gmra.mxu0 %v6572
    %v6574 = vpop.f32.mrf.mxu0
    %v6575 = vadd.f32 %v6468, %v6574
    %v6576 = vand.u32 %v6136, 4294901760
    %v6577 = vsub.f32 %v6136, %v6576
    %v6578 = vand.u32 %v6577, 4294901760
    %6579 = vmatmul.f32.gmra.mxu0 %v6578
    %v6580 = vpop.f32.mrf.mxu0
    %v6581 = vadd.f32 %v6473, %v6580
    %v6582 = vand.u32 %v6139, 4294901760
    %v6583 = vsub.f32 %v6139, %v6582
    %v6584 = vand.u32 %v6583, 4294901760
    %6585 = vmatmul.f32.gmra.mxu0 %v6584
    %v6586 = vpop.f32.mrf.mxu0
    %v6587 = vadd.f32 %v6478, %v6586
    %v6588 = vand.u32 %v6142, 4294901760
    %v6589 = vsub.f32 %v6142, %v6588
    %v6590 = vand.u32 %v6589, 4294901760
    %6591 = vmatmul.f32.gmra.mxu0 %v6590
    %v6592 = vpop.f32.mrf.mxu0
    %v6593 = vadd.f32 %v6483, %v6592
    %v6594 = vand.u32 %v6145, 4294901760
    %v6595 = vsub.f32 %v6145, %v6594
    %v6596 = vand.u32 %v6595, 4294901760
    %6597 = vmatmul.f32.gmra.mxu0 %v6596
    %v6598 = vpop.f32.mrf.mxu0
    %v6599 = vadd.f32 %v6488, %v6598
    %v6600 = vand.u32 %v6148, 4294901760
    %v6601 = vsub.f32 %v6148, %v6600
    %v6602 = vand.u32 %v6601, 4294901760
    %6603 = vmatmul.f32.gmra.mxu0 %v6602
    %v6604 = vpop.f32.mrf.mxu0
    %v6605 = vadd.f32 %v6493, %v6604
    %v6606 = vand.u32 %v6151, 4294901760
    %v6607 = vsub.f32 %v6151, %v6606
    %v6608 = vand.u32 %v6607, 4294901760
    %6609 = vmatmul.f32.gmra.mxu0 %v6608
    %v6610 = vpop.f32.mrf.mxu0
    %v6611 = vadd.f32 %v6498, %v6610
    %v6612 = vand.u32 %v6154, 4294901760
    %v6613 = vsub.f32 %v6154, %v6612
    %v6614 = vand.u32 %v6613, 4294901760
    %6615 = vmatmul.f32.gmra.mxu0 %v6614
    %v6616 = vpop.f32.mrf.mxu0
    %v6617 = vadd.f32 %v6503, %v6616
    %v6618 = vand.u32 %v6157, 4294901760
    %v6619 = vsub.f32 %v6157, %v6618
    %v6620 = vand.u32 %v6619, 4294901760
    %6621 = vmatmul.f32.gmra.mxu0 %v6620
    %v6622 = vpop.f32.mrf.mxu0
    %v6623 = vadd.f32 %v6508, %v6622
    %v6624 = vand.u32 %v6160, 4294901760
    %v6625 = vsub.f32 %v6160, %v6624
    %v6626 = vand.u32 %v6625, 4294901760
    %6627 = vmatmul.f32.gmra.mxu0 %v6626
    %v6628 = vpop.f32.mrf.mxu0
    %v6629 = vadd.f32 %v6513, %v6628
    %v6630 = vand.u32 %v6163, 4294901760
    %v6631 = vsub.f32 %v6163, %v6630
    %v6632 = vand.u32 %v6631, 4294901760
    %6633 = vmatmul.f32.gmra.mxu0 %v6632
    %v6634 = vpop.f32.mrf.mxu0
    %v6635 = vadd.f32 %v6518, %v6634
    %6636 = vdwg.mxu0
    %6637 = vmatpush.msra.mxu0 0.0
    %6638 = vmatpush.msra.mxu0 0.0
    %6639 = vmatpush.msra.mxu0 0.0
    %6640 = vmatpush.msra.mxu0 0.0
    %6641 = vmatpush.msra.mxu0 0.0
    %6642 = vmatpush.msra.mxu0 0.0
    %6643 = vmatpush.msra.mxu0 0.0
    %6644 = vmatpush.msra.mxu0 0.0
    %6645 = vmatpush.msra.mxu0 0.0
    %6646 = vmatpush.msra.mxu0 0.0
    %6647 = vmatpush.msra.mxu0 0.0
    %6648 = vmatpush.msra.mxu0 0.0
    %v6649 = vand.u32 %v6100, 4294901760
    %v6650 = vsub.f32 %v6100, %v6649
    %v6651 = vand.u32 %v6650, 4294901760
    %6652 = vmatpush.msra.mxu0 %v6651
    %v6653 = vand.u32 %v6099, 4294901760
    %v6654 = vsub.f32 %v6099, %v6653
    %v6655 = vand.u32 %v6654, 4294901760
    %6656 = vmatpush.msra.mxu0 %v6655
    %v6657 = vand.u32 %v6098, 4294901760
    %v6658 = vsub.f32 %v6098, %v6657
    %v6659 = vand.u32 %v6658, 4294901760
    %6660 = vmatpush.msra.mxu0 %v6659
    %v6661 = vand.u32 %v6097, 4294901760
    %v6662 = vsub.f32 %v6097, %v6661
    %v6663 = vand.u32 %v6662, 4294901760
    %6664 = vmatpush.msra.mxu0 %v6663
    %v6665 = vand.u32 %v6118, 4294901760
    %6666 = vmatmul.f32.gmra.mxu0 %v6665
    %v6667 = vpop.f32.mrf.mxu0
    %v6668 = vadd.f32 %v6545, %v6667
    %v6669 = vand.u32 %v6121, 4294901760
    %6670 = vmatmul.f32.gmra.mxu0 %v6669
    %v6671 = vpop.f32.mrf.mxu0
    %v6672 = vadd.f32 %v6551, %v6671
    %v6673 = vand.u32 %v6124, 4294901760
    %6674 = vmatmul.f32.gmra.mxu0 %v6673
    %v6675 = vpop.f32.mrf.mxu0
    %v6676 = vadd.f32 %v6557, %v6675
    %v6677 = vand.u32 %v6127, 4294901760
    %6678 = vmatmul.f32.gmra.mxu0 %v6677
    %v6679 = vpop.f32.mrf.mxu0
    %v6680 = vadd.f32 %v6563, %v6679
    %v6681 = vand.u32 %v6130, 4294901760
    %6682 = vmatmul.f32.gmra.mxu0 %v6681
    %v6683 = vpop.f32.mrf.mxu0
    %v6684 = vadd.f32 %v6569, %v6683
    %v6685 = vand.u32 %v6133, 4294901760
    %6686 = vmatmul.f32.gmra.mxu0 %v6685
    %v6687 = vpop.f32.mrf.mxu0
    %v6688 = vadd.f32 %v6575, %v6687
    %v6689 = vand.u32 %v6136, 4294901760
    %6690 = vmatmul.f32.gmra.mxu0 %v6689
    %v6691 = vpop.f32.mrf.mxu0
    %v6692 = vadd.f32 %v6581, %v6691
    %v6693 = vand.u32 %v6139, 4294901760
    %6694 = vmatmul.f32.gmra.mxu0 %v6693
    %v6695 = vpop.f32.mrf.mxu0
    %v6696 = vadd.f32 %v6587, %v6695
    %v6697 = vand.u32 %v6142, 4294901760
    %6698 = vmatmul.f32.gmra.mxu0 %v6697
    %v6699 = vpop.f32.mrf.mxu0
    %v6700 = vadd.f32 %v6593, %v6699
    %v6701 = vand.u32 %v6145, 4294901760
    %6702 = vmatmul.f32.gmra.mxu0 %v6701
    %v6703 = vpop.f32.mrf.mxu0
    %v6704 = vadd.f32 %v6599, %v6703
    %v6705 = vand.u32 %v6148, 4294901760
    %6706 = vmatmul.f32.gmra.mxu0 %v6705
    %v6707 = vpop.f32.mrf.mxu0
    %v6708 = vadd.f32 %v6605, %v6707
    %v6709 = vand.u32 %v6151, 4294901760
    %6710 = vmatmul.f32.gmra.mxu0 %v6709
    %v6711 = vpop.f32.mrf.mxu0
    %v6712 = vadd.f32 %v6611, %v6711
    %v6713 = vand.u32 %v6154, 4294901760
    %6714 = vmatmul.f32.gmra.mxu0 %v6713
    %v6715 = vpop.f32.mrf.mxu0
    %v6716 = vadd.f32 %v6617, %v6715
    %v6717 = vand.u32 %v6157, 4294901760
    %6718 = vmatmul.f32.gmra.mxu0 %v6717
    %v6719 = vpop.f32.mrf.mxu0
    %v6720 = vadd.f32 %v6623, %v6719
    %v6721 = vand.u32 %v6160, 4294901760
    %6722 = vmatmul.f32.gmra.mxu0 %v6721
    %v6723 = vpop.f32.mrf.mxu0
    %v6724 = vadd.f32 %v6629, %v6723
    %v6725 = vand.u32 %v6163, 4294901760
    %6726 = vmatmul.f32.gmra.mxu0 %v6725
    %v6727 = vpop.f32.mrf.mxu0
    %v6728 = vadd.f32 %v6635, %v6727
    %6729 = vdwg.mxu0
    %6730 = vmatpush.msra.mxu0 0.0
    %6731 = vmatpush.msra.mxu0 0.0
    %6732 = vmatpush.msra.mxu0 0.0
    %6733 = vmatpush.msra.mxu0 0.0
    %6734 = vmatpush.msra.mxu0 0.0
    %6735 = vmatpush.msra.mxu0 0.0
    %6736 = vmatpush.msra.mxu0 0.0
    %6737 = vmatpush.msra.mxu0 0.0
    %6738 = vmatpush.msra.mxu0 0.0
    %6739 = vmatpush.msra.mxu0 0.0
    %6740 = vmatpush.msra.mxu0 0.0
    %6741 = vmatpush.msra.mxu0 0.0
    %v6742 = vand.u32 %v6100, 4294901760
    %6743 = vmatpush.msra.mxu0 %v6742
    %v6744 = vand.u32 %v6099, 4294901760
    %6745 = vmatpush.msra.mxu0 %v6744
    %v6746 = vand.u32 %v6098, 4294901760
    %6747 = vmatpush.msra.mxu0 %v6746
    %v6748 = vand.u32 %v6097, 4294901760
    %6749 = vmatpush.msra.mxu0 %v6748
    %v6750 = vand.u32 %v6118, 4294901760
    %6751 = vmatmul.f32.gmra.mxu0 %v6750
    %v6752 = vpop.f32.mrf.mxu0
    %v6753 = vadd.f32 %v6668, %v6752
    %v6754 = vand.u32 %v6121, 4294901760
    %6755 = vmatmul.f32.gmra.mxu0 %v6754
    %v6756 = vpop.f32.mrf.mxu0
    %v6757 = vadd.f32 %v6672, %v6756
    %v6758 = vand.u32 %v6124, 4294901760
    %6759 = vmatmul.f32.gmra.mxu0 %v6758
    %v6760 = vpop.f32.mrf.mxu0
    %v6761 = vadd.f32 %v6676, %v6760
    %v6762 = vand.u32 %v6127, 4294901760
    %6763 = vmatmul.f32.gmra.mxu0 %v6762
    %v6764 = vpop.f32.mrf.mxu0
    %v6765 = vadd.f32 %v6680, %v6764
    %v6766 = vand.u32 %v6130, 4294901760
    %6767 = vmatmul.f32.gmra.mxu0 %v6766
    %v6768 = vpop.f32.mrf.mxu0
    %v6769 = vadd.f32 %v6684, %v6768
    %v6770 = vand.u32 %v6133, 4294901760
    %6771 = vmatmul.f32.gmra.mxu0 %v6770
    %v6772 = vpop.f32.mrf.mxu0
    %v6773 = vadd.f32 %v6688, %v6772
    %v6774 = vand.u32 %v6136, 4294901760
    %6775 = vmatmul.f32.gmra.mxu0 %v6774
    %v6776 = vpop.f32.mrf.mxu0
    %v6777 = vadd.f32 %v6692, %v6776
    %v6778 = vand.u32 %v6139, 4294901760
    %6779 = vmatmul.f32.gmra.mxu0 %v6778
    %v6780 = vpop.f32.mrf.mxu0
    %v6781 = vadd.f32 %v6696, %v6780
    %v6782 = vand.u32 %v6142, 4294901760
    %6783 = vmatmul.f32.gmra.mxu0 %v6782
    %v6784 = vpop.f32.mrf.mxu0
    %v6785 = vadd.f32 %v6700, %v6784
    %v6786 = vand.u32 %v6145, 4294901760
    %6787 = vmatmul.f32.gmra.mxu0 %v6786
    %v6788 = vpop.f32.mrf.mxu0
    %v6789 = vadd.f32 %v6704, %v6788
    %v6790 = vand.u32 %v6148, 4294901760
    %6791 = vmatmul.f32.gmra.mxu0 %v6790
    %v6792 = vpop.f32.mrf.mxu0
    %v6793 = vadd.f32 %v6708, %v6792
    %v6794 = vand.u32 %v6151, 4294901760
    %6795 = vmatmul.f32.gmra.mxu0 %v6794
    %v6796 = vpop.f32.mrf.mxu0
    %v6797 = vadd.f32 %v6712, %v6796
    %v6798 = vand.u32 %v6154, 4294901760
    %6799 = vmatmul.f32.gmra.mxu0 %v6798
    %v6800 = vpop.f32.mrf.mxu0
    %v6801 = vadd.f32 %v6716, %v6800
    %v6802 = vand.u32 %v6157, 4294901760
    %6803 = vmatmul.f32.gmra.mxu0 %v6802
    %v6804 = vpop.f32.mrf.mxu0
    %v6805 = vadd.f32 %v6720, %v6804
    %v6806 = vand.u32 %v6160, 4294901760
    %6807 = vmatmul.f32.gmra.mxu0 %v6806
    %v6808 = vpop.f32.mrf.mxu0
    %v6809 = vadd.f32 %v6724, %v6808
    %v6810 = vand.u32 %v6163, 4294901760
    %6811 = vmatmul.f32.gmra.mxu0 %v6810
    %v6812 = vpop.f32.mrf.mxu0
    %v6813 = vadd.f32 %v6728, %v6812
    %6814 = vdwg.mxu0
    %6815 = vst.msk [vmem:[#allocation3] sm:$0xff] %vm4019, %v6753
    %6817 = vrot.lane.b32.xlu0 %v6757, 32
    %v6818 = vpop.permute.xlu0 %6817
    %6820 = vst.msk [vmem:[#allocation3] sm:$0xff] %vm4040, %v6818
    %6822 = vrot.lane.b32.xlu0 %v6761, 64
    %v6823 = vpop.permute.xlu0 %6822
    %6825 = vst.msk [vmem:[#allocation3] sm:$0xff] %vm4061, %v6823
    %6827 = vrot.lane.b32.xlu0 %v6765, 96
    %v6828 = vpop.permute.xlu0 %6827
    %6830 = vst.msk [vmem:[#allocation3] sm:$0xff] %vm4082, %v6828
    %6831 = vst.msk [vmem:[#allocation3 + $0x8] sm:$0xff] %vm4019, %v6769
    %6833 = vrot.lane.b32.xlu0 %v6773, 32
    %v6834 = vpop.permute.xlu0 %6833
    %6836 = vst.msk [vmem:[#allocation3 + $0x8] sm:$0xff] %vm4040, %v6834
    %6838 = vrot.lane.b32.xlu0 %v6777, 64
    %v6839 = vpop.permute.xlu0 %6838
    %6841 = vst.msk [vmem:[#allocation3 + $0x8] sm:$0xff] %vm4061, %v6839
    %6843 = vrot.lane.b32.xlu0 %v6781, 96
    %v6844 = vpop.permute.xlu0 %6843
    %6846 = vst.msk [vmem:[#allocation3 + $0x8] sm:$0xff] %vm4082, %v6844
    %6847 = vst.msk [vmem:[#allocation3 + $0x10] sm:$0xff] %vm4019, %v6785
    %6849 = vrot.lane.b32.xlu0 %v6789, 32
    %v6850 = vpop.permute.xlu0 %6849
    %6852 = vst.msk [vmem:[#allocation3 + $0x10] sm:$0xff] %vm4040, %v6850
    %6854 = vrot.lane.b32.xlu0 %v6793, 64
    %v6855 = vpop.permute.xlu0 %6854
    %6857 = vst.msk [vmem:[#allocation3 + $0x10] sm:$0xff] %vm4061, %v6855
    %6859 = vrot.lane.b32.xlu0 %v6797, 96
    %v6860 = vpop.permute.xlu0 %6859
    %6862 = vst.msk [vmem:[#allocation3 + $0x10] sm:$0xff] %vm4082, %v6860
    %6863 = vst.msk [vmem:[#allocation3 + $0x18] sm:$0xff] %vm4019, %v6801
    %6865 = vrot.lane.b32.xlu0 %v6805, 32
    %v6866 = vpop.permute.xlu0 %6865
    %6868 = vst.msk [vmem:[#allocation3 + $0x18] sm:$0xff] %vm4040, %v6866
    %6870 = vrot.lane.b32.xlu0 %v6809, 64
    %v6871 = vpop.permute.xlu0 %6870
    %6873 = vst.msk [vmem:[#allocation3 + $0x18] sm:$0xff] %vm4061, %v6871
    %6875 = vrot.lane.b32.xlu0 %v6813, 96
    %v6876 = vpop.permute.xlu0 %6875
    %6878 = vst.msk [vmem:[#allocation3 + $0x18] sm:$0xff] %vm4082, %v6876
    %v6879 = vld [vmem:[#allocation3] sm:$0xff]
    %v6880 = vld [vmem:[#allocation3 + $0x8] sm:$0xff]
    %v6881 = vld [vmem:[#allocation3 + $0x10] sm:$0xff]
    %v6882 = vld [vmem:[#allocation3 + $0x18] sm:$0xff]
    %v6883 = vld [vmem:[%s4 + $0x2c0] sm:$0xff]
    %v6884 = vld [vmem:[%s4 + $0x2c8] sm:$0xff]
    %v6885 = vld [vmem:[%s4 + $0x2d0] sm:$0xff]
    %v6886 = vld [vmem:[%s4 + $0x2d8] sm:$0xff]
    %v6887 = vld [vmem:[%s4 + $0x2e0] sm:$0xff]
    %v6888 = vld [vmem:[%s4 + $0x2e8] sm:$0xff]
    %v6889 = vld [vmem:[%s4 + $0x2f0] sm:$0xff]
    %v6890 = vld [vmem:[%s4 + $0x2f8] sm:$0xff]
    %v6891 = vld [vmem:[%s4 + $0x300] sm:$0xff]
    %v6892 = vld [vmem:[%s4 + $0x308] sm:$0xff]
    %v6893 = vld [vmem:[%s4 + $0x310] sm:$0xff]
    %v6894 = vld [vmem:[%s4 + $0x318] sm:$0xff]
    %v6895 = vld [vmem:[%s4 + $0x320] sm:$0xff]
    %v6896 = vld [vmem:[%s4 + $0x328] sm:$0xff]
    %v6897 = vld [vmem:[%s4 + $0x330] sm:$0xff]
    %v6898 = vld [vmem:[%s4 + $0x338] sm:$0xff]
    %v6899 = vld [vmem:[%s4 + $0x340] sm:$0xff]
    %v6900 = vld [vmem:[%s4 + $0x348] sm:$0xff]
    %v6901 = vld [vmem:[%s4 + $0x350] sm:$0xff]
    %v6902 = vld [vmem:[%s4 + $0x358] sm:$0xff]
    %v6903 = vld [vmem:[%s4 + $0x360] sm:$0xff]
    %v6904 = vld [vmem:[%s4 + $0x368] sm:$0xff]
    %v6905 = vld [vmem:[%s4 + $0x370] sm:$0xff]
    %v6906 = vld [vmem:[%s4 + $0x378] sm:$0xff]
    %v6907 = vld [vmem:[%s4 + $0x380] sm:$0xff]
    %v6908 = vld [vmem:[%s4 + $0x388] sm:$0xff]
    %v6909 = vld [vmem:[%s4 + $0x390] sm:$0xff]
    %v6910 = vld [vmem:[%s4 + $0x398] sm:$0xff]
    %v6911 = vld [vmem:[%s4 + $0x3a0] sm:$0xff]
    %v6912 = vld [vmem:[%s4 + $0x3a8] sm:$0xff]
    %v6913 = vld [vmem:[%s4 + $0x3b0] sm:$0xff]
    %v6914 = vld [vmem:[%s4 + $0x3b8] sm:$0xff]
    %v6915 = vld [vmem:[%s4 + $0x3c0] sm:$0xff]
    %v6916 = vld [vmem:[%s4 + $0x3c8] sm:$0xff]
    %v6917 = vld [vmem:[%s4 + $0x3d0] sm:$0xff]
    %v6918 = vld [vmem:[%s4 + $0x3d8] sm:$0xff]
    %v6919 = vld [vmem:[%s4 + $0x3e0] sm:$0xff]
    %v6920 = vld [vmem:[%s4 + $0x3e8] sm:$0xff]
    %v6921 = vld [vmem:[%s4 + $0x3f0] sm:$0xff]
    %v6922 = vld [vmem:[%s4 + $0x3f8] sm:$0xff]
    %v6923 = vld [vmem:[%s4 + $0x400] sm:$0xff]
    %v6924 = vld [vmem:[%s4 + $0x408] sm:$0xff]
    %v6925 = vld [vmem:[%s4 + $0x410] sm:$0xff]
    %v6926 = vld [vmem:[%s4 + $0x418] sm:$0xff]
    %v6927 = vld [vmem:[%s4 + $0x420] sm:$0xff]
    %v6928 = vld [vmem:[%s4 + $0x428] sm:$0xff]
    %v6929 = vld [vmem:[%s4 + $0x430] sm:$0xff]
    %v6930 = vld [vmem:[%s4 + $0x438] sm:$0xff]
    %v6931 = vld [vmem:[%s4 + $0x440] sm:$0xff]
    %v6932 = vld [vmem:[%s4 + $0x448] sm:$0xff]
    %v6933 = vld [vmem:[%s4 + $0x450] sm:$0xff]
    %v6934 = vld [vmem:[%s4 + $0x458] sm:$0xff]
    %v6935 = vld [vmem:[%s4 + $0x460] sm:$0xff]
    %v6936 = vld [vmem:[%s4 + $0x468] sm:$0xff]
    %v6937 = vld [vmem:[%s4 + $0x470] sm:$0xff]
    %v6938 = vld [vmem:[%s4 + $0x478] sm:$0xff]
    %v6939 = vld [vmem:[%s4 + $0x480] sm:$0xff]
    %v6940 = vld [vmem:[%s4 + $0x488] sm:$0xff]
    %v6941 = vld [vmem:[%s4 + $0x490] sm:$0xff]
    %v6942 = vld [vmem:[%s4 + $0x498] sm:$0xff]
    %v6943 = vld [vmem:[%s4 + $0x4a0] sm:$0xff]
    %v6944 = vld [vmem:[%s4 + $0x4a8] sm:$0xff]
    %v6945 = vld [vmem:[%s4 + $0x4b0] sm:$0xff]
    %v6946 = vld [vmem:[%s4 + $0x4b8] sm:$0xff]
    %v6947 = vld [vmem:[%s7 + $0x2] sm:$0x1]
    %v6948 = vperm.slane %v6947, 0
    %v6949 = vand.u32 %v6898, 4294901760
    %6950 = vmatpush.msra.mxu0 %v6949
    %v6951 = vand.u32 %v6897, 4294901760
    %6952 = vmatpush.msra.mxu0 %v6951
    %v6953 = vand.u32 %v6896, 4294901760
    %6954 = vmatpush.msra.mxu0 %v6953
    %v6955 = vand.u32 %v6895, 4294901760
    %6956 = vmatpush.msra.mxu0 %v6955
    %v6957 = vand.u32 %v6894, 4294901760
    %6958 = vmatpush.msra.mxu0 %v6957
    %v6959 = vand.u32 %v6893, 4294901760
    %6960 = vmatpush.msra.mxu0 %v6959
    %v6961 = vand.u32 %v6892, 4294901760
    %6962 = vmatpush.msra.mxu0 %v6961
    %v6963 = vand.u32 %v6891, 4294901760
    %6964 = vmatpush.msra.mxu0 %v6963
    %v6965 = vand.u32 %v6890, 4294901760
    %6966 = vmatpush.msra.mxu0 %v6965
    %v6967 = vand.u32 %v6889, 4294901760
    %6968 = vmatpush.msra.mxu0 %v6967
    %v6969 = vand.u32 %v6888, 4294901760
    %6970 = vmatpush.msra.mxu0 %v6969
    %v6971 = vand.u32 %v6887, 4294901760
    %6972 = vmatpush.msra.mxu0 %v6971
    %v6973 = vand.u32 %v6886, 4294901760
    %6974 = vmatpush.msra.mxu0 %v6973
    %v6975 = vand.u32 %v6885, 4294901760
    %6976 = vmatpush.msra.mxu0 %v6975
    %v6977 = vand.u32 %v6884, 4294901760
    %6978 = vmatpush.msra.mxu0 %v6977
    %v6979 = vand.u32 %v6883, 4294901760
    %6980 = vmatpush.msra.mxu0 %v6979
    %v6981 = vand.u32 %v6879, 4294901760
    %v6982 = vsub.f32 %v6879, %v6981
    %v6983 = vand.u32 %v6982, 4294901760
    %v6984 = vsub.f32 %v6982, %v6983
    %v6985 = vand.u32 %v6984, 4294901760
    %6986 = vmatmul.f32.gmra.mxu0 %v6985
    %v6987 = vpop.f32.mrf.mxu0
    %v6988 = vadd.f32 %v6948, %v6987
    %6989 = vdwg.mxu0
    %v6990 = vand.u32 %v6898, 4294901760
    %v6991 = vsub.f32 %v6898, %v6990
    %v6992 = vand.u32 %v6991, 4294901760
    %v6993 = vsub.f32 %v6991, %v6992
    %v6994 = vand.u32 %v6993, 4294901760
    %6995 = vmatpush.msra.mxu0 %v6994
    %v6996 = vand.u32 %v6897, 4294901760
    %v6997 = vsub.f32 %v6897, %v6996
    %v6998 = vand.u32 %v6997, 4294901760
    %v6999 = vsub.f32 %v6997, %v6998
    %v7000 = vand.u32 %v6999, 4294901760
    %7001 = vmatpush.msra.mxu0 %v7000
    %v7002 = vand.u32 %v6896, 4294901760
    %v7003 = vsub.f32 %v6896, %v7002
    %v7004 = vand.u32 %v7003, 4294901760
    %v7005 = vsub.f32 %v7003, %v7004
    %v7006 = vand.u32 %v7005, 4294901760
    %7007 = vmatpush.msra.mxu0 %v7006
    %v7008 = vand.u32 %v6895, 4294901760
    %v7009 = vsub.f32 %v6895, %v7008
    %v7010 = vand.u32 %v7009, 4294901760
    %v7011 = vsub.f32 %v7009, %v7010
    %v7012 = vand.u32 %v7011, 4294901760
    %7013 = vmatpush.msra.mxu0 %v7012
    %v7014 = vand.u32 %v6894, 4294901760
    %v7015 = vsub.f32 %v6894, %v7014
    %v7016 = vand.u32 %v7015, 4294901760
    %v7017 = vsub.f32 %v7015, %v7016
    %v7018 = vand.u32 %v7017, 4294901760
    %7019 = vmatpush.msra.mxu0 %v7018
    %v7020 = vand.u32 %v6893, 4294901760
    %v7021 = vsub.f32 %v6893, %v7020
    %v7022 = vand.u32 %v7021, 4294901760
    %v7023 = vsub.f32 %v7021, %v7022
    %v7024 = vand.u32 %v7023, 4294901760
    %7025 = vmatpush.msra.mxu0 %v7024
    %v7026 = vand.u32 %v6892, 4294901760
    %v7027 = vsub.f32 %v6892, %v7026
    %v7028 = vand.u32 %v7027, 4294901760
    %v7029 = vsub.f32 %v7027, %v7028
    %v7030 = vand.u32 %v7029, 4294901760
    %7031 = vmatpush.msra.mxu0 %v7030
    %v7032 = vand.u32 %v6891, 4294901760
    %v7033 = vsub.f32 %v6891, %v7032
    %v7034 = vand.u32 %v7033, 4294901760
    %v7035 = vsub.f32 %v7033, %v7034
    %v7036 = vand.u32 %v7035, 4294901760
    %7037 = vmatpush.msra.mxu0 %v7036
    %v7038 = vand.u32 %v6890, 4294901760
    %v7039 = vsub.f32 %v6890, %v7038
    %v7040 = vand.u32 %v7039, 4294901760
    %v7041 = vsub.f32 %v7039, %v7040
    %v7042 = vand.u32 %v7041, 4294901760
    %7043 = vmatpush.msra.mxu0 %v7042
    %v7044 = vand.u32 %v6889, 4294901760
    %v7045 = vsub.f32 %v6889, %v7044
    %v7046 = vand.u32 %v7045, 4294901760
    %v7047 = vsub.f32 %v7045, %v7046
    %v7048 = vand.u32 %v7047, 4294901760
    %7049 = vmatpush.msra.mxu0 %v7048
    %v7050 = vand.u32 %v6888, 4294901760
    %v7051 = vsub.f32 %v6888, %v7050
    %v7052 = vand.u32 %v7051, 4294901760
    %v7053 = vsub.f32 %v7051, %v7052
    %v7054 = vand.u32 %v7053, 4294901760
    %7055 = vmatpush.msra.mxu0 %v7054
    %v7056 = vand.u32 %v6887, 4294901760
    %v7057 = vsub.f32 %v6887, %v7056
    %v7058 = vand.u32 %v7057, 4294901760
    %v7059 = vsub.f32 %v7057, %v7058
    %v7060 = vand.u32 %v7059, 4294901760
    %7061 = vmatpush.msra.mxu0 %v7060
    %v7062 = vand.u32 %v6886, 4294901760
    %v7063 = vsub.f32 %v6886, %v7062
    %v7064 = vand.u32 %v7063, 4294901760
    %v7065 = vsub.f32 %v7063, %v7064
    %v7066 = vand.u32 %v7065, 4294901760
    %7067 = vmatpush.msra.mxu0 %v7066
    %v7068 = vand.u32 %v6885, 4294901760
    %v7069 = vsub.f32 %v6885, %v7068
    %v7070 = vand.u32 %v7069, 4294901760
    %v7071 = vsub.f32 %v7069, %v7070
    %v7072 = vand.u32 %v7071, 4294901760
    %7073 = vmatpush.msra.mxu0 %v7072
    %v7074 = vand.u32 %v6884, 4294901760
    %v7075 = vsub.f32 %v6884, %v7074
    %v7076 = vand.u32 %v7075, 4294901760
    %v7077 = vsub.f32 %v7075, %v7076
    %v7078 = vand.u32 %v7077, 4294901760
    %7079 = vmatpush.msra.mxu0 %v7078
    %v7080 = vand.u32 %v6883, 4294901760
    %v7081 = vsub.f32 %v6883, %v7080
    %v7082 = vand.u32 %v7081, 4294901760
    %v7083 = vsub.f32 %v7081, %v7082
    %v7084 = vand.u32 %v7083, 4294901760
    %7085 = vmatpush.msra.mxu0 %v7084
    %v7086 = vand.u32 %v6879, 4294901760
    %7087 = vmatmul.f32.gmra.mxu0 %v7086
    %v7088 = vpop.f32.mrf.mxu0
    %v7089 = vadd.f32 %v6988, %v7088
    %7090 = vdwg.mxu0
    %v7091 = vand.u32 %v6898, 4294901760
    %v7092 = vsub.f32 %v6898, %v7091
    %7093 = vmatpush.msra.mxu0 %v7092
    %v7094 = vand.u32 %v6897, 4294901760
    %v7095 = vsub.f32 %v6897, %v7094
    %7096 = vmatpush.msra.mxu0 %v7095
    %v7097 = vand.u32 %v6896, 4294901760
    %v7098 = vsub.f32 %v6896, %v7097
    %7099 = vmatpush.msra.mxu0 %v7098
    %v7100 = vand.u32 %v6895, 4294901760
    %v7101 = vsub.f32 %v6895, %v7100
    %7102 = vmatpush.msra.mxu0 %v7101
    %v7103 = vand.u32 %v6894, 4294901760
    %v7104 = vsub.f32 %v6894, %v7103
    %7105 = vmatpush.msra.mxu0 %v7104
    %v7106 = vand.u32 %v6893, 4294901760
    %v7107 = vsub.f32 %v6893, %v7106
    %7108 = vmatpush.msra.mxu0 %v7107
    %v7109 = vand.u32 %v6892, 4294901760
    %v7110 = vsub.f32 %v6892, %v7109
    %7111 = vmatpush.msra.mxu0 %v7110
    %v7112 = vand.u32 %v6891, 4294901760
    %v7113 = vsub.f32 %v6891, %v7112
    %7114 = vmatpush.msra.mxu0 %v7113
    %v7115 = vand.u32 %v6890, 4294901760
    %v7116 = vsub.f32 %v6890, %v7115
    %7117 = vmatpush.msra.mxu0 %v7116
    %v7118 = vand.u32 %v6889, 4294901760
    %v7119 = vsub.f32 %v6889, %v7118
    %7120 = vmatpush.msra.mxu0 %v7119
    %v7121 = vand.u32 %v6888, 4294901760
    %v7122 = vsub.f32 %v6888, %v7121
    %7123 = vmatpush.msra.mxu0 %v7122
    %v7124 = vand.u32 %v6887, 4294901760
    %v7125 = vsub.f32 %v6887, %v7124
    %7126 = vmatpush.msra.mxu0 %v7125
    %v7127 = vand.u32 %v6886, 4294901760
    %v7128 = vsub.f32 %v6886, %v7127
    %7129 = vmatpush.msra.mxu0 %v7128
    %v7130 = vand.u32 %v6885, 4294901760
    %v7131 = vsub.f32 %v6885, %v7130
    %7132 = vmatpush.msra.mxu0 %v7131
    %v7133 = vand.u32 %v6884, 4294901760
    %v7134 = vsub.f32 %v6884, %v7133
    %7135 = vmatpush.msra.mxu0 %v7134
    %v7136 = vand.u32 %v6883, 4294901760
    %v7137 = vsub.f32 %v6883, %v7136
    %7138 = vmatpush.msra.mxu0 %v7137
    %v7139 = vand.u32 %v6879, 4294901760
    %v7140 = vsub.f32 %v6879, %v7139
    %7141 = vmatmul.f32.gmra.mxu0 %v7140
    %v7142 = vpop.f32.mrf.mxu0
    %v7143 = vadd.f32 %v7089, %v7142
    %7144 = vdwg.mxu0
    %v7145 = vand.u32 %v6898, 4294901760
    %7146 = vmatpush.msra.mxu0 %v7145
    %v7147 = vand.u32 %v6897, 4294901760
    %7148 = vmatpush.msra.mxu0 %v7147
    %v7149 = vand.u32 %v6896, 4294901760
    %7150 = vmatpush.msra.mxu0 %v7149
    %v7151 = vand.u32 %v6895, 4294901760
    %7152 = vmatpush.msra.mxu0 %v7151
    %v7153 = vand.u32 %v6894, 4294901760
    %7154 = vmatpush.msra.mxu0 %v7153
    %v7155 = vand.u32 %v6893, 4294901760
    %7156 = vmatpush.msra.mxu0 %v7155
    %v7157 = vand.u32 %v6892, 4294901760
    %7158 = vmatpush.msra.mxu0 %v7157
    %v7159 = vand.u32 %v6891, 4294901760
    %7160 = vmatpush.msra.mxu0 %v7159
    %v7161 = vand.u32 %v6890, 4294901760
    %7162 = vmatpush.msra.mxu0 %v7161
    %v7163 = vand.u32 %v6889, 4294901760
    %7164 = vmatpush.msra.mxu0 %v7163
    %v7165 = vand.u32 %v6888, 4294901760
    %7166 = vmatpush.msra.mxu0 %v7165
    %v7167 = vand.u32 %v6887, 4294901760
    %7168 = vmatpush.msra.mxu0 %v7167
    %v7169 = vand.u32 %v6886, 4294901760
    %7170 = vmatpush.msra.mxu0 %v7169
    %v7171 = vand.u32 %v6885, 4294901760
    %7172 = vmatpush.msra.mxu0 %v7171
    %v7173 = vand.u32 %v6884, 4294901760
    %7174 = vmatpush.msra.mxu0 %v7173
    %v7175 = vand.u32 %v6883, 4294901760
    %7176 = vmatpush.msra.mxu0 %v7175
    %v7177 = vand.u32 %v6879, 4294901760
    %v7178 = vsub.f32 %v6879, %v7177
    %v7179 = vand.u32 %v7178, 4294901760
    %7180 = vmatmul.f32.gmra.mxu0 %v7179
    %v7181 = vpop.f32.mrf.mxu0
    %v7182 = vadd.f32 %v7143, %v7181
    %7183 = vdwg.mxu0
    %v7184 = vand.u32 %v6898, 4294901760
    %v7185 = vsub.f32 %v6898, %v7184
    %v7186 = vand.u32 %v7185, 4294901760
    %7187 = vmatpush.msra.mxu0 %v7186
    %v7188 = vand.u32 %v6897, 4294901760
    %v7189 = vsub.f32 %v6897, %v7188
    %v7190 = vand.u32 %v7189, 4294901760
    %7191 = vmatpush.msra.mxu0 %v7190
    %v7192 = vand.u32 %v6896, 4294901760
    %v7193 = vsub.f32 %v6896, %v7192
    %v7194 = vand.u32 %v7193, 4294901760
    %7195 = vmatpush.msra.mxu0 %v7194
    %v7196 = vand.u32 %v6895, 4294901760
    %v7197 = vsub.f32 %v6895, %v7196
    %v7198 = vand.u32 %v7197, 4294901760
    %7199 = vmatpush.msra.mxu0 %v7198
    %v7200 = vand.u32 %v6894, 4294901760
    %v7201 = vsub.f32 %v6894, %v7200
    %v7202 = vand.u32 %v7201, 4294901760
    %7203 = vmatpush.msra.mxu0 %v7202
    %v7204 = vand.u32 %v6893, 4294901760
    %v7205 = vsub.f32 %v6893, %v7204
    %v7206 = vand.u32 %v7205, 4294901760
    %7207 = vmatpush.msra.mxu0 %v7206
    %v7208 = vand.u32 %v6892, 4294901760
    %v7209 = vsub.f32 %v6892, %v7208
    %v7210 = vand.u32 %v7209, 4294901760
    %7211 = vmatpush.msra.mxu0 %v7210
    %v7212 = vand.u32 %v6891, 4294901760
    %v7213 = vsub.f32 %v6891, %v7212
    %v7214 = vand.u32 %v7213, 4294901760
    %7215 = vmatpush.msra.mxu0 %v7214
    %v7216 = vand.u32 %v6890, 4294901760
    %v7217 = vsub.f32 %v6890, %v7216
    %v7218 = vand.u32 %v7217, 4294901760
    %7219 = vmatpush.msra.mxu0 %v7218
    %v7220 = vand.u32 %v6889, 4294901760
    %v7221 = vsub.f32 %v6889, %v7220
    %v7222 = vand.u32 %v7221, 4294901760
    %7223 = vmatpush.msra.mxu0 %v7222
    %v7224 = vand.u32 %v6888, 4294901760
    %v7225 = vsub.f32 %v6888, %v7224
    %v7226 = vand.u32 %v7225, 4294901760
    %7227 = vmatpush.msra.mxu0 %v7226
    %v7228 = vand.u32 %v6887, 4294901760
    %v7229 = vsub.f32 %v6887, %v7228
    %v7230 = vand.u32 %v7229, 4294901760
    %7231 = vmatpush.msra.mxu0 %v7230
    %v7232 = vand.u32 %v6886, 4294901760
    %v7233 = vsub.f32 %v6886, %v7232
    %v7234 = vand.u32 %v7233, 4294901760
    %7235 = vmatpush.msra.mxu0 %v7234
    %v7236 = vand.u32 %v6885, 4294901760
    %v7237 = vsub.f32 %v6885, %v7236
    %v7238 = vand.u32 %v7237, 4294901760
    %7239 = vmatpush.msra.mxu0 %v7238
    %v7240 = vand.u32 %v6884, 4294901760
    %v7241 = vsub.f32 %v6884, %v7240
    %v7242 = vand.u32 %v7241, 4294901760
    %7243 = vmatpush.msra.mxu0 %v7242
    %v7244 = vand.u32 %v6883, 4294901760
    %v7245 = vsub.f32 %v6883, %v7244
    %v7246 = vand.u32 %v7245, 4294901760
    %7247 = vmatpush.msra.mxu0 %v7246
    %v7248 = vand.u32 %v6879, 4294901760
    %7249 = vmatmul.f32.gmra.mxu0 %v7248
    %v7250 = vpop.f32.mrf.mxu0
    %v7251 = vadd.f32 %v7182, %v7250
    %7252 = vdwg.mxu0
    %v7253 = vand.u32 %v6898, 4294901760
    %7254 = vmatpush.msra.mxu0 %v7253
    %v7255 = vand.u32 %v6897, 4294901760
    %7256 = vmatpush.msra.mxu0 %v7255
    %v7257 = vand.u32 %v6896, 4294901760
    %7258 = vmatpush.msra.mxu0 %v7257
    %v7259 = vand.u32 %v6895, 4294901760
    %7260 = vmatpush.msra.mxu0 %v7259
    %v7261 = vand.u32 %v6894, 4294901760
    %7262 = vmatpush.msra.mxu0 %v7261
    %v7263 = vand.u32 %v6893, 4294901760
    %7264 = vmatpush.msra.mxu0 %v7263
    %v7265 = vand.u32 %v6892, 4294901760
    %7266 = vmatpush.msra.mxu0 %v7265
    %v7267 = vand.u32 %v6891, 4294901760
    %7268 = vmatpush.msra.mxu0 %v7267
    %v7269 = vand.u32 %v6890, 4294901760
    %7270 = vmatpush.msra.mxu0 %v7269
    %v7271 = vand.u32 %v6889, 4294901760
    %7272 = vmatpush.msra.mxu0 %v7271
    %v7273 = vand.u32 %v6888, 4294901760
    %7274 = vmatpush.msra.mxu0 %v7273
    %v7275 = vand.u32 %v6887, 4294901760
    %7276 = vmatpush.msra.mxu0 %v7275
    %v7277 = vand.u32 %v6886, 4294901760
    %7278 = vmatpush.msra.mxu0 %v7277
    %v7279 = vand.u32 %v6885, 4294901760
    %7280 = vmatpush.msra.mxu0 %v7279
    %v7281 = vand.u32 %v6884, 4294901760
    %7282 = vmatpush.msra.mxu0 %v7281
    %v7283 = vand.u32 %v6883, 4294901760
    %7284 = vmatpush.msra.mxu0 %v7283
    %v7285 = vand.u32 %v6879, 4294901760
    %7286 = vmatmul.f32.gmra.mxu0 %v7285
    %v7287 = vpop.f32.mrf.mxu0
    %v7288 = vadd.f32 %v7251, %v7287
    %7289 = vdwg.mxu0
    %v7290 = vand.u32 %v6914, 4294901760
    %7291 = vmatpush.msra.mxu0 %v7290
    %v7292 = vand.u32 %v6913, 4294901760
    %7293 = vmatpush.msra.mxu0 %v7292
    %v7294 = vand.u32 %v6912, 4294901760
    %7295 = vmatpush.msra.mxu0 %v7294
    %v7296 = vand.u32 %v6911, 4294901760
    %7297 = vmatpush.msra.mxu0 %v7296
    %v7298 = vand.u32 %v6910, 4294901760
    %7299 = vmatpush.msra.mxu0 %v7298
    %v7300 = vand.u32 %v6909, 4294901760
    %7301 = vmatpush.msra.mxu0 %v7300
    %v7302 = vand.u32 %v6908, 4294901760
    %7303 = vmatpush.msra.mxu0 %v7302
    %v7304 = vand.u32 %v6907, 4294901760
    %7305 = vmatpush.msra.mxu0 %v7304
    %v7306 = vand.u32 %v6906, 4294901760
    %7307 = vmatpush.msra.mxu0 %v7306
    %v7308 = vand.u32 %v6905, 4294901760
    %7309 = vmatpush.msra.mxu0 %v7308
    %v7310 = vand.u32 %v6904, 4294901760
    %7311 = vmatpush.msra.mxu0 %v7310
    %v7312 = vand.u32 %v6903, 4294901760
    %7313 = vmatpush.msra.mxu0 %v7312
    %v7314 = vand.u32 %v6902, 4294901760
    %7315 = vmatpush.msra.mxu0 %v7314
    %v7316 = vand.u32 %v6901, 4294901760
    %7317 = vmatpush.msra.mxu0 %v7316
    %v7318 = vand.u32 %v6900, 4294901760
    %7319 = vmatpush.msra.mxu0 %v7318
    %v7320 = vand.u32 %v6899, 4294901760
    %7321 = vmatpush.msra.mxu0 %v7320
    %v7322 = vand.u32 %v6880, 4294901760
    %v7323 = vsub.f32 %v6880, %v7322
    %v7324 = vand.u32 %v7323, 4294901760
    %v7325 = vsub.f32 %v7323, %v7324
    %v7326 = vand.u32 %v7325, 4294901760
    %7327 = vmatmul.f32.gmra.mxu0 %v7326
    %v7328 = vpop.f32.mrf.mxu0
    %v7329 = vadd.f32 %v7288, %v7328
    %7330 = vdwg.mxu0
    %v7331 = vand.u32 %v6914, 4294901760
    %v7332 = vsub.f32 %v6914, %v7331
    %v7333 = vand.u32 %v7332, 4294901760
    %v7334 = vsub.f32 %v7332, %v7333
    %v7335 = vand.u32 %v7334, 4294901760
    %7336 = vmatpush.msra.mxu0 %v7335
    %v7337 = vand.u32 %v6913, 4294901760
    %v7338 = vsub.f32 %v6913, %v7337
    %v7339 = vand.u32 %v7338, 4294901760
    %v7340 = vsub.f32 %v7338, %v7339
    %v7341 = vand.u32 %v7340, 4294901760
    %7342 = vmatpush.msra.mxu0 %v7341
    %v7343 = vand.u32 %v6912, 4294901760
    %v7344 = vsub.f32 %v6912, %v7343
    %v7345 = vand.u32 %v7344, 4294901760
    %v7346 = vsub.f32 %v7344, %v7345
    %v7347 = vand.u32 %v7346, 4294901760
    %7348 = vmatpush.msra.mxu0 %v7347
    %v7349 = vand.u32 %v6911, 4294901760
    %v7350 = vsub.f32 %v6911, %v7349
    %v7351 = vand.u32 %v7350, 4294901760
    %v7352 = vsub.f32 %v7350, %v7351
    %v7353 = vand.u32 %v7352, 4294901760
    %7354 = vmatpush.msra.mxu0 %v7353
    %v7355 = vand.u32 %v6910, 4294901760
    %v7356 = vsub.f32 %v6910, %v7355
    %v7357 = vand.u32 %v7356, 4294901760
    %v7358 = vsub.f32 %v7356, %v7357
    %v7359 = vand.u32 %v7358, 4294901760
    %7360 = vmatpush.msra.mxu0 %v7359
    %v7361 = vand.u32 %v6909, 4294901760
    %v7362 = vsub.f32 %v6909, %v7361
    %v7363 = vand.u32 %v7362, 4294901760
    %v7364 = vsub.f32 %v7362, %v7363
    %v7365 = vand.u32 %v7364, 4294901760
    %7366 = vmatpush.msra.mxu0 %v7365
    %v7367 = vand.u32 %v6908, 4294901760
    %v7368 = vsub.f32 %v6908, %v7367
    %v7369 = vand.u32 %v7368, 4294901760
    %v7370 = vsub.f32 %v7368, %v7369
    %v7371 = vand.u32 %v7370, 4294901760
    %7372 = vmatpush.msra.mxu0 %v7371
    %v7373 = vand.u32 %v6907, 4294901760
    %v7374 = vsub.f32 %v6907, %v7373
    %v7375 = vand.u32 %v7374, 4294901760
    %v7376 = vsub.f32 %v7374, %v7375
    %v7377 = vand.u32 %v7376, 4294901760
    %7378 = vmatpush.msra.mxu0 %v7377
    %v7379 = vand.u32 %v6906, 4294901760
    %v7380 = vsub.f32 %v6906, %v7379
    %v7381 = vand.u32 %v7380, 4294901760
    %v7382 = vsub.f32 %v7380, %v7381
    %v7383 = vand.u32 %v7382, 4294901760
    %7384 = vmatpush.msra.mxu0 %v7383
    %v7385 = vand.u32 %v6905, 4294901760
    %v7386 = vsub.f32 %v6905, %v7385
    %v7387 = vand.u32 %v7386, 4294901760
    %v7388 = vsub.f32 %v7386, %v7387
    %v7389 = vand.u32 %v7388, 4294901760
    %7390 = vmatpush.msra.mxu0 %v7389
    %v7391 = vand.u32 %v6904, 4294901760
    %v7392 = vsub.f32 %v6904, %v7391
    %v7393 = vand.u32 %v7392, 4294901760
    %v7394 = vsub.f32 %v7392, %v7393
    %v7395 = vand.u32 %v7394, 4294901760
    %7396 = vmatpush.msra.mxu0 %v7395
    %v7397 = vand.u32 %v6903, 4294901760
    %v7398 = vsub.f32 %v6903, %v7397
    %v7399 = vand.u32 %v7398, 4294901760
    %v7400 = vsub.f32 %v7398, %v7399
    %v7401 = vand.u32 %v7400, 4294901760
    %7402 = vmatpush.msra.mxu0 %v7401
    %v7403 = vand.u32 %v6902, 4294901760
    %v7404 = vsub.f32 %v6902, %v7403
    %v7405 = vand.u32 %v7404, 4294901760
    %v7406 = vsub.f32 %v7404, %v7405
    %v7407 = vand.u32 %v7406, 4294901760
    %7408 = vmatpush.msra.mxu0 %v7407
    %v7409 = vand.u32 %v6901, 4294901760
    %v7410 = vsub.f32 %v6901, %v7409
    %v7411 = vand.u32 %v7410, 4294901760
    %v7412 = vsub.f32 %v7410, %v7411
    %v7413 = vand.u32 %v7412, 4294901760
    %7414 = vmatpush.msra.mxu0 %v7413
    %v7415 = vand.u32 %v6900, 4294901760
    %v7416 = vsub.f32 %v6900, %v7415
    %v7417 = vand.u32 %v7416, 4294901760
    %v7418 = vsub.f32 %v7416, %v7417
    %v7419 = vand.u32 %v7418, 4294901760
    %7420 = vmatpush.msra.mxu0 %v7419
    %v7421 = vand.u32 %v6899, 4294901760
    %v7422 = vsub.f32 %v6899, %v7421
    %v7423 = vand.u32 %v7422, 4294901760
    %v7424 = vsub.f32 %v7422, %v7423
    %v7425 = vand.u32 %v7424, 4294901760
    %7426 = vmatpush.msra.mxu0 %v7425
    %v7427 = vand.u32 %v6880, 4294901760
    %7428 = vmatmul.f32.gmra.mxu0 %v7427
    %v7429 = vpop.f32.mrf.mxu0
    %v7430 = vadd.f32 %v7329, %v7429
    %7431 = vdwg.mxu0
    %v7432 = vand.u32 %v6914, 4294901760
    %v7433 = vsub.f32 %v6914, %v7432
    %7434 = vmatpush.msra.mxu0 %v7433
    %v7435 = vand.u32 %v6913, 4294901760
    %v7436 = vsub.f32 %v6913, %v7435
    %7437 = vmatpush.msra.mxu0 %v7436
    %v7438 = vand.u32 %v6912, 4294901760
    %v7439 = vsub.f32 %v6912, %v7438
    %7440 = vmatpush.msra.mxu0 %v7439
    %v7441 = vand.u32 %v6911, 4294901760
    %v7442 = vsub.f32 %v6911, %v7441
    %7443 = vmatpush.msra.mxu0 %v7442
    %v7444 = vand.u32 %v6910, 4294901760
    %v7445 = vsub.f32 %v6910, %v7444
    %7446 = vmatpush.msra.mxu0 %v7445
    %v7447 = vand.u32 %v6909, 4294901760
    %v7448 = vsub.f32 %v6909, %v7447
    %7449 = vmatpush.msra.mxu0 %v7448
    %v7450 = vand.u32 %v6908, 4294901760
    %v7451 = vsub.f32 %v6908, %v7450
    %7452 = vmatpush.msra.mxu0 %v7451
    %v7453 = vand.u32 %v6907, 4294901760
    %v7454 = vsub.f32 %v6907, %v7453
    %7455 = vmatpush.msra.mxu0 %v7454
    %v7456 = vand.u32 %v6906, 4294901760
    %v7457 = vsub.f32 %v6906, %v7456
    %7458 = vmatpush.msra.mxu0 %v7457
    %v7459 = vand.u32 %v6905, 4294901760
    %v7460 = vsub.f32 %v6905, %v7459
    %7461 = vmatpush.msra.mxu0 %v7460
    %v7462 = vand.u32 %v6904, 4294901760
    %v7463 = vsub.f32 %v6904, %v7462
    %7464 = vmatpush.msra.mxu0 %v7463
    %v7465 = vand.u32 %v6903, 4294901760
    %v7466 = vsub.f32 %v6903, %v7465
    %7467 = vmatpush.msra.mxu0 %v7466
    %v7468 = vand.u32 %v6902, 4294901760
    %v7469 = vsub.f32 %v6902, %v7468
    %7470 = vmatpush.msra.mxu0 %v7469
    %v7471 = vand.u32 %v6901, 4294901760
    %v7472 = vsub.f32 %v6901, %v7471
    %7473 = vmatpush.msra.mxu0 %v7472
    %v7474 = vand.u32 %v6900, 4294901760
    %v7475 = vsub.f32 %v6900, %v7474
    %7476 = vmatpush.msra.mxu0 %v7475
    %v7477 = vand.u32 %v6899, 4294901760
    %v7478 = vsub.f32 %v6899, %v7477
    %7479 = vmatpush.msra.mxu0 %v7478
    %v7480 = vand.u32 %v6880, 4294901760
    %v7481 = vsub.f32 %v6880, %v7480
    %7482 = vmatmul.f32.gmra.mxu0 %v7481
    %v7483 = vpop.f32.mrf.mxu0
    %v7484 = vadd.f32 %v7430, %v7483
    %7485 = vdwg.mxu0
    %v7486 = vand.u32 %v6914, 4294901760
    %7487 = vmatpush.msra.mxu0 %v7486
    %v7488 = vand.u32 %v6913, 4294901760
    %7489 = vmatpush.msra.mxu0 %v7488
    %v7490 = vand.u32 %v6912, 4294901760
    %7491 = vmatpush.msra.mxu0 %v7490
    %v7492 = vand.u32 %v6911, 4294901760
    %7493 = vmatpush.msra.mxu0 %v7492
    %v7494 = vand.u32 %v6910, 4294901760
    %7495 = vmatpush.msra.mxu0 %v7494
    %v7496 = vand.u32 %v6909, 4294901760
    %7497 = vmatpush.msra.mxu0 %v7496
    %v7498 = vand.u32 %v6908, 4294901760
    %7499 = vmatpush.msra.mxu0 %v7498
    %v7500 = vand.u32 %v6907, 4294901760
    %7501 = vmatpush.msra.mxu0 %v7500
    %v7502 = vand.u32 %v6906, 4294901760
    %7503 = vmatpush.msra.mxu0 %v7502
    %v7504 = vand.u32 %v6905, 4294901760
    %7505 = vmatpush.msra.mxu0 %v7504
    %v7506 = vand.u32 %v6904, 4294901760
    %7507 = vmatpush.msra.mxu0 %v7506
    %v7508 = vand.u32 %v6903, 4294901760
    %7509 = vmatpush.msra.mxu0 %v7508
    %v7510 = vand.u32 %v6902, 4294901760
    %7511 = vmatpush.msra.mxu0 %v7510
    %v7512 = vand.u32 %v6901, 4294901760
    %7513 = vmatpush.msra.mxu0 %v7512
    %v7514 = vand.u32 %v6900, 4294901760
    %7515 = vmatpush.msra.mxu0 %v7514
    %v7516 = vand.u32 %v6899, 4294901760
    %7517 = vmatpush.msra.mxu0 %v7516
    %v7518 = vand.u32 %v6880, 4294901760
    %v7519 = vsub.f32 %v6880, %v7518
    %v7520 = vand.u32 %v7519, 4294901760
    %7521 = vmatmul.f32.gmra.mxu0 %v7520
    %v7522 = vpop.f32.mrf.mxu0
    %v7523 = vadd.f32 %v7484, %v7522
    %7524 = vdwg.mxu0
    %v7525 = vand.u32 %v6914, 4294901760
    %v7526 = vsub.f32 %v6914, %v7525
    %v7527 = vand.u32 %v7526, 4294901760
    %7528 = vmatpush.msra.mxu0 %v7527
    %v7529 = vand.u32 %v6913, 4294901760
    %v7530 = vsub.f32 %v6913, %v7529
    %v7531 = vand.u32 %v7530, 4294901760
    %7532 = vmatpush.msra.mxu0 %v7531
    %v7533 = vand.u32 %v6912, 4294901760
    %v7534 = vsub.f32 %v6912, %v7533
    %v7535 = vand.u32 %v7534, 4294901760
    %7536 = vmatpush.msra.mxu0 %v7535
    %v7537 = vand.u32 %v6911, 4294901760
    %v7538 = vsub.f32 %v6911, %v7537
    %v7539 = vand.u32 %v7538, 4294901760
    %7540 = vmatpush.msra.mxu0 %v7539
    %v7541 = vand.u32 %v6910, 4294901760
    %v7542 = vsub.f32 %v6910, %v7541
    %v7543 = vand.u32 %v7542, 4294901760
    %7544 = vmatpush.msra.mxu0 %v7543
    %v7545 = vand.u32 %v6909, 4294901760
    %v7546 = vsub.f32 %v6909, %v7545
    %v7547 = vand.u32 %v7546, 4294901760
    %7548 = vmatpush.msra.mxu0 %v7547
    %v7549 = vand.u32 %v6908, 4294901760
    %v7550 = vsub.f32 %v6908, %v7549
    %v7551 = vand.u32 %v7550, 4294901760
    %7552 = vmatpush.msra.mxu0 %v7551
    %v7553 = vand.u32 %v6907, 4294901760
    %v7554 = vsub.f32 %v6907, %v7553
    %v7555 = vand.u32 %v7554, 4294901760
    %7556 = vmatpush.msra.mxu0 %v7555
    %v7557 = vand.u32 %v6906, 4294901760
    %v7558 = vsub.f32 %v6906, %v7557
    %v7559 = vand.u32 %v7558, 4294901760
    %7560 = vmatpush.msra.mxu0 %v7559
    %v7561 = vand.u32 %v6905, 4294901760
    %v7562 = vsub.f32 %v6905, %v7561
    %v7563 = vand.u32 %v7562, 4294901760
    %7564 = vmatpush.msra.mxu0 %v7563
    %v7565 = vand.u32 %v6904, 4294901760
    %v7566 = vsub.f32 %v6904, %v7565
    %v7567 = vand.u32 %v7566, 4294901760
    %7568 = vmatpush.msra.mxu0 %v7567
    %v7569 = vand.u32 %v6903, 4294901760
    %v7570 = vsub.f32 %v6903, %v7569
    %v7571 = vand.u32 %v7570, 4294901760
    %7572 = vmatpush.msra.mxu0 %v7571
    %v7573 = vand.u32 %v6902, 4294901760
    %v7574 = vsub.f32 %v6902, %v7573
    %v7575 = vand.u32 %v7574, 4294901760
    %7576 = vmatpush.msra.mxu0 %v7575
    %v7577 = vand.u32 %v6901, 4294901760
    %v7578 = vsub.f32 %v6901, %v7577
    %v7579 = vand.u32 %v7578, 4294901760
    %7580 = vmatpush.msra.mxu0 %v7579
    %v7581 = vand.u32 %v6900, 4294901760
    %v7582 = vsub.f32 %v6900, %v7581
    %v7583 = vand.u32 %v7582, 4294901760
    %7584 = vmatpush.msra.mxu0 %v7583
    %v7585 = vand.u32 %v6899, 4294901760
    %v7586 = vsub.f32 %v6899, %v7585
    %v7587 = vand.u32 %v7586, 4294901760
    %7588 = vmatpush.msra.mxu0 %v7587
    %v7589 = vand.u32 %v6880, 4294901760
    %7590 = vmatmul.f32.gmra.mxu0 %v7589
    %v7591 = vpop.f32.mrf.mxu0
    %v7592 = vadd.f32 %v7523, %v7591
    %7593 = vdwg.mxu0
    %v7594 = vand.u32 %v6914, 4294901760
    %7595 = vmatpush.msra.mxu0 %v7594
    %v7596 = vand.u32 %v6913, 4294901760
    %7597 = vmatpush.msra.mxu0 %v7596
    %v7598 = vand.u32 %v6912, 4294901760
    %7599 = vmatpush.msra.mxu0 %v7598
    %v7600 = vand.u32 %v6911, 4294901760
    %7601 = vmatpush.msra.mxu0 %v7600
    %v7602 = vand.u32 %v6910, 4294901760
    %7603 = vmatpush.msra.mxu0 %v7602
    %v7604 = vand.u32 %v6909, 4294901760
    %7605 = vmatpush.msra.mxu0 %v7604
    %v7606 = vand.u32 %v6908, 4294901760
    %7607 = vmatpush.msra.mxu0 %v7606
    %v7608 = vand.u32 %v6907, 4294901760
    %7609 = vmatpush.msra.mxu0 %v7608
    %v7610 = vand.u32 %v6906, 4294901760
    %7611 = vmatpush.msra.mxu0 %v7610
    %v7612 = vand.u32 %v6905, 4294901760
    %7613 = vmatpush.msra.mxu0 %v7612
    %v7614 = vand.u32 %v6904, 4294901760
    %7615 = vmatpush.msra.mxu0 %v7614
    %v7616 = vand.u32 %v6903, 4294901760
    %7617 = vmatpush.msra.mxu0 %v7616
    %v7618 = vand.u32 %v6902, 4294901760
    %7619 = vmatpush.msra.mxu0 %v7618
    %v7620 = vand.u32 %v6901, 4294901760
    %7621 = vmatpush.msra.mxu0 %v7620
    %v7622 = vand.u32 %v6900, 4294901760
    %7623 = vmatpush.msra.mxu0 %v7622
    %v7624 = vand.u32 %v6899, 4294901760
    %7625 = vmatpush.msra.mxu0 %v7624
    %v7626 = vand.u32 %v6880, 4294901760
    %7627 = vmatmul.f32.gmra.mxu0 %v7626
    %v7628 = vpop.f32.mrf.mxu0
    %v7629 = vadd.f32 %v7592, %v7628
    %7630 = vdwg.mxu0
    %v7631 = vand.u32 %v6930, 4294901760
    %7632 = vmatpush.msra.mxu0 %v7631
    %v7633 = vand.u32 %v6929, 4294901760
    %7634 = vmatpush.msra.mxu0 %v7633
    %v7635 = vand.u32 %v6928, 4294901760
    %7636 = vmatpush.msra.mxu0 %v7635
    %v7637 = vand.u32 %v6927, 4294901760
    %7638 = vmatpush.msra.mxu0 %v7637
    %v7639 = vand.u32 %v6926, 4294901760
    %7640 = vmatpush.msra.mxu0 %v7639
    %v7641 = vand.u32 %v6925, 4294901760
    %7642 = vmatpush.msra.mxu0 %v7641
    %v7643 = vand.u32 %v6924, 4294901760
    %7644 = vmatpush.msra.mxu0 %v7643
    %v7645 = vand.u32 %v6923, 4294901760
    %7646 = vmatpush.msra.mxu0 %v7645
    %v7647 = vand.u32 %v6922, 4294901760
    %7648 = vmatpush.msra.mxu0 %v7647
    %v7649 = vand.u32 %v6921, 4294901760
    %7650 = vmatpush.msra.mxu0 %v7649
    %v7651 = vand.u32 %v6920, 4294901760
    %7652 = vmatpush.msra.mxu0 %v7651
    %v7653 = vand.u32 %v6919, 4294901760
    %7654 = vmatpush.msra.mxu0 %v7653
    %v7655 = vand.u32 %v6918, 4294901760
    %7656 = vmatpush.msra.mxu0 %v7655
    %v7657 = vand.u32 %v6917, 4294901760
    %7658 = vmatpush.msra.mxu0 %v7657
    %v7659 = vand.u32 %v6916, 4294901760
    %7660 = vmatpush.msra.mxu0 %v7659
    %v7661 = vand.u32 %v6915, 4294901760
    %7662 = vmatpush.msra.mxu0 %v7661
    %v7663 = vand.u32 %v6881, 4294901760
    %v7664 = vsub.f32 %v6881, %v7663
    %v7665 = vand.u32 %v7664, 4294901760
    %v7666 = vsub.f32 %v7664, %v7665
    %v7667 = vand.u32 %v7666, 4294901760
    %7668 = vmatmul.f32.gmra.mxu0 %v7667
    %v7669 = vpop.f32.mrf.mxu0
    %v7670 = vadd.f32 %v7629, %v7669
    %7671 = vdwg.mxu0
    %v7672 = vand.u32 %v6930, 4294901760
    %v7673 = vsub.f32 %v6930, %v7672
    %v7674 = vand.u32 %v7673, 4294901760
    %v7675 = vsub.f32 %v7673, %v7674
    %v7676 = vand.u32 %v7675, 4294901760
    %7677 = vmatpush.msra.mxu0 %v7676
    %v7678 = vand.u32 %v6929, 4294901760
    %v7679 = vsub.f32 %v6929, %v7678
    %v7680 = vand.u32 %v7679, 4294901760
    %v7681 = vsub.f32 %v7679, %v7680
    %v7682 = vand.u32 %v7681, 4294901760
    %7683 = vmatpush.msra.mxu0 %v7682
    %v7684 = vand.u32 %v6928, 4294901760
    %v7685 = vsub.f32 %v6928, %v7684
    %v7686 = vand.u32 %v7685, 4294901760
    %v7687 = vsub.f32 %v7685, %v7686
    %v7688 = vand.u32 %v7687, 4294901760
    %7689 = vmatpush.msra.mxu0 %v7688
    %v7690 = vand.u32 %v6927, 4294901760
    %v7691 = vsub.f32 %v6927, %v7690
    %v7692 = vand.u32 %v7691, 4294901760
    %v7693 = vsub.f32 %v7691, %v7692
    %v7694 = vand.u32 %v7693, 4294901760
    %7695 = vmatpush.msra.mxu0 %v7694
    %v7696 = vand.u32 %v6926, 4294901760
    %v7697 = vsub.f32 %v6926, %v7696
    %v7698 = vand.u32 %v7697, 4294901760
    %v7699 = vsub.f32 %v7697, %v7698
    %v7700 = vand.u32 %v7699, 4294901760
    %7701 = vmatpush.msra.mxu0 %v7700
    %v7702 = vand.u32 %v6925, 4294901760
    %v7703 = vsub.f32 %v6925, %v7702
    %v7704 = vand.u32 %v7703, 4294901760
    %v7705 = vsub.f32 %v7703, %v7704
    %v7706 = vand.u32 %v7705, 4294901760
    %7707 = vmatpush.msra.mxu0 %v7706
    %v7708 = vand.u32 %v6924, 4294901760
    %v7709 = vsub.f32 %v6924, %v7708
    %v7710 = vand.u32 %v7709, 4294901760
    %v7711 = vsub.f32 %v7709, %v7710
    %v7712 = vand.u32 %v7711, 4294901760
    %7713 = vmatpush.msra.mxu0 %v7712
    %v7714 = vand.u32 %v6923, 4294901760
    %v7715 = vsub.f32 %v6923, %v7714
    %v7716 = vand.u32 %v7715, 4294901760
    %v7717 = vsub.f32 %v7715, %v7716
    %v7718 = vand.u32 %v7717, 4294901760
    %7719 = vmatpush.msra.mxu0 %v7718
    %v7720 = vand.u32 %v6922, 4294901760
    %v7721 = vsub.f32 %v6922, %v7720
    %v7722 = vand.u32 %v7721, 4294901760
    %v7723 = vsub.f32 %v7721, %v7722
    %v7724 = vand.u32 %v7723, 4294901760
    %7725 = vmatpush.msra.mxu0 %v7724
    %v7726 = vand.u32 %v6921, 4294901760
    %v7727 = vsub.f32 %v6921, %v7726
    %v7728 = vand.u32 %v7727, 4294901760
    %v7729 = vsub.f32 %v7727, %v7728
    %v7730 = vand.u32 %v7729, 4294901760
    %7731 = vmatpush.msra.mxu0 %v7730
    %v7732 = vand.u32 %v6920, 4294901760
    %v7733 = vsub.f32 %v6920, %v7732
    %v7734 = vand.u32 %v7733, 4294901760
    %v7735 = vsub.f32 %v7733, %v7734
    %v7736 = vand.u32 %v7735, 4294901760
    %7737 = vmatpush.msra.mxu0 %v7736
    %v7738 = vand.u32 %v6919, 4294901760
    %v7739 = vsub.f32 %v6919, %v7738
    %v7740 = vand.u32 %v7739, 4294901760
    %v7741 = vsub.f32 %v7739, %v7740
    %v7742 = vand.u32 %v7741, 4294901760
    %7743 = vmatpush.msra.mxu0 %v7742
    %v7744 = vand.u32 %v6918, 4294901760
    %v7745 = vsub.f32 %v6918, %v7744
    %v7746 = vand.u32 %v7745, 4294901760
    %v7747 = vsub.f32 %v7745, %v7746
    %v7748 = vand.u32 %v7747, 4294901760
    %7749 = vmatpush.msra.mxu0 %v7748
    %v7750 = vand.u32 %v6917, 4294901760
    %v7751 = vsub.f32 %v6917, %v7750
    %v7752 = vand.u32 %v7751, 4294901760
    %v7753 = vsub.f32 %v7751, %v7752
    %v7754 = vand.u32 %v7753, 4294901760
    %7755 = vmatpush.msra.mxu0 %v7754
    %v7756 = vand.u32 %v6916, 4294901760
    %v7757 = vsub.f32 %v6916, %v7756
    %v7758 = vand.u32 %v7757, 4294901760
    %v7759 = vsub.f32 %v7757, %v7758
    %v7760 = vand.u32 %v7759, 4294901760
    %7761 = vmatpush.msra.mxu0 %v7760
    %v7762 = vand.u32 %v6915, 4294901760
    %v7763 = vsub.f32 %v6915, %v7762
    %v7764 = vand.u32 %v7763, 4294901760
    %v7765 = vsub.f32 %v7763, %v7764
    %v7766 = vand.u32 %v7765, 4294901760
    %7767 = vmatpush.msra.mxu0 %v7766
    %v7768 = vand.u32 %v6881, 4294901760
    %7769 = vmatmul.f32.gmra.mxu0 %v7768
    %v7770 = vpop.f32.mrf.mxu0
    %v7771 = vadd.f32 %v7670, %v7770
    %7772 = vdwg.mxu0
    %v7773 = vand.u32 %v6930, 4294901760
    %v7774 = vsub.f32 %v6930, %v7773
    %7775 = vmatpush.msra.mxu0 %v7774
    %v7776 = vand.u32 %v6929, 4294901760
    %v7777 = vsub.f32 %v6929, %v7776
    %7778 = vmatpush.msra.mxu0 %v7777
    %v7779 = vand.u32 %v6928, 4294901760
    %v7780 = vsub.f32 %v6928, %v7779
    %7781 = vmatpush.msra.mxu0 %v7780
    %v7782 = vand.u32 %v6927, 4294901760
    %v7783 = vsub.f32 %v6927, %v7782
    %7784 = vmatpush.msra.mxu0 %v7783
    %v7785 = vand.u32 %v6926, 4294901760
    %v7786 = vsub.f32 %v6926, %v7785
    %7787 = vmatpush.msra.mxu0 %v7786
    %v7788 = vand.u32 %v6925, 4294901760
    %v7789 = vsub.f32 %v6925, %v7788
    %7790 = vmatpush.msra.mxu0 %v7789
    %v7791 = vand.u32 %v6924, 4294901760
    %v7792 = vsub.f32 %v6924, %v7791
    %7793 = vmatpush.msra.mxu0 %v7792
    %v7794 = vand.u32 %v6923, 4294901760
    %v7795 = vsub.f32 %v6923, %v7794
    %7796 = vmatpush.msra.mxu0 %v7795
    %v7797 = vand.u32 %v6922, 4294901760
    %v7798 = vsub.f32 %v6922, %v7797
    %7799 = vmatpush.msra.mxu0 %v7798
    %v7800 = vand.u32 %v6921, 4294901760
    %v7801 = vsub.f32 %v6921, %v7800
    %7802 = vmatpush.msra.mxu0 %v7801
    %v7803 = vand.u32 %v6920, 4294901760
    %v7804 = vsub.f32 %v6920, %v7803
    %7805 = vmatpush.msra.mxu0 %v7804
    %v7806 = vand.u32 %v6919, 4294901760
    %v7807 = vsub.f32 %v6919, %v7806
    %7808 = vmatpush.msra.mxu0 %v7807
    %v7809 = vand.u32 %v6918, 4294901760
    %v7810 = vsub.f32 %v6918, %v7809
    %7811 = vmatpush.msra.mxu0 %v7810
    %v7812 = vand.u32 %v6917, 4294901760
    %v7813 = vsub.f32 %v6917, %v7812
    %7814 = vmatpush.msra.mxu0 %v7813
    %v7815 = vand.u32 %v6916, 4294901760
    %v7816 = vsub.f32 %v6916, %v7815
    %7817 = vmatpush.msra.mxu0 %v7816
    %v7818 = vand.u32 %v6915, 4294901760
    %v7819 = vsub.f32 %v6915, %v7818
    %7820 = vmatpush.msra.mxu0 %v7819
    %v7821 = vand.u32 %v6881, 4294901760
    %v7822 = vsub.f32 %v6881, %v7821
    %7823 = vmatmul.f32.gmra.mxu0 %v7822
    %v7824 = vpop.f32.mrf.mxu0
    %v7825 = vadd.f32 %v7771, %v7824
    %7826 = vdwg.mxu0
    %v7827 = vand.u32 %v6930, 4294901760
    %7828 = vmatpush.msra.mxu0 %v7827
    %v7829 = vand.u32 %v6929, 4294901760
    %7830 = vmatpush.msra.mxu0 %v7829
    %v7831 = vand.u32 %v6928, 4294901760
    %7832 = vmatpush.msra.mxu0 %v7831
    %v7833 = vand.u32 %v6927, 4294901760
    %7834 = vmatpush.msra.mxu0 %v7833
    %v7835 = vand.u32 %v6926, 4294901760
    %7836 = vmatpush.msra.mxu0 %v7835
    %v7837 = vand.u32 %v6925, 4294901760
    %7838 = vmatpush.msra.mxu0 %v7837
    %v7839 = vand.u32 %v6924, 4294901760
    %7840 = vmatpush.msra.mxu0 %v7839
    %v7841 = vand.u32 %v6923, 4294901760
    %7842 = vmatpush.msra.mxu0 %v7841
    %v7843 = vand.u32 %v6922, 4294901760
    %7844 = vmatpush.msra.mxu0 %v7843
    %v7845 = vand.u32 %v6921, 4294901760
    %7846 = vmatpush.msra.mxu0 %v7845
    %v7847 = vand.u32 %v6920, 4294901760
    %7848 = vmatpush.msra.mxu0 %v7847
    %v7849 = vand.u32 %v6919, 4294901760
    %7850 = vmatpush.msra.mxu0 %v7849
    %v7851 = vand.u32 %v6918, 4294901760
    %7852 = vmatpush.msra.mxu0 %v7851
    %v7853 = vand.u32 %v6917, 4294901760
    %7854 = vmatpush.msra.mxu0 %v7853
    %v7855 = vand.u32 %v6916, 4294901760
    %7856 = vmatpush.msra.mxu0 %v7855
    %v7857 = vand.u32 %v6915, 4294901760
    %7858 = vmatpush.msra.mxu0 %v7857
    %v7859 = vand.u32 %v6881, 4294901760
    %v7860 = vsub.f32 %v6881, %v7859
    %v7861 = vand.u32 %v7860, 4294901760
    %7862 = vmatmul.f32.gmra.mxu0 %v7861
    %v7863 = vpop.f32.mrf.mxu0
    %v7864 = vadd.f32 %v7825, %v7863
    %7865 = vdwg.mxu0
    %v7866 = vand.u32 %v6930, 4294901760
    %v7867 = vsub.f32 %v6930, %v7866
    %v7868 = vand.u32 %v7867, 4294901760
    %7869 = vmatpush.msra.mxu0 %v7868
    %v7870 = vand.u32 %v6929, 4294901760
    %v7871 = vsub.f32 %v6929, %v7870
    %v7872 = vand.u32 %v7871, 4294901760
    %7873 = vmatpush.msra.mxu0 %v7872
    %v7874 = vand.u32 %v6928, 4294901760
    %v7875 = vsub.f32 %v6928, %v7874
    %v7876 = vand.u32 %v7875, 4294901760
    %7877 = vmatpush.msra.mxu0 %v7876
    %v7878 = vand.u32 %v6927, 4294901760
    %v7879 = vsub.f32 %v6927, %v7878
    %v7880 = vand.u32 %v7879, 4294901760
    %7881 = vmatpush.msra.mxu0 %v7880
    %v7882 = vand.u32 %v6926, 4294901760
    %v7883 = vsub.f32 %v6926, %v7882
    %v7884 = vand.u32 %v7883, 4294901760
    %7885 = vmatpush.msra.mxu0 %v7884
    %v7886 = vand.u32 %v6925, 4294901760
    %v7887 = vsub.f32 %v6925, %v7886
    %v7888 = vand.u32 %v7887, 4294901760
    %7889 = vmatpush.msra.mxu0 %v7888
    %v7890 = vand.u32 %v6924, 4294901760
    %v7891 = vsub.f32 %v6924, %v7890
    %v7892 = vand.u32 %v7891, 4294901760
    %7893 = vmatpush.msra.mxu0 %v7892
    %v7894 = vand.u32 %v6923, 4294901760
    %v7895 = vsub.f32 %v6923, %v7894
    %v7896 = vand.u32 %v7895, 4294901760
    %7897 = vmatpush.msra.mxu0 %v7896
    %v7898 = vand.u32 %v6922, 4294901760
    %v7899 = vsub.f32 %v6922, %v7898
    %v7900 = vand.u32 %v7899, 4294901760
    %7901 = vmatpush.msra.mxu0 %v7900
    %v7902 = vand.u32 %v6921, 4294901760
    %v7903 = vsub.f32 %v6921, %v7902
    %v7904 = vand.u32 %v7903, 4294901760
    %7905 = vmatpush.msra.mxu0 %v7904
    %v7906 = vand.u32 %v6920, 4294901760
    %v7907 = vsub.f32 %v6920, %v7906
    %v7908 = vand.u32 %v7907, 4294901760
    %7909 = vmatpush.msra.mxu0 %v7908
    %v7910 = vand.u32 %v6919, 4294901760
    %v7911 = vsub.f32 %v6919, %v7910
    %v7912 = vand.u32 %v7911, 4294901760
    %7913 = vmatpush.msra.mxu0 %v7912
    %v7914 = vand.u32 %v6918, 4294901760
    %v7915 = vsub.f32 %v6918, %v7914
    %v7916 = vand.u32 %v7915, 4294901760
    %7917 = vmatpush.msra.mxu0 %v7916
    %v7918 = vand.u32 %v6917, 4294901760
    %v7919 = vsub.f32 %v6917, %v7918
    %v7920 = vand.u32 %v7919, 4294901760
    %7921 = vmatpush.msra.mxu0 %v7920
    %v7922 = vand.u32 %v6916, 4294901760
    %v7923 = vsub.f32 %v6916, %v7922
    %v7924 = vand.u32 %v7923, 4294901760
    %7925 = vmatpush.msra.mxu0 %v7924
    %v7926 = vand.u32 %v6915, 4294901760
    %v7927 = vsub.f32 %v6915, %v7926
    %v7928 = vand.u32 %v7927, 4294901760
    %7929 = vmatpush.msra.mxu0 %v7928
    %v7930 = vand.u32 %v6881, 4294901760
    %7931 = vmatmul.f32.gmra.mxu0 %v7930
    %v7932 = vpop.f32.mrf.mxu0
    %v7933 = vadd.f32 %v7864, %v7932
    %7934 = vdwg.mxu0
    %v7935 = vand.u32 %v6930, 4294901760
    %7936 = vmatpush.msra.mxu0 %v7935
    %v7937 = vand.u32 %v6929, 4294901760
    %7938 = vmatpush.msra.mxu0 %v7937
    %v7939 = vand.u32 %v6928, 4294901760
    %7940 = vmatpush.msra.mxu0 %v7939
    %v7941 = vand.u32 %v6927, 4294901760
    %7942 = vmatpush.msra.mxu0 %v7941
    %v7943 = vand.u32 %v6926, 4294901760
    %7944 = vmatpush.msra.mxu0 %v7943
    %v7945 = vand.u32 %v6925, 4294901760
    %7946 = vmatpush.msra.mxu0 %v7945
    %v7947 = vand.u32 %v6924, 4294901760
    %7948 = vmatpush.msra.mxu0 %v7947
    %v7949 = vand.u32 %v6923, 4294901760
    %7950 = vmatpush.msra.mxu0 %v7949
    %v7951 = vand.u32 %v6922, 4294901760
    %7952 = vmatpush.msra.mxu0 %v7951
    %v7953 = vand.u32 %v6921, 4294901760
    %7954 = vmatpush.msra.mxu0 %v7953
    %v7955 = vand.u32 %v6920, 4294901760
    %7956 = vmatpush.msra.mxu0 %v7955
    %v7957 = vand.u32 %v6919, 4294901760
    %7958 = vmatpush.msra.mxu0 %v7957
    %v7959 = vand.u32 %v6918, 4294901760
    %7960 = vmatpush.msra.mxu0 %v7959
    %v7961 = vand.u32 %v6917, 4294901760
    %7962 = vmatpush.msra.mxu0 %v7961
    %v7963 = vand.u32 %v6916, 4294901760
    %7964 = vmatpush.msra.mxu0 %v7963
    %v7965 = vand.u32 %v6915, 4294901760
    %7966 = vmatpush.msra.mxu0 %v7965
    %v7967 = vand.u32 %v6881, 4294901760
    %7968 = vmatmul.f32.gmra.mxu0 %v7967
    %v7969 = vpop.f32.mrf.mxu0
    %v7970 = vadd.f32 %v7933, %v7969
    %7971 = vdwg.mxu0
    %v7972 = vand.u32 %v6946, 4294901760
    %7973 = vmatpush.msra.mxu0 %v7972
    %v7974 = vand.u32 %v6945, 4294901760
    %7975 = vmatpush.msra.mxu0 %v7974
    %v7976 = vand.u32 %v6944, 4294901760
    %7977 = vmatpush.msra.mxu0 %v7976
    %v7978 = vand.u32 %v6943, 4294901760
    %7979 = vmatpush.msra.mxu0 %v7978
    %v7980 = vand.u32 %v6942, 4294901760
    %7981 = vmatpush.msra.mxu0 %v7980
    %v7982 = vand.u32 %v6941, 4294901760
    %7983 = vmatpush.msra.mxu0 %v7982
    %v7984 = vand.u32 %v6940, 4294901760
    %7985 = vmatpush.msra.mxu0 %v7984
    %v7986 = vand.u32 %v6939, 4294901760
    %7987 = vmatpush.msra.mxu0 %v7986
    %v7988 = vand.u32 %v6938, 4294901760
    %7989 = vmatpush.msra.mxu0 %v7988
    %v7990 = vand.u32 %v6937, 4294901760
    %7991 = vmatpush.msra.mxu0 %v7990
    %v7992 = vand.u32 %v6936, 4294901760
    %7993 = vmatpush.msra.mxu0 %v7992
    %v7994 = vand.u32 %v6935, 4294901760
    %7995 = vmatpush.msra.mxu0 %v7994
    %v7996 = vand.u32 %v6934, 4294901760
    %7997 = vmatpush.msra.mxu0 %v7996
    %v7998 = vand.u32 %v6933, 4294901760
    %7999 = vmatpush.msra.mxu0 %v7998
    %v8000 = vand.u32 %v6932, 4294901760
    %8001 = vmatpush.msra.mxu0 %v8000
    %v8002 = vand.u32 %v6931, 4294901760
    %8003 = vmatpush.msra.mxu0 %v8002
    %v8004 = vand.u32 %v6882, 4294901760
    %v8005 = vsub.f32 %v6882, %v8004
    %v8006 = vand.u32 %v8005, 4294901760
    %v8007 = vsub.f32 %v8005, %v8006
    %v8008 = vand.u32 %v8007, 4294901760
    %8009 = vmatmul.f32.gmra.mxu0 %v8008
    %v8010 = vpop.f32.mrf.mxu0
    %v8011 = vadd.f32 %v7970, %v8010
    %8012 = vdwg.mxu0
    %v8013 = vand.u32 %v6946, 4294901760
    %v8014 = vsub.f32 %v6946, %v8013
    %v8015 = vand.u32 %v8014, 4294901760
    %v8016 = vsub.f32 %v8014, %v8015
    %v8017 = vand.u32 %v8016, 4294901760
    %8018 = vmatpush.msra.mxu0 %v8017
    %v8019 = vand.u32 %v6945, 4294901760
    %v8020 = vsub.f32 %v6945, %v8019
    %v8021 = vand.u32 %v8020, 4294901760
    %v8022 = vsub.f32 %v8020, %v8021
    %v8023 = vand.u32 %v8022, 4294901760
    %8024 = vmatpush.msra.mxu0 %v8023
    %v8025 = vand.u32 %v6944, 4294901760
    %v8026 = vsub.f32 %v6944, %v8025
    %v8027 = vand.u32 %v8026, 4294901760
    %v8028 = vsub.f32 %v8026, %v8027
    %v8029 = vand.u32 %v8028, 4294901760
    %8030 = vmatpush.msra.mxu0 %v8029
    %v8031 = vand.u32 %v6943, 4294901760
    %v8032 = vsub.f32 %v6943, %v8031
    %v8033 = vand.u32 %v8032, 4294901760
    %v8034 = vsub.f32 %v8032, %v8033
    %v8035 = vand.u32 %v8034, 4294901760
    %8036 = vmatpush.msra.mxu0 %v8035
    %v8037 = vand.u32 %v6942, 4294901760
    %v8038 = vsub.f32 %v6942, %v8037
    %v8039 = vand.u32 %v8038, 4294901760
    %v8040 = vsub.f32 %v8038, %v8039
    %v8041 = vand.u32 %v8040, 4294901760
    %8042 = vmatpush.msra.mxu0 %v8041
    %v8043 = vand.u32 %v6941, 4294901760
    %v8044 = vsub.f32 %v6941, %v8043
    %v8045 = vand.u32 %v8044, 4294901760
    %v8046 = vsub.f32 %v8044, %v8045
    %v8047 = vand.u32 %v8046, 4294901760
    %8048 = vmatpush.msra.mxu0 %v8047
    %v8049 = vand.u32 %v6940, 4294901760
    %v8050 = vsub.f32 %v6940, %v8049
    %v8051 = vand.u32 %v8050, 4294901760
    %v8052 = vsub.f32 %v8050, %v8051
    %v8053 = vand.u32 %v8052, 4294901760
    %8054 = vmatpush.msra.mxu0 %v8053
    %v8055 = vand.u32 %v6939, 4294901760
    %v8056 = vsub.f32 %v6939, %v8055
    %v8057 = vand.u32 %v8056, 4294901760
    %v8058 = vsub.f32 %v8056, %v8057
    %v8059 = vand.u32 %v8058, 4294901760
    %8060 = vmatpush.msra.mxu0 %v8059
    %v8061 = vand.u32 %v6938, 4294901760
    %v8062 = vsub.f32 %v6938, %v8061
    %v8063 = vand.u32 %v8062, 4294901760
    %v8064 = vsub.f32 %v8062, %v8063
    %v8065 = vand.u32 %v8064, 4294901760
    %8066 = vmatpush.msra.mxu0 %v8065
    %v8067 = vand.u32 %v6937, 4294901760
    %v8068 = vsub.f32 %v6937, %v8067
    %v8069 = vand.u32 %v8068, 4294901760
    %v8070 = vsub.f32 %v8068, %v8069
    %v8071 = vand.u32 %v8070, 4294901760
    %8072 = vmatpush.msra.mxu0 %v8071
    %v8073 = vand.u32 %v6936, 4294901760
    %v8074 = vsub.f32 %v6936, %v8073
    %v8075 = vand.u32 %v8074, 4294901760
    %v8076 = vsub.f32 %v8074, %v8075
    %v8077 = vand.u32 %v8076, 4294901760
    %8078 = vmatpush.msra.mxu0 %v8077
    %v8079 = vand.u32 %v6935, 4294901760
    %v8080 = vsub.f32 %v6935, %v8079
    %v8081 = vand.u32 %v8080, 4294901760
    %v8082 = vsub.f32 %v8080, %v8081
    %v8083 = vand.u32 %v8082, 4294901760
    %8084 = vmatpush.msra.mxu0 %v8083
    %v8085 = vand.u32 %v6934, 4294901760
    %v8086 = vsub.f32 %v6934, %v8085
    %v8087 = vand.u32 %v8086, 4294901760
    %v8088 = vsub.f32 %v8086, %v8087
    %v8089 = vand.u32 %v8088, 4294901760
    %8090 = vmatpush.msra.mxu0 %v8089
    %v8091 = vand.u32 %v6933, 4294901760
    %v8092 = vsub.f32 %v6933, %v8091
    %v8093 = vand.u32 %v8092, 4294901760
    %v8094 = vsub.f32 %v8092, %v8093
    %v8095 = vand.u32 %v8094, 4294901760
    %8096 = vmatpush.msra.mxu0 %v8095
    %v8097 = vand.u32 %v6932, 4294901760
    %v8098 = vsub.f32 %v6932, %v8097
    %v8099 = vand.u32 %v8098, 4294901760
    %v8100 = vsub.f32 %v8098, %v8099
    %v8101 = vand.u32 %v8100, 4294901760
    %8102 = vmatpush.msra.mxu0 %v8101
    %v8103 = vand.u32 %v6931, 4294901760
    %v8104 = vsub.f32 %v6931, %v8103
    %v8105 = vand.u32 %v8104, 4294901760
    %v8106 = vsub.f32 %v8104, %v8105
    %v8107 = vand.u32 %v8106, 4294901760
    %8108 = vmatpush.msra.mxu0 %v8107
    %v8109 = vand.u32 %v6882, 4294901760
    %8110 = vmatmul.f32.gmra.mxu0 %v8109
    %v8111 = vpop.f32.mrf.mxu0
    %v8112 = vadd.f32 %v8011, %v8111
    %8113 = vdwg.mxu0
    %v8114 = vand.u32 %v6946, 4294901760
    %v8115 = vsub.f32 %v6946, %v8114
    %8116 = vmatpush.msra.mxu0 %v8115
    %v8117 = vand.u32 %v6945, 4294901760
    %v8118 = vsub.f32 %v6945, %v8117
    %8119 = vmatpush.msra.mxu0 %v8118
    %v8120 = vand.u32 %v6944, 4294901760
    %v8121 = vsub.f32 %v6944, %v8120
    %8122 = vmatpush.msra.mxu0 %v8121
    %v8123 = vand.u32 %v6943, 4294901760
    %v8124 = vsub.f32 %v6943, %v8123
    %8125 = vmatpush.msra.mxu0 %v8124
    %v8126 = vand.u32 %v6942, 4294901760
    %v8127 = vsub.f32 %v6942, %v8126
    %8128 = vmatpush.msra.mxu0 %v8127
    %v8129 = vand.u32 %v6941, 4294901760
    %v8130 = vsub.f32 %v6941, %v8129
    %8131 = vmatpush.msra.mxu0 %v8130
    %v8132 = vand.u32 %v6940, 4294901760
    %v8133 = vsub.f32 %v6940, %v8132
    %8134 = vmatpush.msra.mxu0 %v8133
    %v8135 = vand.u32 %v6939, 4294901760
    %v8136 = vsub.f32 %v6939, %v8135
    %8137 = vmatpush.msra.mxu0 %v8136
    %v8138 = vand.u32 %v6938, 4294901760
    %v8139 = vsub.f32 %v6938, %v8138
    %8140 = vmatpush.msra.mxu0 %v8139
    %v8141 = vand.u32 %v6937, 4294901760
    %v8142 = vsub.f32 %v6937, %v8141
    %8143 = vmatpush.msra.mxu0 %v8142
    %v8144 = vand.u32 %v6936, 4294901760
    %v8145 = vsub.f32 %v6936, %v8144
    %8146 = vmatpush.msra.mxu0 %v8145
    %v8147 = vand.u32 %v6935, 4294901760
    %v8148 = vsub.f32 %v6935, %v8147
    %8149 = vmatpush.msra.mxu0 %v8148
    %v8150 = vand.u32 %v6934, 4294901760
    %v8151 = vsub.f32 %v6934, %v8150
    %8152 = vmatpush.msra.mxu0 %v8151
    %v8153 = vand.u32 %v6933, 4294901760
    %v8154 = vsub.f32 %v6933, %v8153
    %8155 = vmatpush.msra.mxu0 %v8154
    %v8156 = vand.u32 %v6932, 4294901760
    %v8157 = vsub.f32 %v6932, %v8156
    %8158 = vmatpush.msra.mxu0 %v8157
    %v8159 = vand.u32 %v6931, 4294901760
    %v8160 = vsub.f32 %v6931, %v8159
    %8161 = vmatpush.msra.mxu0 %v8160
    %v8162 = vand.u32 %v6882, 4294901760
    %v8163 = vsub.f32 %v6882, %v8162
    %8164 = vmatmul.f32.gmra.mxu0 %v8163
    %v8165 = vpop.f32.mrf.mxu0
    %v8166 = vadd.f32 %v8112, %v8165
    %8167 = vdwg.mxu0
    %v8168 = vand.u32 %v6946, 4294901760
    %8169 = vmatpush.msra.mxu0 %v8168
    %v8170 = vand.u32 %v6945, 4294901760
    %8171 = vmatpush.msra.mxu0 %v8170
    %v8172 = vand.u32 %v6944, 4294901760
    %8173 = vmatpush.msra.mxu0 %v8172
    %v8174 = vand.u32 %v6943, 4294901760
    %8175 = vmatpush.msra.mxu0 %v8174
    %v8176 = vand.u32 %v6942, 4294901760
    %8177 = vmatpush.msra.mxu0 %v8176
    %v8178 = vand.u32 %v6941, 4294901760
    %8179 = vmatpush.msra.mxu0 %v8178
    %v8180 = vand.u32 %v6940, 4294901760
    %8181 = vmatpush.msra.mxu0 %v8180
    %v8182 = vand.u32 %v6939, 4294901760
    %8183 = vmatpush.msra.mxu0 %v8182
    %v8184 = vand.u32 %v6938, 4294901760
    %8185 = vmatpush.msra.mxu0 %v8184
    %v8186 = vand.u32 %v6937, 4294901760
    %8187 = vmatpush.msra.mxu0 %v8186
    %v8188 = vand.u32 %v6936, 4294901760
    %8189 = vmatpush.msra.mxu0 %v8188
    %v8190 = vand.u32 %v6935, 4294901760
    %8191 = vmatpush.msra.mxu0 %v8190
    %v8192 = vand.u32 %v6934, 4294901760
    %8193 = vmatpush.msra.mxu0 %v8192
    %v8194 = vand.u32 %v6933, 4294901760
    %8195 = vmatpush.msra.mxu0 %v8194
    %v8196 = vand.u32 %v6932, 4294901760
    %8197 = vmatpush.msra.mxu0 %v8196
    %v8198 = vand.u32 %v6931, 4294901760
    %8199 = vmatpush.msra.mxu0 %v8198
    %v8200 = vand.u32 %v6882, 4294901760
    %v8201 = vsub.f32 %v6882, %v8200
    %v8202 = vand.u32 %v8201, 4294901760
    %8203 = vmatmul.f32.gmra.mxu0 %v8202
    %v8204 = vpop.f32.mrf.mxu0
    %v8205 = vadd.f32 %v8166, %v8204
    %8206 = vdwg.mxu0
    %v8207 = vand.u32 %v6946, 4294901760
    %v8208 = vsub.f32 %v6946, %v8207
    %v8209 = vand.u32 %v8208, 4294901760
    %8210 = vmatpush.msra.mxu0 %v8209
    %v8211 = vand.u32 %v6945, 4294901760
    %v8212 = vsub.f32 %v6945, %v8211
    %v8213 = vand.u32 %v8212, 4294901760
    %8214 = vmatpush.msra.mxu0 %v8213
    %v8215 = vand.u32 %v6944, 4294901760
    %v8216 = vsub.f32 %v6944, %v8215
    %v8217 = vand.u32 %v8216, 4294901760
    %8218 = vmatpush.msra.mxu0 %v8217
    %v8219 = vand.u32 %v6943, 4294901760
    %v8220 = vsub.f32 %v6943, %v8219
    %v8221 = vand.u32 %v8220, 4294901760
    %8222 = vmatpush.msra.mxu0 %v8221
    %v8223 = vand.u32 %v6942, 4294901760
    %v8224 = vsub.f32 %v6942, %v8223
    %v8225 = vand.u32 %v8224, 4294901760
    %8226 = vmatpush.msra.mxu0 %v8225
    %v8227 = vand.u32 %v6941, 4294901760
    %v8228 = vsub.f32 %v6941, %v8227
    %v8229 = vand.u32 %v8228, 4294901760
    %8230 = vmatpush.msra.mxu0 %v8229
    %v8231 = vand.u32 %v6940, 4294901760
    %v8232 = vsub.f32 %v6940, %v8231
    %v8233 = vand.u32 %v8232, 4294901760
    %8234 = vmatpush.msra.mxu0 %v8233
    %v8235 = vand.u32 %v6939, 4294901760
    %v8236 = vsub.f32 %v6939, %v8235
    %v8237 = vand.u32 %v8236, 4294901760
    %8238 = vmatpush.msra.mxu0 %v8237
    %v8239 = vand.u32 %v6938, 4294901760
    %v8240 = vsub.f32 %v6938, %v8239
    %v8241 = vand.u32 %v8240, 4294901760
    %8242 = vmatpush.msra.mxu0 %v8241
    %v8243 = vand.u32 %v6937, 4294901760
    %v8244 = vsub.f32 %v6937, %v8243
    %v8245 = vand.u32 %v8244, 4294901760
    %8246 = vmatpush.msra.mxu0 %v8245
    %v8247 = vand.u32 %v6936, 4294901760
    %v8248 = vsub.f32 %v6936, %v8247
    %v8249 = vand.u32 %v8248, 4294901760
    %8250 = vmatpush.msra.mxu0 %v8249
    %v8251 = vand.u32 %v6935, 4294901760
    %v8252 = vsub.f32 %v6935, %v8251
    %v8253 = vand.u32 %v8252, 4294901760
    %8254 = vmatpush.msra.mxu0 %v8253
    %v8255 = vand.u32 %v6934, 4294901760
    %v8256 = vsub.f32 %v6934, %v8255
    %v8257 = vand.u32 %v8256, 4294901760
    %8258 = vmatpush.msra.mxu0 %v8257
    %v8259 = vand.u32 %v6933, 4294901760
    %v8260 = vsub.f32 %v6933, %v8259
    %v8261 = vand.u32 %v8260, 4294901760
    %8262 = vmatpush.msra.mxu0 %v8261
    %v8263 = vand.u32 %v6932, 4294901760
    %v8264 = vsub.f32 %v6932, %v8263
    %v8265 = vand.u32 %v8264, 4294901760
    %8266 = vmatpush.msra.mxu0 %v8265
    %v8267 = vand.u32 %v6931, 4294901760
    %v8268 = vsub.f32 %v6931, %v8267
    %v8269 = vand.u32 %v8268, 4294901760
    %8270 = vmatpush.msra.mxu0 %v8269
    %v8271 = vand.u32 %v6882, 4294901760
    %8272 = vmatmul.f32.gmra.mxu0 %v8271
    %v8273 = vpop.f32.mrf.mxu0
    %v8274 = vadd.f32 %v8205, %v8273
    %8275 = vdwg.mxu0
    %v8276 = vand.u32 %v6946, 4294901760
    %8277 = vmatpush.msra.mxu0 %v8276
    %v8278 = vand.u32 %v6945, 4294901760
    %8279 = vmatpush.msra.mxu0 %v8278
    %v8280 = vand.u32 %v6944, 4294901760
    %8281 = vmatpush.msra.mxu0 %v8280
    %v8282 = vand.u32 %v6943, 4294901760
    %8283 = vmatpush.msra.mxu0 %v8282
    %v8284 = vand.u32 %v6942, 4294901760
    %8285 = vmatpush.msra.mxu0 %v8284
    %v8286 = vand.u32 %v6941, 4294901760
    %8287 = vmatpush.msra.mxu0 %v8286
    %v8288 = vand.u32 %v6940, 4294901760
    %8289 = vmatpush.msra.mxu0 %v8288
    %v8290 = vand.u32 %v6939, 4294901760
    %8291 = vmatpush.msra.mxu0 %v8290
    %v8292 = vand.u32 %v6938, 4294901760
    %8293 = vmatpush.msra.mxu0 %v8292
    %v8294 = vand.u32 %v6937, 4294901760
    %8295 = vmatpush.msra.mxu0 %v8294
    %v8296 = vand.u32 %v6936, 4294901760
    %8297 = vmatpush.msra.mxu0 %v8296
    %v8298 = vand.u32 %v6935, 4294901760
    %8299 = vmatpush.msra.mxu0 %v8298
    %v8300 = vand.u32 %v6934, 4294901760
    %8301 = vmatpush.msra.mxu0 %v8300
    %v8302 = vand.u32 %v6933, 4294901760
    %8303 = vmatpush.msra.mxu0 %v8302
    %v8304 = vand.u32 %v6932, 4294901760
    %8305 = vmatpush.msra.mxu0 %v8304
    %v8306 = vand.u32 %v6931, 4294901760
    %8307 = vmatpush.msra.mxu0 %v8306
    %v8308 = vand.u32 %v6882, 4294901760
    %8309 = vmatmul.f32.gmra.mxu0 %v8308
    %v8310 = vpop.f32.mrf.mxu0
    %v8311 = vadd.f32 %v8274, %v8310
    %8312 = vdwg.mxu0
    %vm8313 = vcmask 254976
    %8314 = vst.msk [vmem:[#allocation4] sm:$0x3] %vm8313, %v8311
    %8316 = vrot.lane.b32.xlu0 %v8311, 32
    %v8317 = vpop.permute.xlu0 %8316
    %vm8319 = vcmask 519426
    %8320 = vst.msk [vmem:[#allocation4 - $0x2] sm:$0xc] %vm8319, %v8317
    %8321 = vrot.lane.b32.xlu0 %v8311, 64
    %v8322 = vpop.permute.xlu0 %8321
    %vm8324 = vcmask 783876
    %8325 = vst.msk [vmem:[#allocation4 - $0x4] sm:$0x30] %vm8324, %v8322
    %8326 = vrot.lane.b32.xlu0 %v8311, 96
    %v8327 = vpop.permute.xlu0 %8326
    %vm8329 = vcmask 1048326
    %8330 = vst.msk [vmem:[#allocation4 - $0x6] sm:$0xc0] %vm8329, %v8327
    %v8331 = vld [vmem:[%s1] sm:$0x3]
    %v8332 = vld [vmem:[%s4 + $0x4c0] sm:$0xff]
    %v8333 = vld [vmem:[%s4 + $0x4c8] sm:$0xff]
    %v8334 = vld [vmem:[%s7 + $0x3] sm:$0x1]
    %v8335 = vperm.slane %v8334, 0
    %vm8336 = vcmask 130048
    %v8338 = vsel %vm8336, %v8331, 0
    %8340 = vmatpush.msra.mxu0 0.0
    %8341 = vmatpush.msra.mxu0 0.0
    %8342 = vmatpush.msra.mxu0 0.0
    %8343 = vmatpush.msra.mxu0 0.0
    %8344 = vmatpush.msra.mxu0 0.0
    %8345 = vmatpush.msra.mxu0 0.0
    %8346 = vmatpush.msra.mxu0 0.0
    %8347 = vmatpush.msra.mxu0 0.0
    %8348 = vmatpush.msra.mxu0 0.0
    %8349 = vmatpush.msra.mxu0 0.0
    %8350 = vmatpush.msra.mxu0 0.0
    %8351 = vmatpush.msra.mxu0 0.0
    %8352 = vmatpush.msra.mxu0 0.0
    %8353 = vmatpush.msra.mxu0 0.0
    %v8354 = vand.u32 %v8333, 4294901760
    %8355 = vmatpush.msra.mxu0 %v8354
    %v8356 = vand.u32 %v8332, 4294901760
    %8357 = vmatpush.msra.mxu0 %v8356
    %v8358 = vand.u32 %v8338, 4294901760
    %v8359 = vsub.f32 %v8338, %v8358
    %v8360 = vand.u32 %v8359, 4294901760
    %v8361 = vsub.f32 %v8359, %v8360
    %v8362 = vand.u32 %v8361, 4294901760
    %8363 = vmatmul.f32.gmra.mxu0 %v8362
    %v8364 = vpop.f32.mrf.mxu0
    %v8365 = vadd.f32 %v8335, %v8364
    %8366 = vdwg.mxu0
    %8367 = vmatpush.msra.mxu0 0.0
    %8368 = vmatpush.msra.mxu0 0.0
    %8369 = vmatpush.msra.mxu0 0.0
    %8370 = vmatpush.msra.mxu0 0.0
    %8371 = vmatpush.msra.mxu0 0.0
    %8372 = vmatpush.msra.mxu0 0.0
    %8373 = vmatpush.msra.mxu0 0.0
    %8374 = vmatpush.msra.mxu0 0.0
    %8375 = vmatpush.msra.mxu0 0.0
    %8376 = vmatpush.msra.mxu0 0.0
    %8377 = vmatpush.msra.mxu0 0.0
    %8378 = vmatpush.msra.mxu0 0.0
    %8379 = vmatpush.msra.mxu0 0.0
    %8380 = vmatpush.msra.mxu0 0.0
    %v8381 = vand.u32 %v8333, 4294901760
    %v8382 = vsub.f32 %v8333, %v8381
    %v8383 = vand.u32 %v8382, 4294901760
    %v8384 = vsub.f32 %v8382, %v8383
    %v8385 = vand.u32 %v8384, 4294901760
    %8386 = vmatpush.msra.mxu0 %v8385
    %v8387 = vand.u32 %v8332, 4294901760
    %v8388 = vsub.f32 %v8332, %v8387
    %v8389 = vand.u32 %v8388, 4294901760
    %v8390 = vsub.f32 %v8388, %v8389
    %v8391 = vand.u32 %v8390, 4294901760
    %8392 = vmatpush.msra.mxu0 %v8391
    %v8393 = vand.u32 %v8338, 4294901760
    %8394 = vmatmul.f32.gmra.mxu0 %v8393
    %v8395 = vpop.f32.mrf.mxu0
    %v8396 = vadd.f32 %v8365, %v8395
    %8397 = vdwg.mxu0
    %8398 = vmatpush.msra.mxu0 0.0
    %8399 = vmatpush.msra.mxu0 0.0
    %8400 = vmatpush.msra.mxu0 0.0
    %8401 = vmatpush.msra.mxu0 0.0
    %8402 = vmatpush.msra.mxu0 0.0
    %8403 = vmatpush.msra.mxu0 0.0
    %8404 = vmatpush.msra.mxu0 0.0
    %8405 = vmatpush.msra.mxu0 0.0
    %8406 = vmatpush.msra.mxu0 0.0
    %8407 = vmatpush.msra.mxu0 0.0
    %8408 = vmatpush.msra.mxu0 0.0
    %8409 = vmatpush.msra.mxu0 0.0
    %8410 = vmatpush.msra.mxu0 0.0
    %8411 = vmatpush.msra.mxu0 0.0
    %v8412 = vand.u32 %v8333, 4294901760
    %v8413 = vsub.f32 %v8333, %v8412
    %8414 = vmatpush.msra.mxu0 %v8413
    %v8415 = vand.u32 %v8332, 4294901760
    %v8416 = vsub.f32 %v8332, %v8415
    %8417 = vmatpush.msra.mxu0 %v8416
    %v8418 = vand.u32 %v8338, 4294901760
    %v8419 = vsub.f32 %v8338, %v8418
    %8420 = vmatmul.f32.gmra.mxu0 %v8419
    %v8421 = vpop.f32.mrf.mxu0
    %v8422 = vadd.f32 %v8396, %v8421
    %8423 = vdwg.mxu0
    %8424 = vmatpush.msra.mxu0 0.0
    %8425 = vmatpush.msra.mxu0 0.0
    %8426 = vmatpush.msra.mxu0 0.0
    %8427 = vmatpush.msra.mxu0 0.0
    %8428 = vmatpush.msra.mxu0 0.0
    %8429 = vmatpush.msra.mxu0 0.0
    %8430 = vmatpush.msra.mxu0 0.0
    %8431 = vmatpush.msra.mxu0 0.0
    %8432 = vmatpush.msra.mxu0 0.0
    %8433 = vmatpush.msra.mxu0 0.0
    %8434 = vmatpush.msra.mxu0 0.0
    %8435 = vmatpush.msra.mxu0 0.0
    %8436 = vmatpush.msra.mxu0 0.0
    %8437 = vmatpush.msra.mxu0 0.0
    %v8438 = vand.u32 %v8333, 4294901760
    %8439 = vmatpush.msra.mxu0 %v8438
    %v8440 = vand.u32 %v8332, 4294901760
    %8441 = vmatpush.msra.mxu0 %v8440
    %v8442 = vand.u32 %v8338, 4294901760
    %v8443 = vsub.f32 %v8338, %v8442
    %v8444 = vand.u32 %v8443, 4294901760
    %8445 = vmatmul.f32.gmra.mxu0 %v8444
    %v8446 = vpop.f32.mrf.mxu0
    %v8447 = vadd.f32 %v8422, %v8446
    %8448 = vdwg.mxu0
    %8449 = vmatpush.msra.mxu0 0.0
    %8450 = vmatpush.msra.mxu0 0.0
    %8451 = vmatpush.msra.mxu0 0.0
    %8452 = vmatpush.msra.mxu0 0.0
    %8453 = vmatpush.msra.mxu0 0.0
    %8454 = vmatpush.msra.mxu0 0.0
    %8455 = vmatpush.msra.mxu0 0.0
    %8456 = vmatpush.msra.mxu0 0.0
    %8457 = vmatpush.msra.mxu0 0.0
    %8458 = vmatpush.msra.mxu0 0.0
    %8459 = vmatpush.msra.mxu0 0.0
    %8460 = vmatpush.msra.mxu0 0.0
    %8461 = vmatpush.msra.mxu0 0.0
    %8462 = vmatpush.msra.mxu0 0.0
    %v8463 = vand.u32 %v8333, 4294901760
    %v8464 = vsub.f32 %v8333, %v8463
    %v8465 = vand.u32 %v8464, 4294901760
    %8466 = vmatpush.msra.mxu0 %v8465
    %v8467 = vand.u32 %v8332, 4294901760
    %v8468 = vsub.f32 %v8332, %v8467
    %v8469 = vand.u32 %v8468, 4294901760
    %8470 = vmatpush.msra.mxu0 %v8469
    %v8471 = vand.u32 %v8338, 4294901760
    %8472 = vmatmul.f32.gmra.mxu0 %v8471
    %v8473 = vpop.f32.mrf.mxu0
    %v8474 = vadd.f32 %v8447, %v8473
    %8475 = vdwg.mxu0
    %8476 = vmatpush.msra.mxu0 0.0
    %8477 = vmatpush.msra.mxu0 0.0
    %8478 = vmatpush.msra.mxu0 0.0
    %8479 = vmatpush.msra.mxu0 0.0
    %8480 = vmatpush.msra.mxu0 0.0
    %8481 = vmatpush.msra.mxu0 0.0
    %8482 = vmatpush.msra.mxu0 0.0
    %8483 = vmatpush.msra.mxu0 0.0
    %8484 = vmatpush.msra.mxu0 0.0
    %8485 = vmatpush.msra.mxu0 0.0
    %8486 = vmatpush.msra.mxu0 0.0
    %8487 = vmatpush.msra.mxu0 0.0
    %8488 = vmatpush.msra.mxu0 0.0
    %8489 = vmatpush.msra.mxu0 0.0
    %v8490 = vand.u32 %v8333, 4294901760
    %8491 = vmatpush.msra.mxu0 %v8490
    %v8492 = vand.u32 %v8332, 4294901760
    %8493 = vmatpush.msra.mxu0 %v8492
    %v8494 = vand.u32 %v8338, 4294901760
    %8495 = vmatmul.f32.gmra.mxu0 %v8494
    %v8496 = vpop.f32.mrf.mxu0
    %v8497 = vadd.f32 %v8474, %v8496
    %8498 = vdwg.mxu0
    %v8499 = vmax.f32 %v8497, 0.0
    %v8500 = vld [vmem:[%s6] sm:$0xff]
    %v8501 = vld [vmem:[%s6 + $0x8] sm:$0xff]
    %v8502 = vld [vmem:[%s6 + $0x10] sm:$0xff]
    %v8503 = vld [vmem:[%s6 + $0x18] sm:$0xff]
    %v8504 = vld [vmem:[%s7 + $0x4] sm:$0x1]
    %v8505 = vperm.slane %v8504, 0
    %v8507 = vsel %vm4019, %v8499, 0
    %8509 = vmatpush.msra.mxu0 0.0
    %8510 = vmatpush.msra.mxu0 0.0
    %8511 = vmatpush.msra.mxu0 0.0
    %8512 = vmatpush.msra.mxu0 0.0
    %8513 = vmatpush.msra.mxu0 0.0
    %8514 = vmatpush.msra.mxu0 0.0
    %8515 = vmatpush.msra.mxu0 0.0
    %8516 = vmatpush.msra.mxu0 0.0
    %8517 = vmatpush.msra.mxu0 0.0
    %8518 = vmatpush.msra.mxu0 0.0
    %8519 = vmatpush.msra.mxu0 0.0
    %8520 = vmatpush.msra.mxu0 0.0
    %v8521 = vand.u32 %v8503, 4294901760
    %8522 = vmatpush.msra.mxu0 %v8521
    %v8523 = vand.u32 %v8502, 4294901760
    %8524 = vmatpush.msra.mxu0 %v8523
    %v8525 = vand.u32 %v8501, 4294901760
    %8526 = vmatpush.msra.mxu0 %v8525
    %v8527 = vand.u32 %v8500, 4294901760
    %8528 = vmatpush.msra.mxu0 %v8527
    %v8529 = vand.u32 %v8507, 4294901760
    %v8530 = vsub.f32 %v8507, %v8529
    %v8531 = vand.u32 %v8530, 4294901760
    %v8532 = vsub.f32 %v8530, %v8531
    %v8533 = vand.u32 %v8532, 4294901760
    %8534 = vmatmul.f32.gmra.mxu0 %v8533
    %v8535 = vpop.f32.mrf.mxu0
    %v8536 = vadd.f32 %v8505, %v8535
    %8537 = vdwg.mxu0
    %8538 = vmatpush.msra.mxu0 0.0
    %8539 = vmatpush.msra.mxu0 0.0
    %8540 = vmatpush.msra.mxu0 0.0
    %8541 = vmatpush.msra.mxu0 0.0
    %8542 = vmatpush.msra.mxu0 0.0
    %8543 = vmatpush.msra.mxu0 0.0
    %8544 = vmatpush.msra.mxu0 0.0
    %8545 = vmatpush.msra.mxu0 0.0
    %8546 = vmatpush.msra.mxu0 0.0
    %8547 = vmatpush.msra.mxu0 0.0
    %8548 = vmatpush.msra.mxu0 0.0
    %8549 = vmatpush.msra.mxu0 0.0
    %v8550 = vand.u32 %v8503, 4294901760
    %v8551 = vsub.f32 %v8503, %v8550
    %v8552 = vand.u32 %v8551, 4294901760
    %v8553 = vsub.f32 %v8551, %v8552
    %v8554 = vand.u32 %v8553, 4294901760
    %8555 = vmatpush.msra.mxu0 %v8554
    %v8556 = vand.u32 %v8502, 4294901760
    %v8557 = vsub.f32 %v8502, %v8556
    %v8558 = vand.u32 %v8557, 4294901760
    %v8559 = vsub.f32 %v8557, %v8558
    %v8560 = vand.u32 %v8559, 4294901760
    %8561 = vmatpush.msra.mxu0 %v8560
    %v8562 = vand.u32 %v8501, 4294901760
    %v8563 = vsub.f32 %v8501, %v8562
    %v8564 = vand.u32 %v8563, 4294901760
    %v8565 = vsub.f32 %v8563, %v8564
    %v8566 = vand.u32 %v8565, 4294901760
    %8567 = vmatpush.msra.mxu0 %v8566
    %v8568 = vand.u32 %v8500, 4294901760
    %v8569 = vsub.f32 %v8500, %v8568
    %v8570 = vand.u32 %v8569, 4294901760
    %v8571 = vsub.f32 %v8569, %v8570
    %v8572 = vand.u32 %v8571, 4294901760
    %8573 = vmatpush.msra.mxu0 %v8572
    %v8574 = vand.u32 %v8507, 4294901760
    %8575 = vmatmul.f32.gmra.mxu0 %v8574
    %v8576 = vpop.f32.mrf.mxu0
    %v8577 = vadd.f32 %v8536, %v8576
    %8578 = vdwg.mxu0
    %8579 = vmatpush.msra.mxu0 0.0
    %8580 = vmatpush.msra.mxu0 0.0
    %8581 = vmatpush.msra.mxu0 0.0
    %8582 = vmatpush.msra.mxu0 0.0
    %8583 = vmatpush.msra.mxu0 0.0
    %8584 = vmatpush.msra.mxu0 0.0
    %8585 = vmatpush.msra.mxu0 0.0
    %8586 = vmatpush.msra.mxu0 0.0
    %8587 = vmatpush.msra.mxu0 0.0
    %8588 = vmatpush.msra.mxu0 0.0
    %8589 = vmatpush.msra.mxu0 0.0
    %8590 = vmatpush.msra.mxu0 0.0
    %v8591 = vand.u32 %v8503, 4294901760
    %v8592 = vsub.f32 %v8503, %v8591
    %8593 = vmatpush.msra.mxu0 %v8592
    %v8594 = vand.u32 %v8502, 4294901760
    %v8595 = vsub.f32 %v8502, %v8594
    %8596 = vmatpush.msra.mxu0 %v8595
    %v8597 = vand.u32 %v8501, 4294901760
    %v8598 = vsub.f32 %v8501, %v8597
    %8599 = vmatpush.msra.mxu0 %v8598
    %v8600 = vand.u32 %v8500, 4294901760
    %v8601 = vsub.f32 %v8500, %v8600
    %8602 = vmatpush.msra.mxu0 %v8601
    %v8603 = vand.u32 %v8507, 4294901760
    %v8604 = vsub.f32 %v8507, %v8603
    %8605 = vmatmul.f32.gmra.mxu0 %v8604
    %v8606 = vpop.f32.mrf.mxu0
    %v8607 = vadd.f32 %v8577, %v8606
    %8608 = vdwg.mxu0
    %8609 = vmatpush.msra.mxu0 0.0
    %8610 = vmatpush.msra.mxu0 0.0
    %8611 = vmatpush.msra.mxu0 0.0
    %8612 = vmatpush.msra.mxu0 0.0
    %8613 = vmatpush.msra.mxu0 0.0
    %8614 = vmatpush.msra.mxu0 0.0
    %8615 = vmatpush.msra.mxu0 0.0
    %8616 = vmatpush.msra.mxu0 0.0
    %8617 = vmatpush.msra.mxu0 0.0
    %8618 = vmatpush.msra.mxu0 0.0
    %8619 = vmatpush.msra.mxu0 0.0
    %8620 = vmatpush.msra.mxu0 0.0
    %v8621 = vand.u32 %v8503, 4294901760
    %8622 = vmatpush.msra.mxu0 %v8621
    %v8623 = vand.u32 %v8502, 4294901760
    %8624 = vmatpush.msra.mxu0 %v8623
    %v8625 = vand.u32 %v8501, 4294901760
    %8626 = vmatpush.msra.mxu0 %v8625
    %v8627 = vand.u32 %v8500, 4294901760
    %8628 = vmatpush.msra.mxu0 %v8627
    %v8629 = vand.u32 %v8507, 4294901760
    %v8630 = vsub.f32 %v8507, %v8629
    %v8631 = vand.u32 %v8630, 4294901760
    %8632 = vmatmul.f32.gmra.mxu0 %v8631
    %v8633 = vpop.f32.mrf.mxu0
    %v8634 = vadd.f32 %v8607, %v8633
    %8635 = vdwg.mxu0
    %8636 = vmatpush.msra.mxu0 0.0
    %8637 = vmatpush.msra.mxu0 0.0
    %8638 = vmatpush.msra.mxu0 0.0
    %8639 = vmatpush.msra.mxu0 0.0
    %8640 = vmatpush.msra.mxu0 0.0
    %8641 = vmatpush.msra.mxu0 0.0
    %8642 = vmatpush.msra.mxu0 0.0
    %8643 = vmatpush.msra.mxu0 0.0
    %8644 = vmatpush.msra.mxu0 0.0
    %8645 = vmatpush.msra.mxu0 0.0
    %8646 = vmatpush.msra.mxu0 0.0
    %8647 = vmatpush.msra.mxu0 0.0
    %v8648 = vand.u32 %v8503, 4294901760
    %v8649 = vsub.f32 %v8503, %v8648
    %v8650 = vand.u32 %v8649, 4294901760
    %8651 = vmatpush.msra.mxu0 %v8650
    %v8652 = vand.u32 %v8502, 4294901760
    %v8653 = vsub.f32 %v8502, %v8652
    %v8654 = vand.u32 %v8653, 4294901760
    %8655 = vmatpush.msra.mxu0 %v8654
    %v8656 = vand.u32 %v8501, 4294901760
    %v8657 = vsub.f32 %v8501, %v8656
    %v8658 = vand.u32 %v8657, 4294901760
    %8659 = vmatpush.msra.mxu0 %v8658
    %v8660 = vand.u32 %v8500, 4294901760
    %v8661 = vsub.f32 %v8500, %v8660
    %v8662 = vand.u32 %v8661, 4294901760
    %8663 = vmatpush.msra.mxu0 %v8662
    %v8664 = vand.u32 %v8507, 4294901760
    %8665 = vmatmul.f32.gmra.mxu0 %v8664
    %v8666 = vpop.f32.mrf.mxu0
    %v8667 = vadd.f32 %v8634, %v8666
    %8668 = vdwg.mxu0
    %8669 = vmatpush.msra.mxu0 0.0
    %8670 = vmatpush.msra.mxu0 0.0
    %8671 = vmatpush.msra.mxu0 0.0
    %8672 = vmatpush.msra.mxu0 0.0
    %8673 = vmatpush.msra.mxu0 0.0
    %8674 = vmatpush.msra.mxu0 0.0
    %8675 = vmatpush.msra.mxu0 0.0
    %8676 = vmatpush.msra.mxu0 0.0
    %8677 = vmatpush.msra.mxu0 0.0
    %8678 = vmatpush.msra.mxu0 0.0
    %8679 = vmatpush.msra.mxu0 0.0
    %8680 = vmatpush.msra.mxu0 0.0
    %v8681 = vand.u32 %v8503, 4294901760
    %8682 = vmatpush.msra.mxu0 %v8681
    %v8683 = vand.u32 %v8502, 4294901760
    %8684 = vmatpush.msra.mxu0 %v8683
    %v8685 = vand.u32 %v8501, 4294901760
    %8686 = vmatpush.msra.mxu0 %v8685
    %v8687 = vand.u32 %v8500, 4294901760
    %8688 = vmatpush.msra.mxu0 %v8687
    %v8689 = vand.u32 %v8507, 4294901760
    %8690 = vmatmul.f32.gmra.mxu0 %v8689
    %v8691 = vpop.f32.mrf.mxu0
    %v8692 = vadd.f32 %v8667, %v8691
    %8693 = vdwg.mxu0
    %v8694 = vld [vmem:[#allocation4] sm:$0x3]
    %v8695 = vadd.f32 %v8692, %v8694
    %v8696 = vld [vmem:[%s5] sm:$0xff]
    %v8697 = vld [vmem:[%s5 + $0x8] sm:$0xff]
    %v8698 = vld [vmem:[%s5 + $0x10] sm:$0xff]
    %v8699 = vld [vmem:[%s5 + $0x18] sm:$0xff]
    %v8700 = vld [vmem:[%s5 + $0x20] sm:$0xff]
    %v8701 = vld [vmem:[%s5 + $0x28] sm:$0xff]
    %v8702 = vld [vmem:[%s5 + $0x30] sm:$0xff]
    %v8703 = vld [vmem:[%s5 + $0x38] sm:$0xff]
    %v8704 = vld [vmem:[%s5 + $0x40] sm:$0xff]
    %v8705 = vld [vmem:[%s5 + $0x48] sm:$0xff]
    %v8706 = vld [vmem:[%s5 + $0x50] sm:$0xff]
    %v8707 = vld [vmem:[%s5 + $0x58] sm:$0xff]
    %v8708 = vld [vmem:[%s5 + $0x60] sm:$0xff]
    %v8709 = vld [vmem:[%s5 + $0x68] sm:$0xff]
    %v8710 = vld [vmem:[%s5 + $0x70] sm:$0xff]
    %v8711 = vld [vmem:[%s5 + $0x78] sm:$0xff]
    %v8712 = vld [vmem:[%s7 + $0x5] sm:$0x1]
    %v8713 = vperm.slane %v8712, 0
    %v8714 = vand.u32 %v8711, 4294901760
    %8715 = vmatpush.msra.mxu0 %v8714
    %v8716 = vand.u32 %v8710, 4294901760
    %8717 = vmatpush.msra.mxu0 %v8716
    %v8718 = vand.u32 %v8709, 4294901760
    %8719 = vmatpush.msra.mxu0 %v8718
    %v8720 = vand.u32 %v8708, 4294901760
    %8721 = vmatpush.msra.mxu0 %v8720
    %v8722 = vand.u32 %v8707, 4294901760
    %8723 = vmatpush.msra.mxu0 %v8722
    %v8724 = vand.u32 %v8706, 4294901760
    %8725 = vmatpush.msra.mxu0 %v8724
    %v8726 = vand.u32 %v8705, 4294901760
    %8727 = vmatpush.msra.mxu0 %v8726
    %v8728 = vand.u32 %v8704, 4294901760
    %8729 = vmatpush.msra.mxu0 %v8728
    %v8730 = vand.u32 %v8703, 4294901760
    %8731 = vmatpush.msra.mxu0 %v8730
    %v8732 = vand.u32 %v8702, 4294901760
    %8733 = vmatpush.msra.mxu0 %v8732
    %v8734 = vand.u32 %v8701, 4294901760
    %8735 = vmatpush.msra.mxu0 %v8734
    %v8736 = vand.u32 %v8700, 4294901760
    %8737 = vmatpush.msra.mxu0 %v8736
    %v8738 = vand.u32 %v8699, 4294901760
    %8739 = vmatpush.msra.mxu0 %v8738
    %v8740 = vand.u32 %v8698, 4294901760
    %8741 = vmatpush.msra.mxu0 %v8740
    %v8742 = vand.u32 %v8697, 4294901760
    %8743 = vmatpush.msra.mxu0 %v8742
    %v8744 = vand.u32 %v8696, 4294901760
    %8745 = vmatpush.msra.mxu0 %v8744
    %v8746 = vand.u32 %v8695, 4294901760
    %v8747 = vsub.f32 %v8695, %v8746
    %v8748 = vand.u32 %v8747, 4294901760
    %v8749 = vsub.f32 %v8747, %v8748
    %v8750 = vand.u32 %v8749, 4294901760
    %8751 = vmatmul.f32.gmra.mxu0 %v8750
    %v8752 = vpop.f32.mrf.mxu0
    %v8753 = vadd.f32 %v8713, %v8752
    %8754 = vdwg.mxu0
    %v8755 = vand.u32 %v8711, 4294901760
    %v8756 = vsub.f32 %v8711, %v8755
    %v8757 = vand.u32 %v8756, 4294901760
    %v8758 = vsub.f32 %v8756, %v8757
    %v8759 = vand.u32 %v8758, 4294901760
    %8760 = vmatpush.msra.mxu0 %v8759
    %v8761 = vand.u32 %v8710, 4294901760
    %v8762 = vsub.f32 %v8710, %v8761
    %v8763 = vand.u32 %v8762, 4294901760
    %v8764 = vsub.f32 %v8762, %v8763
    %v8765 = vand.u32 %v8764, 4294901760
    %8766 = vmatpush.msra.mxu0 %v8765
    %v8767 = vand.u32 %v8709, 4294901760
    %v8768 = vsub.f32 %v8709, %v8767
    %v8769 = vand.u32 %v8768, 4294901760
    %v8770 = vsub.f32 %v8768, %v8769
    %v8771 = vand.u32 %v8770, 4294901760
    %8772 = vmatpush.msra.mxu0 %v8771
    %v8773 = vand.u32 %v8708, 4294901760
    %v8774 = vsub.f32 %v8708, %v8773
    %v8775 = vand.u32 %v8774, 4294901760
    %v8776 = vsub.f32 %v8774, %v8775
    %v8777 = vand.u32 %v8776, 4294901760
    %8778 = vmatpush.msra.mxu0 %v8777
    %v8779 = vand.u32 %v8707, 4294901760
    %v8780 = vsub.f32 %v8707, %v8779
    %v8781 = vand.u32 %v8780, 4294901760
    %v8782 = vsub.f32 %v8780, %v8781
    %v8783 = vand.u32 %v8782, 4294901760
    %8784 = vmatpush.msra.mxu0 %v8783
    %v8785 = vand.u32 %v8706, 4294901760
    %v8786 = vsub.f32 %v8706, %v8785
    %v8787 = vand.u32 %v8786, 4294901760
    %v8788 = vsub.f32 %v8786, %v8787
    %v8789 = vand.u32 %v8788, 4294901760
    %8790 = vmatpush.msra.mxu0 %v8789
    %v8791 = vand.u32 %v8705, 4294901760
    %v8792 = vsub.f32 %v8705, %v8791
    %v8793 = vand.u32 %v8792, 4294901760
    %v8794 = vsub.f32 %v8792, %v8793
    %v8795 = vand.u32 %v8794, 4294901760
    %8796 = vmatpush.msra.mxu0 %v8795
    %v8797 = vand.u32 %v8704, 4294901760
    %v8798 = vsub.f32 %v8704, %v8797
    %v8799 = vand.u32 %v8798, 4294901760
    %v8800 = vsub.f32 %v8798, %v8799
    %v8801 = vand.u32 %v8800, 4294901760
    %8802 = vmatpush.msra.mxu0 %v8801
    %v8803 = vand.u32 %v8703, 4294901760
    %v8804 = vsub.f32 %v8703, %v8803
    %v8805 = vand.u32 %v8804, 4294901760
    %v8806 = vsub.f32 %v8804, %v8805
    %v8807 = vand.u32 %v8806, 4294901760
    %8808 = vmatpush.msra.mxu0 %v8807
    %v8809 = vand.u32 %v8702, 4294901760
    %v8810 = vsub.f32 %v8702, %v8809
    %v8811 = vand.u32 %v8810, 4294901760
    %v8812 = vsub.f32 %v8810, %v8811
    %v8813 = vand.u32 %v8812, 4294901760
    %8814 = vmatpush.msra.mxu0 %v8813
    %v8815 = vand.u32 %v8701, 4294901760
    %v8816 = vsub.f32 %v8701, %v8815
    %v8817 = vand.u32 %v8816, 4294901760
    %v8818 = vsub.f32 %v8816, %v8817
    %v8819 = vand.u32 %v8818, 4294901760
    %8820 = vmatpush.msra.mxu0 %v8819
    %v8821 = vand.u32 %v8700, 4294901760
    %v8822 = vsub.f32 %v8700, %v8821
    %v8823 = vand.u32 %v8822, 4294901760
    %v8824 = vsub.f32 %v8822, %v8823
    %v8825 = vand.u32 %v8824, 4294901760
    %8826 = vmatpush.msra.mxu0 %v8825
    %v8827 = vand.u32 %v8699, 4294901760
    %v8828 = vsub.f32 %v8699, %v8827
    %v8829 = vand.u32 %v8828, 4294901760
    %v8830 = vsub.f32 %v8828, %v8829
    %v8831 = vand.u32 %v8830, 4294901760
    %8832 = vmatpush.msra.mxu0 %v8831
    %v8833 = vand.u32 %v8698, 4294901760
    %v8834 = vsub.f32 %v8698, %v8833
    %v8835 = vand.u32 %v8834, 4294901760
    %v8836 = vsub.f32 %v8834, %v8835
    %v8837 = vand.u32 %v8836, 4294901760
    %8838 = vmatpush.msra.mxu0 %v8837
    %v8839 = vand.u32 %v8697, 4294901760
    %v8840 = vsub.f32 %v8697, %v8839
    %v8841 = vand.u32 %v8840, 4294901760
    %v8842 = vsub.f32 %v8840, %v8841
    %v8843 = vand.u32 %v8842, 4294901760
    %8844 = vmatpush.msra.mxu0 %v8843
    %v8845 = vand.u32 %v8696, 4294901760
    %v8846 = vsub.f32 %v8696, %v8845
    %v8847 = vand.u32 %v8846, 4294901760
    %v8848 = vsub.f32 %v8846, %v8847
    %v8849 = vand.u32 %v8848, 4294901760
    %8850 = vmatpush.msra.mxu0 %v8849
    %v8851 = vand.u32 %v8695, 4294901760
    %8852 = vmatmul.f32.gmra.mxu0 %v8851
    %v8853 = vpop.f32.mrf.mxu0
    %v8854 = vadd.f32 %v8753, %v8853
    %8855 = vdwg.mxu0
    %v8856 = vand.u32 %v8711, 4294901760
    %v8857 = vsub.f32 %v8711, %v8856
    %8858 = vmatpush.msra.mxu0 %v8857
    %v8859 = vand.u32 %v8710, 4294901760
    %v8860 = vsub.f32 %v8710, %v8859
    %8861 = vmatpush.msra.mxu0 %v8860
    %v8862 = vand.u32 %v8709, 4294901760
    %v8863 = vsub.f32 %v8709, %v8862
    %8864 = vmatpush.msra.mxu0 %v8863
    %v8865 = vand.u32 %v8708, 4294901760
    %v8866 = vsub.f32 %v8708, %v8865
    %8867 = vmatpush.msra.mxu0 %v8866
    %v8868 = vand.u32 %v8707, 4294901760
    %v8869 = vsub.f32 %v8707, %v8868
    %8870 = vmatpush.msra.mxu0 %v8869
    %v8871 = vand.u32 %v8706, 4294901760
    %v8872 = vsub.f32 %v8706, %v8871
    %8873 = vmatpush.msra.mxu0 %v8872
    %v8874 = vand.u32 %v8705, 4294901760
    %v8875 = vsub.f32 %v8705, %v8874
    %8876 = vmatpush.msra.mxu0 %v8875
    %v8877 = vand.u32 %v8704, 4294901760
    %v8878 = vsub.f32 %v8704, %v8877
    %8879 = vmatpush.msra.mxu0 %v8878
    %v8880 = vand.u32 %v8703, 4294901760
    %v8881 = vsub.f32 %v8703, %v8880
    %8882 = vmatpush.msra.mxu0 %v8881
    %v8883 = vand.u32 %v8702, 4294901760
    %v8884 = vsub.f32 %v8702, %v8883
    %8885 = vmatpush.msra.mxu0 %v8884
    %v8886 = vand.u32 %v8701, 4294901760
    %v8887 = vsub.f32 %v8701, %v8886
    %8888 = vmatpush.msra.mxu0 %v8887
    %v8889 = vand.u32 %v8700, 4294901760
    %v8890 = vsub.f32 %v8700, %v8889
    %8891 = vmatpush.msra.mxu0 %v8890
    %v8892 = vand.u32 %v8699, 4294901760
    %v8893 = vsub.f32 %v8699, %v8892
    %8894 = vmatpush.msra.mxu0 %v8893
    %v8895 = vand.u32 %v8698, 4294901760
    %v8896 = vsub.f32 %v8698, %v8895
    %8897 = vmatpush.msra.mxu0 %v8896
    %v8898 = vand.u32 %v8697, 4294901760
    %v8899 = vsub.f32 %v8697, %v8898
    %8900 = vmatpush.msra.mxu0 %v8899
    %v8901 = vand.u32 %v8696, 4294901760
    %v8902 = vsub.f32 %v8696, %v8901
    %8903 = vmatpush.msra.mxu0 %v8902
    %v8904 = vand.u32 %v8695, 4294901760
    %v8905 = vsub.f32 %v8695, %v8904
    %8906 = vmatmul.f32.gmra.mxu0 %v8905
    %v8907 = vpop.f32.mrf.mxu0
    %v8908 = vadd.f32 %v8854, %v8907
    %8909 = vdwg.mxu0
    %v8910 = vand.u32 %v8711, 4294901760
    %8911 = vmatpush.msra.mxu0 %v8910
    %v8912 = vand.u32 %v8710, 4294901760
    %8913 = vmatpush.msra.mxu0 %v8912
    %v8914 = vand.u32 %v8709, 4294901760
    %8915 = vmatpush.msra.mxu0 %v8914
    %v8916 = vand.u32 %v8708, 4294901760
    %8917 = vmatpush.msra.mxu0 %v8916
    %v8918 = vand.u32 %v8707, 4294901760
    %8919 = vmatpush.msra.mxu0 %v8918
    %v8920 = vand.u32 %v8706, 4294901760
    %8921 = vmatpush.msra.mxu0 %v8920
    %v8922 = vand.u32 %v8705, 4294901760
    %8923 = vmatpush.msra.mxu0 %v8922
    %v8924 = vand.u32 %v8704, 4294901760
    %8925 = vmatpush.msra.mxu0 %v8924
    %v8926 = vand.u32 %v8703, 4294901760
    %8927 = vmatpush.msra.mxu0 %v8926
    %v8928 = vand.u32 %v8702, 4294901760
    %8929 = vmatpush.msra.mxu0 %v8928
    %v8930 = vand.u32 %v8701, 4294901760
    %8931 = vmatpush.msra.mxu0 %v8930
    %v8932 = vand.u32 %v8700, 4294901760
    %8933 = vmatpush.msra.mxu0 %v8932
    %v8934 = vand.u32 %v8699, 4294901760
    %8935 = vmatpush.msra.mxu0 %v8934
    %v8936 = vand.u32 %v8698, 4294901760
    %8937 = vmatpush.msra.mxu0 %v8936
    %v8938 = vand.u32 %v8697, 4294901760
    %8939 = vmatpush.msra.mxu0 %v8938
    %v8940 = vand.u32 %v8696, 4294901760
    %8941 = vmatpush.msra.mxu0 %v8940
    %v8942 = vand.u32 %v8695, 4294901760
    %v8943 = vsub.f32 %v8695, %v8942
    %v8944 = vand.u32 %v8943, 4294901760
    %8945 = vmatmul.f32.gmra.mxu0 %v8944
    %v8946 = vpop.f32.mrf.mxu0
    %v8947 = vadd.f32 %v8908, %v8946
    %8948 = vdwg.mxu0
    %v8949 = vand.u32 %v8711, 4294901760
    %v8950 = vsub.f32 %v8711, %v8949
    %v8951 = vand.u32 %v8950, 4294901760
    %8952 = vmatpush.msra.mxu0 %v8951
    %v8953 = vand.u32 %v8710, 4294901760
    %v8954 = vsub.f32 %v8710, %v8953
    %v8955 = vand.u32 %v8954, 4294901760
    %8956 = vmatpush.msra.mxu0 %v8955
    %v8957 = vand.u32 %v8709, 4294901760
    %v8958 = vsub.f32 %v8709, %v8957
    %v8959 = vand.u32 %v8958, 4294901760
    %8960 = vmatpush.msra.mxu0 %v8959
    %v8961 = vand.u32 %v8708, 4294901760
    %v8962 = vsub.f32 %v8708, %v8961
    %v8963 = vand.u32 %v8962, 4294901760
    %8964 = vmatpush.msra.mxu0 %v8963
    %v8965 = vand.u32 %v8707, 4294901760
    %v8966 = vsub.f32 %v8707, %v8965
    %v8967 = vand.u32 %v8966, 4294901760
    %8968 = vmatpush.msra.mxu0 %v8967
    %v8969 = vand.u32 %v8706, 4294901760
    %v8970 = vsub.f32 %v8706, %v8969
    %v8971 = vand.u32 %v8970, 4294901760
    %8972 = vmatpush.msra.mxu0 %v8971
    %v8973 = vand.u32 %v8705, 4294901760
    %v8974 = vsub.f32 %v8705, %v8973
    %v8975 = vand.u32 %v8974, 4294901760
    %8976 = vmatpush.msra.mxu0 %v8975
    %v8977 = vand.u32 %v8704, 4294901760
    %v8978 = vsub.f32 %v8704, %v8977
    %v8979 = vand.u32 %v8978, 4294901760
    %8980 = vmatpush.msra.mxu0 %v8979
    %v8981 = vand.u32 %v8703, 4294901760
    %v8982 = vsub.f32 %v8703, %v8981
    %v8983 = vand.u32 %v8982, 4294901760
    %8984 = vmatpush.msra.mxu0 %v8983
    %v8985 = vand.u32 %v8702, 4294901760
    %v8986 = vsub.f32 %v8702, %v8985
    %v8987 = vand.u32 %v8986, 4294901760
    %8988 = vmatpush.msra.mxu0 %v8987
    %v8989 = vand.u32 %v8701, 4294901760
    %v8990 = vsub.f32 %v8701, %v8989
    %v8991 = vand.u32 %v8990, 4294901760
    %8992 = vmatpush.msra.mxu0 %v8991
    %v8993 = vand.u32 %v8700, 4294901760
    %v8994 = vsub.f32 %v8700, %v8993
    %v8995 = vand.u32 %v8994, 4294901760
    %8996 = vmatpush.msra.mxu0 %v8995
    %v8997 = vand.u32 %v8699, 4294901760
    %v8998 = vsub.f32 %v8699, %v8997
    %v8999 = vand.u32 %v8998, 4294901760
    %9000 = vmatpush.msra.mxu0 %v8999
    %v9001 = vand.u32 %v8698, 4294901760
    %v9002 = vsub.f32 %v8698, %v9001
    %v9003 = vand.u32 %v9002, 4294901760
    %9004 = vmatpush.msra.mxu0 %v9003
    %v9005 = vand.u32 %v8697, 4294901760
    %v9006 = vsub.f32 %v8697, %v9005
    %v9007 = vand.u32 %v9006, 4294901760
    %9008 = vmatpush.msra.mxu0 %v9007
    %v9009 = vand.u32 %v8696, 4294901760
    %v9010 = vsub.f32 %v8696, %v9009
    %v9011 = vand.u32 %v9010, 4294901760
    %9012 = vmatpush.msra.mxu0 %v9011
    %v9013 = vand.u32 %v8695, 4294901760
    %9014 = vmatmul.f32.gmra.mxu0 %v9013
    %v9015 = vpop.f32.mrf.mxu0
    %v9016 = vadd.f32 %v8947, %v9015
    %9017 = vdwg.mxu0
    %v9018 = vand.u32 %v8711, 4294901760
    %9019 = vmatpush.msra.mxu0 %v9018
    %v9020 = vand.u32 %v8710, 4294901760
    %9021 = vmatpush.msra.mxu0 %v9020
    %v9022 = vand.u32 %v8709, 4294901760
    %9023 = vmatpush.msra.mxu0 %v9022
    %v9024 = vand.u32 %v8708, 4294901760
    %9025 = vmatpush.msra.mxu0 %v9024
    %v9026 = vand.u32 %v8707, 4294901760
    %9027 = vmatpush.msra.mxu0 %v9026
    %v9028 = vand.u32 %v8706, 4294901760
    %9029 = vmatpush.msra.mxu0 %v9028
    %v9030 = vand.u32 %v8705, 4294901760
    %9031 = vmatpush.msra.mxu0 %v9030
    %v9032 = vand.u32 %v8704, 4294901760
    %9033 = vmatpush.msra.mxu0 %v9032
    %v9034 = vand.u32 %v8703, 4294901760
    %9035 = vmatpush.msra.mxu0 %v9034
    %v9036 = vand.u32 %v8702, 4294901760
    %9037 = vmatpush.msra.mxu0 %v9036
    %v9038 = vand.u32 %v8701, 4294901760
    %9039 = vmatpush.msra.mxu0 %v9038
    %v9040 = vand.u32 %v8700, 4294901760
    %9041 = vmatpush.msra.mxu0 %v9040
    %v9042 = vand.u32 %v8699, 4294901760
    %9043 = vmatpush.msra.mxu0 %v9042
    %v9044 = vand.u32 %v8698, 4294901760
    %9045 = vmatpush.msra.mxu0 %v9044
    %v9046 = vand.u32 %v8697, 4294901760
    %9047 = vmatpush.msra.mxu0 %v9046
    %v9048 = vand.u32 %v8696, 4294901760
    %9049 = vmatpush.msra.mxu0 %v9048
    %v9050 = vand.u32 %v8695, 4294901760
    %9051 = vmatmul.f32.gmra.mxu0 %v9050
    %v9052 = vpop.f32.mrf.mxu0
    %v9053 = vadd.f32 %v9016, %v9052
    %9054 = vdwg.mxu0
    %v9055 = vld [vmem:[%s5 + $0x80] sm:$0xff]
    %v9056 = vld [vmem:[%s5 + $0x88] sm:$0xff]
    %v9057 = vld [vmem:[%s5 + $0x90] sm:$0xff]
    %v9058 = vld [vmem:[%s5 + $0x98] sm:$0xff]
    %v9059 = vld [vmem:[%s5 + $0xa0] sm:$0xff]
    %v9060 = vld [vmem:[%s5 + $0xa8] sm:$0xff]
    %v9061 = vld [vmem:[%s5 + $0xb0] sm:$0xff]
    %v9062 = vld [vmem:[%s5 + $0xb8] sm:$0xff]
    %v9063 = vld [vmem:[%s7 + $0x6] sm:$0x1]
    %v9064 = vperm.slane %v9063, 0
    %v9066 = vsel %vm88, %v9053, 0
    %9068 = vmatpush.msra.mxu0 0.0
    %9069 = vmatpush.msra.mxu0 0.0
    %9070 = vmatpush.msra.mxu0 0.0
    %9071 = vmatpush.msra.mxu0 0.0
    %9072 = vmatpush.msra.mxu0 0.0
    %9073 = vmatpush.msra.mxu0 0.0
    %9074 = vmatpush.msra.mxu0 0.0
    %9075 = vmatpush.msra.mxu0 0.0
    %v9076 = vand.u32 %v9062, 4294901760
    %9077 = vmatpush.msra.mxu0 %v9076
    %v9078 = vand.u32 %v9061, 4294901760
    %9079 = vmatpush.msra.mxu0 %v9078
    %v9080 = vand.u32 %v9060, 4294901760
    %9081 = vmatpush.msra.mxu0 %v9080
    %v9082 = vand.u32 %v9059, 4294901760
    %9083 = vmatpush.msra.mxu0 %v9082
    %v9084 = vand.u32 %v9058, 4294901760
    %9085 = vmatpush.msra.mxu0 %v9084
    %v9086 = vand.u32 %v9057, 4294901760
    %9087 = vmatpush.msra.mxu0 %v9086
    %v9088 = vand.u32 %v9056, 4294901760
    %9089 = vmatpush.msra.mxu0 %v9088
    %v9090 = vand.u32 %v9055, 4294901760
    %9091 = vmatpush.msra.mxu0 %v9090
    %v9092 = vand.u32 %v9066, 4294901760
    %v9093 = vsub.f32 %v9066, %v9092
    %v9094 = vand.u32 %v9093, 4294901760
    %v9095 = vsub.f32 %v9093, %v9094
    %v9096 = vand.u32 %v9095, 4294901760
    %9097 = vmatmul.f32.gmra.mxu0 %v9096
    %v9098 = vpop.f32.mrf.mxu0
    %v9099 = vadd.f32 %v9064, %v9098
    %9100 = vdwg.mxu0
    %9101 = vmatpush.msra.mxu0 0.0
    %9102 = vmatpush.msra.mxu0 0.0
    %9103 = vmatpush.msra.mxu0 0.0
    %9104 = vmatpush.msra.mxu0 0.0
    %9105 = vmatpush.msra.mxu0 0.0
    %9106 = vmatpush.msra.mxu0 0.0
    %9107 = vmatpush.msra.mxu0 0.0
    %9108 = vmatpush.msra.mxu0 0.0
    %v9109 = vand.u32 %v9062, 4294901760
    %v9110 = vsub.f32 %v9062, %v9109
    %v9111 = vand.u32 %v9110, 4294901760
    %v9112 = vsub.f32 %v9110, %v9111
    %v9113 = vand.u32 %v9112, 4294901760
    %9114 = vmatpush.msra.mxu0 %v9113
    %v9115 = vand.u32 %v9061, 4294901760
    %v9116 = vsub.f32 %v9061, %v9115
    %v9117 = vand.u32 %v9116, 4294901760
    %v9118 = vsub.f32 %v9116, %v9117
    %v9119 = vand.u32 %v9118, 4294901760
    %9120 = vmatpush.msra.mxu0 %v9119
    %v9121 = vand.u32 %v9060, 4294901760
    %v9122 = vsub.f32 %v9060, %v9121
    %v9123 = vand.u32 %v9122, 4294901760
    %v9124 = vsub.f32 %v9122, %v9123
    %v9125 = vand.u32 %v9124, 4294901760
    %9126 = vmatpush.msra.mxu0 %v9125
    %v9127 = vand.u32 %v9059, 4294901760
    %v9128 = vsub.f32 %v9059, %v9127
    %v9129 = vand.u32 %v9128, 4294901760
    %v9130 = vsub.f32 %v9128, %v9129
    %v9131 = vand.u32 %v9130, 4294901760
    %9132 = vmatpush.msra.mxu0 %v9131
    %v9133 = vand.u32 %v9058, 4294901760
    %v9134 = vsub.f32 %v9058, %v9133
    %v9135 = vand.u32 %v9134, 4294901760
    %v9136 = vsub.f32 %v9134, %v9135
    %v9137 = vand.u32 %v9136, 4294901760
    %9138 = vmatpush.msra.mxu0 %v9137
    %v9139 = vand.u32 %v9057, 4294901760
    %v9140 = vsub.f32 %v9057, %v9139
    %v9141 = vand.u32 %v9140, 4294901760
    %v9142 = vsub.f32 %v9140, %v9141
    %v9143 = vand.u32 %v9142, 4294901760
    %9144 = vmatpush.msra.mxu0 %v9143
    %v9145 = vand.u32 %v9056, 4294901760
    %v9146 = vsub.f32 %v9056, %v9145
    %v9147 = vand.u32 %v9146, 4294901760
    %v9148 = vsub.f32 %v9146, %v9147
    %v9149 = vand.u32 %v9148, 4294901760
    %9150 = vmatpush.msra.mxu0 %v9149
    %v9151 = vand.u32 %v9055, 4294901760
    %v9152 = vsub.f32 %v9055, %v9151
    %v9153 = vand.u32 %v9152, 4294901760
    %v9154 = vsub.f32 %v9152, %v9153
    %v9155 = vand.u32 %v9154, 4294901760
    %9156 = vmatpush.msra.mxu0 %v9155
    %v9157 = vand.u32 %v9066, 4294901760
    %9158 = vmatmul.f32.gmra.mxu0 %v9157
    %v9159 = vpop.f32.mrf.mxu0
    %v9160 = vadd.f32 %v9099, %v9159
    %9161 = vdwg.mxu0
    %9162 = vmatpush.msra.mxu0 0.0
    %9163 = vmatpush.msra.mxu0 0.0
    %9164 = vmatpush.msra.mxu0 0.0
    %9165 = vmatpush.msra.mxu0 0.0
    %9166 = vmatpush.msra.mxu0 0.0
    %9167 = vmatpush.msra.mxu0 0.0
    %9168 = vmatpush.msra.mxu0 0.0
    %9169 = vmatpush.msra.mxu0 0.0
    %v9170 = vand.u32 %v9062, 4294901760
    %v9171 = vsub.f32 %v9062, %v9170
    %9172 = vmatpush.msra.mxu0 %v9171
    %v9173 = vand.u32 %v9061, 4294901760
    %v9174 = vsub.f32 %v9061, %v9173
    %9175 = vmatpush.msra.mxu0 %v9174
    %v9176 = vand.u32 %v9060, 4294901760
    %v9177 = vsub.f32 %v9060, %v9176
    %9178 = vmatpush.msra.mxu0 %v9177
    %v9179 = vand.u32 %v9059, 4294901760
    %v9180 = vsub.f32 %v9059, %v9179
    %9181 = vmatpush.msra.mxu0 %v9180
    %v9182 = vand.u32 %v9058, 4294901760
    %v9183 = vsub.f32 %v9058, %v9182
    %9184 = vmatpush.msra.mxu0 %v9183
    %v9185 = vand.u32 %v9057, 4294901760
    %v9186 = vsub.f32 %v9057, %v9185
    %9187 = vmatpush.msra.mxu0 %v9186
    %v9188 = vand.u32 %v9056, 4294901760
    %v9189 = vsub.f32 %v9056, %v9188
    %9190 = vmatpush.msra.mxu0 %v9189
    %v9191 = vand.u32 %v9055, 4294901760
    %v9192 = vsub.f32 %v9055, %v9191
    %9193 = vmatpush.msra.mxu0 %v9192
    %v9194 = vand.u32 %v9066, 4294901760
    %v9195 = vsub.f32 %v9066, %v9194
    %9196 = vmatmul.f32.gmra.mxu0 %v9195
    %v9197 = vpop.f32.mrf.mxu0
    %v9198 = vadd.f32 %v9160, %v9197
    %9199 = vdwg.mxu0
    %9200 = vmatpush.msra.mxu0 0.0
    %9201 = vmatpush.msra.mxu0 0.0
    %9202 = vmatpush.msra.mxu0 0.0
    %9203 = vmatpush.msra.mxu0 0.0
    %9204 = vmatpush.msra.mxu0 0.0
    %9205 = vmatpush.msra.mxu0 0.0
    %9206 = vmatpush.msra.mxu0 0.0
    %9207 = vmatpush.msra.mxu0 0.0
    %v9208 = vand.u32 %v9062, 4294901760
    %9209 = vmatpush.msra.mxu0 %v9208
    %v9210 = vand.u32 %v9061, 4294901760
    %9211 = vmatpush.msra.mxu0 %v9210
    %v9212 = vand.u32 %v9060, 4294901760
    %9213 = vmatpush.msra.mxu0 %v9212
    %v9214 = vand.u32 %v9059, 4294901760
    %9215 = vmatpush.msra.mxu0 %v9214
    %v9216 = vand.u32 %v9058, 4294901760
    %9217 = vmatpush.msra.mxu0 %v9216
    %v9218 = vand.u32 %v9057, 4294901760
    %9219 = vmatpush.msra.mxu0 %v9218
    %v9220 = vand.u32 %v9056, 4294901760
    %9221 = vmatpush.msra.mxu0 %v9220
    %v9222 = vand.u32 %v9055, 4294901760
    %9223 = vmatpush.msra.mxu0 %v9222
    %v9224 = vand.u32 %v9066, 4294901760
    %v9225 = vsub.f32 %v9066, %v9224
    %v9226 = vand.u32 %v9225, 4294901760
    %9227 = vmatmul.f32.gmra.mxu0 %v9226
    %v9228 = vpop.f32.mrf.mxu0
    %v9229 = vadd.f32 %v9198, %v9228
    %9230 = vdwg.mxu0
    %9231 = vmatpush.msra.mxu0 0.0
    %9232 = vmatpush.msra.mxu0 0.0
    %9233 = vmatpush.msra.mxu0 0.0
    %9234 = vmatpush.msra.mxu0 0.0
    %9235 = vmatpush.msra.mxu0 0.0
    %9236 = vmatpush.msra.mxu0 0.0
    %9237 = vmatpush.msra.mxu0 0.0
    %9238 = vmatpush.msra.mxu0 0.0
    %v9239 = vand.u32 %v9062, 4294901760
    %v9240 = vsub.f32 %v9062, %v9239
    %v9241 = vand.u32 %v9240, 4294901760
    %9242 = vmatpush.msra.mxu0 %v9241
    %v9243 = vand.u32 %v9061, 4294901760
    %v9244 = vsub.f32 %v9061, %v9243
    %v9245 = vand.u32 %v9244, 4294901760
    %9246 = vmatpush.msra.mxu0 %v9245
    %v9247 = vand.u32 %v9060, 4294901760
    %v9248 = vsub.f32 %v9060, %v9247
    %v9249 = vand.u32 %v9248, 4294901760
    %9250 = vmatpush.msra.mxu0 %v9249
    %v9251 = vand.u32 %v9059, 4294901760
    %v9252 = vsub.f32 %v9059, %v9251
    %v9253 = vand.u32 %v9252, 4294901760
    %9254 = vmatpush.msra.mxu0 %v9253
    %v9255 = vand.u32 %v9058, 4294901760
    %v9256 = vsub.f32 %v9058, %v9255
    %v9257 = vand.u32 %v9256, 4294901760
    %9258 = vmatpush.msra.mxu0 %v9257
    %v9259 = vand.u32 %v9057, 4294901760
    %v9260 = vsub.f32 %v9057, %v9259
    %v9261 = vand.u32 %v9260, 4294901760
    %9262 = vmatpush.msra.mxu0 %v9261
    %v9263 = vand.u32 %v9056, 4294901760
    %v9264 = vsub.f32 %v9056, %v9263
    %v9265 = vand.u32 %v9264, 4294901760
    %9266 = vmatpush.msra.mxu0 %v9265
    %v9267 = vand.u32 %v9055, 4294901760
    %v9268 = vsub.f32 %v9055, %v9267
    %v9269 = vand.u32 %v9268, 4294901760
    %9270 = vmatpush.msra.mxu0 %v9269
    %v9271 = vand.u32 %v9066, 4294901760
    %9272 = vmatmul.f32.gmra.mxu0 %v9271
    %v9273 = vpop.f32.mrf.mxu0
    %v9274 = vadd.f32 %v9229, %v9273
    %9275 = vdwg.mxu0
    %9276 = vmatpush.msra.mxu0 0.0
    %9277 = vmatpush.msra.mxu0 0.0
    %9278 = vmatpush.msra.mxu0 0.0
    %9279 = vmatpush.msra.mxu0 0.0
    %9280 = vmatpush.msra.mxu0 0.0
    %9281 = vmatpush.msra.mxu0 0.0
    %9282 = vmatpush.msra.mxu0 0.0
    %9283 = vmatpush.msra.mxu0 0.0
    %v9284 = vand.u32 %v9062, 4294901760
    %9285 = vmatpush.msra.mxu0 %v9284
    %v9286 = vand.u32 %v9061, 4294901760
    %9287 = vmatpush.msra.mxu0 %v9286
    %v9288 = vand.u32 %v9060, 4294901760
    %9289 = vmatpush.msra.mxu0 %v9288
    %v9290 = vand.u32 %v9059, 4294901760
    %9291 = vmatpush.msra.mxu0 %v9290
    %v9292 = vand.u32 %v9058, 4294901760
    %9293 = vmatpush.msra.mxu0 %v9292
    %v9294 = vand.u32 %v9057, 4294901760
    %9295 = vmatpush.msra.mxu0 %v9294
    %v9296 = vand.u32 %v9056, 4294901760
    %9297 = vmatpush.msra.mxu0 %v9296
    %v9298 = vand.u32 %v9055, 4294901760
    %9299 = vmatpush.msra.mxu0 %v9298
    %v9300 = vand.u32 %v9066, 4294901760
    %9301 = vmatmul.f32.gmra.mxu0 %v9300
    %v9302 = vpop.f32.mrf.mxu0
    %v9303 = vadd.f32 %v9274, %v9302
    %9304 = vdwg.mxu0
    %v9305 = vmax.f32 %v9303, 0.0
    %v9306 = vld [vmem:[%s5 + $0xc0] sm:$0xff]
    %v9307 = vld [vmem:[%s5 + $0xc8] sm:$0xff]
    %v9308 = vld [vmem:[%s5 + $0xd0] sm:$0xff]
    %v9309 = vld [vmem:[%s5 + $0xd8] sm:$0xff]
    %v9310 = vld [vmem:[%s5 + $0xe0] sm:$0xff]
    %v9311 = vld [vmem:[%s5 + $0xe8] sm:$0xff]
    %v9312 = vld [vmem:[%s5 + $0xf0] sm:$0xff]
    %v9313 = vld [vmem:[%s5 + $0xf8] sm:$0xff]
    %v9314 = vld [vmem:[%s7 + $0x7] sm:$0x1]
    %v9315 = vperm.slane %v9314, 0
    %v9317 = vsel %vm88, %v9305, 0
    %9319 = vmatpush.msra.mxu0 0.0
    %9320 = vmatpush.msra.mxu0 0.0
    %9321 = vmatpush.msra.mxu0 0.0
    %9322 = vmatpush.msra.mxu0 0.0
    %9323 = vmatpush.msra.mxu0 0.0
    %9324 = vmatpush.msra.mxu0 0.0
    %9325 = vmatpush.msra.mxu0 0.0
    %9326 = vmatpush.msra.mxu0 0.0
    %v9327 = vand.u32 %v9313, 4294901760
    %9328 = vmatpush.msra.mxu0 %v9327
    %v9329 = vand.u32 %v9312, 4294901760
    %9330 = vmatpush.msra.mxu0 %v9329
    %v9331 = vand.u32 %v9311, 4294901760
    %9332 = vmatpush.msra.mxu0 %v9331
    %v9333 = vand.u32 %v9310, 4294901760
    %9334 = vmatpush.msra.mxu0 %v9333
    %v9335 = vand.u32 %v9309, 4294901760
    %9336 = vmatpush.msra.mxu0 %v9335
    %v9337 = vand.u32 %v9308, 4294901760
    %9338 = vmatpush.msra.mxu0 %v9337
    %v9339 = vand.u32 %v9307, 4294901760
    %9340 = vmatpush.msra.mxu0 %v9339
    %v9341 = vand.u32 %v9306, 4294901760
    %9342 = vmatpush.msra.mxu0 %v9341
    %v9343 = vand.u32 %v9317, 4294901760
    %v9344 = vsub.f32 %v9317, %v9343
    %v9345 = vand.u32 %v9344, 4294901760
    %v9346 = vsub.f32 %v9344, %v9345
    %v9347 = vand.u32 %v9346, 4294901760
    %9348 = vmatmul.f32.gmra.mxu0 %v9347
    %v9349 = vpop.f32.mrf.mxu0
    %v9350 = vadd.f32 %v9315, %v9349
    %9351 = vdwg.mxu0
    %9352 = vmatpush.msra.mxu0 0.0
    %9353 = vmatpush.msra.mxu0 0.0
    %9354 = vmatpush.msra.mxu0 0.0
    %9355 = vmatpush.msra.mxu0 0.0
    %9356 = vmatpush.msra.mxu0 0.0
    %9357 = vmatpush.msra.mxu0 0.0
    %9358 = vmatpush.msra.mxu0 0.0
    %9359 = vmatpush.msra.mxu0 0.0
    %v9360 = vand.u32 %v9313, 4294901760
    %v9361 = vsub.f32 %v9313, %v9360
    %v9362 = vand.u32 %v9361, 4294901760
    %v9363 = vsub.f32 %v9361, %v9362
    %v9364 = vand.u32 %v9363, 4294901760
    %9365 = vmatpush.msra.mxu0 %v9364
    %v9366 = vand.u32 %v9312, 4294901760
    %v9367 = vsub.f32 %v9312, %v9366
    %v9368 = vand.u32 %v9367, 4294901760
    %v9369 = vsub.f32 %v9367, %v9368
    %v9370 = vand.u32 %v9369, 4294901760
    %9371 = vmatpush.msra.mxu0 %v9370
    %v9372 = vand.u32 %v9311, 4294901760
    %v9373 = vsub.f32 %v9311, %v9372
    %v9374 = vand.u32 %v9373, 4294901760
    %v9375 = vsub.f32 %v9373, %v9374
    %v9376 = vand.u32 %v9375, 4294901760
    %9377 = vmatpush.msra.mxu0 %v9376
    %v9378 = vand.u32 %v9310, 4294901760
    %v9379 = vsub.f32 %v9310, %v9378
    %v9380 = vand.u32 %v9379, 4294901760
    %v9381 = vsub.f32 %v9379, %v9380
    %v9382 = vand.u32 %v9381, 4294901760
    %9383 = vmatpush.msra.mxu0 %v9382
    %v9384 = vand.u32 %v9309, 4294901760
    %v9385 = vsub.f32 %v9309, %v9384
    %v9386 = vand.u32 %v9385, 4294901760
    %v9387 = vsub.f32 %v9385, %v9386
    %v9388 = vand.u32 %v9387, 4294901760
    %9389 = vmatpush.msra.mxu0 %v9388
    %v9390 = vand.u32 %v9308, 4294901760
    %v9391 = vsub.f32 %v9308, %v9390
    %v9392 = vand.u32 %v9391, 4294901760
    %v9393 = vsub.f32 %v9391, %v9392
    %v9394 = vand.u32 %v9393, 4294901760
    %9395 = vmatpush.msra.mxu0 %v9394
    %v9396 = vand.u32 %v9307, 4294901760
    %v9397 = vsub.f32 %v9307, %v9396
    %v9398 = vand.u32 %v9397, 4294901760
    %v9399 = vsub.f32 %v9397, %v9398
    %v9400 = vand.u32 %v9399, 4294901760
    %9401 = vmatpush.msra.mxu0 %v9400
    %v9402 = vand.u32 %v9306, 4294901760
    %v9403 = vsub.f32 %v9306, %v9402
    %v9404 = vand.u32 %v9403, 4294901760
    %v9405 = vsub.f32 %v9403, %v9404
    %v9406 = vand.u32 %v9405, 4294901760
    %9407 = vmatpush.msra.mxu0 %v9406
    %v9408 = vand.u32 %v9317, 4294901760
    %9409 = vmatmul.f32.gmra.mxu0 %v9408
    %v9410 = vpop.f32.mrf.mxu0
    %v9411 = vadd.f32 %v9350, %v9410
    %9412 = vdwg.mxu0
    %9413 = vmatpush.msra.mxu0 0.0
    %9414 = vmatpush.msra.mxu0 0.0
    %9415 = vmatpush.msra.mxu0 0.0
    %9416 = vmatpush.msra.mxu0 0.0
    %9417 = vmatpush.msra.mxu0 0.0
    %9418 = vmatpush.msra.mxu0 0.0
    %9419 = vmatpush.msra.mxu0 0.0
    %9420 = vmatpush.msra.mxu0 0.0
    %v9421 = vand.u32 %v9313, 4294901760
    %v9422 = vsub.f32 %v9313, %v9421
    %9423 = vmatpush.msra.mxu0 %v9422
    %v9424 = vand.u32 %v9312, 4294901760
    %v9425 = vsub.f32 %v9312, %v9424
    %9426 = vmatpush.msra.mxu0 %v9425
    %v9427 = vand.u32 %v9311, 4294901760
    %v9428 = vsub.f32 %v9311, %v9427
    %9429 = vmatpush.msra.mxu0 %v9428
    %v9430 = vand.u32 %v9310, 4294901760
    %v9431 = vsub.f32 %v9310, %v9430
    %9432 = vmatpush.msra.mxu0 %v9431
    %v9433 = vand.u32 %v9309, 4294901760
    %v9434 = vsub.f32 %v9309, %v9433
    %9435 = vmatpush.msra.mxu0 %v9434
    %v9436 = vand.u32 %v9308, 4294901760
    %v9437 = vsub.f32 %v9308, %v9436
    %9438 = vmatpush.msra.mxu0 %v9437
    %v9439 = vand.u32 %v9307, 4294901760
    %v9440 = vsub.f32 %v9307, %v9439
    %9441 = vmatpush.msra.mxu0 %v9440
    %v9442 = vand.u32 %v9306, 4294901760
    %v9443 = vsub.f32 %v9306, %v9442
    %9444 = vmatpush.msra.mxu0 %v9443
    %v9445 = vand.u32 %v9317, 4294901760
    %v9446 = vsub.f32 %v9317, %v9445
    %9447 = vmatmul.f32.gmra.mxu0 %v9446
    %v9448 = vpop.f32.mrf.mxu0
    %v9449 = vadd.f32 %v9411, %v9448
    %9450 = vdwg.mxu0
    %9451 = vmatpush.msra.mxu0 0.0
    %9452 = vmatpush.msra.mxu0 0.0
    %9453 = vmatpush.msra.mxu0 0.0
    %9454 = vmatpush.msra.mxu0 0.0
    %9455 = vmatpush.msra.mxu0 0.0
    %9456 = vmatpush.msra.mxu0 0.0
    %9457 = vmatpush.msra.mxu0 0.0
    %9458 = vmatpush.msra.mxu0 0.0
    %v9459 = vand.u32 %v9313, 4294901760
    %9460 = vmatpush.msra.mxu0 %v9459
    %v9461 = vand.u32 %v9312, 4294901760
    %9462 = vmatpush.msra.mxu0 %v9461
    %v9463 = vand.u32 %v9311, 4294901760
    %9464 = vmatpush.msra.mxu0 %v9463
    %v9465 = vand.u32 %v9310, 4294901760
    %9466 = vmatpush.msra.mxu0 %v9465
    %v9467 = vand.u32 %v9309, 4294901760
    %9468 = vmatpush.msra.mxu0 %v9467
    %v9469 = vand.u32 %v9308, 4294901760
    %9470 = vmatpush.msra.mxu0 %v9469
    %v9471 = vand.u32 %v9307, 4294901760
    %9472 = vmatpush.msra.mxu0 %v9471
    %v9473 = vand.u32 %v9306, 4294901760
    %9474 = vmatpush.msra.mxu0 %v9473
    %v9475 = vand.u32 %v9317, 4294901760
    %v9476 = vsub.f32 %v9317, %v9475
    %v9477 = vand.u32 %v9476, 4294901760
    %9478 = vmatmul.f32.gmra.mxu0 %v9477
    %v9479 = vpop.f32.mrf.mxu0
    %v9480 = vadd.f32 %v9449, %v9479
    %9481 = vdwg.mxu0
    %9482 = vmatpush.msra.mxu0 0.0
    %9483 = vmatpush.msra.mxu0 0.0
    %9484 = vmatpush.msra.mxu0 0.0
    %9485 = vmatpush.msra.mxu0 0.0
    %9486 = vmatpush.msra.mxu0 0.0
    %9487 = vmatpush.msra.mxu0 0.0
    %9488 = vmatpush.msra.mxu0 0.0
    %9489 = vmatpush.msra.mxu0 0.0
    %v9490 = vand.u32 %v9313, 4294901760
    %v9491 = vsub.f32 %v9313, %v9490
    %v9492 = vand.u32 %v9491, 4294901760
    %9493 = vmatpush.msra.mxu0 %v9492
    %v9494 = vand.u32 %v9312, 4294901760
    %v9495 = vsub.f32 %v9312, %v9494
    %v9496 = vand.u32 %v9495, 4294901760
    %9497 = vmatpush.msra.mxu0 %v9496
    %v9498 = vand.u32 %v9311, 4294901760
    %v9499 = vsub.f32 %v9311, %v9498
    %v9500 = vand.u32 %v9499, 4294901760
    %9501 = vmatpush.msra.mxu0 %v9500
    %v9502 = vand.u32 %v9310, 4294901760
    %v9503 = vsub.f32 %v9310, %v9502
    %v9504 = vand.u32 %v9503, 4294901760
    %9505 = vmatpush.msra.mxu0 %v9504
    %v9506 = vand.u32 %v9309, 4294901760
    %v9507 = vsub.f32 %v9309, %v9506
    %v9508 = vand.u32 %v9507, 4294901760
    %9509 = vmatpush.msra.mxu0 %v9508
    %v9510 = vand.u32 %v9308, 4294901760
    %v9511 = vsub.f32 %v9308, %v9510
    %v9512 = vand.u32 %v9511, 4294901760
    %9513 = vmatpush.msra.mxu0 %v9512
    %v9514 = vand.u32 %v9307, 4294901760
    %v9515 = vsub.f32 %v9307, %v9514
    %v9516 = vand.u32 %v9515, 4294901760
    %9517 = vmatpush.msra.mxu0 %v9516
    %v9518 = vand.u32 %v9306, 4294901760
    %v9519 = vsub.f32 %v9306, %v9518
    %v9520 = vand.u32 %v9519, 4294901760
    %9521 = vmatpush.msra.mxu0 %v9520
    %v9522 = vand.u32 %v9317, 4294901760
    %9523 = vmatmul.f32.gmra.mxu0 %v9522
    %v9524 = vpop.f32.mrf.mxu0
    %v9525 = vadd.f32 %v9480, %v9524
    %9526 = vdwg.mxu0
    %9527 = vmatpush.msra.mxu0 0.0
    %9528 = vmatpush.msra.mxu0 0.0
    %9529 = vmatpush.msra.mxu0 0.0
    %9530 = vmatpush.msra.mxu0 0.0
    %9531 = vmatpush.msra.mxu0 0.0
    %9532 = vmatpush.msra.mxu0 0.0
    %9533 = vmatpush.msra.mxu0 0.0
    %9534 = vmatpush.msra.mxu0 0.0
    %v9535 = vand.u32 %v9313, 4294901760
    %9536 = vmatpush.msra.mxu0 %v9535
    %v9537 = vand.u32 %v9312, 4294901760
    %9538 = vmatpush.msra.mxu0 %v9537
    %v9539 = vand.u32 %v9311, 4294901760
    %9540 = vmatpush.msra.mxu0 %v9539
    %v9541 = vand.u32 %v9310, 4294901760
    %9542 = vmatpush.msra.mxu0 %v9541
    %v9543 = vand.u32 %v9309, 4294901760
    %9544 = vmatpush.msra.mxu0 %v9543
    %v9545 = vand.u32 %v9308, 4294901760
    %9546 = vmatpush.msra.mxu0 %v9545
    %v9547 = vand.u32 %v9307, 4294901760
    %9548 = vmatpush.msra.mxu0 %v9547
    %v9549 = vand.u32 %v9306, 4294901760
    %9550 = vmatpush.msra.mxu0 %v9549
    %v9551 = vand.u32 %v9317, 4294901760
    %9552 = vmatmul.f32.gmra.mxu0 %v9551
    %v9553 = vpop.f32.mrf.mxu0
    %v9554 = vadd.f32 %v9525, %v9553
    %9555 = vdwg.mxu0
    %v9556 = vmax.f32 %v9554, 0.0
    %v9557 = vld [vmem:[%s6 + $0x20] sm:$0xff]
    %v9558 = vld [vmem:[%s6 + $0x28] sm:$0xff]
    %v9559 = vld [vmem:[%s6 + $0x30] sm:$0xff]
    %v9560 = vld [vmem:[%s6 + $0x38] sm:$0xff]
    %v9561 = vld [vmem:[%s6 + $0x40] sm:$0xff]
    %v9562 = vld [vmem:[%s6 + $0x48] sm:$0xff]
    %v9563 = vld [vmem:[%s6 + $0x50] sm:$0xff]
    %v9564 = vld [vmem:[%s6 + $0x58] sm:$0xff]
    %v9565 = vld [vmem:[%s7 + $0x8] sm:$0x1]
    %v9566 = vperm.slane %v9565, 0
    %v9568 = vsel %vm88, %v9556, 0
    %9570 = vmatpush.msra.mxu0 0.0
    %9571 = vmatpush.msra.mxu0 0.0
    %9572 = vmatpush.msra.mxu0 0.0
    %9573 = vmatpush.msra.mxu0 0.0
    %9574 = vmatpush.msra.mxu0 0.0
    %9575 = vmatpush.msra.mxu0 0.0
    %9576 = vmatpush.msra.mxu0 0.0
    %9577 = vmatpush.msra.mxu0 0.0
    %v9578 = vand.u32 %v9564, 4294901760
    %9579 = vmatpush.msra.mxu0 %v9578
    %v9580 = vand.u32 %v9563, 4294901760
    %9581 = vmatpush.msra.mxu0 %v9580
    %v9582 = vand.u32 %v9562, 4294901760
    %9583 = vmatpush.msra.mxu0 %v9582
    %v9584 = vand.u32 %v9561, 4294901760
    %9585 = vmatpush.msra.mxu0 %v9584
    %v9586 = vand.u32 %v9560, 4294901760
    %9587 = vmatpush.msra.mxu0 %v9586
    %v9588 = vand.u32 %v9559, 4294901760
    %9589 = vmatpush.msra.mxu0 %v9588
    %v9590 = vand.u32 %v9558, 4294901760
    %9591 = vmatpush.msra.mxu0 %v9590
    %v9592 = vand.u32 %v9557, 4294901760
    %9593 = vmatpush.msra.mxu0 %v9592
    %v9594 = vand.u32 %v9568, 4294901760
    %v9595 = vsub.f32 %v9568, %v9594
    %v9596 = vand.u32 %v9595, 4294901760
    %v9597 = vsub.f32 %v9595, %v9596
    %v9598 = vand.u32 %v9597, 4294901760
    %9599 = vmatmul.f32.gmra.mxu0 %v9598
    %v9600 = vpop.f32.mrf.mxu0
    %v9601 = vadd.f32 %v9566, %v9600
    %9602 = vdwg.mxu0
    %9603 = vmatpush.msra.mxu0 0.0
    %9604 = vmatpush.msra.mxu0 0.0
    %9605 = vmatpush.msra.mxu0 0.0
    %9606 = vmatpush.msra.mxu0 0.0
    %9607 = vmatpush.msra.mxu0 0.0
    %9608 = vmatpush.msra.mxu0 0.0
    %9609 = vmatpush.msra.mxu0 0.0
    %9610 = vmatpush.msra.mxu0 0.0
    %v9611 = vand.u32 %v9564, 4294901760
    %v9612 = vsub.f32 %v9564, %v9611
    %v9613 = vand.u32 %v9612, 4294901760
    %v9614 = vsub.f32 %v9612, %v9613
    %v9615 = vand.u32 %v9614, 4294901760
    %9616 = vmatpush.msra.mxu0 %v9615
    %v9617 = vand.u32 %v9563, 4294901760
    %v9618 = vsub.f32 %v9563, %v9617
    %v9619 = vand.u32 %v9618, 4294901760
    %v9620 = vsub.f32 %v9618, %v9619
    %v9621 = vand.u32 %v9620, 4294901760
    %9622 = vmatpush.msra.mxu0 %v9621
    %v9623 = vand.u32 %v9562, 4294901760
    %v9624 = vsub.f32 %v9562, %v9623
    %v9625 = vand.u32 %v9624, 4294901760
    %v9626 = vsub.f32 %v9624, %v9625
    %v9627 = vand.u32 %v9626, 4294901760
    %9628 = vmatpush.msra.mxu0 %v9627
    %v9629 = vand.u32 %v9561, 4294901760
    %v9630 = vsub.f32 %v9561, %v9629
    %v9631 = vand.u32 %v9630, 4294901760
    %v9632 = vsub.f32 %v9630, %v9631
    %v9633 = vand.u32 %v9632, 4294901760
    %9634 = vmatpush.msra.mxu0 %v9633
    %v9635 = vand.u32 %v9560, 4294901760
    %v9636 = vsub.f32 %v9560, %v9635
    %v9637 = vand.u32 %v9636, 4294901760
    %v9638 = vsub.f32 %v9636, %v9637
    %v9639 = vand.u32 %v9638, 4294901760
    %9640 = vmatpush.msra.mxu0 %v9639
    %v9641 = vand.u32 %v9559, 4294901760
    %v9642 = vsub.f32 %v9559, %v9641
    %v9643 = vand.u32 %v9642, 4294901760
    %v9644 = vsub.f32 %v9642, %v9643
    %v9645 = vand.u32 %v9644, 4294901760
    %9646 = vmatpush.msra.mxu0 %v9645
    %v9647 = vand.u32 %v9558, 4294901760
    %v9648 = vsub.f32 %v9558, %v9647
    %v9649 = vand.u32 %v9648, 4294901760
    %v9650 = vsub.f32 %v9648, %v9649
    %v9651 = vand.u32 %v9650, 4294901760
    %9652 = vmatpush.msra.mxu0 %v9651
    %v9653 = vand.u32 %v9557, 4294901760
    %v9654 = vsub.f32 %v9557, %v9653
    %v9655 = vand.u32 %v9654, 4294901760
    %v9656 = vsub.f32 %v9654, %v9655
    %v9657 = vand.u32 %v9656, 4294901760
    %9658 = vmatpush.msra.mxu0 %v9657
    %v9659 = vand.u32 %v9568, 4294901760
    %9660 = vmatmul.f32.gmra.mxu0 %v9659
    %v9661 = vpop.f32.mrf.mxu0
    %v9662 = vadd.f32 %v9601, %v9661
    %9663 = vdwg.mxu0
    %9664 = vmatpush.msra.mxu0 0.0
    %9665 = vmatpush.msra.mxu0 0.0
    %9666 = vmatpush.msra.mxu0 0.0
    %9667 = vmatpush.msra.mxu0 0.0
    %9668 = vmatpush.msra.mxu0 0.0
    %9669 = vmatpush.msra.mxu0 0.0
    %9670 = vmatpush.msra.mxu0 0.0
    %9671 = vmatpush.msra.mxu0 0.0
    %v9672 = vand.u32 %v9564, 4294901760
    %v9673 = vsub.f32 %v9564, %v9672
    %9674 = vmatpush.msra.mxu0 %v9673
    %v9675 = vand.u32 %v9563, 4294901760
    %v9676 = vsub.f32 %v9563, %v9675
    %9677 = vmatpush.msra.mxu0 %v9676
    %v9678 = vand.u32 %v9562, 4294901760
    %v9679 = vsub.f32 %v9562, %v9678
    %9680 = vmatpush.msra.mxu0 %v9679
    %v9681 = vand.u32 %v9561, 4294901760
    %v9682 = vsub.f32 %v9561, %v9681
    %9683 = vmatpush.msra.mxu0 %v9682
    %v9684 = vand.u32 %v9560, 4294901760
    %v9685 = vsub.f32 %v9560, %v9684
    %9686 = vmatpush.msra.mxu0 %v9685
    %v9687 = vand.u32 %v9559, 4294901760
    %v9688 = vsub.f32 %v9559, %v9687
    %9689 = vmatpush.msra.mxu0 %v9688
    %v9690 = vand.u32 %v9558, 4294901760
    %v9691 = vsub.f32 %v9558, %v9690
    %9692 = vmatpush.msra.mxu0 %v9691
    %v9693 = vand.u32 %v9557, 4294901760
    %v9694 = vsub.f32 %v9557, %v9693
    %9695 = vmatpush.msra.mxu0 %v9694
    %v9696 = vand.u32 %v9568, 4294901760
    %v9697 = vsub.f32 %v9568, %v9696
    %9698 = vmatmul.f32.gmra.mxu0 %v9697
    %v9699 = vpop.f32.mrf.mxu0
    %v9700 = vadd.f32 %v9662, %v9699
    %9701 = vdwg.mxu0
    %9702 = vmatpush.msra.mxu0 0.0
    %9703 = vmatpush.msra.mxu0 0.0
    %9704 = vmatpush.msra.mxu0 0.0
    %9705 = vmatpush.msra.mxu0 0.0
    %9706 = vmatpush.msra.mxu0 0.0
    %9707 = vmatpush.msra.mxu0 0.0
    %9708 = vmatpush.msra.mxu0 0.0
    %9709 = vmatpush.msra.mxu0 0.0
    %v9710 = vand.u32 %v9564, 4294901760
    %9711 = vmatpush.msra.mxu0 %v9710
    %v9712 = vand.u32 %v9563, 4294901760
    %9713 = vmatpush.msra.mxu0 %v9712
    %v9714 = vand.u32 %v9562, 4294901760
    %9715 = vmatpush.msra.mxu0 %v9714
    %v9716 = vand.u32 %v9561, 4294901760
    %9717 = vmatpush.msra.mxu0 %v9716
    %v9718 = vand.u32 %v9560, 4294901760
    %9719 = vmatpush.msra.mxu0 %v9718
    %v9720 = vand.u32 %v9559, 4294901760
    %9721 = vmatpush.msra.mxu0 %v9720
    %v9722 = vand.u32 %v9558, 4294901760
    %9723 = vmatpush.msra.mxu0 %v9722
    %v9724 = vand.u32 %v9557, 4294901760
    %9725 = vmatpush.msra.mxu0 %v9724
    %v9726 = vand.u32 %v9568, 4294901760
    %v9727 = vsub.f32 %v9568, %v9726
    %v9728 = vand.u32 %v9727, 4294901760
    %9729 = vmatmul.f32.gmra.mxu0 %v9728
    %v9730 = vpop.f32.mrf.mxu0
    %v9731 = vadd.f32 %v9700, %v9730
    %9732 = vdwg.mxu0
    %9733 = vmatpush.msra.mxu0 0.0
    %9734 = vmatpush.msra.mxu0 0.0
    %9735 = vmatpush.msra.mxu0 0.0
    %9736 = vmatpush.msra.mxu0 0.0
    %9737 = vmatpush.msra.mxu0 0.0
    %9738 = vmatpush.msra.mxu0 0.0
    %9739 = vmatpush.msra.mxu0 0.0
    %9740 = vmatpush.msra.mxu0 0.0
    %v9741 = vand.u32 %v9564, 4294901760
    %v9742 = vsub.f32 %v9564, %v9741
    %v9743 = vand.u32 %v9742, 4294901760
    %9744 = vmatpush.msra.mxu0 %v9743
    %v9745 = vand.u32 %v9563, 4294901760
    %v9746 = vsub.f32 %v9563, %v9745
    %v9747 = vand.u32 %v9746, 4294901760
    %9748 = vmatpush.msra.mxu0 %v9747
    %v9749 = vand.u32 %v9562, 4294901760
    %v9750 = vsub.f32 %v9562, %v9749
    %v9751 = vand.u32 %v9750, 4294901760
    %9752 = vmatpush.msra.mxu0 %v9751
    %v9753 = vand.u32 %v9561, 4294901760
    %v9754 = vsub.f32 %v9561, %v9753
    %v9755 = vand.u32 %v9754, 4294901760
    %9756 = vmatpush.msra.mxu0 %v9755
    %v9757 = vand.u32 %v9560, 4294901760
    %v9758 = vsub.f32 %v9560, %v9757
    %v9759 = vand.u32 %v9758, 4294901760
    %9760 = vmatpush.msra.mxu0 %v9759
    %v9761 = vand.u32 %v9559, 4294901760
    %v9762 = vsub.f32 %v9559, %v9761
    %v9763 = vand.u32 %v9762, 4294901760
    %9764 = vmatpush.msra.mxu0 %v9763
    %v9765 = vand.u32 %v9558, 4294901760
    %v9766 = vsub.f32 %v9558, %v9765
    %v9767 = vand.u32 %v9766, 4294901760
    %9768 = vmatpush.msra.mxu0 %v9767
    %v9769 = vand.u32 %v9557, 4294901760
    %v9770 = vsub.f32 %v9557, %v9769
    %v9771 = vand.u32 %v9770, 4294901760
    %9772 = vmatpush.msra.mxu0 %v9771
    %v9773 = vand.u32 %v9568, 4294901760
    %9774 = vmatmul.f32.gmra.mxu0 %v9773
    %v9775 = vpop.f32.mrf.mxu0
    %v9776 = vadd.f32 %v9731, %v9775
    %9777 = vdwg.mxu0
    %9778 = vmatpush.msra.mxu0 0.0
    %9779 = vmatpush.msra.mxu0 0.0
    %9780 = vmatpush.msra.mxu0 0.0
    %9781 = vmatpush.msra.mxu0 0.0
    %9782 = vmatpush.msra.mxu0 0.0
    %9783 = vmatpush.msra.mxu0 0.0
    %9784 = vmatpush.msra.mxu0 0.0
    %9785 = vmatpush.msra.mxu0 0.0
    %v9786 = vand.u32 %v9564, 4294901760
    %9787 = vmatpush.msra.mxu0 %v9786
    %v9788 = vand.u32 %v9563, 4294901760
    %9789 = vmatpush.msra.mxu0 %v9788
    %v9790 = vand.u32 %v9562, 4294901760
    %9791 = vmatpush.msra.mxu0 %v9790
    %v9792 = vand.u32 %v9561, 4294901760
    %9793 = vmatpush.msra.mxu0 %v9792
    %v9794 = vand.u32 %v9560, 4294901760
    %9795 = vmatpush.msra.mxu0 %v9794
    %v9796 = vand.u32 %v9559, 4294901760
    %9797 = vmatpush.msra.mxu0 %v9796
    %v9798 = vand.u32 %v9558, 4294901760
    %9799 = vmatpush.msra.mxu0 %v9798
    %v9800 = vand.u32 %v9557, 4294901760
    %9801 = vmatpush.msra.mxu0 %v9800
    %v9802 = vand.u32 %v9568, 4294901760
    %9803 = vmatmul.f32.gmra.mxu0 %v9802
    %v9804 = vpop.f32.mrf.mxu0
    %v9805 = vadd.f32 %v9776, %v9804
    %9806 = vdwg.mxu0
    %9807 = vst [vmem:[#allocation5] sm:$0x3] %v9805
    // Predicated region
    $region34: #{mixout_policy_forward.1} parent=1 // pred_check
      _
    $region35: #{mixout_policy_forward.1} parent=1 // pred_check_branch
      %9809 = sbr.rel (0) target = $region37
    $region36: #{mixout_policy_forward.1} parent=1 // pred_region
      %9811 = vsyncadd [#allocation6], 0
      %s9813 = sshll.u32 [#allocation5], 4
      %s9814 = int_to_ptr.vmem [resolvable:$true] %s9813
      %s9815 = sshll.u32 %s8, 4
      %s9816 = int_to_ptr.hbm [resolvable:$true] %s9815
      %9818 = dma.vmem_to_hbm [thread:$0]  %s9814, 32, %s9816, [#allocation6]
    $region37: #{mixout_policy_forward.1} parent=1 // pred_fallthru
      _
    // Predicated region
    $region38: #{mixout_policy_forward.1} parent=1 // pred_check
      _
    $region39: #{mixout_policy_forward.1} parent=1 // pred_check_branch
      %9820 = sbr.rel (0) target = $region41
    $region40: #{mixout_policy_forward.1} parent=1 // pred_region
      %9822 = dma.done [#allocation6], 32
    $region41: #{mixout_policy_forward.1} parent=1 // pred_fallthru
      _
    %9823 = vsyncpa [#allocation6], 1

</llo_original>
